<compile_context>
chip_gen: v5e
topology: v5e:2x2
jax: 0.10.0
libtpu: 0.0.40
codegen_flags: <defaults>
</compile_context>

<pallas_src>
import functools

import numpy as np
import jax
import jax.numpy as jnp
from jax import lax
from jax.experimental import pallas as pl
from jax.experimental.pallas import tpu as pltpu


# ----------------------------------------------------------------------------
# Fused kernel: merged spatial conv -> tap-merged dilated temporal convs
#               -> (free) concat -> fused BatchNorm
# ----------------------------------------------------------------------------
def _fused_kernel(xcol_ref, w1_ref, w2_ref, g_ref, b_ref, o_ref,
                  mid_ref, stg_ref, ybuf_ref, *, N, T, S, F, dilations, eps):
    TS = T * S          # per-sample "pixels" (time * spatial), on lanes
    C2 = 2 * F          # per-branch spatial-conv channels
    C6 = 6 * F          # per-branch staged rows (3 taps x 2F)

    # ---- Stage 1: merged spatial conv, one wide MXU matmul -------------------
    # (8F, 9*Cin) x (9*Cin, N*T*S) -> (8F, N*T*S), straight into VMEM scratch.
    mid_ref[...] = jnp.dot(w1_ref[...], xcol_ref[...],
                           preferred_element_type=jnp.float32)

    # ---- Stage 2 prep: zero only the needed temporal-halo columns, once ------
    # Tap k=0 needs the first d*S cols zero, tap k=2 the last d*S cols; tap k=1
    # has no halo.  These regions are identical for every sample, so zero once.
    for b, d in enumerate(dilations):
        hw = min(d * S, TS)
        r0 = b * C6               # rows of tap k=0
        r2 = b * C6 + 2 * C2      # rows of tap k=2
        stg_ref[r0:r0 + C2, :hw] = jnp.zeros((C2, hw), jnp.float32)
        stg_ref[r2:r2 + C2, TS - hw:] = jnp.zeros((C2, hw), jnp.float32)

    # ---- Stage 2: dilated temporal convs (tap-merged, block-diagonal MXU) ----
    sum_acc = jnp.zeros((4 * F, 1), jnp.float32)
    sq_acc = jnp.zeros((4 * F, 1), jnp.float32)
    for n in range(N):
        base = n * TS
        for b, d in enumerate(dilations):
            ch0 = b * C2
            row = b * C6
            hw = d * S
            if hw < TS:       # tap k=0 (shift -d): valid output frames t >= d
                stg_ref[row:row + C2, hw:] = \
                    mid_ref[ch0:ch0 + C2, base:base + TS - hw]
            # tap k=1 (no shift)
            stg_ref[row + C2:row + 2 * C2, :] = \
                mid_ref[ch0:ch0 + C2, base:base + TS]
            if hw < TS:       # tap k=2 (shift +d): valid output frames t < T-d
                stg_ref[row + 2 * C2:row + 3 * C2, :TS - hw] = \
                    mid_ref[ch0:ch0 + C2, base + hw:base + TS]
        # Block-diagonal (4F, 24F) x (24F, T*S) -> (4F, T*S): all 4 branches,
        # all 3 taps of sample n in one MXU pass; branch concat is free.
        res = jnp.dot(w2_ref[...], stg_ref[...],
                      preferred_element_type=jnp.float32)          # (4F, TS)
        ybuf_ref[n] = res
        # Fused BatchNorm statistics from the f32 pre-cast values.
        sum_acc = sum_acc + jnp.sum(res, axis=1, keepdims=True)
        sq_acc = sq_acc + jnp.sum(res * res, axis=1, keepdims=True)

    # ---- Stage 3: BatchNorm3d finalize (training-mode, biased variance) ------
    inv_cnt = jnp.float32(1.0 / (N * TS))
    mean = sum_acc * inv_cnt                                       # (4F, 1)
    var = sq_acc * inv_cnt - mean * mean                           # (4F, 1)
    scale = lax.rsqrt(var + eps) * g_ref[...]                      # (4F, 1)
    shift = b_ref[...] - mean * scale                              # (4F, 1)
    for n in range(N):
        o_ref[n] = (ybuf_ref[n] * scale + shift).astype(o_ref.dtype)


# ----------------------------------------------------------------------------
# Full module forward
# ----------------------------------------------------------------------------
def dilated_dcnn_v2(x_ncdhw, params, eps=1e-3, activation=None):
    # x_ncdhw: (N, Cin, T, H, W)  ->  output (N, 4*F, T, H, W)
    N, Cin, T, H, W = x_ncdhw.shape
    F = params["w2_1"].shape[-1]
    dil = (1, 2, 4, 8)
    S = H * W
    TS = T * S
    R = N * TS

    # Merged spatial weights: (8F, 9*Cin), Cout order = [branch1 | branch2 | ...]
    w1_all = jnp.concatenate([params[f"w1_{d}"] for d in dil], axis=-1)  # (3,3,Cin,8F)
    w1m = jnp.transpose(w1_all.reshape(9 * Cin, 8 * F))                  # (8F, 9*Cin)

    # Block-diagonal tap-merged temporal weights: (4F, 24F).  Row block b holds
    # branch b's F output channels; its nonzero column block [b*6F,(b+1)*6F) is
    # ordered (tap k, in-channel i) with value w2_{d}[k, i, o].
    w2blk = jnp.zeros((4 * F, 24 * F), jnp.float32)
    for b, d in enumerate(dil):
        w2m_b = jnp.transpose(params[f"w2_{d}"], (2, 0, 1)).reshape(F, 6 * F)
        w2blk = w2blk.at[b * F:(b + 1) * F, b * 6 * F:(b + 1) * 6 * F].set(w2m_b)

    # im2col of the tiny input done by XLA; everything downstream is fused and
    # VMEM-resident.  Rows: tap-major then Cin; cols: (n, t, h, w).
    xc = jnp.transpose(x_ncdhw, (1, 0, 2, 3, 4))                 # (Cin, N, T, H, W)
    xp = jnp.pad(xc, ((0, 0), (0, 0), (0, 0), (1, 1), (1, 1)))
    cols = [xp[:, :, :, dh:dh + H, dw:dw + W]
            for dh in range(3) for dw in range(3)]
    xcol = jnp.stack(cols, axis=0).reshape(9 * Cin, R)           # (9*Cin, R)

    gamma = params["gamma"].reshape(4 * F, 1)
    beta = params["beta"].reshape(4 * F, 1)

    kernel = functools.partial(_fused_kernel, N=N, T=T, S=S, F=F,
                               dilations=dil, eps=eps)

    y = pl.pallas_call(
        kernel,
        out_shape=jax.ShapeDtypeStruct((N, 4 * F, TS), x_ncdhw.dtype),
        grid=(1,),
        in_specs=[
            pl.BlockSpec((9 * Cin, R), lambda i: (0, 0)),
            pl.BlockSpec((8 * F, 9 * Cin), lambda i: (0, 0)),
            pl.BlockSpec((4 * F, 24 * F), lambda i: (0, 0)),
            pl.BlockSpec((4 * F, 1), lambda i: (0, 0)),
            pl.BlockSpec((4 * F, 1), lambda i: (0, 0)),
        ],
        out_specs=pl.BlockSpec((N, 4 * F, TS), lambda i: (0, 0, 0)),
        scratch_shapes=[
            pltpu.VMEM((8 * F, R), jnp.float32),       # mid: spatial-conv result
            pltpu.VMEM((24 * F, TS), jnp.float32),     # stg: tap-shifted MXU RHS
            pltpu.VMEM((N, 4 * F, TS), jnp.float32),   # ybuf: pre-BN f32 values
        ],
        compiler_params=pltpu.CompilerParams(
            dimension_semantics=("arbitrary",),
            vmem_limit_bytes=32 * 1024 * 1024),
    )(xcol, w1m, w2blk, gamma, beta)

    # activation is None by module default -> identity.
    # TODO(synk): fuse user-supplied activation callables into the kernel epilogue.
    if activation is not None:
        y = activation(y)

    # Channel-major per-sample output => plain reshape back to NCDHW, no transpose.
    return y.reshape(N, 4 * F, T, H, W)


# ----------------------------------------------------------------------------
# Pure-JAX reference (for correctness check only)
# ----------------------------------------------------------------------------
def _ref_forward(x, params, eps=1e-3):
    outs = []
    for d in (1, 2, 4, 8):
        w1 = params[f"w1_{d}"]                     # (3,3,Cin,2F)
        w2 = params[f"w2_{d}"]                     # (3,2F,F)
        k1 = jnp.transpose(w1, (3, 2, 0, 1))[:, :, None, :, :]   # (2F,Cin,1,3,3)
        h = lax.conv_general_dilated(
            x, k1, (1, 1, 1), [(0, 0), (1, 1), (1, 1)],
            dimension_numbers=("NCDHW", "OIDHW", "NCDHW"))
        k2 = jnp.transpose(w2, (2, 1, 0))[:, :, :, None, None]   # (F,2F,3,1,1)
        h = lax.conv_general_dilated(
            h, k2, (1, 1, 1), [(d, d), (0, 0), (0, 0)],
            rhs_dilation=(d, 1, 1),
            dimension_numbers=("NCDHW", "OIDHW", "NCDHW"))
        outs.append(h)
    y = jnp.concatenate(outs, axis=1)              # (N, 4F, T, H, W)
    mean = jnp.mean(y, axis=(0, 2, 3, 4), keepdims=True)
    var = jnp.mean(jnp.square(y - mean), axis=(0, 2, 3, 4), keepdims=True)
    g = params["gamma"].reshape(1, -1, 1, 1, 1)
    b = params["beta"].reshape(1, -1, 1, 1, 1)
    return (y - mean) * lax.rsqrt(var + eps) * g + b


# ----------------------------------------------------------------------------
# Deterministic parameter init (synthetic; shapes match the torch module)
# ----------------------------------------------------------------------------
def init_params(key, cin, f):
    params = {}
    keys = jax.random.split(key, 10)
    i = 0
    for d in (1, 2, 4, 8):
        params[f"w1_{d}"] = 0.1 * jax.random.normal(
            keys[i], (3, 3, cin, 2 * f), jnp.float32); i += 1
        params[f"w2_{d}"] = 0.1 * jax.random.normal(
            keys[i], (3, 2 * f, f), jnp.float32); i += 1
    params["gamma"] = 1.0 + 0.1 * jax.random.normal(keys[i], (4 * f,), jnp.float32)
    params["beta"] = 0.1 * jax.random.normal(keys[i + 1], (4 * f,), jnp.float32)
    return params


if __name__ == "__main__":
    N, Cin, T, H, W = 2, 4, 8, 16, 16
    F = 8  # filters -> output channels 4*F = 32

    key = jax.random.PRNGKey(0)
    kx, kp = jax.random.split(key)
    x = jax.random.normal(kx, (N, Cin, T, H, W), jnp.float32)
    params = init_params(kp, Cin, F)

    fwd = jax.jit(lambda xx: dilated_dcnn_v2(xx, params))
    y = jax.block_until_ready(fwd(x))
    assert y.shape == (N, 4 * F, T, H, W)

    y_ref = _ref_forward(x, params)
    np.testing.assert_allclose(np.asarray(y), np.asarray(y_ref),
                               rtol=2e-3, atol=2e-3)
    print("KERNEL_OK")
</pallas_src>

<mosaic_0001>
module attributes {stable_mosaic.version = 11 : i64} {
  func.func @_fused_kernel(%arg0: i32, %arg1: memref<36x4096xf32, #tpu.memory_space<vmem>>, %arg2: memref<64x36xf32, #tpu.memory_space<vmem>>, %arg3: memref<32x192xf32, #tpu.memory_space<vmem>>, %arg4: memref<32x1xf32, #tpu.memory_space<vmem>>, %arg5: memref<32x1xf32, #tpu.memory_space<vmem>>, %arg6: memref<2x32x2048xf32, #tpu.memory_space<vmem>>, %arg7: memref<64x4096xf32, #tpu.memory_space<vmem>>, %arg8: memref<192x2048xf32, #tpu.memory_space<vmem>>, %arg9: memref<2x32x2048xf32, #tpu.memory_space<vmem>>) attributes {dimension_semantics = [#tpu.dimension_semantics<arbitrary>], iteration_bounds = array<i64: 1>, scalar_prefetch = 0 : i64, scratch_operands = 3 : i64, tpu.core_type = #tpu.core_type<tc>, window_params = [{pipeline_mode = #tpu.pipeline_mode<synchronous>, transform_indices = @transform_0, window_bounds = array<i64: 36, 4096>}, {pipeline_mode = #tpu.pipeline_mode<synchronous>, transform_indices = @transform_1, window_bounds = array<i64: 64, 36>}, {pipeline_mode = #tpu.pipeline_mode<synchronous>, transform_indices = @transform_2, window_bounds = array<i64: 32, 192>}, {pipeline_mode = #tpu.pipeline_mode<synchronous>, transform_indices = @transform_3, window_bounds = array<i64: 32, 1>}, {pipeline_mode = #tpu.pipeline_mode<synchronous>, transform_indices = @transform_4, window_bounds = array<i64: 32, 1>}, {pipeline_mode = #tpu.pipeline_mode<synchronous>, transform_indices = @transform_5, window_bounds = array<i64: 2, 32, 2048>}]} {
    %c0 = arith.constant 0 : index
    %c0_0 = arith.constant 0 : index
    %0 = vector.load %arg2[%c0, %c0_0] : memref<64x36xf32, #tpu.memory_space<vmem>>, vector<64x36xf32>
    %c0_1 = arith.constant 0 : index
    %c0_2 = arith.constant 0 : index
    %1 = vector.load %arg1[%c0_1, %c0_2] : memref<36x4096xf32, #tpu.memory_space<vmem>>, vector<36x4096xf32>
    %cst = arith.constant dense<0.000000e+00> : vector<64x4096xf32>
    %2 = tpu.matmul %0, %1, %cst {dimension_numbers = #tpu.dot_dimension_numbers<[1], [0], [0], [1], [0, 0, 1, 1], [], []>} : vector<64x36xf32>, vector<36x4096xf32>, vector<64x4096xf32> -> vector<64x4096xf32>
    %c0_3 = arith.constant 0 : index
    %c0_4 = arith.constant 0 : index
    %3 = vector.load %arg7[%c0_3, %c0_4] : memref<64x4096xf32, #tpu.memory_space<vmem>>, vector<64x4096xf32>
    tpu.vector_store %arg7[%c0_3, %c0_4], %2 {strides = array<i32>} : memref<64x4096xf32, #tpu.memory_space<vmem>>, vector<64x4096xf32>,
    %cst_5 = arith.constant 0.000000e+00 : f32
    %4 = vector.broadcast %cst_5 : f32 to vector<16x256xf32>
    %c0_6 = arith.constant 0 : index
    %c0_7 = arith.constant 0 : index
    %5 = vector.load %arg8[%c0_6, %c0_7] : memref<192x2048xf32, #tpu.memory_space<vmem>>, vector<16x256xf32>
    tpu.vector_store %arg8[%c0_6, %c0_7], %4 {strides = array<i32>} : memref<192x2048xf32, #tpu.memory_space<vmem>>, vector<16x256xf32>,
    %cst_8 = arith.constant 0.000000e+00 : f32
    %6 = vector.broadcast %cst_8 : f32 to vector<16x256xf32>
    %c32 = arith.constant 32 : index
    %c1792 = arith.constant 1792 : index
    %7 = vector.load %arg8[%c32, %c1792] : memref<192x2048xf32, #tpu.memory_space<vmem>>, vector<16x256xf32>
    tpu.vector_store %arg8[%c32, %c1792], %6 {strides = array<i32>} : memref<192x2048xf32, #tpu.memory_space<vmem>>, vector<16x256xf32>,
    %cst_9 = arith.constant 0.000000e+00 : f32
    %8 = vector.broadcast %cst_9 : f32 to vector<16x512xf32>
    %c48 = arith.constant 48 : index
    %c0_10 = arith.constant 0 : index
    %9 = vector.load %arg8[%c48, %c0_10] : memref<192x2048xf32, #tpu.memory_space<vmem>>, vector<16x512xf32>
    tpu.vector_store %arg8[%c48, %c0_10], %8 {strides = array<i32>} : memref<192x2048xf32, #tpu.memory_space<vmem>>, vector<16x512xf32>,
    %cst_11 = arith.constant 0.000000e+00 : f32
    %10 = vector.broadcast %cst_11 : f32 to vector<16x512xf32>
    %c80 = arith.constant 80 : index
    %c1536 = arith.constant 1536 : index
    %11 = vector.load %arg8[%c80, %c1536] : memref<192x2048xf32, #tpu.memory_space<vmem>>, vector<16x512xf32>
    tpu.vector_store %arg8[%c80, %c1536], %10 {strides = array<i32>} : memref<192x2048xf32, #tpu.memory_space<vmem>>, vector<16x512xf32>,
    %cst_12 = arith.constant 0.000000e+00 : f32
    %12 = vector.broadcast %cst_12 : f32 to vector<16x1024xf32>
    %c96 = arith.constant 96 : index
    %c0_13 = arith.constant 0 : index
    %13 = vector.load %arg8[%c96, %c0_13] : memref<192x2048xf32, #tpu.memory_space<vmem>>, vector<16x1024xf32>
    tpu.vector_store %arg8[%c96, %c0_13], %12 {strides = array<i32>} : memref<192x2048xf32, #tpu.memory_space<vmem>>, vector<16x1024xf32>,
    %cst_14 = arith.constant 0.000000e+00 : f32
    %14 = vector.broadcast %cst_14 : f32 to vector<16x1024xf32>
    %c128 = arith.constant 128 : index
    %c1024 = arith.constant 1024 : index
    %15 = vector.load %arg8[%c128, %c1024] : memref<192x2048xf32, #tpu.memory_space<vmem>>, vector<16x1024xf32>
    tpu.vector_store %arg8[%c128, %c1024], %14 {strides = array<i32>} : memref<192x2048xf32, #tpu.memory_space<vmem>>, vector<16x1024xf32>,
    %cst_15 = arith.constant 0.000000e+00 : f32
    %16 = vector.broadcast %cst_15 : f32 to vector<16x2048xf32>
    %c144 = arith.constant 144 : index
    %c0_16 = arith.constant 0 : index
    %17 = vector.load %arg8[%c144, %c0_16] : memref<192x2048xf32, #tpu.memory_space<vmem>>, vector<16x2048xf32>
    tpu.vector_store %arg8[%c144, %c0_16], %16 {strides = array<i32>} : memref<192x2048xf32, #tpu.memory_space<vmem>>, vector<16x2048xf32>,
    %cst_17 = arith.constant 0.000000e+00 : f32
    %18 = vector.broadcast %cst_17 : f32 to vector<16x2048xf32>
    %c176 = arith.constant 176 : index
    %c0_18 = arith.constant 0 : index
    %19 = vector.load %arg8[%c176, %c0_18] : memref<192x2048xf32, #tpu.memory_space<vmem>>, vector<16x2048xf32>
    tpu.vector_store %arg8[%c176, %c0_18], %18 {strides = array<i32>} : memref<192x2048xf32, #tpu.memory_space<vmem>>, vector<16x2048xf32>,
    %cst_19 = arith.constant 0.000000e+00 : f32
    %20 = vector.broadcast %cst_19 : f32 to vector<32x1xf32>
    %cst_20 = arith.constant 0.000000e+00 : f32
    %21 = vector.broadcast %cst_20 : f32 to vector<32x1xf32>
    %c0_21 = arith.constant 0 : index
    %c0_22 = arith.constant 0 : index
    %22 = vector.load %arg7[%c0_21, %c0_22] : memref<64x4096xf32, #tpu.memory_space<vmem>>, vector<16x1792xf32>
    %c0_23 = arith.constant 0 : index
    %c256 = arith.constant 256 : index
    %23 = vector.load %arg8[%c0_23, %c256] : memref<192x2048xf32, #tpu.memory_space<vmem>>, vector<16x1792xf32>
    tpu.vector_store %arg8[%c0_23, %c256], %22 {strides = array<i32>} : memref<192x2048xf32, #tpu.memory_space<vmem>>, vector<16x1792xf32>,
    %c0_24 = arith.constant 0 : index
    %c0_25 = arith.constant 0 : index
    %24 = vector.load %arg7[%c0_24, %c0_25] : memref<64x4096xf32, #tpu.memory_space<vmem>>, vector<16x2048xf32>
    %c16 = arith.constant 16 : index
    %c0_26 = arith.constant 0 : index
    %25 = vector.load %arg8[%c16, %c0_26] : memref<192x2048xf32, #tpu.memory_space<vmem>>, vector<16x2048xf32>
    tpu.vector_store %arg8[%c16, %c0_26], %24 {strides = array<i32>} : memref<192x2048xf32, #tpu.memory_space<vmem>>, vector<16x2048xf32>,
    %c0_27 = arith.constant 0 : index
    %c256_28 = arith.constant 256 : index
    %26 = vector.load %arg7[%c0_27, %c256_28] : memref<64x4096xf32, #tpu.memory_space<vmem>>, vector<16x1792xf32>
    %c32_29 = arith.constant 32 : index
    %c0_30 = arith.constant 0 : index
    %27 = vector.load %arg8[%c32_29, %c0_30] : memref<192x2048xf32, #tpu.memory_space<vmem>>, vector<16x1792xf32>
    tpu.vector_store %arg8[%c32_29, %c0_30], %26 {strides = array<i32>} : memref<192x2048xf32, #tpu.memory_space<vmem>>, vector<16x1792xf32>,
    %c16_31 = arith.constant 16 : index
    %c0_32 = arith.constant 0 : index
    %28 = vector.load %arg7[%c16_31, %c0_32] : memref<64x4096xf32, #tpu.memory_space<vmem>>, vector<16x1536xf32>
    %c48_33 = arith.constant 48 : index
    %c512 = arith.constant 512 : index
    %29 = vector.load %arg8[%c48_33, %c512] : memref<192x2048xf32, #tpu.memory_space<vmem>>, vector<16x1536xf32>
    tpu.vector_store %arg8[%c48_33, %c512], %28 {strides = array<i32>} : memref<192x2048xf32, #tpu.memory_space<vmem>>, vector<16x1536xf32>,
    %c16_34 = arith.constant 16 : index
    %c0_35 = arith.constant 0 : index
    %30 = vector.load %arg7[%c16_34, %c0_35] : memref<64x4096xf32, #tpu.memory_space<vmem>>, vector<16x2048xf32>
    %c64 = arith.constant 64 : index
    %c0_36 = arith.constant 0 : index
    %31 = vector.load %arg8[%c64, %c0_36] : memref<192x2048xf32, #tpu.memory_space<vmem>>, vector<16x2048xf32>
    tpu.vector_store %arg8[%c64, %c0_36], %30 {strides = array<i32>} : memref<192x2048xf32, #tpu.memory_space<vmem>>, vector<16x2048xf32>,
    %c16_37 = arith.constant 16 : index
    %c512_38 = arith.constant 512 : index
    %32 = vector.load %arg7[%c16_37, %c512_38] : memref<64x4096xf32, #tpu.memory_space<vmem>>, vector<16x1536xf32>
    %c80_39 = arith.constant 80 : index
    %c0_40 = arith.constant 0 : index
    %33 = vector.load %arg8[%c80_39, %c0_40] : memref<192x2048xf32, #tpu.memory_space<vmem>>, vector<16x1536xf32>
    tpu.vector_store %arg8[%c80_39, %c0_40], %32 {strides = array<i32>} : memref<192x2048xf32, #tpu.memory_space<vmem>>, vector<16x1536xf32>,
    %c32_41 = arith.constant 32 : index
    %c0_42 = arith.constant 0 : index
    %34 = vector.load %arg7[%c32_41, %c0_42] : memref<64x4096xf32, #tpu.memory_space<vmem>>, vector<16x1024xf32>
    %c96_43 = arith.constant 96 : index
    %c1024_44 = arith.constant 1024 : index
    %35 = vector.load %arg8[%c96_43, %c1024_44] : memref<192x2048xf32, #tpu.memory_space<vmem>>, vector<16x1024xf32>
    tpu.vector_store %arg8[%c96_43, %c1024_44], %34 {strides = array<i32>} : memref<192x2048xf32, #tpu.memory_space<vmem>>, vector<16x1024xf32>,
    %c32_45 = arith.constant 32 : index
    %c0_46 = arith.constant 0 : index
    %36 = vector.load %arg7[%c32_45, %c0_46] : memref<64x4096xf32, #tpu.memory_space<vmem>>, vector<16x2048xf32>
    %c112 = arith.constant 112 : index
    %c0_47 = arith.constant 0 : index
    %37 = vector.load %arg8[%c112, %c0_47] : memref<192x2048xf32, #tpu.memory_space<vmem>>, vector<16x2048xf32>
    tpu.vector_store %arg8[%c112, %c0_47], %36 {strides = array<i32>} : memref<192x2048xf32, #tpu.memory_space<vmem>>, vector<16x2048xf32>,
    %c32_48 = arith.constant 32 : index
    %c1024_49 = arith.constant 1024 : index
    %38 = vector.load %arg7[%c32_48, %c1024_49] : memref<64x4096xf32, #tpu.memory_space<vmem>>, vector<16x1024xf32>
    %c128_50 = arith.constant 128 : index
    %c0_51 = arith.constant 0 : index
    %39 = vector.load %arg8[%c128_50, %c0_51] : memref<192x2048xf32, #tpu.memory_space<vmem>>, vector<16x1024xf32>
    tpu.vector_store %arg8[%c128_50, %c0_51], %38 {strides = array<i32>} : memref<192x2048xf32, #tpu.memory_space<vmem>>, vector<16x1024xf32>,
    %c48_52 = arith.constant 48 : index
    %c0_53 = arith.constant 0 : index
    %40 = vector.load %arg7[%c48_52, %c0_53] : memref<64x4096xf32, #tpu.memory_space<vmem>>, vector<16x2048xf32>
    %c160 = arith.constant 160 : index
    %c0_54 = arith.constant 0 : index
    %41 = vector.load %arg8[%c160, %c0_54] : memref<192x2048xf32, #tpu.memory_space<vmem>>, vector<16x2048xf32>
    tpu.vector_store %arg8[%c160, %c0_54], %40 {strides = array<i32>} : memref<192x2048xf32, #tpu.memory_space<vmem>>, vector<16x2048xf32>,
    %c0_55 = arith.constant 0 : index
    %c0_56 = arith.constant 0 : index
    %42 = vector.load %arg3[%c0_55, %c0_56] : memref<32x192xf32, #tpu.memory_space<vmem>>, vector<32x192xf32>
    %c0_57 = arith.constant 0 : index
    %c0_58 = arith.constant 0 : index
    %43 = vector.load %arg8[%c0_57, %c0_58] : memref<192x2048xf32, #tpu.memory_space<vmem>>, vector<192x2048xf32>
    %cst_59 = arith.constant dense<0.000000e+00> : vector<32x2048xf32>
    %44 = tpu.matmul %42, %43, %cst_59 {dimension_numbers = #tpu.dot_dimension_numbers<[1], [0], [0], [1], [0, 0, 1, 1], [], []>} : vector<32x192xf32>, vector<192x2048xf32>, vector<32x2048xf32> -> vector<32x2048xf32>
    %c0_60 = arith.constant 0 : index
    %c0_61 = arith.constant 0 : index
    %c0_62 = arith.constant 0 : index
    %45 = vector.load %arg9[%c0_60, %c0_61, %c0_62] : memref<2x32x2048xf32, #tpu.memory_space<vmem>>, vector<1x32x2048xf32>
    %46 = vector.shape_cast %45 : vector<1x32x2048xf32> to vector<32x2048xf32>
    %47 = vector.shape_cast %44 : vector<32x2048xf32> to vector<1x32x2048xf32>
    tpu.vector_store %arg9[%c0_60, %c0_61, %c0_62], %47 {strides = array<i32>} : memref<2x32x2048xf32, #tpu.memory_space<vmem>>, vector<1x32x2048xf32>,
    %cst_63 = arith.constant dense<0.000000e+00> : vector<32xf32>
    %48 = vector.multi_reduction <add>, %44, %cst_63 [1] : vector<32x2048xf32> to vector<32xf32>
    %49 = vector.shape_cast %48 : vector<32xf32> to vector<32x1xf32>
    %50 = arith.addf %20, %49 : vector<32x1xf32>
    %51 = arith.mulf %44, %44 : vector<32x2048xf32>
    %cst_64 = arith.constant dense<0.000000e+00> : vector<32xf32>
    %52 = vector.multi_reduction <add>, %51, %cst_64 [1] : vector<32x2048xf32> to vector<32xf32>
    %53 = vector.shape_cast %52 : vector<32xf32> to vector<32x1xf32>
    %54 = arith.addf %21, %53 : vector<32x1xf32>
    %c0_65 = arith.constant 0 : index
    %c2048 = arith.constant 2048 : index
    %55 = vector.load %arg7[%c0_65, %c2048] : memref<64x4096xf32, #tpu.memory_space<vmem>>, vector<16x1792xf32>
    %c0_66 = arith.constant 0 : index
    %c256_67 = arith.constant 256 : index
    %56 = vector.load %arg8[%c0_66, %c256_67] : memref<192x2048xf32, #tpu.memory_space<vmem>>, vector<16x1792xf32>
    tpu.vector_store %arg8[%c0_66, %c256_67], %55 {strides = array<i32>} : memref<192x2048xf32, #tpu.memory_space<vmem>>, vector<16x1792xf32>,
    %c0_68 = arith.constant 0 : index
    %c2048_69 = arith.constant 2048 : index
    %57 = vector.load %arg7[%c0_68, %c2048_69] : memref<64x4096xf32, #tpu.memory_space<vmem>>, vector<16x2048xf32>
    %c16_70 = arith.constant 16 : index
    %c0_71 = arith.constant 0 : index
    %58 = vector.load %arg8[%c16_70, %c0_71] : memref<192x2048xf32, #tpu.memory_space<vmem>>, vector<16x2048xf32>
    tpu.vector_store %arg8[%c16_70, %c0_71], %57 {strides = array<i32>} : memref<192x2048xf32, #tpu.memory_space<vmem>>, vector<16x2048xf32>,
    %c0_72 = arith.constant 0 : index
    %c2304 = arith.constant 2304 : index
    %59 = vector.load %arg7[%c0_72, %c2304] : memref<64x4096xf32, #tpu.memory_space<vmem>>, vector<16x1792xf32>
    %c32_73 = arith.constant 32 : index
    %c0_74 = arith.constant 0 : index
    %60 = vector.load %arg8[%c32_73, %c0_74] : memref<192x2048xf32, #tpu.memory_space<vmem>>, vector<16x1792xf32>
    tpu.vector_store %arg8[%c32_73, %c0_74], %59 {strides = array<i32>} : memref<192x2048xf32, #tpu.memory_space<vmem>>, vector<16x1792xf32>,
    %c16_75 = arith.constant 16 : index
    %c2048_76 = arith.constant 2048 : index
    %61 = vector.load %arg7[%c16_75, %c2048_76] : memref<64x4096xf32, #tpu.memory_space<vmem>>, vector<16x1536xf32>
    %c48_77 = arith.constant 48 : index
    %c512_78 = arith.constant 512 : index
    %62 = vector.load %arg8[%c48_77, %c512_78] : memref<192x2048xf32, #tpu.memory_space<vmem>>, vector<16x1536xf32>
    tpu.vector_store %arg8[%c48_77, %c512_78], %61 {strides = array<i32>} : memref<192x2048xf32, #tpu.memory_space<vmem>>, vector<16x1536xf32>,
    %c16_79 = arith.constant 16 : index
    %c2048_80 = arith.constant 2048 : index
    %63 = vector.load %arg7[%c16_79, %c2048_80] : memref<64x4096xf32, #tpu.memory_space<vmem>>, vector<16x2048xf32>
    %c64_81 = arith.constant 64 : index
    %c0_82 = arith.constant 0 : index
    %64 = vector.load %arg8[%c64_81, %c0_82] : memref<192x2048xf32, #tpu.memory_space<vmem>>, vector<16x2048xf32>
    tpu.vector_store %arg8[%c64_81, %c0_82], %63 {strides = array<i32>} : memref<192x2048xf32, #tpu.memory_space<vmem>>, vector<16x2048xf32>,
    %c16_83 = arith.constant 16 : index
    %c2560 = arith.constant 2560 : index
    %65 = vector.load %arg7[%c16_83, %c2560] : memref<64x4096xf32, #tpu.memory_space<vmem>>, vector<16x1536xf32>
    %c80_84 = arith.constant 80 : index
    %c0_85 = arith.constant 0 : index
    %66 = vector.load %arg8[%c80_84, %c0_85] : memref<192x2048xf32, #tpu.memory_space<vmem>>, vector<16x1536xf32>
    tpu.vector_store %arg8[%c80_84, %c0_85], %65 {strides = array<i32>} : memref<192x2048xf32, #tpu.memory_space<vmem>>, vector<16x1536xf32>,
    %c32_86 = arith.constant 32 : index
    %c2048_87 = arith.constant 2048 : index
    %67 = vector.load %arg7[%c32_86, %c2048_87] : memref<64x4096xf32, #tpu.memory_space<vmem>>, vector<16x1024xf32>
    %c96_88 = arith.constant 96 : index
    %c1024_89 = arith.constant 1024 : index
    %68 = vector.load %arg8[%c96_88, %c1024_89] : memref<192x2048xf32, #tpu.memory_space<vmem>>, vector<16x1024xf32>
    tpu.vector_store %arg8[%c96_88, %c1024_89], %67 {strides = array<i32>} : memref<192x2048xf32, #tpu.memory_space<vmem>>, vector<16x1024xf32>,
    %c32_90 = arith.constant 32 : index
    %c2048_91 = arith.constant 2048 : index
    %69 = vector.load %arg7[%c32_90, %c2048_91] : memref<64x4096xf32, #tpu.memory_space<vmem>>, vector<16x2048xf32>
    %c112_92 = arith.constant 112 : index
    %c0_93 = arith.constant 0 : index
    %70 = vector.load %arg8[%c112_92, %c0_93] : memref<192x2048xf32, #tpu.memory_space<vmem>>, vector<16x2048xf32>
    tpu.vector_store %arg8[%c112_92, %c0_93], %69 {strides = array<i32>} : memref<192x2048xf32, #tpu.memory_space<vmem>>, vector<16x2048xf32>,
    %c32_94 = arith.constant 32 : index
    %c3072 = arith.constant 3072 : index
    %71 = vector.load %arg7[%c32_94, %c3072] : memref<64x4096xf32, #tpu.memory_space<vmem>>, vector<16x1024xf32>
    %c128_95 = arith.constant 128 : index
    %c0_96 = arith.constant 0 : index
    %72 = vector.load %arg8[%c128_95, %c0_96] : memref<192x2048xf32, #tpu.memory_space<vmem>>, vector<16x1024xf32>
    tpu.vector_store %arg8[%c128_95, %c0_96], %71 {strides = array<i32>} : memref<192x2048xf32, #tpu.memory_space<vmem>>, vector<16x1024xf32>,
    %c48_97 = arith.constant 48 : index
    %c2048_98 = arith.constant 2048 : index
    %73 = vector.load %arg7[%c48_97, %c2048_98] : memref<64x4096xf32, #tpu.memory_space<vmem>>, vector<16x2048xf32>
    %c160_99 = arith.constant 160 : index
    %c0_100 = arith.constant 0 : index
    %74 = vector.load %arg8[%c160_99, %c0_100] : memref<192x2048xf32, #tpu.memory_space<vmem>>, vector<16x2048xf32>
    tpu.vector_store %arg8[%c160_99, %c0_100], %73 {strides = array<i32>} : memref<192x2048xf32, #tpu.memory_space<vmem>>, vector<16x2048xf32>,
    %c0_101 = arith.constant 0 : index
    %c0_102 = arith.constant 0 : index
    %75 = vector.load %arg3[%c0_101, %c0_102] : memref<32x192xf32, #tpu.memory_space<vmem>>, vector<32x192xf32>
    %c0_103 = arith.constant 0 : index
    %c0_104 = arith.constant 0 : index
    %76 = vector.load %arg8[%c0_103, %c0_104] : memref<192x2048xf32, #tpu.memory_space<vmem>>, vector<192x2048xf32>
    %cst_105 = arith.constant dense<0.000000e+00> : vector<32x2048xf32>
    %77 = tpu.matmul %75, %76, %cst_105 {dimension_numbers = #tpu.dot_dimension_numbers<[1], [0], [0], [1], [0, 0, 1, 1], [], []>} : vector<32x192xf32>, vector<192x2048xf32>, vector<32x2048xf32> -> vector<32x2048xf32>
    %c1 = arith.constant 1 : index
    %c0_106 = arith.constant 0 : index
    %c0_107 = arith.constant 0 : index
    %78 = vector.load %arg9[%c1, %c0_106, %c0_107] : memref<2x32x2048xf32, #tpu.memory_space<vmem>>, vector<1x32x2048xf32>
    %79 = vector.shape_cast %78 : vector<1x32x2048xf32> to vector<32x2048xf32>
    %80 = vector.shape_cast %77 : vector<32x2048xf32> to vector<1x32x2048xf32>
    tpu.vector_store %arg9[%c1, %c0_106, %c0_107], %80 {strides = array<i32>} : memref<2x32x2048xf32, #tpu.memory_space<vmem>>, vector<1x32x2048xf32>,
    %cst_108 = arith.constant dense<0.000000e+00> : vector<32xf32>
    %81 = vector.multi_reduction <add>, %77, %cst_108 [1] : vector<32x2048xf32> to vector<32xf32>
    %82 = vector.shape_cast %81 : vector<32xf32> to vector<32x1xf32>
    %83 = arith.addf %50, %82 : vector<32x1xf32>
    %84 = arith.mulf %77, %77 : vector<32x2048xf32>
    %cst_109 = arith.constant dense<0.000000e+00> : vector<32xf32>
    %85 = vector.multi_reduction <add>, %84, %cst_109 [1] : vector<32x2048xf32> to vector<32xf32>
    %86 = vector.shape_cast %85 : vector<32xf32> to vector<32x1xf32>
    %87 = arith.addf %54, %86 : vector<32x1xf32>
    %cst_110 = arith.constant 2.44140625E-4 : f32
    %88 = vector.broadcast %cst_110 : f32 to vector<32x1xf32>
    %89 = arith.mulf %83, %88 : vector<32x1xf32>
    %cst_111 = arith.constant 2.44140625E-4 : f32
    %90 = vector.broadcast %cst_111 : f32 to vector<32x1xf32>
    %91 = arith.mulf %87, %90 : vector<32x1xf32>
    %92 = arith.mulf %89, %89 : vector<32x1xf32>
    %93 = arith.subf %91, %92 : vector<32x1xf32>
    %cst_112 = arith.constant 1.000000e-03 : f32
    %94 = vector.broadcast %cst_112 : f32 to vector<32x1xf32>
    %95 = arith.addf %93, %94 : vector<32x1xf32>
    %96 = math.rsqrt %95 : vector<32x1xf32>
    %c0_113 = arith.constant 0 : index
    %c0_114 = arith.constant 0 : index
    %97 = vector.load %arg4[%c0_113, %c0_114] : memref<32x1xf32, #tpu.memory_space<vmem>>, vector<32x1xf32>
    %98 = arith.mulf %96, %97 : vector<32x1xf32>
    %c0_115 = arith.constant 0 : index
    %c0_116 = arith.constant 0 : index
    %99 = vector.load %arg5[%c0_115, %c0_116] : memref<32x1xf32, #tpu.memory_space<vmem>>, vector<32x1xf32>
    %100 = arith.mulf %89, %98 : vector<32x1xf32>
    %101 = arith.subf %99, %100 : vector<32x1xf32>
    %c0_117 = arith.constant 0 : index
    %c0_118 = arith.constant 0 : index
    %c0_119 = arith.constant 0 : index
    %102 = vector.load %arg9[%c0_117, %c0_118, %c0_119] : memref<2x32x2048xf32, #tpu.memory_space<vmem>>, vector<1x32x2048xf32>
    %103 = vector.shape_cast %102 : vector<1x32x2048xf32> to vector<32x2048xf32>
    %104 = vector.broadcast %98 : vector<32x1xf32> to vector<32x2048xf32>
    %105 = arith.mulf %103, %104 : vector<32x2048xf32>
    %106 = vector.broadcast %101 : vector<32x1xf32> to vector<32x2048xf32>
    %107 = arith.addf %105, %106 : vector<32x2048xf32>
    %c0_120 = arith.constant 0 : index
    %c0_121 = arith.constant 0 : index
    %c0_122 = arith.constant 0 : index
    %108 = vector.load %arg6[%c0_120, %c0_121, %c0_122] : memref<2x32x2048xf32, #tpu.memory_space<vmem>>, vector<1x32x2048xf32>
    %109 = vector.shape_cast %108 : vector<1x32x2048xf32> to vector<32x2048xf32>
    %110 = vector.shape_cast %107 : vector<32x2048xf32> to vector<1x32x2048xf32>
    tpu.vector_store %arg6[%c0_120, %c0_121, %c0_122], %110 {strides = array<i32>} : memref<2x32x2048xf32, #tpu.memory_space<vmem>>, vector<1x32x2048xf32>,
    %c1_123 = arith.constant 1 : index
    %c0_124 = arith.constant 0 : index
    %c0_125 = arith.constant 0 : index
    %111 = vector.load %arg9[%c1_123, %c0_124, %c0_125] : memref<2x32x2048xf32, #tpu.memory_space<vmem>>, vector<1x32x2048xf32>
    %112 = vector.shape_cast %111 : vector<1x32x2048xf32> to vector<32x2048xf32>
    %113 = vector.broadcast %98 : vector<32x1xf32> to vector<32x2048xf32>
    %114 = arith.mulf %112, %113 : vector<32x2048xf32>
    %115 = vector.broadcast %101 : vector<32x1xf32> to vector<32x2048xf32>
    %116 = arith.addf %114, %115 : vector<32x2048xf32>
    %c1_126 = arith.constant 1 : index
    %c0_127 = arith.constant 0 : index
    %c0_128 = arith.constant 0 : index
    %117 = vector.load %arg6[%c1_126, %c0_127, %c0_128] : memref<2x32x2048xf32, #tpu.memory_space<vmem>>, vector<1x32x2048xf32>
    %118 = vector.shape_cast %117 : vector<1x32x2048xf32> to vector<32x2048xf32>
    %119 = vector.shape_cast %116 : vector<32x2048xf32> to vector<1x32x2048xf32>
    tpu.vector_store %arg6[%c1_126, %c0_127, %c0_128], %119 {strides = array<i32>} : memref<2x32x2048xf32, #tpu.memory_space<vmem>>, vector<1x32x2048xf32>,
    return
  }
  func.func @transform_0(%arg0: i32) -> (i32, i32) {
    %c0_i32 = arith.constant 0 : i32
    %c0_i32_0 = arith.constant 0 : i32
    %c0_i32_1 = arith.constant 0 : i32
    return %c0_i32, %c0_i32_0 : i32, i32
  }
  func.func @transform_1(%arg0: i32) -> (i32, i32) {
    %c0_i32 = arith.constant 0 : i32
    %c0_i32_0 = arith.constant 0 : i32
    %c0_i32_1 = arith.constant 0 : i32
    return %c0_i32, %c0_i32_0 : i32, i32
  }
  func.func @transform_2(%arg0: i32) -> (i32, i32) {
    %c0_i32 = arith.constant 0 : i32
    %c0_i32_0 = arith.constant 0 : i32
    %c0_i32_1 = arith.constant 0 : i32
    return %c0_i32, %c0_i32_0 : i32, i32
  }
  func.func @transform_3(%arg0: i32) -> (i32, i32) {
    %c0_i32 = arith.constant 0 : i32
    %c0_i32_0 = arith.constant 0 : i32
    %c0_i32_1 = arith.constant 0 : i32
    return %c0_i32, %c0_i32_0 : i32, i32
  }
  func.func @transform_4(%arg0: i32) -> (i32, i32) {
    %c0_i32 = arith.constant 0 : i32
    %c0_i32_0 = arith.constant 0 : i32
    %c0_i32_1 = arith.constant 0 : i32
    return %c0_i32, %c0_i32_0 : i32, i32
  }
  func.func @transform_5(%arg0: i32) -> (i32, i32, i32) {
    %c0_i32 = arith.constant 0 : i32
    %c0_i32_0 = arith.constant 0 : i32
    %c0_i32_1 = arith.constant 0 : i32
    %c0_i32_2 = arith.constant 0 : i32
    return %c0_i32, %c0_i32_0, %c0_i32_1 : i32, i32, i32
  }
}

</mosaic_0001>

<llo_original>
// kernel: _lambda_.1
$region0: #{_lambda_.1}
  #allocation0 [shape = 'u32[]', space=smem, size = 0x4, offset = 0x4, fixed_abs, tag = 'smem constant byte address 0x4 - core index']
  #allocation1 [shape = 'u32[72,128]{1,0:T(1,128)}', space=vmem, size = 0x9000, scoped, tag = 'internal scratch']
  #allocation2 [shape = 'f32[64,4096]{1,0:T(8,128)}', space=vmem, size = 0x100000, scoped, tag = 'scratch operand']
  #allocation3 [shape = 'f32[192,2048]{1,0:T(8,128)}', space=vmem, size = 0x180000, scoped, tag = 'scratch operand']
  #allocation4 [shape = 'f32[2,32,2048]{2,1,0:T(8,128)}', space=vmem, size = 0x80000, scoped, tag = 'scratch operand']
  %s0 = inlined_call_operand.vmem [shape: f32[36,4096], index: 0, kind: input, shape index: {}]
  %s1 = inlined_call_operand.vmem [shape: f32[64,36], index: 1, kind: input, shape index: {}]
  %s2 = inlined_call_operand.vmem [shape: f32[32,192], index: 2, kind: input, shape index: {}]
  %s3 = inlined_call_operand.vmem [shape: f32[32,1], index: 3, kind: input, shape index: {}]
  %s4 = inlined_call_operand.vmem [shape: f32[32,1], index: 4, kind: input, shape index: {}]
  %s5 = inlined_call_operand.vmem [shape: f32[2,32,2048], index: 5, kind: output, shape index: {}]
  %s6 = sld [smem:[#allocation0]]
  $region30: #{_lambda_.1} parent=0
    _
  %s8 = ssub.s32 1, %s6
  %s9 = scalar_select 0, %s8, %s6
  // Predicated region
  $region2: #{_lambda_.1} parent=0 // pred_check
    _
  $region3: #{_lambda_.1} parent=0 // pred_check_branch
    %11 = sbr.rel (0) target = $region5
  $region4: #{_lambda_.1} parent=0 // pred_region
    _
  $region5: #{_lambda_.1} parent=0 // pred_fallthru
    _
  // Predicated region
  $region6: #{_lambda_.1} parent=0 // pred_check
    _
  $region7: #{_lambda_.1} parent=0 // pred_check_branch
    %13 = sbr.rel (0) target = $region9
  $region8: #{_lambda_.1} parent=0 // pred_region
    _
  $region9: #{_lambda_.1} parent=0 // pred_fallthru
    _
  // Predicated region
  $region10: #{_lambda_.1} parent=0 // pred_check
    _
  $region11: #{_lambda_.1} parent=0 // pred_check_branch
    %15 = sbr.rel (0) target = $region13
  $region12: #{_lambda_.1} parent=0 // pred_region
    _
  $region13: #{_lambda_.1} parent=0 // pred_fallthru
    _
  // Predicated region
  $region14: #{_lambda_.1} parent=0 // pred_check
    _
  $region15: #{_lambda_.1} parent=0 // pred_check_branch
    %17 = sbr.rel (0) target = $region17
  $region16: #{_lambda_.1} parent=0 // pred_region
    _
  $region17: #{_lambda_.1} parent=0 // pred_fallthru
    _
  // Predicated region
  $region18: #{_lambda_.1} parent=0 // pred_check
    _
  $region19: #{_lambda_.1} parent=0 // pred_check_branch
    %19 = sbr.rel (0) target = $region21
  $region20: #{_lambda_.1} parent=0 // pred_region
    _
  $region21: #{_lambda_.1} parent=0 // pred_fallthru
    _
  %v20 = vld [vmem:[%s1] sm:$0xff]
  %v21 = vld [vmem:[%s1 + $0x8] sm:$0xff]
  %v22 = vld [vmem:[%s1 + $0x10] sm:$0xff]
  %v23 = vld [vmem:[%s1 + $0x18] sm:$0xff]
  %v24 = vld [vmem:[%s1 + $0x20] sm:$0xff]
  %v25 = vld [vmem:[%s1 + $0x28] sm:$0xff]
  %v26 = vld [vmem:[%s1 + $0x30] sm:$0xff]
  %v27 = vld [vmem:[%s1 + $0x38] sm:$0xff]
  %v28 = vld [vmem:[%s0] sm:$0xff]
  %v29 = vld [vmem:[%s0 + $0x8] sm:$0xff]
  %v30 = vld [vmem:[%s0 + $0x10] sm:$0xff]
  %v31 = vld [vmem:[%s0 + $0x18] sm:$0xff]
  %v32 = vld [vmem:[%s0 + $0x20] sm:$0xff]
  %v33 = vld [vmem:[%s0 + $0x28] sm:$0xff]
  %v34 = vld [vmem:[%s0 + $0x30] sm:$0xff]
  %v35 = vld [vmem:[%s0 + $0x38] sm:$0xff]
  %v36 = vld [vmem:[%s0 + $0x40] sm:$0xff]
  %v37 = vld [vmem:[%s0 + $0x48] sm:$0xff]
  %v38 = vld [vmem:[%s0 + $0x50] sm:$0xff]
  %v39 = vld [vmem:[%s0 + $0x58] sm:$0xff]
  %v40 = vld [vmem:[%s0 + $0x60] sm:$0xff]
  %v41 = vld [vmem:[%s0 + $0x68] sm:$0xff]
  %v42 = vld [vmem:[%s0 + $0x70] sm:$0xff]
  %v43 = vld [vmem:[%s0 + $0x78] sm:$0xff]
  %v44 = vld [vmem:[%s0 + $0x80] sm:$0xff]
  %v45 = vld [vmem:[%s0 + $0x88] sm:$0xff]
  %v46 = vld [vmem:[%s0 + $0x90] sm:$0xff]
  %v47 = vld [vmem:[%s0 + $0x98] sm:$0xff]
  %v48 = vld [vmem:[%s0 + $0xa0] sm:$0xff]
  %v49 = vld [vmem:[%s0 + $0xa8] sm:$0xff]
  %v50 = vld [vmem:[%s0 + $0xb0] sm:$0xff]
  %v51 = vld [vmem:[%s0 + $0xb8] sm:$0xff]
  %v52 = vld [vmem:[%s0 + $0xc0] sm:$0xff]
  %v53 = vld [vmem:[%s0 + $0xc8] sm:$0xff]
  %v54 = vld [vmem:[%s0 + $0xd0] sm:$0xff]
  %v55 = vld [vmem:[%s0 + $0xd8] sm:$0xff]
  %v56 = vld [vmem:[%s0 + $0xe0] sm:$0xff]
  %v57 = vld [vmem:[%s0 + $0xe8] sm:$0xff]
  %v58 = vld [vmem:[%s0 + $0xf0] sm:$0xff]
  %v59 = vld [vmem:[%s0 + $0xf8] sm:$0xff]
  %v60 = vld [vmem:[%s0 + $0x100] sm:$0xff]
  %v61 = vld [vmem:[%s0 + $0x108] sm:$0xff]
  %v62 = vld [vmem:[%s0 + $0x110] sm:$0xff]
  %v63 = vld [vmem:[%s0 + $0x118] sm:$0xff]
  %v64 = vld [vmem:[%s0 + $0x120] sm:$0xff]
  %v65 = vld [vmem:[%s0 + $0x128] sm:$0xff]
  %v66 = vld [vmem:[%s0 + $0x130] sm:$0xff]
  %v67 = vld [vmem:[%s0 + $0x138] sm:$0xff]
  %v68 = vld [vmem:[%s0 + $0x140] sm:$0xff]
  %v69 = vld [vmem:[%s0 + $0x148] sm:$0xff]
  %v70 = vld [vmem:[%s0 + $0x150] sm:$0xff]
  %v71 = vld [vmem:[%s0 + $0x158] sm:$0xff]
  %v72 = vld [vmem:[%s0 + $0x160] sm:$0xff]
  %v73 = vld [vmem:[%s0 + $0x168] sm:$0xff]
  %v74 = vld [vmem:[%s0 + $0x170] sm:$0xff]
  %v75 = vld [vmem:[%s0 + $0x178] sm:$0xff]
  %v76 = vld [vmem:[%s0 + $0x180] sm:$0xff]
  %v77 = vld [vmem:[%s0 + $0x188] sm:$0xff]
  %v78 = vld [vmem:[%s0 + $0x190] sm:$0xff]
  %v79 = vld [vmem:[%s0 + $0x198] sm:$0xff]
  %v80 = vld [vmem:[%s0 + $0x1a0] sm:$0xff]
  %v81 = vld [vmem:[%s0 + $0x1a8] sm:$0xff]
  %v82 = vld [vmem:[%s0 + $0x1b0] sm:$0xff]
  %v83 = vld [vmem:[%s0 + $0x1b8] sm:$0xff]
  %v84 = vld [vmem:[%s0 + $0x1c0] sm:$0xff]
  %v85 = vld [vmem:[%s0 + $0x1c8] sm:$0xff]
  %v86 = vld [vmem:[%s0 + $0x1d0] sm:$0xff]
  %v87 = vld [vmem:[%s0 + $0x1d8] sm:$0xff]
  %v88 = vld [vmem:[%s0 + $0x1e0] sm:$0xff]
  %v89 = vld [vmem:[%s0 + $0x1e8] sm:$0xff]
  %v90 = vld [vmem:[%s0 + $0x1f0] sm:$0xff]
  %v91 = vld [vmem:[%s0 + $0x1f8] sm:$0xff]
  %v92 = vld [vmem:[%s0 + $0x200] sm:$0xff]
  %v93 = vld [vmem:[%s0 + $0x208] sm:$0xff]
  %v94 = vld [vmem:[%s0 + $0x210] sm:$0xff]
  %v95 = vld [vmem:[%s0 + $0x218] sm:$0xff]
  %v96 = vld [vmem:[%s0 + $0x220] sm:$0xff]
  %v97 = vld [vmem:[%s0 + $0x228] sm:$0xff]
  %v98 = vld [vmem:[%s0 + $0x230] sm:$0xff]
  %v99 = vld [vmem:[%s0 + $0x238] sm:$0xff]
  %v100 = vld [vmem:[%s0 + $0x240] sm:$0xff]
  %v101 = vld [vmem:[%s0 + $0x248] sm:$0xff]
  %v102 = vld [vmem:[%s0 + $0x250] sm:$0xff]
  %v103 = vld [vmem:[%s0 + $0x258] sm:$0xff]
  %v104 = vld [vmem:[%s0 + $0x260] sm:$0xff]
  %v105 = vld [vmem:[%s0 + $0x268] sm:$0xff]
  %v106 = vld [vmem:[%s0 + $0x270] sm:$0xff]
  %v107 = vld [vmem:[%s0 + $0x278] sm:$0xff]
  %v108 = vld [vmem:[%s0 + $0x280] sm:$0xff]
  %v109 = vld [vmem:[%s0 + $0x288] sm:$0xff]
  %v110 = vld [vmem:[%s0 + $0x290] sm:$0xff]
  %v111 = vld [vmem:[%s0 + $0x298] sm:$0xff]
  %v112 = vld [vmem:[%s0 + $0x2a0] sm:$0xff]
  %v113 = vld [vmem:[%s0 + $0x2a8] sm:$0xff]
  %v114 = vld [vmem:[%s0 + $0x2b0] sm:$0xff]
  %v115 = vld [vmem:[%s0 + $0x2b8] sm:$0xff]
  %v116 = vld [vmem:[%s0 + $0x2c0] sm:$0xff]
  %v117 = vld [vmem:[%s0 + $0x2c8] sm:$0xff]
  %v118 = vld [vmem:[%s0 + $0x2d0] sm:$0xff]
  %v119 = vld [vmem:[%s0 + $0x2d8] sm:$0xff]
  %v120 = vld [vmem:[%s0 + $0x2e0] sm:$0xff]
  %v121 = vld [vmem:[%s0 + $0x2e8] sm:$0xff]
  %v122 = vld [vmem:[%s0 + $0x2f0] sm:$0xff]
  %v123 = vld [vmem:[%s0 + $0x2f8] sm:$0xff]
  %v124 = vld [vmem:[%s0 + $0x300] sm:$0xff]
  %v125 = vld [vmem:[%s0 + $0x308] sm:$0xff]
  %v126 = vld [vmem:[%s0 + $0x310] sm:$0xff]
  %v127 = vld [vmem:[%s0 + $0x318] sm:$0xff]
  %v128 = vld [vmem:[%s0 + $0x320] sm:$0xff]
  %v129 = vld [vmem:[%s0 + $0x328] sm:$0xff]
  %v130 = vld [vmem:[%s0 + $0x330] sm:$0xff]
  %v131 = vld [vmem:[%s0 + $0x338] sm:$0xff]
  %v132 = vld [vmem:[%s0 + $0x340] sm:$0xff]
  %v133 = vld [vmem:[%s0 + $0x348] sm:$0xff]
  %v134 = vld [vmem:[%s0 + $0x350] sm:$0xff]
  %v135 = vld [vmem:[%s0 + $0x358] sm:$0xff]
  %v136 = vld [vmem:[%s0 + $0x360] sm:$0xff]
  %v137 = vld [vmem:[%s0 + $0x368] sm:$0xff]
  %v138 = vld [vmem:[%s0 + $0x370] sm:$0xff]
  %v139 = vld [vmem:[%s0 + $0x378] sm:$0xff]
  %v140 = vld [vmem:[%s0 + $0x380] sm:$0xff]
  %v141 = vld [vmem:[%s0 + $0x388] sm:$0xff]
  %v142 = vld [vmem:[%s0 + $0x390] sm:$0xff]
  %v143 = vld [vmem:[%s0 + $0x398] sm:$0xff]
  %v144 = vld [vmem:[%s0 + $0x3a0] sm:$0xff]
  %v145 = vld [vmem:[%s0 + $0x3a8] sm:$0xff]
  %v146 = vld [vmem:[%s0 + $0x3b0] sm:$0xff]
  %v147 = vld [vmem:[%s0 + $0x3b8] sm:$0xff]
  %v148 = vld [vmem:[%s0 + $0x3c0] sm:$0xff]
  %v149 = vld [vmem:[%s0 + $0x3c8] sm:$0xff]
  %v150 = vld [vmem:[%s0 + $0x3d0] sm:$0xff]
  %v151 = vld [vmem:[%s0 + $0x3d8] sm:$0xff]
  %v152 = vld [vmem:[%s0 + $0x3e0] sm:$0xff]
  %v153 = vld [vmem:[%s0 + $0x3e8] sm:$0xff]
  %v154 = vld [vmem:[%s0 + $0x3f0] sm:$0xff]
  %v155 = vld [vmem:[%s0 + $0x3f8] sm:$0xff]
  %v156 = vld [vmem:[%s0 + $0x400] sm:$0xf]
  %v157 = vld [vmem:[%s0 + $0x408] sm:$0xf]
  %v158 = vld [vmem:[%s0 + $0x410] sm:$0xf]
  %v159 = vld [vmem:[%s0 + $0x418] sm:$0xf]
  %v160 = vld [vmem:[%s0 + $0x420] sm:$0xf]
  %v161 = vld [vmem:[%s0 + $0x428] sm:$0xf]
  %v162 = vld [vmem:[%s0 + $0x430] sm:$0xf]
  %v163 = vld [vmem:[%s0 + $0x438] sm:$0xf]
  %v164 = vld [vmem:[%s0 + $0x440] sm:$0xf]
  %v165 = vld [vmem:[%s0 + $0x448] sm:$0xf]
  %v166 = vld [vmem:[%s0 + $0x450] sm:$0xf]
  %v167 = vld [vmem:[%s0 + $0x458] sm:$0xf]
  %v168 = vld [vmem:[%s0 + $0x460] sm:$0xf]
  %v169 = vld [vmem:[%s0 + $0x468] sm:$0xf]
  %v170 = vld [vmem:[%s0 + $0x470] sm:$0xf]
  %v171 = vld [vmem:[%s0 + $0x478] sm:$0xf]
  %v172 = vld [vmem:[%s0 + $0x480] sm:$0xf]
  %v173 = vld [vmem:[%s0 + $0x488] sm:$0xf]
  %v174 = vld [vmem:[%s0 + $0x490] sm:$0xf]
  %v175 = vld [vmem:[%s0 + $0x498] sm:$0xf]
  %v176 = vld [vmem:[%s0 + $0x4a0] sm:$0xf]
  %v177 = vld [vmem:[%s0 + $0x4a8] sm:$0xf]
  %v178 = vld [vmem:[%s0 + $0x4b0] sm:$0xf]
  %v179 = vld [vmem:[%s0 + $0x4b8] sm:$0xf]
  %v180 = vld [vmem:[%s0 + $0x4c0] sm:$0xf]
  %v181 = vld [vmem:[%s0 + $0x4c8] sm:$0xf]
  %v182 = vld [vmem:[%s0 + $0x4d0] sm:$0xf]
  %v183 = vld [vmem:[%s0 + $0x4d8] sm:$0xf]
  %v184 = vld [vmem:[%s0 + $0x4e0] sm:$0xf]
  %v185 = vld [vmem:[%s0 + $0x4e8] sm:$0xf]
  %v186 = vld [vmem:[%s0 + $0x4f0] sm:$0xf]
  %v187 = vld [vmem:[%s0 + $0x4f8] sm:$0xf]
  %vm188 = vcmask 293888
  %v190 = vsel %vm188, %v20, 0
  %v193 = vsel %vm188, %v21, 0
  %v196 = vsel %vm188, %v22, 0
  %v199 = vsel %vm188, %v23, 0
  %v202 = vsel %vm188, %v24, 0
  %v205 = vsel %vm188, %v25, 0
  %v208 = vsel %vm188, %v26, 0
  %v211 = vsel %vm188, %v27, 0
  %vm213 = vcmask 1043456
  %v215 = vsel %vm213, %v156, 0
  %v218 = vsel %vm213, %v157, 0
  %v221 = vsel %vm213, %v158, 0
  %v224 = vsel %vm213, %v159, 0
  %v227 = vsel %vm213, %v160, 0
  %v230 = vsel %vm213, %v161, 0
  %v233 = vsel %vm213, %v162, 0
  %v236 = vsel %vm213, %v163, 0
  %v239 = vsel %vm213, %v164, 0
  %v242 = vsel %vm213, %v165, 0
  %v245 = vsel %vm213, %v166, 0
  %v248 = vsel %vm213, %v167, 0
  %v251 = vsel %vm213, %v168, 0
  %v254 = vsel %vm213, %v169, 0
  %v257 = vsel %vm213, %v170, 0
  %v260 = vsel %vm213, %v171, 0
  %v263 = vsel %vm213, %v172, 0
  %v266 = vsel %vm213, %v173, 0
  %v269 = vsel %vm213, %v174, 0
  %v272 = vsel %vm213, %v175, 0
  %v275 = vsel %vm213, %v176, 0
  %v278 = vsel %vm213, %v177, 0
  %v281 = vsel %vm213, %v178, 0
  %v284 = vsel %vm213, %v179, 0
  %v287 = vsel %vm213, %v180, 0
  %v290 = vsel %vm213, %v181, 0
  %v293 = vsel %vm213, %v182, 0
  %v296 = vsel %vm213, %v183, 0
  %v299 = vsel %vm213, %v184, 0
  %v302 = vsel %vm213, %v185, 0
  %v305 = vsel %vm213, %v186, 0
  %v308 = vsel %vm213, %v187, 0
  %310 = vmatpush.msra.mxu0 0.0
  %311 = vmatpush.msra.mxu0 0.0
  %312 = vmatpush.msra.mxu0 0.0
  %313 = vmatpush.msra.mxu0 0.0
  %314 = vmatpush.msra.mxu0 0.0
  %315 = vmatpush.msra.mxu0 0.0
  %316 = vmatpush.msra.mxu0 0.0
  %317 = vmatpush.msra.mxu0 0.0
  %318 = vmatpush.msra.mxu0 0.0
  %319 = vmatpush.msra.mxu0 0.0
  %320 = vmatpush.msra.mxu0 0.0
  %321 = vmatpush.msra.mxu0 %v215
  %322 = vmatpush.msra.mxu0 %v124
  %323 = vmatpush.msra.mxu0 %v92
  %324 = vmatpush.msra.mxu0 %v60
  %325 = vmatpush.msra.mxu0 %v28
  %326 = vmatmul.f32.gmra.mxu0 %v190
  %v327 = vpop.f32.mrf.mxu0
  %v328 = vadd.f32 0.0, %v327
  %329 = vmatmul.f32.gmra.mxu0 %v193
  %v330 = vpop.f32.mrf.mxu0
  %v331 = vadd.f32 0.0, %v330
  %332 = vmatmul.f32.gmra.mxu0 %v196
  %v333 = vpop.f32.mrf.mxu0
  %v334 = vadd.f32 0.0, %v333
  %335 = vmatmul.f32.gmra.mxu0 %v199
  %v336 = vpop.f32.mrf.mxu0
  %v337 = vadd.f32 0.0, %v336
  %338 = vmatmul.f32.gmra.mxu0 %v202
  %v339 = vpop.f32.mrf.mxu0
  %v340 = vadd.f32 0.0, %v339
  %341 = vmatmul.f32.gmra.mxu0 %v205
  %v342 = vpop.f32.mrf.mxu0
  %v343 = vadd.f32 0.0, %v342
  %344 = vmatmul.f32.gmra.mxu0 %v208
  %v345 = vpop.f32.mrf.mxu0
  %v346 = vadd.f32 0.0, %v345
  %347 = vmatmul.f32.gmra.mxu0 %v211
  %v348 = vpop.f32.mrf.mxu0
  %v349 = vadd.f32 0.0, %v348
  %350 = vdwg.mxu0
  %351 = vmatpush.msra.mxu0 0.0
  %352 = vmatpush.msra.mxu0 0.0
  %353 = vmatpush.msra.mxu0 0.0
  %354 = vmatpush.msra.mxu0 0.0
  %355 = vmatpush.msra.mxu0 0.0
  %356 = vmatpush.msra.mxu0 0.0
  %357 = vmatpush.msra.mxu0 0.0
  %358 = vmatpush.msra.mxu0 0.0
  %359 = vmatpush.msra.mxu0 0.0
  %360 = vmatpush.msra.mxu0 0.0
  %361 = vmatpush.msra.mxu0 0.0
  %362 = vmatpush.msra.mxu0 %v218
  %363 = vmatpush.msra.mxu0 %v125
  %364 = vmatpush.msra.mxu0 %v93
  %365 = vmatpush.msra.mxu0 %v61
  %366 = vmatpush.msra.mxu0 %v29
  %367 = vmatmul.f32.gmra.mxu0 %v190
  %v368 = vpop.f32.mrf.mxu0
  %v369 = vadd.f32 0.0, %v368
  %370 = vmatmul.f32.gmra.mxu0 %v193
  %v371 = vpop.f32.mrf.mxu0
  %v372 = vadd.f32 0.0, %v371
  %373 = vmatmul.f32.gmra.mxu0 %v196
  %v374 = vpop.f32.mrf.mxu0
  %v375 = vadd.f32 0.0, %v374
  %376 = vmatmul.f32.gmra.mxu0 %v199
  %v377 = vpop.f32.mrf.mxu0
  %v378 = vadd.f32 0.0, %v377
  %379 = vmatmul.f32.gmra.mxu0 %v202
  %v380 = vpop.f32.mrf.mxu0
  %v381 = vadd.f32 0.0, %v380
  %382 = vmatmul.f32.gmra.mxu0 %v205
  %v383 = vpop.f32.mrf.mxu0
  %v384 = vadd.f32 0.0, %v383
  %385 = vmatmul.f32.gmra.mxu0 %v208
  %v386 = vpop.f32.mrf.mxu0
  %v387 = vadd.f32 0.0, %v386
  %388 = vmatmul.f32.gmra.mxu0 %v211
  %v389 = vpop.f32.mrf.mxu0
  %v390 = vadd.f32 0.0, %v389
  %391 = vdwg.mxu0
  %392 = vmatpush.msra.mxu0 0.0
  %393 = vmatpush.msra.mxu0 0.0
  %394 = vmatpush.msra.mxu0 0.0
  %395 = vmatpush.msra.mxu0 0.0
  %396 = vmatpush.msra.mxu0 0.0
  %397 = vmatpush.msra.mxu0 0.0
  %398 = vmatpush.msra.mxu0 0.0
  %399 = vmatpush.msra.mxu0 0.0
  %400 = vmatpush.msra.mxu0 0.0
  %401 = vmatpush.msra.mxu0 0.0
  %402 = vmatpush.msra.mxu0 0.0
  %403 = vmatpush.msra.mxu0 %v221
  %404 = vmatpush.msra.mxu0 %v126
  %405 = vmatpush.msra.mxu0 %v94
  %406 = vmatpush.msra.mxu0 %v62
  %407 = vmatpush.msra.mxu0 %v30
  %408 = vmatmul.f32.gmra.mxu0 %v190
  %v409 = vpop.f32.mrf.mxu0
  %v410 = vadd.f32 0.0, %v409
  %411 = vmatmul.f32.gmra.mxu0 %v193
  %v412 = vpop.f32.mrf.mxu0
  %v413 = vadd.f32 0.0, %v412
  %414 = vmatmul.f32.gmra.mxu0 %v196
  %v415 = vpop.f32.mrf.mxu0
  %v416 = vadd.f32 0.0, %v415
  %417 = vmatmul.f32.gmra.mxu0 %v199
  %v418 = vpop.f32.mrf.mxu0
  %v419 = vadd.f32 0.0, %v418
  %420 = vmatmul.f32.gmra.mxu0 %v202
  %v421 = vpop.f32.mrf.mxu0
  %v422 = vadd.f32 0.0, %v421
  %423 = vmatmul.f32.gmra.mxu0 %v205
  %v424 = vpop.f32.mrf.mxu0
  %v425 = vadd.f32 0.0, %v424
  %426 = vmatmul.f32.gmra.mxu0 %v208
  %v427 = vpop.f32.mrf.mxu0
  %v428 = vadd.f32 0.0, %v427
  %429 = vmatmul.f32.gmra.mxu0 %v211
  %v430 = vpop.f32.mrf.mxu0
  %v431 = vadd.f32 0.0, %v430
  %432 = vdwg.mxu0
  %433 = vmatpush.msra.mxu0 0.0
  %434 = vmatpush.msra.mxu0 0.0
  %435 = vmatpush.msra.mxu0 0.0
  %436 = vmatpush.msra.mxu0 0.0
  %437 = vmatpush.msra.mxu0 0.0
  %438 = vmatpush.msra.mxu0 0.0
  %439 = vmatpush.msra.mxu0 0.0
  %440 = vmatpush.msra.mxu0 0.0
  %441 = vmatpush.msra.mxu0 0.0
  %442 = vmatpush.msra.mxu0 0.0
  %443 = vmatpush.msra.mxu0 0.0
  %444 = vmatpush.msra.mxu0 %v224
  %445 = vmatpush.msra.mxu0 %v127
  %446 = vmatpush.msra.mxu0 %v95
  %447 = vmatpush.msra.mxu0 %v63
  %448 = vmatpush.msra.mxu0 %v31
  %449 = vmatmul.f32.gmra.mxu0 %v190
  %v450 = vpop.f32.mrf.mxu0
  %v451 = vadd.f32 0.0, %v450
  %452 = vmatmul.f32.gmra.mxu0 %v193
  %v453 = vpop.f32.mrf.mxu0
  %v454 = vadd.f32 0.0, %v453
  %455 = vmatmul.f32.gmra.mxu0 %v196
  %v456 = vpop.f32.mrf.mxu0
  %v457 = vadd.f32 0.0, %v456
  %458 = vmatmul.f32.gmra.mxu0 %v199
  %v459 = vpop.f32.mrf.mxu0
  %v460 = vadd.f32 0.0, %v459
  %461 = vmatmul.f32.gmra.mxu0 %v202
  %v462 = vpop.f32.mrf.mxu0
  %v463 = vadd.f32 0.0, %v462
  %464 = vmatmul.f32.gmra.mxu0 %v205
  %v465 = vpop.f32.mrf.mxu0
  %v466 = vadd.f32 0.0, %v465
  %467 = vmatmul.f32.gmra.mxu0 %v208
  %v468 = vpop.f32.mrf.mxu0
  %v469 = vadd.f32 0.0, %v468
  %470 = vmatmul.f32.gmra.mxu0 %v211
  %v471 = vpop.f32.mrf.mxu0
  %v472 = vadd.f32 0.0, %v471
  %473 = vdwg.mxu0
  %474 = vmatpush.msra.mxu0 0.0
  %475 = vmatpush.msra.mxu0 0.0
  %476 = vmatpush.msra.mxu0 0.0
  %477 = vmatpush.msra.mxu0 0.0
  %478 = vmatpush.msra.mxu0 0.0
  %479 = vmatpush.msra.mxu0 0.0
  %480 = vmatpush.msra.mxu0 0.0
  %481 = vmatpush.msra.mxu0 0.0
  %482 = vmatpush.msra.mxu0 0.0
  %483 = vmatpush.msra.mxu0 0.0
  %484 = vmatpush.msra.mxu0 0.0
  %485 = vmatpush.msra.mxu0 %v227
  %486 = vmatpush.msra.mxu0 %v128
  %487 = vmatpush.msra.mxu0 %v96
  %488 = vmatpush.msra.mxu0 %v64
  %489 = vmatpush.msra.mxu0 %v32
  %490 = vmatmul.f32.gmra.mxu0 %v190
  %v491 = vpop.f32.mrf.mxu0
  %v492 = vadd.f32 0.0, %v491
  %493 = vmatmul.f32.gmra.mxu0 %v193
  %v494 = vpop.f32.mrf.mxu0
  %v495 = vadd.f32 0.0, %v494
  %496 = vmatmul.f32.gmra.mxu0 %v196
  %v497 = vpop.f32.mrf.mxu0
  %v498 = vadd.f32 0.0, %v497
  %499 = vmatmul.f32.gmra.mxu0 %v199
  %v500 = vpop.f32.mrf.mxu0
  %v501 = vadd.f32 0.0, %v500
  %502 = vmatmul.f32.gmra.mxu0 %v202
  %v503 = vpop.f32.mrf.mxu0
  %v504 = vadd.f32 0.0, %v503
  %505 = vmatmul.f32.gmra.mxu0 %v205
  %v506 = vpop.f32.mrf.mxu0
  %v507 = vadd.f32 0.0, %v506
  %508 = vmatmul.f32.gmra.mxu0 %v208
  %v509 = vpop.f32.mrf.mxu0
  %v510 = vadd.f32 0.0, %v509
  %511 = vmatmul.f32.gmra.mxu0 %v211
  %v512 = vpop.f32.mrf.mxu0
  %v513 = vadd.f32 0.0, %v512
  %514 = vdwg.mxu0
  %515 = vmatpush.msra.mxu0 0.0
  %516 = vmatpush.msra.mxu0 0.0
  %517 = vmatpush.msra.mxu0 0.0
  %518 = vmatpush.msra.mxu0 0.0
  %519 = vmatpush.msra.mxu0 0.0
  %520 = vmatpush.msra.mxu0 0.0
  %521 = vmatpush.msra.mxu0 0.0
  %522 = vmatpush.msra.mxu0 0.0
  %523 = vmatpush.msra.mxu0 0.0
  %524 = vmatpush.msra.mxu0 0.0
  %525 = vmatpush.msra.mxu0 0.0
  %526 = vmatpush.msra.mxu0 %v230
  %527 = vmatpush.msra.mxu0 %v129
  %528 = vmatpush.msra.mxu0 %v97
  %529 = vmatpush.msra.mxu0 %v65
  %530 = vmatpush.msra.mxu0 %v33
  %531 = vmatmul.f32.gmra.mxu0 %v190
  %v532 = vpop.f32.mrf.mxu0
  %v533 = vadd.f32 0.0, %v532
  %534 = vmatmul.f32.gmra.mxu0 %v193
  %v535 = vpop.f32.mrf.mxu0
  %v536 = vadd.f32 0.0, %v535
  %537 = vmatmul.f32.gmra.mxu0 %v196
  %v538 = vpop.f32.mrf.mxu0
  %v539 = vadd.f32 0.0, %v538
  %540 = vmatmul.f32.gmra.mxu0 %v199
  %v541 = vpop.f32.mrf.mxu0
  %v542 = vadd.f32 0.0, %v541
  %543 = vmatmul.f32.gmra.mxu0 %v202
  %v544 = vpop.f32.mrf.mxu0
  %v545 = vadd.f32 0.0, %v544
  %546 = vmatmul.f32.gmra.mxu0 %v205
  %v547 = vpop.f32.mrf.mxu0
  %v548 = vadd.f32 0.0, %v547
  %549 = vmatmul.f32.gmra.mxu0 %v208
  %v550 = vpop.f32.mrf.mxu0
  %v551 = vadd.f32 0.0, %v550
  %552 = vmatmul.f32.gmra.mxu0 %v211
  %v553 = vpop.f32.mrf.mxu0
  %v554 = vadd.f32 0.0, %v553
  %555 = vdwg.mxu0
  %556 = vmatpush.msra.mxu0 0.0
  %557 = vmatpush.msra.mxu0 0.0
  %558 = vmatpush.msra.mxu0 0.0
  %559 = vmatpush.msra.mxu0 0.0
  %560 = vmatpush.msra.mxu0 0.0
  %561 = vmatpush.msra.mxu0 0.0
  %562 = vmatpush.msra.mxu0 0.0
  %563 = vmatpush.msra.mxu0 0.0
  %564 = vmatpush.msra.mxu0 0.0
  %565 = vmatpush.msra.mxu0 0.0
  %566 = vmatpush.msra.mxu0 0.0
  %567 = vmatpush.msra.mxu0 %v233
  %568 = vmatpush.msra.mxu0 %v130
  %569 = vmatpush.msra.mxu0 %v98
  %570 = vmatpush.msra.mxu0 %v66
  %571 = vmatpush.msra.mxu0 %v34
  %572 = vmatmul.f32.gmra.mxu0 %v190
  %v573 = vpop.f32.mrf.mxu0
  %v574 = vadd.f32 0.0, %v573
  %575 = vmatmul.f32.gmra.mxu0 %v193
  %v576 = vpop.f32.mrf.mxu0
  %v577 = vadd.f32 0.0, %v576
  %578 = vmatmul.f32.gmra.mxu0 %v196
  %v579 = vpop.f32.mrf.mxu0
  %v580 = vadd.f32 0.0, %v579
  %581 = vmatmul.f32.gmra.mxu0 %v199
  %v582 = vpop.f32.mrf.mxu0
  %v583 = vadd.f32 0.0, %v582
  %584 = vmatmul.f32.gmra.mxu0 %v202
  %v585 = vpop.f32.mrf.mxu0
  %v586 = vadd.f32 0.0, %v585
  %587 = vmatmul.f32.gmra.mxu0 %v205
  %v588 = vpop.f32.mrf.mxu0
  %v589 = vadd.f32 0.0, %v588
  %590 = vmatmul.f32.gmra.mxu0 %v208
  %v591 = vpop.f32.mrf.mxu0
  %v592 = vadd.f32 0.0, %v591
  %593 = vmatmul.f32.gmra.mxu0 %v211
  %v594 = vpop.f32.mrf.mxu0
  %v595 = vadd.f32 0.0, %v594
  %596 = vdwg.mxu0
  %597 = vmatpush.msra.mxu0 0.0
  %598 = vmatpush.msra.mxu0 0.0
  %599 = vmatpush.msra.mxu0 0.0
  %600 = vmatpush.msra.mxu0 0.0
  %601 = vmatpush.msra.mxu0 0.0
  %602 = vmatpush.msra.mxu0 0.0
  %603 = vmatpush.msra.mxu0 0.0
  %604 = vmatpush.msra.mxu0 0.0
  %605 = vmatpush.msra.mxu0 0.0
  %606 = vmatpush.msra.mxu0 0.0
  %607 = vmatpush.msra.mxu0 0.0
  %608 = vmatpush.msra.mxu0 %v236
  %609 = vmatpush.msra.mxu0 %v131
  %610 = vmatpush.msra.mxu0 %v99
  %611 = vmatpush.msra.mxu0 %v67
  %612 = vmatpush.msra.mxu0 %v35
  %613 = vmatmul.f32.gmra.mxu0 %v190
  %v614 = vpop.f32.mrf.mxu0
  %v615 = vadd.f32 0.0, %v614
  %616 = vmatmul.f32.gmra.mxu0 %v193
  %v617 = vpop.f32.mrf.mxu0
  %v618 = vadd.f32 0.0, %v617
  %619 = vmatmul.f32.gmra.mxu0 %v196
  %v620 = vpop.f32.mrf.mxu0
  %v621 = vadd.f32 0.0, %v620
  %622 = vmatmul.f32.gmra.mxu0 %v199
  %v623 = vpop.f32.mrf.mxu0
  %v624 = vadd.f32 0.0, %v623
  %625 = vmatmul.f32.gmra.mxu0 %v202
  %v626 = vpop.f32.mrf.mxu0
  %v627 = vadd.f32 0.0, %v626
  %628 = vmatmul.f32.gmra.mxu0 %v205
  %v629 = vpop.f32.mrf.mxu0
  %v630 = vadd.f32 0.0, %v629
  %631 = vmatmul.f32.gmra.mxu0 %v208
  %v632 = vpop.f32.mrf.mxu0
  %v633 = vadd.f32 0.0, %v632
  %634 = vmatmul.f32.gmra.mxu0 %v211
  %v635 = vpop.f32.mrf.mxu0
  %v636 = vadd.f32 0.0, %v635
  %637 = vdwg.mxu0
  %638 = vmatpush.msra.mxu0 0.0
  %639 = vmatpush.msra.mxu0 0.0
  %640 = vmatpush.msra.mxu0 0.0
  %641 = vmatpush.msra.mxu0 0.0
  %642 = vmatpush.msra.mxu0 0.0
  %643 = vmatpush.msra.mxu0 0.0
  %644 = vmatpush.msra.mxu0 0.0
  %645 = vmatpush.msra.mxu0 0.0
  %646 = vmatpush.msra.mxu0 0.0
  %647 = vmatpush.msra.mxu0 0.0
  %648 = vmatpush.msra.mxu0 0.0
  %649 = vmatpush.msra.mxu0 %v239
  %650 = vmatpush.msra.mxu0 %v132
  %651 = vmatpush.msra.mxu0 %v100
  %652 = vmatpush.msra.mxu0 %v68
  %653 = vmatpush.msra.mxu0 %v36
  %654 = vmatmul.f32.gmra.mxu0 %v190
  %v655 = vpop.f32.mrf.mxu0
  %v656 = vadd.f32 0.0, %v655
  %657 = vmatmul.f32.gmra.mxu0 %v193
  %v658 = vpop.f32.mrf.mxu0
  %v659 = vadd.f32 0.0, %v658
  %660 = vmatmul.f32.gmra.mxu0 %v196
  %v661 = vpop.f32.mrf.mxu0
  %v662 = vadd.f32 0.0, %v661
  %663 = vmatmul.f32.gmra.mxu0 %v199
  %v664 = vpop.f32.mrf.mxu0
  %v665 = vadd.f32 0.0, %v664
  %666 = vmatmul.f32.gmra.mxu0 %v202
  %v667 = vpop.f32.mrf.mxu0
  %v668 = vadd.f32 0.0, %v667
  %669 = vmatmul.f32.gmra.mxu0 %v205
  %v670 = vpop.f32.mrf.mxu0
  %v671 = vadd.f32 0.0, %v670
  %672 = vmatmul.f32.gmra.mxu0 %v208
  %v673 = vpop.f32.mrf.mxu0
  %v674 = vadd.f32 0.0, %v673
  %675 = vmatmul.f32.gmra.mxu0 %v211
  %v676 = vpop.f32.mrf.mxu0
  %v677 = vadd.f32 0.0, %v676
  %678 = vdwg.mxu0
  %679 = vmatpush.msra.mxu0 0.0
  %680 = vmatpush.msra.mxu0 0.0
  %681 = vmatpush.msra.mxu0 0.0
  %682 = vmatpush.msra.mxu0 0.0
  %683 = vmatpush.msra.mxu0 0.0
  %684 = vmatpush.msra.mxu0 0.0
  %685 = vmatpush.msra.mxu0 0.0
  %686 = vmatpush.msra.mxu0 0.0
  %687 = vmatpush.msra.mxu0 0.0
  %688 = vmatpush.msra.mxu0 0.0
  %689 = vmatpush.msra.mxu0 0.0
  %690 = vmatpush.msra.mxu0 %v242
  %691 = vmatpush.msra.mxu0 %v133
  %692 = vmatpush.msra.mxu0 %v101
  %693 = vmatpush.msra.mxu0 %v69
  %694 = vmatpush.msra.mxu0 %v37
  %695 = vmatmul.f32.gmra.mxu0 %v190
  %v696 = vpop.f32.mrf.mxu0
  %v697 = vadd.f32 0.0, %v696
  %698 = vmatmul.f32.gmra.mxu0 %v193
  %v699 = vpop.f32.mrf.mxu0
  %v700 = vadd.f32 0.0, %v699
  %701 = vmatmul.f32.gmra.mxu0 %v196
  %v702 = vpop.f32.mrf.mxu0
  %v703 = vadd.f32 0.0, %v702
  %704 = vmatmul.f32.gmra.mxu0 %v199
  %v705 = vpop.f32.mrf.mxu0
  %v706 = vadd.f32 0.0, %v705
  %707 = vmatmul.f32.gmra.mxu0 %v202
  %v708 = vpop.f32.mrf.mxu0
  %v709 = vadd.f32 0.0, %v708
  %710 = vmatmul.f32.gmra.mxu0 %v205
  %v711 = vpop.f32.mrf.mxu0
  %v712 = vadd.f32 0.0, %v711
  %713 = vmatmul.f32.gmra.mxu0 %v208
  %v714 = vpop.f32.mrf.mxu0
  %v715 = vadd.f32 0.0, %v714
  %716 = vmatmul.f32.gmra.mxu0 %v211
  %v717 = vpop.f32.mrf.mxu0
  %v718 = vadd.f32 0.0, %v717
  %719 = vdwg.mxu0
  %720 = vmatpush.msra.mxu0 0.0
  %721 = vmatpush.msra.mxu0 0.0
  %722 = vmatpush.msra.mxu0 0.0
  %723 = vmatpush.msra.mxu0 0.0
  %724 = vmatpush.msra.mxu0 0.0
  %725 = vmatpush.msra.mxu0 0.0
  %726 = vmatpush.msra.mxu0 0.0
  %727 = vmatpush.msra.mxu0 0.0
  %728 = vmatpush.msra.mxu0 0.0
  %729 = vmatpush.msra.mxu0 0.0
  %730 = vmatpush.msra.mxu0 0.0
  %731 = vmatpush.msra.mxu0 %v245
  %732 = vmatpush.msra.mxu0 %v134
  %733 = vmatpush.msra.mxu0 %v102
  %734 = vmatpush.msra.mxu0 %v70
  %735 = vmatpush.msra.mxu0 %v38
  %736 = vmatmul.f32.gmra.mxu0 %v190
  %v737 = vpop.f32.mrf.mxu0
  %v738 = vadd.f32 0.0, %v737
  %739 = vmatmul.f32.gmra.mxu0 %v193
  %v740 = vpop.f32.mrf.mxu0
  %v741 = vadd.f32 0.0, %v740
  %742 = vmatmul.f32.gmra.mxu0 %v196
  %v743 = vpop.f32.mrf.mxu0
  %v744 = vadd.f32 0.0, %v743
  %745 = vmatmul.f32.gmra.mxu0 %v199
  %v746 = vpop.f32.mrf.mxu0
  %v747 = vadd.f32 0.0, %v746
  %748 = vmatmul.f32.gmra.mxu0 %v202
  %v749 = vpop.f32.mrf.mxu0
  %v750 = vadd.f32 0.0, %v749
  %751 = vmatmul.f32.gmra.mxu0 %v205
  %v752 = vpop.f32.mrf.mxu0
  %v753 = vadd.f32 0.0, %v752
  %754 = vmatmul.f32.gmra.mxu0 %v208
  %v755 = vpop.f32.mrf.mxu0
  %v756 = vadd.f32 0.0, %v755
  %757 = vmatmul.f32.gmra.mxu0 %v211
  %v758 = vpop.f32.mrf.mxu0
  %v759 = vadd.f32 0.0, %v758
  %760 = vdwg.mxu0
  %761 = vmatpush.msra.mxu0 0.0
  %762 = vmatpush.msra.mxu0 0.0
  %763 = vmatpush.msra.mxu0 0.0
  %764 = vmatpush.msra.mxu0 0.0
  %765 = vmatpush.msra.mxu0 0.0
  %766 = vmatpush.msra.mxu0 0.0
  %767 = vmatpush.msra.mxu0 0.0
  %768 = vmatpush.msra.mxu0 0.0
  %769 = vmatpush.msra.mxu0 0.0
  %770 = vmatpush.msra.mxu0 0.0
  %771 = vmatpush.msra.mxu0 0.0
  %772 = vmatpush.msra.mxu0 %v248
  %773 = vmatpush.msra.mxu0 %v135
  %774 = vmatpush.msra.mxu0 %v103
  %775 = vmatpush.msra.mxu0 %v71
  %776 = vmatpush.msra.mxu0 %v39
  %777 = vmatmul.f32.gmra.mxu0 %v190
  %v778 = vpop.f32.mrf.mxu0
  %v779 = vadd.f32 0.0, %v778
  %780 = vmatmul.f32.gmra.mxu0 %v193
  %v781 = vpop.f32.mrf.mxu0
  %v782 = vadd.f32 0.0, %v781
  %783 = vmatmul.f32.gmra.mxu0 %v196
  %v784 = vpop.f32.mrf.mxu0
  %v785 = vadd.f32 0.0, %v784
  %786 = vmatmul.f32.gmra.mxu0 %v199
  %v787 = vpop.f32.mrf.mxu0
  %v788 = vadd.f32 0.0, %v787
  %789 = vmatmul.f32.gmra.mxu0 %v202
  %v790 = vpop.f32.mrf.mxu0
  %v791 = vadd.f32 0.0, %v790
  %792 = vmatmul.f32.gmra.mxu0 %v205
  %v793 = vpop.f32.mrf.mxu0
  %v794 = vadd.f32 0.0, %v793
  %795 = vmatmul.f32.gmra.mxu0 %v208
  %v796 = vpop.f32.mrf.mxu0
  %v797 = vadd.f32 0.0, %v796
  %798 = vmatmul.f32.gmra.mxu0 %v211
  %v799 = vpop.f32.mrf.mxu0
  %v800 = vadd.f32 0.0, %v799
  %801 = vdwg.mxu0
  %802 = vmatpush.msra.mxu0 0.0
  %803 = vmatpush.msra.mxu0 0.0
  %804 = vmatpush.msra.mxu0 0.0
  %805 = vmatpush.msra.mxu0 0.0
  %806 = vmatpush.msra.mxu0 0.0
  %807 = vmatpush.msra.mxu0 0.0
  %808 = vmatpush.msra.mxu0 0.0
  %809 = vmatpush.msra.mxu0 0.0
  %810 = vmatpush.msra.mxu0 0.0
  %811 = vmatpush.msra.mxu0 0.0
  %812 = vmatpush.msra.mxu0 0.0
  %813 = vmatpush.msra.mxu0 %v251
  %814 = vmatpush.msra.mxu0 %v136
  %815 = vmatpush.msra.mxu0 %v104
  %816 = vmatpush.msra.mxu0 %v72
  %817 = vmatpush.msra.mxu0 %v40
  %818 = vmatmul.f32.gmra.mxu0 %v190
  %v819 = vpop.f32.mrf.mxu0
  %v820 = vadd.f32 0.0, %v819
  %821 = vmatmul.f32.gmra.mxu0 %v193
  %v822 = vpop.f32.mrf.mxu0
  %v823 = vadd.f32 0.0, %v822
  %824 = vmatmul.f32.gmra.mxu0 %v196
  %v825 = vpop.f32.mrf.mxu0
  %v826 = vadd.f32 0.0, %v825
  %827 = vmatmul.f32.gmra.mxu0 %v199
  %v828 = vpop.f32.mrf.mxu0
  %v829 = vadd.f32 0.0, %v828
  %830 = vmatmul.f32.gmra.mxu0 %v202
  %v831 = vpop.f32.mrf.mxu0
  %v832 = vadd.f32 0.0, %v831
  %833 = vmatmul.f32.gmra.mxu0 %v205
  %v834 = vpop.f32.mrf.mxu0
  %v835 = vadd.f32 0.0, %v834
  %836 = vmatmul.f32.gmra.mxu0 %v208
  %v837 = vpop.f32.mrf.mxu0
  %v838 = vadd.f32 0.0, %v837
  %839 = vmatmul.f32.gmra.mxu0 %v211
  %v840 = vpop.f32.mrf.mxu0
  %v841 = vadd.f32 0.0, %v840
  %842 = vdwg.mxu0
  %843 = vmatpush.msra.mxu0 0.0
  %844 = vmatpush.msra.mxu0 0.0
  %845 = vmatpush.msra.mxu0 0.0
  %846 = vmatpush.msra.mxu0 0.0
  %847 = vmatpush.msra.mxu0 0.0
  %848 = vmatpush.msra.mxu0 0.0
  %849 = vmatpush.msra.mxu0 0.0
  %850 = vmatpush.msra.mxu0 0.0
  %851 = vmatpush.msra.mxu0 0.0
  %852 = vmatpush.msra.mxu0 0.0
  %853 = vmatpush.msra.mxu0 0.0
  %854 = vmatpush.msra.mxu0 %v254
  %855 = vmatpush.msra.mxu0 %v137
  %856 = vmatpush.msra.mxu0 %v105
  %857 = vmatpush.msra.mxu0 %v73
  %858 = vmatpush.msra.mxu0 %v41
  %859 = vmatmul.f32.gmra.mxu0 %v190
  %v860 = vpop.f32.mrf.mxu0
  %v861 = vadd.f32 0.0, %v860
  %862 = vmatmul.f32.gmra.mxu0 %v193
  %v863 = vpop.f32.mrf.mxu0
  %v864 = vadd.f32 0.0, %v863
  %865 = vmatmul.f32.gmra.mxu0 %v196
  %v866 = vpop.f32.mrf.mxu0
  %v867 = vadd.f32 0.0, %v866
  %868 = vmatmul.f32.gmra.mxu0 %v199
  %v869 = vpop.f32.mrf.mxu0
  %v870 = vadd.f32 0.0, %v869
  %871 = vmatmul.f32.gmra.mxu0 %v202
  %v872 = vpop.f32.mrf.mxu0
  %v873 = vadd.f32 0.0, %v872
  %874 = vmatmul.f32.gmra.mxu0 %v205
  %v875 = vpop.f32.mrf.mxu0
  %v876 = vadd.f32 0.0, %v875
  %877 = vmatmul.f32.gmra.mxu0 %v208
  %v878 = vpop.f32.mrf.mxu0
  %v879 = vadd.f32 0.0, %v878
  %880 = vmatmul.f32.gmra.mxu0 %v211
  %v881 = vpop.f32.mrf.mxu0
  %v882 = vadd.f32 0.0, %v881
  %883 = vdwg.mxu0
  %884 = vmatpush.msra.mxu0 0.0
  %885 = vmatpush.msra.mxu0 0.0
  %886 = vmatpush.msra.mxu0 0.0
  %887 = vmatpush.msra.mxu0 0.0
  %888 = vmatpush.msra.mxu0 0.0
  %889 = vmatpush.msra.mxu0 0.0
  %890 = vmatpush.msra.mxu0 0.0
  %891 = vmatpush.msra.mxu0 0.0
  %892 = vmatpush.msra.mxu0 0.0
  %893 = vmatpush.msra.mxu0 0.0
  %894 = vmatpush.msra.mxu0 0.0
  %895 = vmatpush.msra.mxu0 %v257
  %896 = vmatpush.msra.mxu0 %v138
  %897 = vmatpush.msra.mxu0 %v106
  %898 = vmatpush.msra.mxu0 %v74
  %899 = vmatpush.msra.mxu0 %v42
  %900 = vmatmul.f32.gmra.mxu0 %v190
  %v901 = vpop.f32.mrf.mxu0
  %v902 = vadd.f32 0.0, %v901
  %903 = vmatmul.f32.gmra.mxu0 %v193
  %v904 = vpop.f32.mrf.mxu0
  %v905 = vadd.f32 0.0, %v904
  %906 = vmatmul.f32.gmra.mxu0 %v196
  %v907 = vpop.f32.mrf.mxu0
  %v908 = vadd.f32 0.0, %v907
  %909 = vmatmul.f32.gmra.mxu0 %v199
  %v910 = vpop.f32.mrf.mxu0
  %v911 = vadd.f32 0.0, %v910
  %912 = vmatmul.f32.gmra.mxu0 %v202
  %v913 = vpop.f32.mrf.mxu0
  %v914 = vadd.f32 0.0, %v913
  %915 = vmatmul.f32.gmra.mxu0 %v205
  %v916 = vpop.f32.mrf.mxu0
  %v917 = vadd.f32 0.0, %v916
  %918 = vmatmul.f32.gmra.mxu0 %v208
  %v919 = vpop.f32.mrf.mxu0
  %v920 = vadd.f32 0.0, %v919
  %921 = vmatmul.f32.gmra.mxu0 %v211
  %v922 = vpop.f32.mrf.mxu0
  %v923 = vadd.f32 0.0, %v922
  %924 = vdwg.mxu0
  %925 = vmatpush.msra.mxu0 0.0
  %926 = vmatpush.msra.mxu0 0.0
  %927 = vmatpush.msra.mxu0 0.0
  %928 = vmatpush.msra.mxu0 0.0
  %929 = vmatpush.msra.mxu0 0.0
  %930 = vmatpush.msra.mxu0 0.0
  %931 = vmatpush.msra.mxu0 0.0
  %932 = vmatpush.msra.mxu0 0.0
  %933 = vmatpush.msra.mxu0 0.0
  %934 = vmatpush.msra.mxu0 0.0
  %935 = vmatpush.msra.mxu0 0.0
  %936 = vmatpush.msra.mxu0 %v260
  %937 = vmatpush.msra.mxu0 %v139
  %938 = vmatpush.msra.mxu0 %v107
  %939 = vmatpush.msra.mxu0 %v75
  %940 = vmatpush.msra.mxu0 %v43
  %941 = vmatmul.f32.gmra.mxu0 %v190
  %v942 = vpop.f32.mrf.mxu0
  %v943 = vadd.f32 0.0, %v942
  %944 = vmatmul.f32.gmra.mxu0 %v193
  %v945 = vpop.f32.mrf.mxu0
  %v946 = vadd.f32 0.0, %v945
  %947 = vmatmul.f32.gmra.mxu0 %v196
  %v948 = vpop.f32.mrf.mxu0
  %v949 = vadd.f32 0.0, %v948
  %950 = vmatmul.f32.gmra.mxu0 %v199
  %v951 = vpop.f32.mrf.mxu0
  %v952 = vadd.f32 0.0, %v951
  %953 = vmatmul.f32.gmra.mxu0 %v202
  %v954 = vpop.f32.mrf.mxu0
  %v955 = vadd.f32 0.0, %v954
  %956 = vmatmul.f32.gmra.mxu0 %v205
  %v957 = vpop.f32.mrf.mxu0
  %v958 = vadd.f32 0.0, %v957
  %959 = vmatmul.f32.gmra.mxu0 %v208
  %v960 = vpop.f32.mrf.mxu0
  %v961 = vadd.f32 0.0, %v960
  %962 = vmatmul.f32.gmra.mxu0 %v211
  %v963 = vpop.f32.mrf.mxu0
  %v964 = vadd.f32 0.0, %v963
  %965 = vdwg.mxu0
  %966 = vmatpush.msra.mxu0 0.0
  %967 = vmatpush.msra.mxu0 0.0
  %968 = vmatpush.msra.mxu0 0.0
  %969 = vmatpush.msra.mxu0 0.0
  %970 = vmatpush.msra.mxu0 0.0
  %971 = vmatpush.msra.mxu0 0.0
  %972 = vmatpush.msra.mxu0 0.0
  %973 = vmatpush.msra.mxu0 0.0
  %974 = vmatpush.msra.mxu0 0.0
  %975 = vmatpush.msra.mxu0 0.0
  %976 = vmatpush.msra.mxu0 0.0
  %977 = vmatpush.msra.mxu0 %v263
  %978 = vmatpush.msra.mxu0 %v140
  %979 = vmatpush.msra.mxu0 %v108
  %980 = vmatpush.msra.mxu0 %v76
  %981 = vmatpush.msra.mxu0 %v44
  %982 = vmatmul.f32.gmra.mxu0 %v190
  %v983 = vpop.f32.mrf.mxu0
  %v984 = vadd.f32 0.0, %v983
  %985 = vmatmul.f32.gmra.mxu0 %v193
  %v986 = vpop.f32.mrf.mxu0
  %v987 = vadd.f32 0.0, %v986
  %988 = vmatmul.f32.gmra.mxu0 %v196
  %v989 = vpop.f32.mrf.mxu0
  %v990 = vadd.f32 0.0, %v989
  %991 = vmatmul.f32.gmra.mxu0 %v199
  %v992 = vpop.f32.mrf.mxu0
  %v993 = vadd.f32 0.0, %v992
  %994 = vmatmul.f32.gmra.mxu0 %v202
  %v995 = vpop.f32.mrf.mxu0
  %v996 = vadd.f32 0.0, %v995
  %997 = vmatmul.f32.gmra.mxu0 %v205
  %v998 = vpop.f32.mrf.mxu0
  %v999 = vadd.f32 0.0, %v998
  %1000 = vmatmul.f32.gmra.mxu0 %v208
  %v1001 = vpop.f32.mrf.mxu0
  %v1002 = vadd.f32 0.0, %v1001
  %1003 = vmatmul.f32.gmra.mxu0 %v211
  %v1004 = vpop.f32.mrf.mxu0
  %v1005 = vadd.f32 0.0, %v1004
  %1006 = vdwg.mxu0
  %1007 = vmatpush.msra.mxu0 0.0
  %1008 = vmatpush.msra.mxu0 0.0
  %1009 = vmatpush.msra.mxu0 0.0
  %1010 = vmatpush.msra.mxu0 0.0
  %1011 = vmatpush.msra.mxu0 0.0
  %1012 = vmatpush.msra.mxu0 0.0
  %1013 = vmatpush.msra.mxu0 0.0
  %1014 = vmatpush.msra.mxu0 0.0
  %1015 = vmatpush.msra.mxu0 0.0
  %1016 = vmatpush.msra.mxu0 0.0
  %1017 = vmatpush.msra.mxu0 0.0
  %1018 = vmatpush.msra.mxu0 %v266
  %1019 = vmatpush.msra.mxu0 %v141
  %1020 = vmatpush.msra.mxu0 %v109
  %1021 = vmatpush.msra.mxu0 %v77
  %1022 = vmatpush.msra.mxu0 %v45
  %1023 = vmatmul.f32.gmra.mxu0 %v190
  %v1024 = vpop.f32.mrf.mxu0
  %v1025 = vadd.f32 0.0, %v1024
  %1026 = vmatmul.f32.gmra.mxu0 %v193
  %v1027 = vpop.f32.mrf.mxu0
  %v1028 = vadd.f32 0.0, %v1027
  %1029 = vmatmul.f32.gmra.mxu0 %v196
  %v1030 = vpop.f32.mrf.mxu0
  %v1031 = vadd.f32 0.0, %v1030
  %1032 = vmatmul.f32.gmra.mxu0 %v199
  %v1033 = vpop.f32.mrf.mxu0
  %v1034 = vadd.f32 0.0, %v1033
  %1035 = vmatmul.f32.gmra.mxu0 %v202
  %v1036 = vpop.f32.mrf.mxu0
  %v1037 = vadd.f32 0.0, %v1036
  %1038 = vmatmul.f32.gmra.mxu0 %v205
  %v1039 = vpop.f32.mrf.mxu0
  %v1040 = vadd.f32 0.0, %v1039
  %1041 = vmatmul.f32.gmra.mxu0 %v208
  %v1042 = vpop.f32.mrf.mxu0
  %v1043 = vadd.f32 0.0, %v1042
  %1044 = vmatmul.f32.gmra.mxu0 %v211
  %v1045 = vpop.f32.mrf.mxu0
  %v1046 = vadd.f32 0.0, %v1045
  %1047 = vdwg.mxu0
  %1048 = vmatpush.msra.mxu0 0.0
  %1049 = vmatpush.msra.mxu0 0.0
  %1050 = vmatpush.msra.mxu0 0.0
  %1051 = vmatpush.msra.mxu0 0.0
  %1052 = vmatpush.msra.mxu0 0.0
  %1053 = vmatpush.msra.mxu0 0.0
  %1054 = vmatpush.msra.mxu0 0.0
  %1055 = vmatpush.msra.mxu0 0.0
  %1056 = vmatpush.msra.mxu0 0.0
  %1057 = vmatpush.msra.mxu0 0.0
  %1058 = vmatpush.msra.mxu0 0.0
  %1059 = vmatpush.msra.mxu0 %v269
  %1060 = vmatpush.msra.mxu0 %v142
  %1061 = vmatpush.msra.mxu0 %v110
  %1062 = vmatpush.msra.mxu0 %v78
  %1063 = vmatpush.msra.mxu0 %v46
  %1064 = vmatmul.f32.gmra.mxu0 %v190
  %v1065 = vpop.f32.mrf.mxu0
  %v1066 = vadd.f32 0.0, %v1065
  %1067 = vmatmul.f32.gmra.mxu0 %v193
  %v1068 = vpop.f32.mrf.mxu0
  %v1069 = vadd.f32 0.0, %v1068
  %1070 = vmatmul.f32.gmra.mxu0 %v196
  %v1071 = vpop.f32.mrf.mxu0
  %v1072 = vadd.f32 0.0, %v1071
  %1073 = vmatmul.f32.gmra.mxu0 %v199
  %v1074 = vpop.f32.mrf.mxu0
  %v1075 = vadd.f32 0.0, %v1074
  %1076 = vmatmul.f32.gmra.mxu0 %v202
  %v1077 = vpop.f32.mrf.mxu0
  %v1078 = vadd.f32 0.0, %v1077
  %1079 = vmatmul.f32.gmra.mxu0 %v205
  %v1080 = vpop.f32.mrf.mxu0
  %v1081 = vadd.f32 0.0, %v1080
  %1082 = vmatmul.f32.gmra.mxu0 %v208
  %v1083 = vpop.f32.mrf.mxu0
  %v1084 = vadd.f32 0.0, %v1083
  %1085 = vmatmul.f32.gmra.mxu0 %v211
  %v1086 = vpop.f32.mrf.mxu0
  %v1087 = vadd.f32 0.0, %v1086
  %1088 = vdwg.mxu0
  %1089 = vmatpush.msra.mxu0 0.0
  %1090 = vmatpush.msra.mxu0 0.0
  %1091 = vmatpush.msra.mxu0 0.0
  %1092 = vmatpush.msra.mxu0 0.0
  %1093 = vmatpush.msra.mxu0 0.0
  %1094 = vmatpush.msra.mxu0 0.0
  %1095 = vmatpush.msra.mxu0 0.0
  %1096 = vmatpush.msra.mxu0 0.0
  %1097 = vmatpush.msra.mxu0 0.0
  %1098 = vmatpush.msra.mxu0 0.0
  %1099 = vmatpush.msra.mxu0 0.0
  %1100 = vmatpush.msra.mxu0 %v272
  %1101 = vmatpush.msra.mxu0 %v143
  %1102 = vmatpush.msra.mxu0 %v111
  %1103 = vmatpush.msra.mxu0 %v79
  %1104 = vmatpush.msra.mxu0 %v47
  %1105 = vmatmul.f32.gmra.mxu0 %v190
  %v1106 = vpop.f32.mrf.mxu0
  %v1107 = vadd.f32 0.0, %v1106
  %1108 = vmatmul.f32.gmra.mxu0 %v193
  %v1109 = vpop.f32.mrf.mxu0
  %v1110 = vadd.f32 0.0, %v1109
  %1111 = vmatmul.f32.gmra.mxu0 %v196
  %v1112 = vpop.f32.mrf.mxu0
  %v1113 = vadd.f32 0.0, %v1112
  %1114 = vmatmul.f32.gmra.mxu0 %v199
  %v1115 = vpop.f32.mrf.mxu0
  %v1116 = vadd.f32 0.0, %v1115
  %1117 = vmatmul.f32.gmra.mxu0 %v202
  %v1118 = vpop.f32.mrf.mxu0
  %v1119 = vadd.f32 0.0, %v1118
  %1120 = vmatmul.f32.gmra.mxu0 %v205
  %v1121 = vpop.f32.mrf.mxu0
  %v1122 = vadd.f32 0.0, %v1121
  %1123 = vmatmul.f32.gmra.mxu0 %v208
  %v1124 = vpop.f32.mrf.mxu0
  %v1125 = vadd.f32 0.0, %v1124
  %1126 = vmatmul.f32.gmra.mxu0 %v211
  %v1127 = vpop.f32.mrf.mxu0
  %v1128 = vadd.f32 0.0, %v1127
  %1129 = vdwg.mxu0
  %1130 = vmatpush.msra.mxu0 0.0
  %1131 = vmatpush.msra.mxu0 0.0
  %1132 = vmatpush.msra.mxu0 0.0
  %1133 = vmatpush.msra.mxu0 0.0
  %1134 = vmatpush.msra.mxu0 0.0
  %1135 = vmatpush.msra.mxu0 0.0
  %1136 = vmatpush.msra.mxu0 0.0
  %1137 = vmatpush.msra.mxu0 0.0
  %1138 = vmatpush.msra.mxu0 0.0
  %1139 = vmatpush.msra.mxu0 0.0
  %1140 = vmatpush.msra.mxu0 0.0
  %1141 = vmatpush.msra.mxu0 %v275
  %1142 = vmatpush.msra.mxu0 %v144
  %1143 = vmatpush.msra.mxu0 %v112
  %1144 = vmatpush.msra.mxu0 %v80
  %1145 = vmatpush.msra.mxu0 %v48
  %1146 = vmatmul.f32.gmra.mxu0 %v190
  %v1147 = vpop.f32.mrf.mxu0
  %v1148 = vadd.f32 0.0, %v1147
  %1149 = vmatmul.f32.gmra.mxu0 %v193
  %v1150 = vpop.f32.mrf.mxu0
  %v1151 = vadd.f32 0.0, %v1150
  %1152 = vmatmul.f32.gmra.mxu0 %v196
  %v1153 = vpop.f32.mrf.mxu0
  %v1154 = vadd.f32 0.0, %v1153
  %1155 = vmatmul.f32.gmra.mxu0 %v199
  %v1156 = vpop.f32.mrf.mxu0
  %v1157 = vadd.f32 0.0, %v1156
  %1158 = vmatmul.f32.gmra.mxu0 %v202
  %v1159 = vpop.f32.mrf.mxu0
  %v1160 = vadd.f32 0.0, %v1159
  %1161 = vmatmul.f32.gmra.mxu0 %v205
  %v1162 = vpop.f32.mrf.mxu0
  %v1163 = vadd.f32 0.0, %v1162
  %1164 = vmatmul.f32.gmra.mxu0 %v208
  %v1165 = vpop.f32.mrf.mxu0
  %v1166 = vadd.f32 0.0, %v1165
  %1167 = vmatmul.f32.gmra.mxu0 %v211
  %v1168 = vpop.f32.mrf.mxu0
  %v1169 = vadd.f32 0.0, %v1168
  %1170 = vdwg.mxu0
  %1171 = vmatpush.msra.mxu0 0.0
  %1172 = vmatpush.msra.mxu0 0.0
  %1173 = vmatpush.msra.mxu0 0.0
  %1174 = vmatpush.msra.mxu0 0.0
  %1175 = vmatpush.msra.mxu0 0.0
  %1176 = vmatpush.msra.mxu0 0.0
  %1177 = vmatpush.msra.mxu0 0.0
  %1178 = vmatpush.msra.mxu0 0.0
  %1179 = vmatpush.msra.mxu0 0.0
  %1180 = vmatpush.msra.mxu0 0.0
  %1181 = vmatpush.msra.mxu0 0.0
  %1182 = vmatpush.msra.mxu0 %v278
  %1183 = vmatpush.msra.mxu0 %v145
  %1184 = vmatpush.msra.mxu0 %v113
  %1185 = vmatpush.msra.mxu0 %v81
  %1186 = vmatpush.msra.mxu0 %v49
  %1187 = vmatmul.f32.gmra.mxu0 %v190
  %v1188 = vpop.f32.mrf.mxu0
  %v1189 = vadd.f32 0.0, %v1188
  %1190 = vmatmul.f32.gmra.mxu0 %v193
  %v1191 = vpop.f32.mrf.mxu0
  %v1192 = vadd.f32 0.0, %v1191
  %1193 = vmatmul.f32.gmra.mxu0 %v196
  %v1194 = vpop.f32.mrf.mxu0
  %v1195 = vadd.f32 0.0, %v1194
  %1196 = vmatmul.f32.gmra.mxu0 %v199
  %v1197 = vpop.f32.mrf.mxu0
  %v1198 = vadd.f32 0.0, %v1197
  %1199 = vmatmul.f32.gmra.mxu0 %v202
  %v1200 = vpop.f32.mrf.mxu0
  %v1201 = vadd.f32 0.0, %v1200
  %1202 = vmatmul.f32.gmra.mxu0 %v205
  %v1203 = vpop.f32.mrf.mxu0
  %v1204 = vadd.f32 0.0, %v1203
  %1205 = vmatmul.f32.gmra.mxu0 %v208
  %v1206 = vpop.f32.mrf.mxu0
  %v1207 = vadd.f32 0.0, %v1206
  %1208 = vmatmul.f32.gmra.mxu0 %v211
  %v1209 = vpop.f32.mrf.mxu0
  %v1210 = vadd.f32 0.0, %v1209
  %1211 = vdwg.mxu0
  %1212 = vmatpush.msra.mxu0 0.0
  %1213 = vmatpush.msra.mxu0 0.0
  %1214 = vmatpush.msra.mxu0 0.0
  %1215 = vmatpush.msra.mxu0 0.0
  %1216 = vmatpush.msra.mxu0 0.0
  %1217 = vmatpush.msra.mxu0 0.0
  %1218 = vmatpush.msra.mxu0 0.0
  %1219 = vmatpush.msra.mxu0 0.0
  %1220 = vmatpush.msra.mxu0 0.0
  %1221 = vmatpush.msra.mxu0 0.0
  %1222 = vmatpush.msra.mxu0 0.0
  %1223 = vmatpush.msra.mxu0 %v281
  %1224 = vmatpush.msra.mxu0 %v146
  %1225 = vmatpush.msra.mxu0 %v114
  %1226 = vmatpush.msra.mxu0 %v82
  %1227 = vmatpush.msra.mxu0 %v50
  %1228 = vmatmul.f32.gmra.mxu0 %v190
  %v1229 = vpop.f32.mrf.mxu0
  %v1230 = vadd.f32 0.0, %v1229
  %1231 = vmatmul.f32.gmra.mxu0 %v193
  %v1232 = vpop.f32.mrf.mxu0
  %v1233 = vadd.f32 0.0, %v1232
  %1234 = vmatmul.f32.gmra.mxu0 %v196
  %v1235 = vpop.f32.mrf.mxu0
  %v1236 = vadd.f32 0.0, %v1235
  %1237 = vmatmul.f32.gmra.mxu0 %v199
  %v1238 = vpop.f32.mrf.mxu0
  %v1239 = vadd.f32 0.0, %v1238
  %1240 = vmatmul.f32.gmra.mxu0 %v202
  %v1241 = vpop.f32.mrf.mxu0
  %v1242 = vadd.f32 0.0, %v1241
  %1243 = vmatmul.f32.gmra.mxu0 %v205
  %v1244 = vpop.f32.mrf.mxu0
  %v1245 = vadd.f32 0.0, %v1244
  %1246 = vmatmul.f32.gmra.mxu0 %v208
  %v1247 = vpop.f32.mrf.mxu0
  %v1248 = vadd.f32 0.0, %v1247
  %1249 = vmatmul.f32.gmra.mxu0 %v211
  %v1250 = vpop.f32.mrf.mxu0
  %v1251 = vadd.f32 0.0, %v1250
  %1252 = vdwg.mxu0
  %1253 = vmatpush.msra.mxu0 0.0
  %1254 = vmatpush.msra.mxu0 0.0
  %1255 = vmatpush.msra.mxu0 0.0
  %1256 = vmatpush.msra.mxu0 0.0
  %1257 = vmatpush.msra.mxu0 0.0
  %1258 = vmatpush.msra.mxu0 0.0
  %1259 = vmatpush.msra.mxu0 0.0
  %1260 = vmatpush.msra.mxu0 0.0
  %1261 = vmatpush.msra.mxu0 0.0
  %1262 = vmatpush.msra.mxu0 0.0
  %1263 = vmatpush.msra.mxu0 0.0
  %1264 = vmatpush.msra.mxu0 %v284
  %1265 = vmatpush.msra.mxu0 %v147
  %1266 = vmatpush.msra.mxu0 %v115
  %1267 = vmatpush.msra.mxu0 %v83
  %1268 = vmatpush.msra.mxu0 %v51
  %1269 = vmatmul.f32.gmra.mxu0 %v190
  %v1270 = vpop.f32.mrf.mxu0
  %v1271 = vadd.f32 0.0, %v1270
  %1272 = vmatmul.f32.gmra.mxu0 %v193
  %v1273 = vpop.f32.mrf.mxu0
  %v1274 = vadd.f32 0.0, %v1273
  %1275 = vmatmul.f32.gmra.mxu0 %v196
  %v1276 = vpop.f32.mrf.mxu0
  %v1277 = vadd.f32 0.0, %v1276
  %1278 = vmatmul.f32.gmra.mxu0 %v199
  %v1279 = vpop.f32.mrf.mxu0
  %v1280 = vadd.f32 0.0, %v1279
  %1281 = vmatmul.f32.gmra.mxu0 %v202
  %v1282 = vpop.f32.mrf.mxu0
  %v1283 = vadd.f32 0.0, %v1282
  %1284 = vmatmul.f32.gmra.mxu0 %v205
  %v1285 = vpop.f32.mrf.mxu0
  %v1286 = vadd.f32 0.0, %v1285
  %1287 = vmatmul.f32.gmra.mxu0 %v208
  %v1288 = vpop.f32.mrf.mxu0
  %v1289 = vadd.f32 0.0, %v1288
  %1290 = vmatmul.f32.gmra.mxu0 %v211
  %v1291 = vpop.f32.mrf.mxu0
  %v1292 = vadd.f32 0.0, %v1291
  %1293 = vdwg.mxu0
  %1294 = vmatpush.msra.mxu0 0.0
  %1295 = vmatpush.msra.mxu0 0.0
  %1296 = vmatpush.msra.mxu0 0.0
  %1297 = vmatpush.msra.mxu0 0.0
  %1298 = vmatpush.msra.mxu0 0.0
  %1299 = vmatpush.msra.mxu0 0.0
  %1300 = vmatpush.msra.mxu0 0.0
  %1301 = vmatpush.msra.mxu0 0.0
  %1302 = vmatpush.msra.mxu0 0.0
  %1303 = vmatpush.msra.mxu0 0.0
  %1304 = vmatpush.msra.mxu0 0.0
  %1305 = vmatpush.msra.mxu0 %v287
  %1306 = vmatpush.msra.mxu0 %v148
  %1307 = vmatpush.msra.mxu0 %v116
  %1308 = vmatpush.msra.mxu0 %v84
  %1309 = vmatpush.msra.mxu0 %v52
  %1310 = vmatmul.f32.gmra.mxu0 %v190
  %v1311 = vpop.f32.mrf.mxu0
  %v1312 = vadd.f32 0.0, %v1311
  %1313 = vmatmul.f32.gmra.mxu0 %v193
  %v1314 = vpop.f32.mrf.mxu0
  %v1315 = vadd.f32 0.0, %v1314
  %1316 = vmatmul.f32.gmra.mxu0 %v196
  %v1317 = vpop.f32.mrf.mxu0
  %v1318 = vadd.f32 0.0, %v1317
  %1319 = vmatmul.f32.gmra.mxu0 %v199
  %v1320 = vpop.f32.mrf.mxu0
  %v1321 = vadd.f32 0.0, %v1320
  %1322 = vmatmul.f32.gmra.mxu0 %v202
  %v1323 = vpop.f32.mrf.mxu0
  %v1324 = vadd.f32 0.0, %v1323
  %1325 = vmatmul.f32.gmra.mxu0 %v205
  %v1326 = vpop.f32.mrf.mxu0
  %v1327 = vadd.f32 0.0, %v1326
  %1328 = vmatmul.f32.gmra.mxu0 %v208
  %v1329 = vpop.f32.mrf.mxu0
  %v1330 = vadd.f32 0.0, %v1329
  %1331 = vmatmul.f32.gmra.mxu0 %v211
  %v1332 = vpop.f32.mrf.mxu0
  %v1333 = vadd.f32 0.0, %v1332
  %1334 = vdwg.mxu0
  %1335 = vmatpush.msra.mxu0 0.0
  %1336 = vmatpush.msra.mxu0 0.0
  %1337 = vmatpush.msra.mxu0 0.0
  %1338 = vmatpush.msra.mxu0 0.0
  %1339 = vmatpush.msra.mxu0 0.0
  %1340 = vmatpush.msra.mxu0 0.0
  %1341 = vmatpush.msra.mxu0 0.0
  %1342 = vmatpush.msra.mxu0 0.0
  %1343 = vmatpush.msra.mxu0 0.0
  %1344 = vmatpush.msra.mxu0 0.0
  %1345 = vmatpush.msra.mxu0 0.0
  %1346 = vmatpush.msra.mxu0 %v290
  %1347 = vmatpush.msra.mxu0 %v149
  %1348 = vmatpush.msra.mxu0 %v117
  %1349 = vmatpush.msra.mxu0 %v85
  %1350 = vmatpush.msra.mxu0 %v53
  %1351 = vmatmul.f32.gmra.mxu0 %v190
  %v1352 = vpop.f32.mrf.mxu0
  %v1353 = vadd.f32 0.0, %v1352
  %1354 = vmatmul.f32.gmra.mxu0 %v193
  %v1355 = vpop.f32.mrf.mxu0
  %v1356 = vadd.f32 0.0, %v1355
  %1357 = vmatmul.f32.gmra.mxu0 %v196
  %v1358 = vpop.f32.mrf.mxu0
  %v1359 = vadd.f32 0.0, %v1358
  %1360 = vmatmul.f32.gmra.mxu0 %v199
  %v1361 = vpop.f32.mrf.mxu0
  %v1362 = vadd.f32 0.0, %v1361
  %1363 = vmatmul.f32.gmra.mxu0 %v202
  %v1364 = vpop.f32.mrf.mxu0
  %v1365 = vadd.f32 0.0, %v1364
  %1366 = vmatmul.f32.gmra.mxu0 %v205
  %v1367 = vpop.f32.mrf.mxu0
  %v1368 = vadd.f32 0.0, %v1367
  %1369 = vmatmul.f32.gmra.mxu0 %v208
  %v1370 = vpop.f32.mrf.mxu0
  %v1371 = vadd.f32 0.0, %v1370
  %1372 = vmatmul.f32.gmra.mxu0 %v211
  %v1373 = vpop.f32.mrf.mxu0
  %v1374 = vadd.f32 0.0, %v1373
  %1375 = vdwg.mxu0
  %1376 = vmatpush.msra.mxu0 0.0
  %1377 = vmatpush.msra.mxu0 0.0
  %1378 = vmatpush.msra.mxu0 0.0
  %1379 = vmatpush.msra.mxu0 0.0
  %1380 = vmatpush.msra.mxu0 0.0
  %1381 = vmatpush.msra.mxu0 0.0
  %1382 = vmatpush.msra.mxu0 0.0
  %1383 = vmatpush.msra.mxu0 0.0
  %1384 = vmatpush.msra.mxu0 0.0
  %1385 = vmatpush.msra.mxu0 0.0
  %1386 = vmatpush.msra.mxu0 0.0
  %1387 = vmatpush.msra.mxu0 %v293
  %1388 = vmatpush.msra.mxu0 %v150
  %1389 = vmatpush.msra.mxu0 %v118
  %1390 = vmatpush.msra.mxu0 %v86
  %1391 = vmatpush.msra.mxu0 %v54
  %1392 = vmatmul.f32.gmra.mxu0 %v190
  %v1393 = vpop.f32.mrf.mxu0
  %v1394 = vadd.f32 0.0, %v1393
  %1395 = vmatmul.f32.gmra.mxu0 %v193
  %v1396 = vpop.f32.mrf.mxu0
  %v1397 = vadd.f32 0.0, %v1396
  %1398 = vmatmul.f32.gmra.mxu0 %v196
  %v1399 = vpop.f32.mrf.mxu0
  %v1400 = vadd.f32 0.0, %v1399
  %1401 = vmatmul.f32.gmra.mxu0 %v199
  %v1402 = vpop.f32.mrf.mxu0
  %v1403 = vadd.f32 0.0, %v1402
  %1404 = vmatmul.f32.gmra.mxu0 %v202
  %v1405 = vpop.f32.mrf.mxu0
  %v1406 = vadd.f32 0.0, %v1405
  %1407 = vmatmul.f32.gmra.mxu0 %v205
  %v1408 = vpop.f32.mrf.mxu0
  %v1409 = vadd.f32 0.0, %v1408
  %1410 = vmatmul.f32.gmra.mxu0 %v208
  %v1411 = vpop.f32.mrf.mxu0
  %v1412 = vadd.f32 0.0, %v1411
  %1413 = vmatmul.f32.gmra.mxu0 %v211
  %v1414 = vpop.f32.mrf.mxu0
  %v1415 = vadd.f32 0.0, %v1414
  %1416 = vdwg.mxu0
  %1417 = vmatpush.msra.mxu0 0.0
  %1418 = vmatpush.msra.mxu0 0.0
  %1419 = vmatpush.msra.mxu0 0.0
  %1420 = vmatpush.msra.mxu0 0.0
  %1421 = vmatpush.msra.mxu0 0.0
  %1422 = vmatpush.msra.mxu0 0.0
  %1423 = vmatpush.msra.mxu0 0.0
  %1424 = vmatpush.msra.mxu0 0.0
  %1425 = vmatpush.msra.mxu0 0.0
  %1426 = vmatpush.msra.mxu0 0.0
  %1427 = vmatpush.msra.mxu0 0.0
  %1428 = vmatpush.msra.mxu0 %v296
  %1429 = vmatpush.msra.mxu0 %v151
  %1430 = vmatpush.msra.mxu0 %v119
  %1431 = vmatpush.msra.mxu0 %v87
  %1432 = vmatpush.msra.mxu0 %v55
  %1433 = vmatmul.f32.gmra.mxu0 %v190
  %v1434 = vpop.f32.mrf.mxu0
  %v1435 = vadd.f32 0.0, %v1434
  %1436 = vmatmul.f32.gmra.mxu0 %v193
  %v1437 = vpop.f32.mrf.mxu0
  %v1438 = vadd.f32 0.0, %v1437
  %1439 = vmatmul.f32.gmra.mxu0 %v196
  %v1440 = vpop.f32.mrf.mxu0
  %v1441 = vadd.f32 0.0, %v1440
  %1442 = vmatmul.f32.gmra.mxu0 %v199
  %v1443 = vpop.f32.mrf.mxu0
  %v1444 = vadd.f32 0.0, %v1443
  %1445 = vmatmul.f32.gmra.mxu0 %v202
  %v1446 = vpop.f32.mrf.mxu0
  %v1447 = vadd.f32 0.0, %v1446
  %1448 = vmatmul.f32.gmra.mxu0 %v205
  %v1449 = vpop.f32.mrf.mxu0
  %v1450 = vadd.f32 0.0, %v1449
  %1451 = vmatmul.f32.gmra.mxu0 %v208
  %v1452 = vpop.f32.mrf.mxu0
  %v1453 = vadd.f32 0.0, %v1452
  %1454 = vmatmul.f32.gmra.mxu0 %v211
  %v1455 = vpop.f32.mrf.mxu0
  %v1456 = vadd.f32 0.0, %v1455
  %1457 = vdwg.mxu0
  %1458 = vmatpush.msra.mxu0 0.0
  %1459 = vmatpush.msra.mxu0 0.0
  %1460 = vmatpush.msra.mxu0 0.0
  %1461 = vmatpush.msra.mxu0 0.0
  %1462 = vmatpush.msra.mxu0 0.0
  %1463 = vmatpush.msra.mxu0 0.0
  %1464 = vmatpush.msra.mxu0 0.0
  %1465 = vmatpush.msra.mxu0 0.0
  %1466 = vmatpush.msra.mxu0 0.0
  %1467 = vmatpush.msra.mxu0 0.0
  %1468 = vmatpush.msra.mxu0 0.0
  %1469 = vmatpush.msra.mxu0 %v299
  %1470 = vmatpush.msra.mxu0 %v152
  %1471 = vmatpush.msra.mxu0 %v120
  %1472 = vmatpush.msra.mxu0 %v88
  %1473 = vmatpush.msra.mxu0 %v56
  %1474 = vmatmul.f32.gmra.mxu0 %v190
  %v1475 = vpop.f32.mrf.mxu0
  %v1476 = vadd.f32 0.0, %v1475
  %1477 = vmatmul.f32.gmra.mxu0 %v193
  %v1478 = vpop.f32.mrf.mxu0
  %v1479 = vadd.f32 0.0, %v1478
  %1480 = vmatmul.f32.gmra.mxu0 %v196
  %v1481 = vpop.f32.mrf.mxu0
  %v1482 = vadd.f32 0.0, %v1481
  %1483 = vmatmul.f32.gmra.mxu0 %v199
  %v1484 = vpop.f32.mrf.mxu0
  %v1485 = vadd.f32 0.0, %v1484
  %1486 = vmatmul.f32.gmra.mxu0 %v202
  %v1487 = vpop.f32.mrf.mxu0
  %v1488 = vadd.f32 0.0, %v1487
  %1489 = vmatmul.f32.gmra.mxu0 %v205
  %v1490 = vpop.f32.mrf.mxu0
  %v1491 = vadd.f32 0.0, %v1490
  %1492 = vmatmul.f32.gmra.mxu0 %v208
  %v1493 = vpop.f32.mrf.mxu0
  %v1494 = vadd.f32 0.0, %v1493
  %1495 = vmatmul.f32.gmra.mxu0 %v211
  %v1496 = vpop.f32.mrf.mxu0
  %v1497 = vadd.f32 0.0, %v1496
  %1498 = vdwg.mxu0
  %1499 = vmatpush.msra.mxu0 0.0
  %1500 = vmatpush.msra.mxu0 0.0
  %1501 = vmatpush.msra.mxu0 0.0
  %1502 = vmatpush.msra.mxu0 0.0
  %1503 = vmatpush.msra.mxu0 0.0
  %1504 = vmatpush.msra.mxu0 0.0
  %1505 = vmatpush.msra.mxu0 0.0
  %1506 = vmatpush.msra.mxu0 0.0
  %1507 = vmatpush.msra.mxu0 0.0
  %1508 = vmatpush.msra.mxu0 0.0
  %1509 = vmatpush.msra.mxu0 0.0
  %1510 = vmatpush.msra.mxu0 %v302
  %1511 = vmatpush.msra.mxu0 %v153
  %1512 = vmatpush.msra.mxu0 %v121
  %1513 = vmatpush.msra.mxu0 %v89
  %1514 = vmatpush.msra.mxu0 %v57
  %1515 = vmatmul.f32.gmra.mxu0 %v190
  %v1516 = vpop.f32.mrf.mxu0
  %v1517 = vadd.f32 0.0, %v1516
  %1518 = vmatmul.f32.gmra.mxu0 %v193
  %v1519 = vpop.f32.mrf.mxu0
  %v1520 = vadd.f32 0.0, %v1519
  %1521 = vmatmul.f32.gmra.mxu0 %v196
  %v1522 = vpop.f32.mrf.mxu0
  %v1523 = vadd.f32 0.0, %v1522
  %1524 = vmatmul.f32.gmra.mxu0 %v199
  %v1525 = vpop.f32.mrf.mxu0
  %v1526 = vadd.f32 0.0, %v1525
  %1527 = vmatmul.f32.gmra.mxu0 %v202
  %v1528 = vpop.f32.mrf.mxu0
  %v1529 = vadd.f32 0.0, %v1528
  %1530 = vmatmul.f32.gmra.mxu0 %v205
  %v1531 = vpop.f32.mrf.mxu0
  %v1532 = vadd.f32 0.0, %v1531
  %1533 = vmatmul.f32.gmra.mxu0 %v208
  %v1534 = vpop.f32.mrf.mxu0
  %v1535 = vadd.f32 0.0, %v1534
  %1536 = vmatmul.f32.gmra.mxu0 %v211
  %v1537 = vpop.f32.mrf.mxu0
  %v1538 = vadd.f32 0.0, %v1537
  %1539 = vdwg.mxu0
  %1540 = vmatpush.msra.mxu0 0.0
  %1541 = vmatpush.msra.mxu0 0.0
  %1542 = vmatpush.msra.mxu0 0.0
  %1543 = vmatpush.msra.mxu0 0.0
  %1544 = vmatpush.msra.mxu0 0.0
  %1545 = vmatpush.msra.mxu0 0.0
  %1546 = vmatpush.msra.mxu0 0.0
  %1547 = vmatpush.msra.mxu0 0.0
  %1548 = vmatpush.msra.mxu0 0.0
  %1549 = vmatpush.msra.mxu0 0.0
  %1550 = vmatpush.msra.mxu0 0.0
  %1551 = vmatpush.msra.mxu0 %v305
  %1552 = vmatpush.msra.mxu0 %v154
  %1553 = vmatpush.msra.mxu0 %v122
  %1554 = vmatpush.msra.mxu0 %v90
  %1555 = vmatpush.msra.mxu0 %v58
  %1556 = vmatmul.f32.gmra.mxu0 %v190
  %v1557 = vpop.f32.mrf.mxu0
  %v1558 = vadd.f32 0.0, %v1557
  %1559 = vmatmul.f32.gmra.mxu0 %v193
  %v1560 = vpop.f32.mrf.mxu0
  %v1561 = vadd.f32 0.0, %v1560
  %1562 = vmatmul.f32.gmra.mxu0 %v196
  %v1563 = vpop.f32.mrf.mxu0
  %v1564 = vadd.f32 0.0, %v1563
  %1565 = vmatmul.f32.gmra.mxu0 %v199
  %v1566 = vpop.f32.mrf.mxu0
  %v1567 = vadd.f32 0.0, %v1566
  %1568 = vmatmul.f32.gmra.mxu0 %v202
  %v1569 = vpop.f32.mrf.mxu0
  %v1570 = vadd.f32 0.0, %v1569
  %1571 = vmatmul.f32.gmra.mxu0 %v205
  %v1572 = vpop.f32.mrf.mxu0
  %v1573 = vadd.f32 0.0, %v1572
  %1574 = vmatmul.f32.gmra.mxu0 %v208
  %v1575 = vpop.f32.mrf.mxu0
  %v1576 = vadd.f32 0.0, %v1575
  %1577 = vmatmul.f32.gmra.mxu0 %v211
  %v1578 = vpop.f32.mrf.mxu0
  %v1579 = vadd.f32 0.0, %v1578
  %1580 = vdwg.mxu0
  %1581 = vmatpush.msra.mxu0 0.0
  %1582 = vmatpush.msra.mxu0 0.0
  %1583 = vmatpush.msra.mxu0 0.0
  %1584 = vmatpush.msra.mxu0 0.0
  %1585 = vmatpush.msra.mxu0 0.0
  %1586 = vmatpush.msra.mxu0 0.0
  %1587 = vmatpush.msra.mxu0 0.0
  %1588 = vmatpush.msra.mxu0 0.0
  %1589 = vmatpush.msra.mxu0 0.0
  %1590 = vmatpush.msra.mxu0 0.0
  %1591 = vmatpush.msra.mxu0 0.0
  %1592 = vmatpush.msra.mxu0 %v308
  %1593 = vmatpush.msra.mxu0 %v155
  %1594 = vmatpush.msra.mxu0 %v123
  %1595 = vmatpush.msra.mxu0 %v91
  %1596 = vmatpush.msra.mxu0 %v59
  %1597 = vmatmul.f32.gmra.mxu0 %v190
  %v1598 = vpop.f32.mrf.mxu0
  %v1599 = vadd.f32 0.0, %v1598
  %1600 = vmatmul.f32.gmra.mxu0 %v193
  %v1601 = vpop.f32.mrf.mxu0
  %v1602 = vadd.f32 0.0, %v1601
  %1603 = vmatmul.f32.gmra.mxu0 %v196
  %v1604 = vpop.f32.mrf.mxu0
  %v1605 = vadd.f32 0.0, %v1604
  %1606 = vmatmul.f32.gmra.mxu0 %v199
  %v1607 = vpop.f32.mrf.mxu0
  %v1608 = vadd.f32 0.0, %v1607
  %1609 = vmatmul.f32.gmra.mxu0 %v202
  %v1610 = vpop.f32.mrf.mxu0
  %v1611 = vadd.f32 0.0, %v1610
  %1612 = vmatmul.f32.gmra.mxu0 %v205
  %v1613 = vpop.f32.mrf.mxu0
  %v1614 = vadd.f32 0.0, %v1613
  %1615 = vmatmul.f32.gmra.mxu0 %v208
  %v1616 = vpop.f32.mrf.mxu0
  %v1617 = vadd.f32 0.0, %v1616
  %1618 = vmatmul.f32.gmra.mxu0 %v211
  %v1619 = vpop.f32.mrf.mxu0
  %v1620 = vadd.f32 0.0, %v1619
  %1621 = vdwg.mxu0
  %1622 = vst [vmem:[#allocation2] sm:$0xff] %v328
  %1623 = vst [vmem:[#allocation2 + $0x8] sm:$0xff] %v369
  %1624 = vst [vmem:[#allocation2 + $0x10] sm:$0xff] %v410
  %1625 = vst [vmem:[#allocation2 + $0x18] sm:$0xff] %v451
  %1626 = vst [vmem:[#allocation2 + $0x20] sm:$0xff] %v492
  %1627 = vst [vmem:[#allocation2 + $0x28] sm:$0xff] %v533
  %1628 = vst [vmem:[#allocation2 + $0x30] sm:$0xff] %v574
  %1629 = vst [vmem:[#allocation2 + $0x38] sm:$0xff] %v615
  %1630 = vst [vmem:[#allocation2 + $0x40] sm:$0xff] %v656
  %1631 = vst [vmem:[#allocation2 + $0x48] sm:$0xff] %v697
  %1632 = vst [vmem:[#allocation2 + $0x50] sm:$0xff] %v738
  %1633 = vst [vmem:[#allocation2 + $0x58] sm:$0xff] %v779
  %1634 = vst [vmem:[#allocation2 + $0x60] sm:$0xff] %v820
  %1635 = vst [vmem:[#allocation2 + $0x68] sm:$0xff] %v861
  %1636 = vst [vmem:[#allocation2 + $0x70] sm:$0xff] %v902
  %1637 = vst [vmem:[#allocation2 + $0x78] sm:$0xff] %v943
  %1638 = vst [vmem:[#allocation2 + $0x80] sm:$0xff] %v984
  %1639 = vst [vmem:[#allocation2 + $0x88] sm:$0xff] %v1025
  %1640 = vst [vmem:[#allocation2 + $0x90] sm:$0xff] %v1066
  %1641 = vst [vmem:[#allocation2 + $0x98] sm:$0xff] %v1107
  %1642 = vst [vmem:[#allocation2 + $0xa0] sm:$0xff] %v1148
  %1643 = vst [vmem:[#allocation2 + $0xa8] sm:$0xff] %v1189
  %1644 = vst [vmem:[#allocation2 + $0xb0] sm:$0xff] %v1230
  %1645 = vst [vmem:[#allocation2 + $0xb8] sm:$0xff] %v1271
  %1646 = vst [vmem:[#allocation2 + $0xc0] sm:$0xff] %v1312
  %1647 = vst [vmem:[#allocation2 + $0xc8] sm:$0xff] %v1353
  %1648 = vst [vmem:[#allocation2 + $0xd0] sm:$0xff] %v1394
  %1649 = vst [vmem:[#allocation2 + $0xd8] sm:$0xff] %v1435
  %1650 = vst [vmem:[#allocation2 + $0xe0] sm:$0xff] %v1476
  %1651 = vst [vmem:[#allocation2 + $0xe8] sm:$0xff] %v1517
  %1652 = vst [vmem:[#allocation2 + $0xf0] sm:$0xff] %v1558
  %1653 = vst [vmem:[#allocation2 + $0xf8] sm:$0xff] %v1599
  %1654 = vst [vmem:[#allocation2 + $0x100] sm:$0xff] %v331
  %1655 = vst [vmem:[#allocation2 + $0x108] sm:$0xff] %v372
  %1656 = vst [vmem:[#allocation2 + $0x110] sm:$0xff] %v413
  %1657 = vst [vmem:[#allocation2 + $0x118] sm:$0xff] %v454
  %1658 = vst [vmem:[#allocation2 + $0x120] sm:$0xff] %v495
  %1659 = vst [vmem:[#allocation2 + $0x128] sm:$0xff] %v536
  %1660 = vst [vmem:[#allocation2 + $0x130] sm:$0xff] %v577
  %1661 = vst [vmem:[#allocation2 + $0x138] sm:$0xff] %v618
  %1662 = vst [vmem:[#allocation2 + $0x140] sm:$0xff] %v659
  %1663 = vst [vmem:[#allocation2 + $0x148] sm:$0xff] %v700
  %1664 = vst [vmem:[#allocation2 + $0x150] sm:$0xff] %v741
  %1665 = vst [vmem:[#allocation2 + $0x158] sm:$0xff] %v782
  %1666 = vst [vmem:[#allocation2 + $0x160] sm:$0xff] %v823
  %1667 = vst [vmem:[#allocation2 + $0x168] sm:$0xff] %v864
  %1668 = vst [vmem:[#allocation2 + $0x170] sm:$0xff] %v905
  %1669 = vst [vmem:[#allocation2 + $0x178] sm:$0xff] %v946
  %1670 = vst [vmem:[#allocation2 + $0x180] sm:$0xff] %v987
  %1671 = vst [vmem:[#allocation2 + $0x188] sm:$0xff] %v1028
  %1672 = vst [vmem:[#allocation2 + $0x190] sm:$0xff] %v1069
  %1673 = vst [vmem:[#allocation2 + $0x198] sm:$0xff] %v1110
  %1674 = vst [vmem:[#allocation2 + $0x1a0] sm:$0xff] %v1151
  %1675 = vst [vmem:[#allocation2 + $0x1a8] sm:$0xff] %v1192
  %1676 = vst [vmem:[#allocation2 + $0x1b0] sm:$0xff] %v1233
  %1677 = vst [vmem:[#allocation2 + $0x1b8] sm:$0xff] %v1274
  %1678 = vst [vmem:[#allocation2 + $0x1c0] sm:$0xff] %v1315
  %1679 = vst [vmem:[#allocation2 + $0x1c8] sm:$0xff] %v1356
  %1680 = vst [vmem:[#allocation2 + $0x1d0] sm:$0xff] %v1397
  %1681 = vst [vmem:[#allocation2 + $0x1d8] sm:$0xff] %v1438
  %1682 = vst [vmem:[#allocation2 + $0x1e0] sm:$0xff] %v1479
  %1683 = vst [vmem:[#allocation2 + $0x1e8] sm:$0xff] %v1520
  %1684 = vst [vmem:[#allocation2 + $0x1f0] sm:$0xff] %v1561
  %1685 = vst [vmem:[#allocation2 + $0x1f8] sm:$0xff] %v1602
  %1686 = vst [vmem:[#allocation2 + $0x200] sm:$0xff] %v334
  %1687 = vst [vmem:[#allocation2 + $0x208] sm:$0xff] %v375
  %1688 = vst [vmem:[#allocation2 + $0x210] sm:$0xff] %v416
  %1689 = vst [vmem:[#allocation2 + $0x218] sm:$0xff] %v457
  %1690 = vst [vmem:[#allocation2 + $0x220] sm:$0xff] %v498
  %1691 = vst [vmem:[#allocation2 + $0x228] sm:$0xff] %v539
  %1692 = vst [vmem:[#allocation2 + $0x230] sm:$0xff] %v580
  %1693 = vst [vmem:[#allocation2 + $0x238] sm:$0xff] %v621
  %1694 = vst [vmem:[#allocation2 + $0x240] sm:$0xff] %v662
  %1695 = vst [vmem:[#allocation2 + $0x248] sm:$0xff] %v703
  %1696 = vst [vmem:[#allocation2 + $0x250] sm:$0xff] %v744
  %1697 = vst [vmem:[#allocation2 + $0x258] sm:$0xff] %v785
  %1698 = vst [vmem:[#allocation2 + $0x260] sm:$0xff] %v826
  %1699 = vst [vmem:[#allocation2 + $0x268] sm:$0xff] %v867
  %1700 = vst [vmem:[#allocation2 + $0x270] sm:$0xff] %v908
  %1701 = vst [vmem:[#allocation2 + $0x278] sm:$0xff] %v949
  %1702 = vst [vmem:[#allocation2 + $0x280] sm:$0xff] %v990
  %1703 = vst [vmem:[#allocation2 + $0x288] sm:$0xff] %v1031
  %1704 = vst [vmem:[#allocation2 + $0x290] sm:$0xff] %v1072
  %1705 = vst [vmem:[#allocation2 + $0x298] sm:$0xff] %v1113
  %1706 = vst [vmem:[#allocation2 + $0x2a0] sm:$0xff] %v1154
  %1707 = vst [vmem:[#allocation2 + $0x2a8] sm:$0xff] %v1195
  %1708 = vst [vmem:[#allocation2 + $0x2b0] sm:$0xff] %v1236
  %1709 = vst [vmem:[#allocation2 + $0x2b8] sm:$0xff] %v1277
  %1710 = vst [vmem:[#allocation2 + $0x2c0] sm:$0xff] %v1318
  %1711 = vst [vmem:[#allocation2 + $0x2c8] sm:$0xff] %v1359
  %1712 = vst [vmem:[#allocation2 + $0x2d0] sm:$0xff] %v1400
  %1713 = vst [vmem:[#allocation2 + $0x2d8] sm:$0xff] %v1441
  %1714 = vst [vmem:[#allocation2 + $0x2e0] sm:$0xff] %v1482
  %1715 = vst [vmem:[#allocation2 + $0x2e8] sm:$0xff] %v1523
  %1716 = vst [vmem:[#allocation2 + $0x2f0] sm:$0xff] %v1564
  %1717 = vst [vmem:[#allocation2 + $0x2f8] sm:$0xff] %v1605
  %1718 = vst [vmem:[#allocation2 + $0x300] sm:$0xff] %v337
  %1719 = vst [vmem:[#allocation2 + $0x308] sm:$0xff] %v378
  %1720 = vst [vmem:[#allocation2 + $0x310] sm:$0xff] %v419
  %1721 = vst [vmem:[#allocation2 + $0x318] sm:$0xff] %v460
  %1722 = vst [vmem:[#allocation2 + $0x320] sm:$0xff] %v501
  %1723 = vst [vmem:[#allocation2 + $0x328] sm:$0xff] %v542
  %1724 = vst [vmem:[#allocation2 + $0x330] sm:$0xff] %v583
  %1725 = vst [vmem:[#allocation2 + $0x338] sm:$0xff] %v624
  %1726 = vst [vmem:[#allocation2 + $0x340] sm:$0xff] %v665
  %1727 = vst [vmem:[#allocation2 + $0x348] sm:$0xff] %v706
  %1728 = vst [vmem:[#allocation2 + $0x350] sm:$0xff] %v747
  %1729 = vst [vmem:[#allocation2 + $0x358] sm:$0xff] %v788
  %1730 = vst [vmem:[#allocation2 + $0x360] sm:$0xff] %v829
  %1731 = vst [vmem:[#allocation2 + $0x368] sm:$0xff] %v870
  %1732 = vst [vmem:[#allocation2 + $0x370] sm:$0xff] %v911
  %1733 = vst [vmem:[#allocation2 + $0x378] sm:$0xff] %v952
  %1734 = vst [vmem:[#allocation2 + $0x380] sm:$0xff] %v993
  %1735 = vst [vmem:[#allocation2 + $0x388] sm:$0xff] %v1034
  %1736 = vst [vmem:[#allocation2 + $0x390] sm:$0xff] %v1075
  %1737 = vst [vmem:[#allocation2 + $0x398] sm:$0xff] %v1116
  %1738 = vst [vmem:[#allocation2 + $0x3a0] sm:$0xff] %v1157
  %1739 = vst [vmem:[#allocation2 + $0x3a8] sm:$0xff] %v1198
  %1740 = vst [vmem:[#allocation2 + $0x3b0] sm:$0xff] %v1239
  %1741 = vst [vmem:[#allocation2 + $0x3b8] sm:$0xff] %v1280
  %1742 = vst [vmem:[#allocation2 + $0x3c0] sm:$0xff] %v1321
  %1743 = vst [vmem:[#allocation2 + $0x3c8] sm:$0xff] %v1362
  %1744 = vst [vmem:[#allocation2 + $0x3d0] sm:$0xff] %v1403
  %1745 = vst [vmem:[#allocation2 + $0x3d8] sm:$0xff] %v1444
  %1746 = vst [vmem:[#allocation2 + $0x3e0] sm:$0xff] %v1485
  %1747 = vst [vmem:[#allocation2 + $0x3e8] sm:$0xff] %v1526
  %1748 = vst [vmem:[#allocation2 + $0x3f0] sm:$0xff] %v1567
  %1749 = vst [vmem:[#allocation2 + $0x3f8] sm:$0xff] %v1608
  %1750 = vst [vmem:[#allocation2 + $0x400] sm:$0xff] %v340
  %1751 = vst [vmem:[#allocation2 + $0x408] sm:$0xff] %v381
  %1752 = vst [vmem:[#allocation2 + $0x410] sm:$0xff] %v422
  %1753 = vst [vmem:[#allocation2 + $0x418] sm:$0xff] %v463
  %1754 = vst [vmem:[#allocation2 + $0x420] sm:$0xff] %v504
  %1755 = vst [vmem:[#allocation2 + $0x428] sm:$0xff] %v545
  %1756 = vst [vmem:[#allocation2 + $0x430] sm:$0xff] %v586
  %1757 = vst [vmem:[#allocation2 + $0x438] sm:$0xff] %v627
  %1758 = vst [vmem:[#allocation2 + $0x440] sm:$0xff] %v668
  %1759 = vst [vmem:[#allocation2 + $0x448] sm:$0xff] %v709
  %1760 = vst [vmem:[#allocation2 + $0x450] sm:$0xff] %v750
  %1761 = vst [vmem:[#allocation2 + $0x458] sm:$0xff] %v791
  %1762 = vst [vmem:[#allocation2 + $0x460] sm:$0xff] %v832
  %1763 = vst [vmem:[#allocation2 + $0x468] sm:$0xff] %v873
  %1764 = vst [vmem:[#allocation2 + $0x470] sm:$0xff] %v914
  %1765 = vst [vmem:[#allocation2 + $0x478] sm:$0xff] %v955
  %1766 = vst [vmem:[#allocation2 + $0x480] sm:$0xff] %v996
  %1767 = vst [vmem:[#allocation2 + $0x488] sm:$0xff] %v1037
  %1768 = vst [vmem:[#allocation2 + $0x490] sm:$0xff] %v1078
  %1769 = vst [vmem:[#allocation2 + $0x498] sm:$0xff] %v1119
  %1770 = vst [vmem:[#allocation2 + $0x4a0] sm:$0xff] %v1160
  %1771 = vst [vmem:[#allocation2 + $0x4a8] sm:$0xff] %v1201
  %1772 = vst [vmem:[#allocation2 + $0x4b0] sm:$0xff] %v1242
  %1773 = vst [vmem:[#allocation2 + $0x4b8] sm:$0xff] %v1283
  %1774 = vst [vmem:[#allocation2 + $0x4c0] sm:$0xff] %v1324
  %1775 = vst [vmem:[#allocation2 + $0x4c8] sm:$0xff] %v1365
  %1776 = vst [vmem:[#allocation2 + $0x4d0] sm:$0xff] %v1406
  %1777 = vst [vmem:[#allocation2 + $0x4d8] sm:$0xff] %v1447
  %1778 = vst [vmem:[#allocation2 + $0x4e0] sm:$0xff] %v1488
  %1779 = vst [vmem:[#allocation2 + $0x4e8] sm:$0xff] %v1529
  %1780 = vst [vmem:[#allocation2 + $0x4f0] sm:$0xff] %v1570
  %1781 = vst [vmem:[#allocation2 + $0x4f8] sm:$0xff] %v1611
  %1782 = vst [vmem:[#allocation2 + $0x500] sm:$0xff] %v343
  %1783 = vst [vmem:[#allocation2 + $0x508] sm:$0xff] %v384
  %1784 = vst [vmem:[#allocation2 + $0x510] sm:$0xff] %v425
  %1785 = vst [vmem:[#allocation2 + $0x518] sm:$0xff] %v466
  %1786 = vst [vmem:[#allocation2 + $0x520] sm:$0xff] %v507
  %1787 = vst [vmem:[#allocation2 + $0x528] sm:$0xff] %v548
  %1788 = vst [vmem:[#allocation2 + $0x530] sm:$0xff] %v589
  %1789 = vst [vmem:[#allocation2 + $0x538] sm:$0xff] %v630
  %1790 = vst [vmem:[#allocation2 + $0x540] sm:$0xff] %v671
  %1791 = vst [vmem:[#allocation2 + $0x548] sm:$0xff] %v712
  %1792 = vst [vmem:[#allocation2 + $0x550] sm:$0xff] %v753
  %1793 = vst [vmem:[#allocation2 + $0x558] sm:$0xff] %v794
  %1794 = vst [vmem:[#allocation2 + $0x560] sm:$0xff] %v835
  %1795 = vst [vmem:[#allocation2 + $0x568] sm:$0xff] %v876
  %1796 = vst [vmem:[#allocation2 + $0x570] sm:$0xff] %v917
  %1797 = vst [vmem:[#allocation2 + $0x578] sm:$0xff] %v958
  %1798 = vst [vmem:[#allocation2 + $0x580] sm:$0xff] %v999
  %1799 = vst [vmem:[#allocation2 + $0x588] sm:$0xff] %v1040
  %1800 = vst [vmem:[#allocation2 + $0x590] sm:$0xff] %v1081
  %1801 = vst [vmem:[#allocation2 + $0x598] sm:$0xff] %v1122
  %1802 = vst [vmem:[#allocation2 + $0x5a0] sm:$0xff] %v1163
  %1803 = vst [vmem:[#allocation2 + $0x5a8] sm:$0xff] %v1204
  %1804 = vst [vmem:[#allocation2 + $0x5b0] sm:$0xff] %v1245
  %1805 = vst [vmem:[#allocation2 + $0x5b8] sm:$0xff] %v1286
  %1806 = vst [vmem:[#allocation2 + $0x5c0] sm:$0xff] %v1327
  %1807 = vst [vmem:[#allocation2 + $0x5c8] sm:$0xff] %v1368
  %1808 = vst [vmem:[#allocation2 + $0x5d0] sm:$0xff] %v1409
  %1809 = vst [vmem:[#allocation2 + $0x5d8] sm:$0xff] %v1450
  %1810 = vst [vmem:[#allocation2 + $0x5e0] sm:$0xff] %v1491
  %1811 = vst [vmem:[#allocation2 + $0x5e8] sm:$0xff] %v1532
  %1812 = vst [vmem:[#allocation2 + $0x5f0] sm:$0xff] %v1573
  %1813 = vst [vmem:[#allocation2 + $0x5f8] sm:$0xff] %v1614
  %1814 = vst [vmem:[#allocation2 + $0x600] sm:$0xff] %v346
  %1815 = vst [vmem:[#allocation2 + $0x608] sm:$0xff] %v387
  %1816 = vst [vmem:[#allocation2 + $0x610] sm:$0xff] %v428
  %1817 = vst [vmem:[#allocation2 + $0x618] sm:$0xff] %v469
  %1818 = vst [vmem:[#allocation2 + $0x620] sm:$0xff] %v510
  %1819 = vst [vmem:[#allocation2 + $0x628] sm:$0xff] %v551
  %1820 = vst [vmem:[#allocation2 + $0x630] sm:$0xff] %v592
  %1821 = vst [vmem:[#allocation2 + $0x638] sm:$0xff] %v633
  %1822 = vst [vmem:[#allocation2 + $0x640] sm:$0xff] %v674
  %1823 = vst [vmem:[#allocation2 + $0x648] sm:$0xff] %v715
  %1824 = vst [vmem:[#allocation2 + $0x650] sm:$0xff] %v756
  %1825 = vst [vmem:[#allocation2 + $0x658] sm:$0xff] %v797
  %1826 = vst [vmem:[#allocation2 + $0x660] sm:$0xff] %v838
  %1827 = vst [vmem:[#allocation2 + $0x668] sm:$0xff] %v879
  %1828 = vst [vmem:[#allocation2 + $0x670] sm:$0xff] %v920
  %1829 = vst [vmem:[#allocation2 + $0x678] sm:$0xff] %v961
  %1830 = vst [vmem:[#allocation2 + $0x680] sm:$0xff] %v1002
  %1831 = vst [vmem:[#allocation2 + $0x688] sm:$0xff] %v1043
  %1832 = vst [vmem:[#allocation2 + $0x690] sm:$0xff] %v1084
  %1833 = vst [vmem:[#allocation2 + $0x698] sm:$0xff] %v1125
  %1834 = vst [vmem:[#allocation2 + $0x6a0] sm:$0xff] %v1166
  %1835 = vst [vmem:[#allocation2 + $0x6a8] sm:$0xff] %v1207
  %1836 = vst [vmem:[#allocation2 + $0x6b0] sm:$0xff] %v1248
  %1837 = vst [vmem:[#allocation2 + $0x6b8] sm:$0xff] %v1289
  %1838 = vst [vmem:[#allocation2 + $0x6c0] sm:$0xff] %v1330
  %1839 = vst [vmem:[#allocation2 + $0x6c8] sm:$0xff] %v1371
  %1840 = vst [vmem:[#allocation2 + $0x6d0] sm:$0xff] %v1412
  %1841 = vst [vmem:[#allocation2 + $0x6d8] sm:$0xff] %v1453
  %1842 = vst [vmem:[#allocation2 + $0x6e0] sm:$0xff] %v1494
  %1843 = vst [vmem:[#allocation2 + $0x6e8] sm:$0xff] %v1535
  %1844 = vst [vmem:[#allocation2 + $0x6f0] sm:$0xff] %v1576
  %1845 = vst [vmem:[#allocation2 + $0x6f8] sm:$0xff] %v1617
  %1846 = vst [vmem:[#allocation2 + $0x700] sm:$0xff] %v349
  %1847 = vst [vmem:[#allocation2 + $0x708] sm:$0xff] %v390
  %1848 = vst [vmem:[#allocation2 + $0x710] sm:$0xff] %v431
  %1849 = vst [vmem:[#allocation2 + $0x718] sm:$0xff] %v472
  %1850 = vst [vmem:[#allocation2 + $0x720] sm:$0xff] %v513
  %1851 = vst [vmem:[#allocation2 + $0x728] sm:$0xff] %v554
  %1852 = vst [vmem:[#allocation2 + $0x730] sm:$0xff] %v595
  %1853 = vst [vmem:[#allocation2 + $0x738] sm:$0xff] %v636
  %1854 = vst [vmem:[#allocation2 + $0x740] sm:$0xff] %v677
  %1855 = vst [vmem:[#allocation2 + $0x748] sm:$0xff] %v718
  %1856 = vst [vmem:[#allocation2 + $0x750] sm:$0xff] %v759
  %1857 = vst [vmem:[#allocation2 + $0x758] sm:$0xff] %v800
  %1858 = vst [vmem:[#allocation2 + $0x760] sm:$0xff] %v841
  %1859 = vst [vmem:[#allocation2 + $0x768] sm:$0xff] %v882
  %1860 = vst [vmem:[#allocation2 + $0x770] sm:$0xff] %v923
  %1861 = vst [vmem:[#allocation2 + $0x778] sm:$0xff] %v964
  %1862 = vst [vmem:[#allocation2 + $0x780] sm:$0xff] %v1005
  %1863 = vst [vmem:[#allocation2 + $0x788] sm:$0xff] %v1046
  %1864 = vst [vmem:[#allocation2 + $0x790] sm:$0xff] %v1087
  %1865 = vst [vmem:[#allocation2 + $0x798] sm:$0xff] %v1128
  %1866 = vst [vmem:[#allocation2 + $0x7a0] sm:$0xff] %v1169
  %1867 = vst [vmem:[#allocation2 + $0x7a8] sm:$0xff] %v1210
  %1868 = vst [vmem:[#allocation2 + $0x7b0] sm:$0xff] %v1251
  %1869 = vst [vmem:[#allocation2 + $0x7b8] sm:$0xff] %v1292
  %1870 = vst [vmem:[#allocation2 + $0x7c0] sm:$0xff] %v1333
  %1871 = vst [vmem:[#allocation2 + $0x7c8] sm:$0xff] %v1374
  %1872 = vst [vmem:[#allocation2 + $0x7d0] sm:$0xff] %v1415
  %1873 = vst [vmem:[#allocation2 + $0x7d8] sm:$0xff] %v1456
  %1874 = vst [vmem:[#allocation2 + $0x7e0] sm:$0xff] %v1497
  %1875 = vst [vmem:[#allocation2 + $0x7e8] sm:$0xff] %v1538
  %1876 = vst [vmem:[#allocation2 + $0x7f0] sm:$0xff] %v1579
  %1877 = vst [vmem:[#allocation2 + $0x7f8] sm:$0xff] %v1620
  %1878 = vst [vmem:[#allocation3] sm:$0xff] 0.0
  %1879 = vst [vmem:[#allocation3 + $0x8] sm:$0xff] 0.0
  %1880 = vst [vmem:[#allocation3 + $0x80] sm:$0xff] 0.0
  %1881 = vst [vmem:[#allocation3 + $0x88] sm:$0xff] 0.0
  %1882 = vst [vmem:[#allocation3 + $0x270] sm:$0xff] 0.0
  %1883 = vst [vmem:[#allocation3 + $0x278] sm:$0xff] 0.0
  %1884 = vst [vmem:[#allocation3 + $0x2f0] sm:$0xff] 0.0
  %1885 = vst [vmem:[#allocation3 + $0x2f8] sm:$0xff] 0.0
  %1886 = vst [vmem:[#allocation3 + $0x300] sm:$0xff] 0.0
  %1887 = vst [vmem:[#allocation3 + $0x308] sm:$0xff] 0.0
  %1888 = vst [vmem:[#allocation3 + $0x310] sm:$0xff] 0.0
  %1889 = vst [vmem:[#allocation3 + $0x318] sm:$0xff] 0.0
  %1890 = vst [vmem:[#allocation3 + $0x380] sm:$0xff] 0.0
  %1891 = vst [vmem:[#allocation3 + $0x388] sm:$0xff] 0.0
  %1892 = vst [vmem:[#allocation3 + $0x390] sm:$0xff] 0.0
  %1893 = vst [vmem:[#allocation3 + $0x398] sm:$0xff] 0.0
  %1894 = vst [vmem:[#allocation3 + $0x560] sm:$0xff] 0.0
  %1895 = vst [vmem:[#allocation3 + $0x568] sm:$0xff] 0.0
  %1896 = vst [vmem:[#allocation3 + $0x570] sm:$0xff] 0.0
  %1897 = vst [vmem:[#allocation3 + $0x578] sm:$0xff] 0.0
  %1898 = vst [vmem:[#allocation3 + $0x5e0] sm:$0xff] 0.0
  %1899 = vst [vmem:[#allocation3 + $0x5e8] sm:$0xff] 0.0
  %1900 = vst [vmem:[#allocation3 + $0x5f0] sm:$0xff] 0.0
  %1901 = vst [vmem:[#allocation3 + $0x5f8] sm:$0xff] 0.0
  %1902 = vst [vmem:[#allocation3 + $0x600] sm:$0xff] 0.0
  %1903 = vst [vmem:[#allocation3 + $0x608] sm:$0xff] 0.0
  %1904 = vst [vmem:[#allocation3 + $0x610] sm:$0xff] 0.0
  %1905 = vst [vmem:[#allocation3 + $0x618] sm:$0xff] 0.0
  %1906 = vst [vmem:[#allocation3 + $0x620] sm:$0xff] 0.0
  %1907 = vst [vmem:[#allocation3 + $0x628] sm:$0xff] 0.0
  %1908 = vst [vmem:[#allocation3 + $0x630] sm:$0xff] 0.0
  %1909 = vst [vmem:[#allocation3 + $0x638] sm:$0xff] 0.0
  %1910 = vst [vmem:[#allocation3 + $0x680] sm:$0xff] 0.0
  %1911 = vst [vmem:[#allocation3 + $0x688] sm:$0xff] 0.0
  %1912 = vst [vmem:[#allocation3 + $0x690] sm:$0xff] 0.0
  %1913 = vst [vmem:[#allocation3 + $0x698] sm:$0xff] 0.0
  %1914 = vst [vmem:[#allocation3 + $0x6a0] sm:$0xff] 0.0
  %1915 = vst [vmem:[#allocation3 + $0x6a8] sm:$0xff] 0.0
  %1916 = vst [vmem:[#allocation3 + $0x6b0] sm:$0xff] 0.0
  %1917 = vst [vmem:[#allocation3 + $0x6b8] sm:$0xff] 0.0
  %1918 = vst [vmem:[#allocation3 + $0x840] sm:$0xff] 0.0
  %1919 = vst [vmem:[#allocation3 + $0x848] sm:$0xff] 0.0
  %1920 = vst [vmem:[#allocation3 + $0x850] sm:$0xff] 0.0
  %1921 = vst [vmem:[#allocation3 + $0x858] sm:$0xff] 0.0
  %1922 = vst [vmem:[#allocation3 + $0x860] sm:$0xff] 0.0
  %1923 = vst [vmem:[#allocation3 + $0x868] sm:$0xff] 0.0
  %1924 = vst [vmem:[#allocation3 + $0x870] sm:$0xff] 0.0
  %1925 = vst [vmem:[#allocation3 + $0x878] sm:$0xff] 0.0
  %1926 = vst [vmem:[#allocation3 + $0x8c0] sm:$0xff] 0.0
  %1927 = vst [vmem:[#allocation3 + $0x8c8] sm:$0xff] 0.0
  %1928 = vst [vmem:[#allocation3 + $0x8d0] sm:$0xff] 0.0
  %1929 = vst [vmem:[#allocation3 + $0x8d8] sm:$0xff] 0.0
  %1930 = vst [vmem:[#allocation3 + $0x8e0] sm:$0xff] 0.0
  %1931 = vst [vmem:[#allocation3 + $0x8e8] sm:$0xff] 0.0
  %1932 = vst [vmem:[#allocation3 + $0x8f0] sm:$0xff] 0.0
  %1933 = vst [vmem:[#allocation3 + $0x8f8] sm:$0xff] 0.0
  %1934 = vst [vmem:[#allocation3 + $0x900] sm:$0xff] 0.0
  %1935 = vst [vmem:[#allocation3 + $0x908] sm:$0xff] 0.0
  %1936 = vst [vmem:[#allocation3 + $0x910] sm:$0xff] 0.0
  %1937 = vst [vmem:[#allocation3 + $0x918] sm:$0xff] 0.0
  %1938 = vst [vmem:[#allocation3 + $0x920] sm:$0xff] 0.0
  %1939 = vst [vmem:[#allocation3 + $0x928] sm:$0xff] 0.0
  %1940 = vst [vmem:[#allocation3 + $0x930] sm:$0xff] 0.0
  %1941 = vst [vmem:[#allocation3 + $0x938] sm:$0xff] 0.0
  %1942 = vst [vmem:[#allocation3 + $0x940] sm:$0xff] 0.0
  %1943 = vst [vmem:[#allocation3 + $0x948] sm:$0xff] 0.0
  %1944 = vst [vmem:[#allocation3 + $0x950] sm:$0xff] 0.0
  %1945 = vst [vmem:[#allocation3 + $0x958] sm:$0xff] 0.0
  %1946 = vst [vmem:[#allocation3 + $0x960] sm:$0xff] 0.0
  %1947 = vst [vmem:[#allocation3 + $0x968] sm:$0xff] 0.0
  %1948 = vst [vmem:[#allocation3 + $0x970] sm:$0xff] 0.0
  %1949 = vst [vmem:[#allocation3 + $0x978] sm:$0xff] 0.0
  %1950 = vst [vmem:[#allocation3 + $0x980] sm:$0xff] 0.0
  %1951 = vst [vmem:[#allocation3 + $0x988] sm:$0xff] 0.0
  %1952 = vst [vmem:[#allocation3 + $0x990] sm:$0xff] 0.0
  %1953 = vst [vmem:[#allocation3 + $0x998] sm:$0xff] 0.0
  %1954 = vst [vmem:[#allocation3 + $0x9a0] sm:$0xff] 0.0
  %1955 = vst [vmem:[#allocation3 + $0x9a8] sm:$0xff] 0.0
  %1956 = vst [vmem:[#allocation3 + $0x9b0] sm:$0xff] 0.0
  %1957 = vst [vmem:[#allocation3 + $0x9b8] sm:$0xff] 0.0
  %1958 = vst [vmem:[#allocation3 + $0x9c0] sm:$0xff] 0.0
  %1959 = vst [vmem:[#allocation3 + $0x9c8] sm:$0xff] 0.0
  %1960 = vst [vmem:[#allocation3 + $0x9d0] sm:$0xff] 0.0
  %1961 = vst [vmem:[#allocation3 + $0x9d8] sm:$0xff] 0.0
  %1962 = vst [vmem:[#allocation3 + $0x9e0] sm:$0xff] 0.0
  %1963 = vst [vmem:[#allocation3 + $0x9e8] sm:$0xff] 0.0
  %1964 = vst [vmem:[#allocation3 + $0x9f0] sm:$0xff] 0.0
  %1965 = vst [vmem:[#allocation3 + $0x9f8] sm:$0xff] 0.0
  %1966 = vst [vmem:[#allocation3 + $0xb00] sm:$0xff] 0.0
  %1967 = vst [vmem:[#allocation3 + $0xb08] sm:$0xff] 0.0
  %1968 = vst [vmem:[#allocation3 + $0xb10] sm:$0xff] 0.0
  %1969 = vst [vmem:[#allocation3 + $0xb18] sm:$0xff] 0.0
  %1970 = vst [vmem:[#allocation3 + $0xb20] sm:$0xff] 0.0
  %1971 = vst [vmem:[#allocation3 + $0xb28] sm:$0xff] 0.0
  %1972 = vst [vmem:[#allocation3 + $0xb30] sm:$0xff] 0.0
  %1973 = vst [vmem:[#allocation3 + $0xb38] sm:$0xff] 0.0
  %1974 = vst [vmem:[#allocation3 + $0xb40] sm:$0xff] 0.0
  %1975 = vst [vmem:[#allocation3 + $0xb48] sm:$0xff] 0.0
  %1976 = vst [vmem:[#allocation3 + $0xb50] sm:$0xff] 0.0
  %1977 = vst [vmem:[#allocation3 + $0xb58] sm:$0xff] 0.0
  %1978 = vst [vmem:[#allocation3 + $0xb60] sm:$0xff] 0.0
  %1979 = vst [vmem:[#allocation3 + $0xb68] sm:$0xff] 0.0
  %1980 = vst [vmem:[#allocation3 + $0xb70] sm:$0xff] 0.0
  %1981 = vst [vmem:[#allocation3 + $0xb78] sm:$0xff] 0.0
  %1982 = vst [vmem:[#allocation3 + $0xb80] sm:$0xff] 0.0
  %1983 = vst [vmem:[#allocation3 + $0xb88] sm:$0xff] 0.0
  %1984 = vst [vmem:[#allocation3 + $0xb90] sm:$0xff] 0.0
  %1985 = vst [vmem:[#allocation3 + $0xb98] sm:$0xff] 0.0
  %1986 = vst [vmem:[#allocation3 + $0xba0] sm:$0xff] 0.0
  %1987 = vst [vmem:[#allocation3 + $0xba8] sm:$0xff] 0.0
  %1988 = vst [vmem:[#allocation3 + $0xbb0] sm:$0xff] 0.0
  %1989 = vst [vmem:[#allocation3 + $0xbb8] sm:$0xff] 0.0
  %1990 = vst [vmem:[#allocation3 + $0xbc0] sm:$0xff] 0.0
  %1991 = vst [vmem:[#allocation3 + $0xbc8] sm:$0xff] 0.0
  %1992 = vst [vmem:[#allocation3 + $0xbd0] sm:$0xff] 0.0
  %1993 = vst [vmem:[#allocation3 + $0xbd8] sm:$0xff] 0.0
  %1994 = vst [vmem:[#allocation3 + $0xbe0] sm:$0xff] 0.0
  %1995 = vst [vmem:[#allocation3 + $0xbe8] sm:$0xff] 0.0
  %1996 = vst [vmem:[#allocation3 + $0xbf0] sm:$0xff] 0.0
  %1997 = vst [vmem:[#allocation3 + $0xbf8] sm:$0xff] 0.0
  %v1998 = vld [vmem:[#allocation2] sm:$0xff]
  %v1999 = vld [vmem:[#allocation2 + $0x8] sm:$0xff]
  %v2000 = vld [vmem:[#allocation2 + $0x10] sm:$0xff]
  %v2001 = vld [vmem:[#allocation2 + $0x18] sm:$0xff]
  %v2002 = vld [vmem:[#allocation2 + $0x20] sm:$0xff]
  %v2003 = vld [vmem:[#allocation2 + $0x28] sm:$0xff]
  %v2004 = vld [vmem:[#allocation2 + $0x30] sm:$0xff]
  %v2005 = vld [vmem:[#allocation2 + $0x38] sm:$0xff]
  %v2006 = vld [vmem:[#allocation2 + $0x40] sm:$0xff]
  %v2007 = vld [vmem:[#allocation2 + $0x48] sm:$0xff]
  %v2008 = vld [vmem:[#allocation2 + $0x50] sm:$0xff]
  %v2009 = vld [vmem:[#allocation2 + $0x58] sm:$0xff]
  %v2010 = vld [vmem:[#allocation2 + $0x60] sm:$0xff]
  %v2011 = vld [vmem:[#allocation2 + $0x68] sm:$0xff]
  %v2012 = vld [vmem:[#allocation2 + $0x100] sm:$0xff]
  %v2013 = vld [vmem:[#allocation2 + $0x108] sm:$0xff]
  %v2014 = vld [vmem:[#allocation2 + $0x110] sm:$0xff]
  %v2015 = vld [vmem:[#allocation2 + $0x118] sm:$0xff]
  %v2016 = vld [vmem:[#allocation2 + $0x120] sm:$0xff]
  %v2017 = vld [vmem:[#allocation2 + $0x128] sm:$0xff]
  %v2018 = vld [vmem:[#allocation2 + $0x130] sm:$0xff]
  %v2019 = vld [vmem:[#allocation2 + $0x138] sm:$0xff]
  %v2020 = vld [vmem:[#allocation2 + $0x140] sm:$0xff]
  %v2021 = vld [vmem:[#allocation2 + $0x148] sm:$0xff]
  %v2022 = vld [vmem:[#allocation2 + $0x150] sm:$0xff]
  %v2023 = vld [vmem:[#allocation2 + $0x158] sm:$0xff]
  %v2024 = vld [vmem:[#allocation2 + $0x160] sm:$0xff]
  %v2025 = vld [vmem:[#allocation2 + $0x168] sm:$0xff]
  %2026 = vst [vmem:[#allocation3 + $0x10] sm:$0xff] %v1998
  %2027 = vst [vmem:[#allocation3 + $0x18] sm:$0xff] %v1999
  %2028 = vst [vmem:[#allocation3 + $0x20] sm:$0xff] %v2000
  %2029 = vst [vmem:[#allocation3 + $0x28] sm:$0xff] %v2001
  %2030 = vst [vmem:[#allocation3 + $0x30] sm:$0xff] %v2002
  %2031 = vst [vmem:[#allocation3 + $0x38] sm:$0xff] %v2003
  %2032 = vst [vmem:[#allocation3 + $0x40] sm:$0xff] %v2004
  %2033 = vst [vmem:[#allocation3 + $0x48] sm:$0xff] %v2005
  %2034 = vst [vmem:[#allocation3 + $0x50] sm:$0xff] %v2006
  %2035 = vst [vmem:[#allocation3 + $0x58] sm:$0xff] %v2007
  %2036 = vst [vmem:[#allocation3 + $0x60] sm:$0xff] %v2008
  %2037 = vst [vmem:[#allocation3 + $0x68] sm:$0xff] %v2009
  %2038 = vst [vmem:[#allocation3 + $0x70] sm:$0xff] %v2010
  %2039 = vst [vmem:[#allocation3 + $0x78] sm:$0xff] %v2011
  %2040 = vst [vmem:[#allocation3 + $0x90] sm:$0xff] %v2012
  %2041 = vst [vmem:[#allocation3 + $0x98] sm:$0xff] %v2013
  %2042 = vst [vmem:[#allocation3 + $0xa0] sm:$0xff] %v2014
  %2043 = vst [vmem:[#allocation3 + $0xa8] sm:$0xff] %v2015
  %2044 = vst [vmem:[#allocation3 + $0xb0] sm:$0xff] %v2016
  %2045 = vst [vmem:[#allocation3 + $0xb8] sm:$0xff] %v2017
  %2046 = vst [vmem:[#allocation3 + $0xc0] sm:$0xff] %v2018
  %2047 = vst [vmem:[#allocation3 + $0xc8] sm:$0xff] %v2019
  %2048 = vst [vmem:[#allocation3 + $0xd0] sm:$0xff] %v2020
  %2049 = vst [vmem:[#allocation3 + $0xd8] sm:$0xff] %v2021
  %2050 = vst [vmem:[#allocation3 + $0xe0] sm:$0xff] %v2022
  %2051 = vst [vmem:[#allocation3 + $0xe8] sm:$0xff] %v2023
  %2052 = vst [vmem:[#allocation3 + $0xf0] sm:$0xff] %v2024
  %2053 = vst [vmem:[#allocation3 + $0xf8] sm:$0xff] %v2025
  %v2054 = vld [vmem:[#allocation2] sm:$0xff]
  %v2055 = vld [vmem:[#allocation2 + $0x8] sm:$0xff]
  %v2056 = vld [vmem:[#allocation2 + $0x10] sm:$0xff]
  %v2057 = vld [vmem:[#allocation2 + $0x18] sm:$0xff]
  %v2058 = vld [vmem:[#allocation2 + $0x20] sm:$0xff]
  %v2059 = vld [vmem:[#allocation2 + $0x28] sm:$0xff]
  %v2060 = vld [vmem:[#allocation2 + $0x30] sm:$0xff]
  %v2061 = vld [vmem:[#allocation2 + $0x38] sm:$0xff]
  %v2062 = vld [vmem:[#allocation2 + $0x40] sm:$0xff]
  %v2063 = vld [vmem:[#allocation2 + $0x48] sm:$0xff]
  %v2064 = vld [vmem:[#allocation2 + $0x50] sm:$0xff]
  %v2065 = vld [vmem:[#allocation2 + $0x58] sm:$0xff]
  %v2066 = vld [vmem:[#allocation2 + $0x60] sm:$0xff]
  %v2067 = vld [vmem:[#allocation2 + $0x68] sm:$0xff]
  %v2068 = vld [vmem:[#allocation2 + $0x70] sm:$0xff]
  %v2069 = vld [vmem:[#allocation2 + $0x78] sm:$0xff]
  %v2070 = vld [vmem:[#allocation2 + $0x100] sm:$0xff]
  %v2071 = vld [vmem:[#allocation2 + $0x108] sm:$0xff]
  %v2072 = vld [vmem:[#allocation2 + $0x110] sm:$0xff]
  %v2073 = vld [vmem:[#allocation2 + $0x118] sm:$0xff]
  %v2074 = vld [vmem:[#allocation2 + $0x120] sm:$0xff]
  %v2075 = vld [vmem:[#allocation2 + $0x128] sm:$0xff]
  %v2076 = vld [vmem:[#allocation2 + $0x130] sm:$0xff]
  %v2077 = vld [vmem:[#allocation2 + $0x138] sm:$0xff]
  %v2078 = vld [vmem:[#allocation2 + $0x140] sm:$0xff]
  %v2079 = vld [vmem:[#allocation2 + $0x148] sm:$0xff]
  %v2080 = vld [vmem:[#allocation2 + $0x150] sm:$0xff]
  %v2081 = vld [vmem:[#allocation2 + $0x158] sm:$0xff]
  %v2082 = vld [vmem:[#allocation2 + $0x160] sm:$0xff]
  %v2083 = vld [vmem:[#allocation2 + $0x168] sm:$0xff]
  %v2084 = vld [vmem:[#allocation2 + $0x170] sm:$0xff]
  %v2085 = vld [vmem:[#allocation2 + $0x178] sm:$0xff]
  %2086 = vst [vmem:[#allocation3 + $0x100] sm:$0xff] %v2054
  %2087 = vst [vmem:[#allocation3 + $0x108] sm:$0xff] %v2055
  %2088 = vst [vmem:[#allocation3 + $0x110] sm:$0xff] %v2056
  %2089 = vst [vmem:[#allocation3 + $0x118] sm:$0xff] %v2057
  %2090 = vst [vmem:[#allocation3 + $0x120] sm:$0xff] %v2058
  %2091 = vst [vmem:[#allocation3 + $0x128] sm:$0xff] %v2059
  %2092 = vst [vmem:[#allocation3 + $0x130] sm:$0xff] %v2060
  %2093 = vst [vmem:[#allocation3 + $0x138] sm:$0xff] %v2061
  %2094 = vst [vmem:[#allocation3 + $0x140] sm:$0xff] %v2062
  %2095 = vst [vmem:[#allocation3 + $0x148] sm:$0xff] %v2063
  %2096 = vst [vmem:[#allocation3 + $0x150] sm:$0xff] %v2064
  %2097 = vst [vmem:[#allocation3 + $0x158] sm:$0xff] %v2065
  %2098 = vst [vmem:[#allocation3 + $0x160] sm:$0xff] %v2066
  %2099 = vst [vmem:[#allocation3 + $0x168] sm:$0xff] %v2067
  %2100 = vst [vmem:[#allocation3 + $0x170] sm:$0xff] %v2068
  %2101 = vst [vmem:[#allocation3 + $0x178] sm:$0xff] %v2069
  %2102 = vst [vmem:[#allocation3 + $0x180] sm:$0xff] %v2070
  %2103 = vst [vmem:[#allocation3 + $0x188] sm:$0xff] %v2071
  %2104 = vst [vmem:[#allocation3 + $0x190] sm:$0xff] %v2072
  %2105 = vst [vmem:[#allocation3 + $0x198] sm:$0xff] %v2073
  %2106 = vst [vmem:[#allocation3 + $0x1a0] sm:$0xff] %v2074
  %2107 = vst [vmem:[#allocation3 + $0x1a8] sm:$0xff] %v2075
  %2108 = vst [vmem:[#allocation3 + $0x1b0] sm:$0xff] %v2076
  %2109 = vst [vmem:[#allocation3 + $0x1b8] sm:$0xff] %v2077
  %2110 = vst [vmem:[#allocation3 + $0x1c0] sm:$0xff] %v2078
  %2111 = vst [vmem:[#allocation3 + $0x1c8] sm:$0xff] %v2079
  %2112 = vst [vmem:[#allocation3 + $0x1d0] sm:$0xff] %v2080
  %2113 = vst [vmem:[#allocation3 + $0x1d8] sm:$0xff] %v2081
  %2114 = vst [vmem:[#allocation3 + $0x1e0] sm:$0xff] %v2082
  %2115 = vst [vmem:[#allocation3 + $0x1e8] sm:$0xff] %v2083
  %2116 = vst [vmem:[#allocation3 + $0x1f0] sm:$0xff] %v2084
  %2117 = vst [vmem:[#allocation3 + $0x1f8] sm:$0xff] %v2085
  %v2118 = vld [vmem:[#allocation2 + $0x10] sm:$0xff]
  %v2119 = vld [vmem:[#allocation2 + $0x18] sm:$0xff]
  %v2120 = vld [vmem:[#allocation2 + $0x20] sm:$0xff]
  %v2121 = vld [vmem:[#allocation2 + $0x28] sm:$0xff]
  %v2122 = vld [vmem:[#allocation2 + $0x30] sm:$0xff]
  %v2123 = vld [vmem:[#allocation2 + $0x38] sm:$0xff]
  %v2124 = vld [vmem:[#allocation2 + $0x40] sm:$0xff]
  %v2125 = vld [vmem:[#allocation2 + $0x48] sm:$0xff]
  %v2126 = vld [vmem:[#allocation2 + $0x50] sm:$0xff]
  %v2127 = vld [vmem:[#allocation2 + $0x58] sm:$0xff]
  %v2128 = vld [vmem:[#allocation2 + $0x60] sm:$0xff]
  %v2129 = vld [vmem:[#allocation2 + $0x68] sm:$0xff]
  %v2130 = vld [vmem:[#allocation2 + $0x70] sm:$0xff]
  %v2131 = vld [vmem:[#allocation2 + $0x78] sm:$0xff]
  %v2132 = vld [vmem:[#allocation2 + $0x110] sm:$0xff]
  %v2133 = vld [vmem:[#allocation2 + $0x118] sm:$0xff]
  %v2134 = vld [vmem:[#allocation2 + $0x120] sm:$0xff]
  %v2135 = vld [vmem:[#allocation2 + $0x128] sm:$0xff]
  %v2136 = vld [vmem:[#allocation2 + $0x130] sm:$0xff]
  %v2137 = vld [vmem:[#allocation2 + $0x138] sm:$0xff]
  %v2138 = vld [vmem:[#allocation2 + $0x140] sm:$0xff]
  %v2139 = vld [vmem:[#allocation2 + $0x148] sm:$0xff]
  %v2140 = vld [vmem:[#allocation2 + $0x150] sm:$0xff]
  %v2141 = vld [vmem:[#allocation2 + $0x158] sm:$0xff]
  %v2142 = vld [vmem:[#allocation2 + $0x160] sm:$0xff]
  %v2143 = vld [vmem:[#allocation2 + $0x168] sm:$0xff]
  %v2144 = vld [vmem:[#allocation2 + $0x170] sm:$0xff]
  %v2145 = vld [vmem:[#allocation2 + $0x178] sm:$0xff]
  %2146 = vst [vmem:[#allocation3 + $0x200] sm:$0xff] %v2118
  %2147 = vst [vmem:[#allocation3 + $0x208] sm:$0xff] %v2119
  %2148 = vst [vmem:[#allocation3 + $0x210] sm:$0xff] %v2120
  %2149 = vst [vmem:[#allocation3 + $0x218] sm:$0xff] %v2121
  %2150 = vst [vmem:[#allocation3 + $0x220] sm:$0xff] %v2122
  %2151 = vst [vmem:[#allocation3 + $0x228] sm:$0xff] %v2123
  %2152 = vst [vmem:[#allocation3 + $0x230] sm:$0xff] %v2124
  %2153 = vst [vmem:[#allocation3 + $0x238] sm:$0xff] %v2125
  %2154 = vst [vmem:[#allocation3 + $0x240] sm:$0xff] %v2126
  %2155 = vst [vmem:[#allocation3 + $0x248] sm:$0xff] %v2127
  %2156 = vst [vmem:[#allocation3 + $0x250] sm:$0xff] %v2128
  %2157 = vst [vmem:[#allocation3 + $0x258] sm:$0xff] %v2129
  %2158 = vst [vmem:[#allocation3 + $0x260] sm:$0xff] %v2130
  %2159 = vst [vmem:[#allocation3 + $0x268] sm:$0xff] %v2131
  %2160 = vst [vmem:[#allocation3 + $0x280] sm:$0xff] %v2132
  %2161 = vst [vmem:[#allocation3 + $0x288] sm:$0xff] %v2133
  %2162 = vst [vmem:[#allocation3 + $0x290] sm:$0xff] %v2134
  %2163 = vst [vmem:[#allocation3 + $0x298] sm:$0xff] %v2135
  %2164 = vst [vmem:[#allocation3 + $0x2a0] sm:$0xff] %v2136
  %2165 = vst [vmem:[#allocation3 + $0x2a8] sm:$0xff] %v2137
  %2166 = vst [vmem:[#allocation3 + $0x2b0] sm:$0xff] %v2138
  %2167 = vst [vmem:[#allocation3 + $0x2b8] sm:$0xff] %v2139
  %2168 = vst [vmem:[#allocation3 + $0x2c0] sm:$0xff] %v2140
  %2169 = vst [vmem:[#allocation3 + $0x2c8] sm:$0xff] %v2141
  %2170 = vst [vmem:[#allocation3 + $0x2d0] sm:$0xff] %v2142
  %2171 = vst [vmem:[#allocation3 + $0x2d8] sm:$0xff] %v2143
  %2172 = vst [vmem:[#allocation3 + $0x2e0] sm:$0xff] %v2144
  %2173 = vst [vmem:[#allocation3 + $0x2e8] sm:$0xff] %v2145
  %v2174 = vld [vmem:[#allocation2 + $0x200] sm:$0xff]
  %v2175 = vld [vmem:[#allocation2 + $0x208] sm:$0xff]
  %v2176 = vld [vmem:[#allocation2 + $0x210] sm:$0xff]
  %v2177 = vld [vmem:[#allocation2 + $0x218] sm:$0xff]
  %v2178 = vld [vmem:[#allocation2 + $0x220] sm:$0xff]
  %v2179 = vld [vmem:[#allocation2 + $0x228] sm:$0xff]
  %v2180 = vld [vmem:[#allocation2 + $0x230] sm:$0xff]
  %v2181 = vld [vmem:[#allocation2 + $0x238] sm:$0xff]
  %v2182 = vld [vmem:[#allocation2 + $0x240] sm:$0xff]
  %v2183 = vld [vmem:[#allocation2 + $0x248] sm:$0xff]
  %v2184 = vld [vmem:[#allocation2 + $0x250] sm:$0xff]
  %v2185 = vld [vmem:[#allocation2 + $0x258] sm:$0xff]
  %v2186 = vld [vmem:[#allocation2 + $0x300] sm:$0xff]
  %v2187 = vld [vmem:[#allocation2 + $0x308] sm:$0xff]
  %v2188 = vld [vmem:[#allocation2 + $0x310] sm:$0xff]
  %v2189 = vld [vmem:[#allocation2 + $0x318] sm:$0xff]
  %v2190 = vld [vmem:[#allocation2 + $0x320] sm:$0xff]
  %v2191 = vld [vmem:[#allocation2 + $0x328] sm:$0xff]
  %v2192 = vld [vmem:[#allocation2 + $0x330] sm:$0xff]
  %v2193 = vld [vmem:[#allocation2 + $0x338] sm:$0xff]
  %v2194 = vld [vmem:[#allocation2 + $0x340] sm:$0xff]
  %v2195 = vld [vmem:[#allocation2 + $0x348] sm:$0xff]
  %v2196 = vld [vmem:[#allocation2 + $0x350] sm:$0xff]
  %v2197 = vld [vmem:[#allocation2 + $0x358] sm:$0xff]
  %2198 = vst [vmem:[#allocation3 + $0x320] sm:$0xff] %v2174
  %2199 = vst [vmem:[#allocation3 + $0x328] sm:$0xff] %v2175
  %2200 = vst [vmem:[#allocation3 + $0x330] sm:$0xff] %v2176
  %2201 = vst [vmem:[#allocation3 + $0x338] sm:$0xff] %v2177
  %2202 = vst [vmem:[#allocation3 + $0x340] sm:$0xff] %v2178
  %2203 = vst [vmem:[#allocation3 + $0x348] sm:$0xff] %v2179
  %2204 = vst [vmem:[#allocation3 + $0x350] sm:$0xff] %v2180
  %2205 = vst [vmem:[#allocation3 + $0x358] sm:$0xff] %v2181
  %2206 = vst [vmem:[#allocation3 + $0x360] sm:$0xff] %v2182
  %2207 = vst [vmem:[#allocation3 + $0x368] sm:$0xff] %v2183
  %2208 = vst [vmem:[#allocation3 + $0x370] sm:$0xff] %v2184
  %2209 = vst [vmem:[#allocation3 + $0x378] sm:$0xff] %v2185
  %2210 = vst [vmem:[#allocation3 + $0x3a0] sm:$0xff] %v2186
  %2211 = vst [vmem:[#allocation3 + $0x3a8] sm:$0xff] %v2187
  %2212 = vst [vmem:[#allocation3 + $0x3b0] sm:$0xff] %v2188
  %2213 = vst [vmem:[#allocation3 + $0x3b8] sm:$0xff] %v2189
  %2214 = vst [vmem:[#allocation3 + $0x3c0] sm:$0xff] %v2190
  %2215 = vst [vmem:[#allocation3 + $0x3c8] sm:$0xff] %v2191
  %2216 = vst [vmem:[#allocation3 + $0x3d0] sm:$0xff] %v2192
  %2217 = vst [vmem:[#allocation3 + $0x3d8] sm:$0xff] %v2193
  %2218 = vst [vmem:[#allocation3 + $0x3e0] sm:$0xff] %v2194
  %2219 = vst [vmem:[#allocation3 + $0x3e8] sm:$0xff] %v2195
  %2220 = vst [vmem:[#allocation3 + $0x3f0] sm:$0xff] %v2196
  %2221 = vst [vmem:[#allocation3 + $0x3f8] sm:$0xff] %v2197
  %v2222 = vld [vmem:[#allocation2 + $0x200] sm:$0xff]
  %v2223 = vld [vmem:[#allocation2 + $0x208] sm:$0xff]
  %v2224 = vld [vmem:[#allocation2 + $0x210] sm:$0xff]
  %v2225 = vld [vmem:[#allocation2 + $0x218] sm:$0xff]
  %v2226 = vld [vmem:[#allocation2 + $0x220] sm:$0xff]
  %v2227 = vld [vmem:[#allocation2 + $0x228] sm:$0xff]
  %v2228 = vld [vmem:[#allocation2 + $0x230] sm:$0xff]
  %v2229 = vld [vmem:[#allocation2 + $0x238] sm:$0xff]
  %v2230 = vld [vmem:[#allocation2 + $0x240] sm:$0xff]
  %v2231 = vld [vmem:[#allocation2 + $0x248] sm:$0xff]
  %v2232 = vld [vmem:[#allocation2 + $0x250] sm:$0xff]
  %v2233 = vld [vmem:[#allocation2 + $0x258] sm:$0xff]
  %v2234 = vld [vmem:[#allocation2 + $0x260] sm:$0xff]
  %v2235 = vld [vmem:[#allocation2 + $0x268] sm:$0xff]
  %v2236 = vld [vmem:[#allocation2 + $0x270] sm:$0xff]
  %v2237 = vld [vmem:[#allocation2 + $0x278] sm:$0xff]
  %v2238 = vld [vmem:[#allocation2 + $0x300] sm:$0xff]
  %v2239 = vld [vmem:[#allocation2 + $0x308] sm:$0xff]
  %v2240 = vld [vmem:[#allocation2 + $0x310] sm:$0xff]
  %v2241 = vld [vmem:[#allocation2 + $0x318] sm:$0xff]
  %v2242 = vld [vmem:[#allocation2 + $0x320] sm:$0xff]
  %v2243 = vld [vmem:[#allocation2 + $0x328] sm:$0xff]
  %v2244 = vld [vmem:[#allocation2 + $0x330] sm:$0xff]
  %v2245 = vld [vmem:[#allocation2 + $0x338] sm:$0xff]
  %v2246 = vld [vmem:[#allocation2 + $0x340] sm:$0xff]
  %v2247 = vld [vmem:[#allocation2 + $0x348] sm:$0xff]
  %v2248 = vld [vmem:[#allocation2 + $0x350] sm:$0xff]
  %v2249 = vld [vmem:[#allocation2 + $0x358] sm:$0xff]
  %v2250 = vld [vmem:[#allocation2 + $0x360] sm:$0xff]
  %v2251 = vld [vmem:[#allocation2 + $0x368] sm:$0xff]
  %v2252 = vld [vmem:[#allocation2 + $0x370] sm:$0xff]
  %v2253 = vld [vmem:[#allocation2 + $0x378] sm:$0xff]
  %2254 = vst [vmem:[#allocation3 + $0x400] sm:$0xff] %v2222
  %2255 = vst [vmem:[#allocation3 + $0x408] sm:$0xff] %v2223
  %2256 = vst [vmem:[#allocation3 + $0x410] sm:$0xff] %v2224
  %2257 = vst [vmem:[#allocation3 + $0x418] sm:$0xff] %v2225
  %2258 = vst [vmem:[#allocation3 + $0x420] sm:$0xff] %v2226
  %2259 = vst [vmem:[#allocation3 + $0x428] sm:$0xff] %v2227
  %2260 = vst [vmem:[#allocation3 + $0x430] sm:$0xff] %v2228
  %2261 = vst [vmem:[#allocation3 + $0x438] sm:$0xff] %v2229
  %2262 = vst [vmem:[#allocation3 + $0x440] sm:$0xff] %v2230
  %2263 = vst [vmem:[#allocation3 + $0x448] sm:$0xff] %v2231
  %2264 = vst [vmem:[#allocation3 + $0x450] sm:$0xff] %v2232
  %2265 = vst [vmem:[#allocation3 + $0x458] sm:$0xff] %v2233
  %2266 = vst [vmem:[#allocation3 + $0x460] sm:$0xff] %v2234
  %2267 = vst [vmem:[#allocation3 + $0x468] sm:$0xff] %v2235
  %2268 = vst [vmem:[#allocation3 + $0x470] sm:$0xff] %v2236
  %2269 = vst [vmem:[#allocation3 + $0x478] sm:$0xff] %v2237
  %2270 = vst [vmem:[#allocation3 + $0x480] sm:$0xff] %v2238
  %2271 = vst [vmem:[#allocation3 + $0x488] sm:$0xff] %v2239
  %2272 = vst [vmem:[#allocation3 + $0x490] sm:$0xff] %v2240
  %2273 = vst [vmem:[#allocation3 + $0x498] sm:$0xff] %v2241
  %2274 = vst [vmem:[#allocation3 + $0x4a0] sm:$0xff] %v2242
  %2275 = vst [vmem:[#allocation3 + $0x4a8] sm:$0xff] %v2243
  %2276 = vst [vmem:[#allocation3 + $0x4b0] sm:$0xff] %v2244
  %2277 = vst [vmem:[#allocation3 + $0x4b8] sm:$0xff] %v2245
  %2278 = vst [vmem:[#allocation3 + $0x4c0] sm:$0xff] %v2246
  %2279 = vst [vmem:[#allocation3 + $0x4c8] sm:$0xff] %v2247
  %2280 = vst [vmem:[#allocation3 + $0x4d0] sm:$0xff] %v2248
  %2281 = vst [vmem:[#allocation3 + $0x4d8] sm:$0xff] %v2249
  %2282 = vst [vmem:[#allocation3 + $0x4e0] sm:$0xff] %v2250
  %2283 = vst [vmem:[#allocation3 + $0x4e8] sm:$0xff] %v2251
  %2284 = vst [vmem:[#allocation3 + $0x4f0] sm:$0xff] %v2252
  %2285 = vst [vmem:[#allocation3 + $0x4f8] sm:$0xff] %v2253
  %v2286 = vld [vmem:[#allocation2 + $0x220] sm:$0xff]
  %v2287 = vld [vmem:[#allocation2 + $0x228] sm:$0xff]
  %v2288 = vld [vmem:[#allocation2 + $0x230] sm:$0xff]
  %v2289 = vld [vmem:[#allocation2 + $0x238] sm:$0xff]
  %v2290 = vld [vmem:[#allocation2 + $0x240] sm:$0xff]
  %v2291 = vld [vmem:[#allocation2 + $0x248] sm:$0xff]
  %v2292 = vld [vmem:[#allocation2 + $0x250] sm:$0xff]
  %v2293 = vld [vmem:[#allocation2 + $0x258] sm:$0xff]
  %v2294 = vld [vmem:[#allocation2 + $0x260] sm:$0xff]
  %v2295 = vld [vmem:[#allocation2 + $0x268] sm:$0xff]
  %v2296 = vld [vmem:[#allocation2 + $0x270] sm:$0xff]
  %v2297 = vld [vmem:[#allocation2 + $0x278] sm:$0xff]
  %v2298 = vld [vmem:[#allocation2 + $0x320] sm:$0xff]
  %v2299 = vld [vmem:[#allocation2 + $0x328] sm:$0xff]
  %v2300 = vld [vmem:[#allocation2 + $0x330] sm:$0xff]
  %v2301 = vld [vmem:[#allocation2 + $0x338] sm:$0xff]
  %v2302 = vld [vmem:[#allocation2 + $0x340] sm:$0xff]
  %v2303 = vld [vmem:[#allocation2 + $0x348] sm:$0xff]
  %v2304 = vld [vmem:[#allocation2 + $0x350] sm:$0xff]
  %v2305 = vld [vmem:[#allocation2 + $0x358] sm:$0xff]
  %v2306 = vld [vmem:[#allocation2 + $0x360] sm:$0xff]
  %v2307 = vld [vmem:[#allocation2 + $0x368] sm:$0xff]
  %v2308 = vld [vmem:[#allocation2 + $0x370] sm:$0xff]
  %v2309 = vld [vmem:[#allocation2 + $0x378] sm:$0xff]
  %2310 = vst [vmem:[#allocation3 + $0x500] sm:$0xff] %v2286
  %2311 = vst [vmem:[#allocation3 + $0x508] sm:$0xff] %v2287
  %2312 = vst [vmem:[#allocation3 + $0x510] sm:$0xff] %v2288
  %2313 = vst [vmem:[#allocation3 + $0x518] sm:$0xff] %v2289
  %2314 = vst [vmem:[#allocation3 + $0x520] sm:$0xff] %v2290
  %2315 = vst [vmem:[#allocation3 + $0x528] sm:$0xff] %v2291
  %2316 = vst [vmem:[#allocation3 + $0x530] sm:$0xff] %v2292
  %2317 = vst [vmem:[#allocation3 + $0x538] sm:$0xff] %v2293
  %2318 = vst [vmem:[#allocation3 + $0x540] sm:$0xff] %v2294
  %2319 = vst [vmem:[#allocation3 + $0x548] sm:$0xff] %v2295
  %2320 = vst [vmem:[#allocation3 + $0x550] sm:$0xff] %v2296
  %2321 = vst [vmem:[#allocation3 + $0x558] sm:$0xff] %v2297
  %2322 = vst [vmem:[#allocation3 + $0x580] sm:$0xff] %v2298
  %2323 = vst [vmem:[#allocation3 + $0x588] sm:$0xff] %v2299
  %2324 = vst [vmem:[#allocation3 + $0x590] sm:$0xff] %v2300
  %2325 = vst [vmem:[#allocation3 + $0x598] sm:$0xff] %v2301
  %2326 = vst [vmem:[#allocation3 + $0x5a0] sm:$0xff] %v2302
  %2327 = vst [vmem:[#allocation3 + $0x5a8] sm:$0xff] %v2303
  %2328 = vst [vmem:[#allocation3 + $0x5b0] sm:$0xff] %v2304
  %2329 = vst [vmem:[#allocation3 + $0x5b8] sm:$0xff] %v2305
  %2330 = vst [vmem:[#allocation3 + $0x5c0] sm:$0xff] %v2306
  %2331 = vst [vmem:[#allocation3 + $0x5c8] sm:$0xff] %v2307
  %2332 = vst [vmem:[#allocation3 + $0x5d0] sm:$0xff] %v2308
  %2333 = vst [vmem:[#allocation3 + $0x5d8] sm:$0xff] %v2309
  %v2334 = vld [vmem:[#allocation2 + $0x400] sm:$0xff]
  %v2335 = vld [vmem:[#allocation2 + $0x408] sm:$0xff]
  %v2336 = vld [vmem:[#allocation2 + $0x410] sm:$0xff]
  %v2337 = vld [vmem:[#allocation2 + $0x418] sm:$0xff]
  %v2338 = vld [vmem:[#allocation2 + $0x420] sm:$0xff]
  %v2339 = vld [vmem:[#allocation2 + $0x428] sm:$0xff]
  %v2340 = vld [vmem:[#allocation2 + $0x430] sm:$0xff]
  %v2341 = vld [vmem:[#allocation2 + $0x438] sm:$0xff]
  %v2342 = vld [vmem:[#allocation2 + $0x500] sm:$0xff]
  %v2343 = vld [vmem:[#allocation2 + $0x508] sm:$0xff]
  %v2344 = vld [vmem:[#allocation2 + $0x510] sm:$0xff]
  %v2345 = vld [vmem:[#allocation2 + $0x518] sm:$0xff]
  %v2346 = vld [vmem:[#allocation2 + $0x520] sm:$0xff]
  %v2347 = vld [vmem:[#allocation2 + $0x528] sm:$0xff]
  %v2348 = vld [vmem:[#allocation2 + $0x530] sm:$0xff]
  %v2349 = vld [vmem:[#allocation2 + $0x538] sm:$0xff]
  %2350 = vst [vmem:[#allocation3 + $0x640] sm:$0xff] %v2334
  %2351 = vst [vmem:[#allocation3 + $0x648] sm:$0xff] %v2335
  %2352 = vst [vmem:[#allocation3 + $0x650] sm:$0xff] %v2336
  %2353 = vst [vmem:[#allocation3 + $0x658] sm:$0xff] %v2337
  %2354 = vst [vmem:[#allocation3 + $0x660] sm:$0xff] %v2338
  %2355 = vst [vmem:[#allocation3 + $0x668] sm:$0xff] %v2339
  %2356 = vst [vmem:[#allocation3 + $0x670] sm:$0xff] %v2340
  %2357 = vst [vmem:[#allocation3 + $0x678] sm:$0xff] %v2341
  %2358 = vst [vmem:[#allocation3 + $0x6c0] sm:$0xff] %v2342
  %2359 = vst [vmem:[#allocation3 + $0x6c8] sm:$0xff] %v2343
  %2360 = vst [vmem:[#allocation3 + $0x6d0] sm:$0xff] %v2344
  %2361 = vst [vmem:[#allocation3 + $0x6d8] sm:$0xff] %v2345
  %2362 = vst [vmem:[#allocation3 + $0x6e0] sm:$0xff] %v2346
  %2363 = vst [vmem:[#allocation3 + $0x6e8] sm:$0xff] %v2347
  %2364 = vst [vmem:[#allocation3 + $0x6f0] sm:$0xff] %v2348
  %2365 = vst [vmem:[#allocation3 + $0x6f8] sm:$0xff] %v2349
  %v2366 = vld [vmem:[#allocation2 + $0x400] sm:$0xff]
  %v2367 = vld [vmem:[#allocation2 + $0x408] sm:$0xff]
  %v2368 = vld [vmem:[#allocation2 + $0x410] sm:$0xff]
  %v2369 = vld [vmem:[#allocation2 + $0x418] sm:$0xff]
  %v2370 = vld [vmem:[#allocation2 + $0x420] sm:$0xff]
  %v2371 = vld [vmem:[#allocation2 + $0x428] sm:$0xff]
  %v2372 = vld [vmem:[#allocation2 + $0x430] sm:$0xff]
  %v2373 = vld [vmem:[#allocation2 + $0x438] sm:$0xff]
  %v2374 = vld [vmem:[#allocation2 + $0x440] sm:$0xff]
  %v2375 = vld [vmem:[#allocation2 + $0x448] sm:$0xff]
  %v2376 = vld [vmem:[#allocation2 + $0x450] sm:$0xff]
  %v2377 = vld [vmem:[#allocation2 + $0x458] sm:$0xff]
  %v2378 = vld [vmem:[#allocation2 + $0x460] sm:$0xff]
  %v2379 = vld [vmem:[#allocation2 + $0x468] sm:$0xff]
  %v2380 = vld [vmem:[#allocation2 + $0x470] sm:$0xff]
  %v2381 = vld [vmem:[#allocation2 + $0x478] sm:$0xff]
  %v2382 = vld [vmem:[#allocation2 + $0x500] sm:$0xff]
  %v2383 = vld [vmem:[#allocation2 + $0x508] sm:$0xff]
  %v2384 = vld [vmem:[#allocation2 + $0x510] sm:$0xff]
  %v2385 = vld [vmem:[#allocation2 + $0x518] sm:$0xff]
  %v2386 = vld [vmem:[#allocation2 + $0x520] sm:$0xff]
  %v2387 = vld [vmem:[#allocation2 + $0x528] sm:$0xff]
  %v2388 = vld [vmem:[#allocation2 + $0x530] sm:$0xff]
  %v2389 = vld [vmem:[#allocation2 + $0x538] sm:$0xff]
  %v2390 = vld [vmem:[#allocation2 + $0x540] sm:$0xff]
  %v2391 = vld [vmem:[#allocation2 + $0x548] sm:$0xff]
  %v2392 = vld [vmem:[#allocation2 + $0x550] sm:$0xff]
  %v2393 = vld [vmem:[#allocation2 + $0x558] sm:$0xff]
  %v2394 = vld [vmem:[#allocation2 + $0x560] sm:$0xff]
  %v2395 = vld [vmem:[#allocation2 + $0x568] sm:$0xff]
  %v2396 = vld [vmem:[#allocation2 + $0x570] sm:$0xff]
  %v2397 = vld [vmem:[#allocation2 + $0x578] sm:$0xff]
  %2398 = vst [vmem:[#allocation3 + $0x700] sm:$0xff] %v2366
  %2399 = vst [vmem:[#allocation3 + $0x708] sm:$0xff] %v2367
  %2400 = vst [vmem:[#allocation3 + $0x710] sm:$0xff] %v2368
  %2401 = vst [vmem:[#allocation3 + $0x718] sm:$0xff] %v2369
  %2402 = vst [vmem:[#allocation3 + $0x720] sm:$0xff] %v2370
  %2403 = vst [vmem:[#allocation3 + $0x728] sm:$0xff] %v2371
  %2404 = vst [vmem:[#allocation3 + $0x730] sm:$0xff] %v2372
  %2405 = vst [vmem:[#allocation3 + $0x738] sm:$0xff] %v2373
  %2406 = vst [vmem:[#allocation3 + $0x740] sm:$0xff] %v2374
  %2407 = vst [vmem:[#allocation3 + $0x748] sm:$0xff] %v2375
  %2408 = vst [vmem:[#allocation3 + $0x750] sm:$0xff] %v2376
  %2409 = vst [vmem:[#allocation3 + $0x758] sm:$0xff] %v2377
  %2410 = vst [vmem:[#allocation3 + $0x760] sm:$0xff] %v2378
  %2411 = vst [vmem:[#allocation3 + $0x768] sm:$0xff] %v2379
  %2412 = vst [vmem:[#allocation3 + $0x770] sm:$0xff] %v2380
  %2413 = vst [vmem:[#allocation3 + $0x778] sm:$0xff] %v2381
  %2414 = vst [vmem:[#allocation3 + $0x780] sm:$0xff] %v2382
  %2415 = vst [vmem:[#allocation3 + $0x788] sm:$0xff] %v2383
  %2416 = vst [vmem:[#allocation3 + $0x790] sm:$0xff] %v2384
  %2417 = vst [vmem:[#allocation3 + $0x798] sm:$0xff] %v2385
  %2418 = vst [vmem:[#allocation3 + $0x7a0] sm:$0xff] %v2386
  %2419 = vst [vmem:[#allocation3 + $0x7a8] sm:$0xff] %v2387
  %2420 = vst [vmem:[#allocation3 + $0x7b0] sm:$0xff] %v2388
  %2421 = vst [vmem:[#allocation3 + $0x7b8] sm:$0xff] %v2389
  %2422 = vst [vmem:[#allocation3 + $0x7c0] sm:$0xff] %v2390
  %2423 = vst [vmem:[#allocation3 + $0x7c8] sm:$0xff] %v2391
  %2424 = vst [vmem:[#allocation3 + $0x7d0] sm:$0xff] %v2392
  %2425 = vst [vmem:[#allocation3 + $0x7d8] sm:$0xff] %v2393
  %2426 = vst [vmem:[#allocation3 + $0x7e0] sm:$0xff] %v2394
  %2427 = vst [vmem:[#allocation3 + $0x7e8] sm:$0xff] %v2395
  %2428 = vst [vmem:[#allocation3 + $0x7f0] sm:$0xff] %v2396
  %2429 = vst [vmem:[#allocation3 + $0x7f8] sm:$0xff] %v2397
  %v2430 = vld [vmem:[#allocation2 + $0x440] sm:$0xff]
  %v2431 = vld [vmem:[#allocation2 + $0x448] sm:$0xff]
  %v2432 = vld [vmem:[#allocation2 + $0x450] sm:$0xff]
  %v2433 = vld [vmem:[#allocation2 + $0x458] sm:$0xff]
  %v2434 = vld [vmem:[#allocation2 + $0x460] sm:$0xff]
  %v2435 = vld [vmem:[#allocation2 + $0x468] sm:$0xff]
  %v2436 = vld [vmem:[#allocation2 + $0x470] sm:$0xff]
  %v2437 = vld [vmem:[#allocation2 + $0x478] sm:$0xff]
  %v2438 = vld [vmem:[#allocation2 + $0x540] sm:$0xff]
  %v2439 = vld [vmem:[#allocation2 + $0x548] sm:$0xff]
  %v2440 = vld [vmem:[#allocation2 + $0x550] sm:$0xff]
  %v2441 = vld [vmem:[#allocation2 + $0x558] sm:$0xff]
  %v2442 = vld [vmem:[#allocation2 + $0x560] sm:$0xff]
  %v2443 = vld [vmem:[#allocation2 + $0x568] sm:$0xff]
  %v2444 = vld [vmem:[#allocation2 + $0x570] sm:$0xff]
  %v2445 = vld [vmem:[#allocation2 + $0x578] sm:$0xff]
  %2446 = vst [vmem:[#allocation3 + $0x800] sm:$0xff] %v2430
  %2447 = vst [vmem:[#allocation3 + $0x808] sm:$0xff] %v2431
  %2448 = vst [vmem:[#allocation3 + $0x810] sm:$0xff] %v2432
  %2449 = vst [vmem:[#allocation3 + $0x818] sm:$0xff] %v2433
  %2450 = vst [vmem:[#allocation3 + $0x820] sm:$0xff] %v2434
  %2451 = vst [vmem:[#allocation3 + $0x828] sm:$0xff] %v2435
  %2452 = vst [vmem:[#allocation3 + $0x830] sm:$0xff] %v2436
  %2453 = vst [vmem:[#allocation3 + $0x838] sm:$0xff] %v2437
  %2454 = vst [vmem:[#allocation3 + $0x880] sm:$0xff] %v2438
  %2455 = vst [vmem:[#allocation3 + $0x888] sm:$0xff] %v2439
  %2456 = vst [vmem:[#allocation3 + $0x890] sm:$0xff] %v2440
  %2457 = vst [vmem:[#allocation3 + $0x898] sm:$0xff] %v2441
  %2458 = vst [vmem:[#allocation3 + $0x8a0] sm:$0xff] %v2442
  %2459 = vst [vmem:[#allocation3 + $0x8a8] sm:$0xff] %v2443
  %2460 = vst [vmem:[#allocation3 + $0x8b0] sm:$0xff] %v2444
  %2461 = vst [vmem:[#allocation3 + $0x8b8] sm:$0xff] %v2445
  %v2462 = vld [vmem:[#allocation2 + $0x600] sm:$0xff]
  %v2463 = vld [vmem:[#allocation2 + $0x608] sm:$0xff]
  %v2464 = vld [vmem:[#allocation2 + $0x610] sm:$0xff]
  %v2465 = vld [vmem:[#allocation2 + $0x618] sm:$0xff]
  %v2466 = vld [vmem:[#allocation2 + $0x620] sm:$0xff]
  %v2467 = vld [vmem:[#allocation2 + $0x628] sm:$0xff]
  %v2468 = vld [vmem:[#allocation2 + $0x630] sm:$0xff]
  %v2469 = vld [vmem:[#allocation2 + $0x638] sm:$0xff]
  %v2470 = vld [vmem:[#allocation2 + $0x640] sm:$0xff]
  %v2471 = vld [vmem:[#allocation2 + $0x648] sm:$0xff]
  %v2472 = vld [vmem:[#allocation2 + $0x650] sm:$0xff]
  %v2473 = vld [vmem:[#allocation2 + $0x658] sm:$0xff]
  %v2474 = vld [vmem:[#allocation2 + $0x660] sm:$0xff]
  %v2475 = vld [vmem:[#allocation2 + $0x668] sm:$0xff]
  %v2476 = vld [vmem:[#allocation2 + $0x670] sm:$0xff]
  %v2477 = vld [vmem:[#allocation2 + $0x678] sm:$0xff]
  %v2478 = vld [vmem:[#allocation2 + $0x700] sm:$0xff]
  %v2479 = vld [vmem:[#allocation2 + $0x708] sm:$0xff]
  %v2480 = vld [vmem:[#allocation2 + $0x710] sm:$0xff]
  %v2481 = vld [vmem:[#allocation2 + $0x718] sm:$0xff]
  %v2482 = vld [vmem:[#allocation2 + $0x720] sm:$0xff]
  %v2483 = vld [vmem:[#allocation2 + $0x728] sm:$0xff]
  %v2484 = vld [vmem:[#allocation2 + $0x730] sm:$0xff]
  %v2485 = vld [vmem:[#allocation2 + $0x738] sm:$0xff]
  %v2486 = vld [vmem:[#allocation2 + $0x740] sm:$0xff]
  %v2487 = vld [vmem:[#allocation2 + $0x748] sm:$0xff]
  %v2488 = vld [vmem:[#allocation2 + $0x750] sm:$0xff]
  %v2489 = vld [vmem:[#allocation2 + $0x758] sm:$0xff]
  %v2490 = vld [vmem:[#allocation2 + $0x760] sm:$0xff]
  %v2491 = vld [vmem:[#allocation2 + $0x768] sm:$0xff]
  %v2492 = vld [vmem:[#allocation2 + $0x770] sm:$0xff]
  %v2493 = vld [vmem:[#allocation2 + $0x778] sm:$0xff]
  %2494 = vst [vmem:[#allocation3 + $0xa00] sm:$0xff] %v2462
  %2495 = vst [vmem:[#allocation3 + $0xa08] sm:$0xff] %v2463
  %2496 = vst [vmem:[#allocation3 + $0xa10] sm:$0xff] %v2464
  %2497 = vst [vmem:[#allocation3 + $0xa18] sm:$0xff] %v2465
  %2498 = vst [vmem:[#allocation3 + $0xa20] sm:$0xff] %v2466
  %2499 = vst [vmem:[#allocation3 + $0xa28] sm:$0xff] %v2467
  %2500 = vst [vmem:[#allocation3 + $0xa30] sm:$0xff] %v2468
  %2501 = vst [vmem:[#allocation3 + $0xa38] sm:$0xff] %v2469
  %2502 = vst [vmem:[#allocation3 + $0xa40] sm:$0xff] %v2470
  %2503 = vst [vmem:[#allocation3 + $0xa48] sm:$0xff] %v2471
  %2504 = vst [vmem:[#allocation3 + $0xa50] sm:$0xff] %v2472
  %2505 = vst [vmem:[#allocation3 + $0xa58] sm:$0xff] %v2473
  %2506 = vst [vmem:[#allocation3 + $0xa60] sm:$0xff] %v2474
  %2507 = vst [vmem:[#allocation3 + $0xa68] sm:$0xff] %v2475
  %2508 = vst [vmem:[#allocation3 + $0xa70] sm:$0xff] %v2476
  %2509 = vst [vmem:[#allocation3 + $0xa78] sm:$0xff] %v2477
  %2510 = vst [vmem:[#allocation3 + $0xa80] sm:$0xff] %v2478
  %2511 = vst [vmem:[#allocation3 + $0xa88] sm:$0xff] %v2479
  %2512 = vst [vmem:[#allocation3 + $0xa90] sm:$0xff] %v2480
  %2513 = vst [vmem:[#allocation3 + $0xa98] sm:$0xff] %v2481
  %2514 = vst [vmem:[#allocation3 + $0xaa0] sm:$0xff] %v2482
  %2515 = vst [vmem:[#allocation3 + $0xaa8] sm:$0xff] %v2483
  %2516 = vst [vmem:[#allocation3 + $0xab0] sm:$0xff] %v2484
  %2517 = vst [vmem:[#allocation3 + $0xab8] sm:$0xff] %v2485
  %2518 = vst [vmem:[#allocation3 + $0xac0] sm:$0xff] %v2486
  %2519 = vst [vmem:[#allocation3 + $0xac8] sm:$0xff] %v2487
  %2520 = vst [vmem:[#allocation3 + $0xad0] sm:$0xff] %v2488
  %2521 = vst [vmem:[#allocation3 + $0xad8] sm:$0xff] %v2489
  %2522 = vst [vmem:[#allocation3 + $0xae0] sm:$0xff] %v2490
  %2523 = vst [vmem:[#allocation3 + $0xae8] sm:$0xff] %v2491
  %2524 = vst [vmem:[#allocation3 + $0xaf0] sm:$0xff] %v2492
  %2525 = vst [vmem:[#allocation3 + $0xaf8] sm:$0xff] %v2493
  %v2526 = vld [vmem:[%s2] sm:$0xff]
  %v2527 = vld [vmem:[%s2 + $0x8] sm:$0xff]
  %v2528 = vld [vmem:[%s2 + $0x10] sm:$0xff]
  %v2529 = vld [vmem:[%s2 + $0x18] sm:$0xff]
  %v2530 = vld [vmem:[%s2 + $0x20] sm:$0xff]
  %v2531 = vld [vmem:[%s2 + $0x28] sm:$0xff]
  %v2532 = vld [vmem:[%s2 + $0x30] sm:$0xff]
  %v2533 = vld [vmem:[%s2 + $0x38] sm:$0xff]
  %v2534 = vld [vmem:[#allocation3] sm:$0xff]
  %v2535 = vld [vmem:[#allocation3 + $0x8] sm:$0xff]
  %v2536 = vld [vmem:[#allocation3 + $0x10] sm:$0xff]
  %v2537 = vld [vmem:[#allocation3 + $0x18] sm:$0xff]
  %v2538 = vld [vmem:[#allocation3 + $0x20] sm:$0xff]
  %v2539 = vld [vmem:[#allocation3 + $0x28] sm:$0xff]
  %v2540 = vld [vmem:[#allocation3 + $0x30] sm:$0xff]
  %v2541 = vld [vmem:[#allocation3 + $0x38] sm:$0xff]
  %v2542 = vld [vmem:[#allocation3 + $0x40] sm:$0xff]
  %v2543 = vld [vmem:[#allocation3 + $0x48] sm:$0xff]
  %v2544 = vld [vmem:[#allocation3 + $0x50] sm:$0xff]
  %v2545 = vld [vmem:[#allocation3 + $0x58] sm:$0xff]
  %v2546 = vld [vmem:[#allocation3 + $0x60] sm:$0xff]
  %v2547 = vld [vmem:[#allocation3 + $0x68] sm:$0xff]
  %v2548 = vld [vmem:[#allocation3 + $0x70] sm:$0xff]
  %v2549 = vld [vmem:[#allocation3 + $0x78] sm:$0xff]
  %v2550 = vld [vmem:[#allocation3 + $0x80] sm:$0xff]
  %v2551 = vld [vmem:[#allocation3 + $0x88] sm:$0xff]
  %v2552 = vld [vmem:[#allocation3 + $0x90] sm:$0xff]
  %v2553 = vld [vmem:[#allocation3 + $0x98] sm:$0xff]
  %v2554 = vld [vmem:[#allocation3 + $0xa0] sm:$0xff]
  %v2555 = vld [vmem:[#allocation3 + $0xa8] sm:$0xff]
  %v2556 = vld [vmem:[#allocation3 + $0xb0] sm:$0xff]
  %v2557 = vld [vmem:[#allocation3 + $0xb8] sm:$0xff]
  %v2558 = vld [vmem:[#allocation3 + $0xc0] sm:$0xff]
  %v2559 = vld [vmem:[#allocation3 + $0xc8] sm:$0xff]
  %v2560 = vld [vmem:[#allocation3 + $0xd0] sm:$0xff]
  %v2561 = vld [vmem:[#allocation3 + $0xd8] sm:$0xff]
  %v2562 = vld [vmem:[#allocation3 + $0xe0] sm:$0xff]
  %v2563 = vld [vmem:[#allocation3 + $0xe8] sm:$0xff]
  %v2564 = vld [vmem:[#allocation3 + $0xf0] sm:$0xff]
  %v2565 = vld [vmem:[#allocation3 + $0xf8] sm:$0xff]
  %v2566 = vld [vmem:[#allocation3 + $0x100] sm:$0xff]
  %v2567 = vld [vmem:[#allocation3 + $0x108] sm:$0xff]
  %v2568 = vld [vmem:[#allocation3 + $0x110] sm:$0xff]
  %v2569 = vld [vmem:[#allocation3 + $0x118] sm:$0xff]
  %v2570 = vld [vmem:[#allocation3 + $0x120] sm:$0xff]
  %v2571 = vld [vmem:[#allocation3 + $0x128] sm:$0xff]
  %v2572 = vld [vmem:[#allocation3 + $0x130] sm:$0xff]
  %v2573 = vld [vmem:[#allocation3 + $0x138] sm:$0xff]
  %v2574 = vld [vmem:[#allocation3 + $0x140] sm:$0xff]
  %v2575 = vld [vmem:[#allocation3 + $0x148] sm:$0xff]
  %v2576 = vld [vmem:[#allocation3 + $0x150] sm:$0xff]
  %v2577 = vld [vmem:[#allocation3 + $0x158] sm:$0xff]
  %v2578 = vld [vmem:[#allocation3 + $0x160] sm:$0xff]
  %v2579 = vld [vmem:[#allocation3 + $0x168] sm:$0xff]
  %v2580 = vld [vmem:[#allocation3 + $0x170] sm:$0xff]
  %v2581 = vld [vmem:[#allocation3 + $0x178] sm:$0xff]
  %v2582 = vld [vmem:[#allocation3 + $0x180] sm:$0xff]
  %v2583 = vld [vmem:[#allocation3 + $0x188] sm:$0xff]
  %v2584 = vld [vmem:[#allocation3 + $0x190] sm:$0xff]
  %v2585 = vld [vmem:[#allocation3 + $0x198] sm:$0xff]
  %v2586 = vld [vmem:[#allocation3 + $0x1a0] sm:$0xff]
  %v2587 = vld [vmem:[#allocation3 + $0x1a8] sm:$0xff]
  %v2588 = vld [vmem:[#allocation3 + $0x1b0] sm:$0xff]
  %v2589 = vld [vmem:[#allocation3 + $0x1b8] sm:$0xff]
  %v2590 = vld [vmem:[#allocation3 + $0x1c0] sm:$0xff]
  %v2591 = vld [vmem:[#allocation3 + $0x1c8] sm:$0xff]
  %v2592 = vld [vmem:[#allocation3 + $0x1d0] sm:$0xff]
  %v2593 = vld [vmem:[#allocation3 + $0x1d8] sm:$0xff]
  %v2594 = vld [vmem:[#allocation3 + $0x1e0] sm:$0xff]
  %v2595 = vld [vmem:[#allocation3 + $0x1e8] sm:$0xff]
  %v2596 = vld [vmem:[#allocation3 + $0x1f0] sm:$0xff]
  %v2597 = vld [vmem:[#allocation3 + $0x1f8] sm:$0xff]
  %v2598 = vld [vmem:[#allocation3 + $0x200] sm:$0xff]
  %v2599 = vld [vmem:[#allocation3 + $0x208] sm:$0xff]
  %v2600 = vld [vmem:[#allocation3 + $0x210] sm:$0xff]
  %v2601 = vld [vmem:[#allocation3 + $0x218] sm:$0xff]
  %v2602 = vld [vmem:[#allocation3 + $0x220] sm:$0xff]
  %v2603 = vld [vmem:[#allocation3 + $0x228] sm:$0xff]
  %v2604 = vld [vmem:[#allocation3 + $0x230] sm:$0xff]
  %v2605 = vld [vmem:[#allocation3 + $0x238] sm:$0xff]
  %v2606 = vld [vmem:[#allocation3 + $0x240] sm:$0xff]
  %v2607 = vld [vmem:[#allocation3 + $0x248] sm:$0xff]
  %v2608 = vld [vmem:[#allocation3 + $0x250] sm:$0xff]
  %v2609 = vld [vmem:[#allocation3 + $0x258] sm:$0xff]
  %v2610 = vld [vmem:[#allocation3 + $0x260] sm:$0xff]
  %v2611 = vld [vmem:[#allocation3 + $0x268] sm:$0xff]
  %v2612 = vld [vmem:[#allocation3 + $0x270] sm:$0xff]
  %v2613 = vld [vmem:[#allocation3 + $0x278] sm:$0xff]
  %v2614 = vld [vmem:[#allocation3 + $0x280] sm:$0xff]
  %v2615 = vld [vmem:[#allocation3 + $0x288] sm:$0xff]
  %v2616 = vld [vmem:[#allocation3 + $0x290] sm:$0xff]
  %v2617 = vld [vmem:[#allocation3 + $0x298] sm:$0xff]
  %v2618 = vld [vmem:[#allocation3 + $0x2a0] sm:$0xff]
  %v2619 = vld [vmem:[#allocation3 + $0x2a8] sm:$0xff]
  %v2620 = vld [vmem:[#allocation3 + $0x2b0] sm:$0xff]
  %v2621 = vld [vmem:[#allocation3 + $0x2b8] sm:$0xff]
  %v2622 = vld [vmem:[#allocation3 + $0x2c0] sm:$0xff]
  %v2623 = vld [vmem:[#allocation3 + $0x2c8] sm:$0xff]
  %v2624 = vld [vmem:[#allocation3 + $0x2d0] sm:$0xff]
  %v2625 = vld [vmem:[#allocation3 + $0x2d8] sm:$0xff]
  %v2626 = vld [vmem:[#allocation3 + $0x2e0] sm:$0xff]
  %v2627 = vld [vmem:[#allocation3 + $0x2e8] sm:$0xff]
  %v2628 = vld [vmem:[#allocation3 + $0x2f0] sm:$0xff]
  %v2629 = vld [vmem:[#allocation3 + $0x2f8] sm:$0xff]
  %v2630 = vld [vmem:[#allocation3 + $0x300] sm:$0xff]
  %v2631 = vld [vmem:[#allocation3 + $0x308] sm:$0xff]
  %v2632 = vld [vmem:[#allocation3 + $0x310] sm:$0xff]
  %v2633 = vld [vmem:[#allocation3 + $0x318] sm:$0xff]
  %v2634 = vld [vmem:[#allocation3 + $0x320] sm:$0xff]
  %v2635 = vld [vmem:[#allocation3 + $0x328] sm:$0xff]
  %v2636 = vld [vmem:[#allocation3 + $0x330] sm:$0xff]
  %v2637 = vld [vmem:[#allocation3 + $0x338] sm:$0xff]
  %v2638 = vld [vmem:[#allocation3 + $0x340] sm:$0xff]
  %v2639 = vld [vmem:[#allocation3 + $0x348] sm:$0xff]
  %v2640 = vld [vmem:[#allocation3 + $0x350] sm:$0xff]
  %v2641 = vld [vmem:[#allocation3 + $0x358] sm:$0xff]
  %v2642 = vld [vmem:[#allocation3 + $0x360] sm:$0xff]
  %v2643 = vld [vmem:[#allocation3 + $0x368] sm:$0xff]
  %v2644 = vld [vmem:[#allocation3 + $0x370] sm:$0xff]
  %v2645 = vld [vmem:[#allocation3 + $0x378] sm:$0xff]
  %v2646 = vld [vmem:[#allocation3 + $0x380] sm:$0xff]
  %v2647 = vld [vmem:[#allocation3 + $0x388] sm:$0xff]
  %v2648 = vld [vmem:[#allocation3 + $0x390] sm:$0xff]
  %v2649 = vld [vmem:[#allocation3 + $0x398] sm:$0xff]
  %v2650 = vld [vmem:[#allocation3 + $0x3a0] sm:$0xff]
  %v2651 = vld [vmem:[#allocation3 + $0x3a8] sm:$0xff]
  %v2652 = vld [vmem:[#allocation3 + $0x3b0] sm:$0xff]
  %v2653 = vld [vmem:[#allocation3 + $0x3b8] sm:$0xff]
  %v2654 = vld [vmem:[#allocation3 + $0x3c0] sm:$0xff]
  %v2655 = vld [vmem:[#allocation3 + $0x3c8] sm:$0xff]
  %v2656 = vld [vmem:[#allocation3 + $0x3d0] sm:$0xff]
  %v2657 = vld [vmem:[#allocation3 + $0x3d8] sm:$0xff]
  %v2658 = vld [vmem:[#allocation3 + $0x3e0] sm:$0xff]
  %v2659 = vld [vmem:[#allocation3 + $0x3e8] sm:$0xff]
  %v2660 = vld [vmem:[#allocation3 + $0x3f0] sm:$0xff]
  %v2661 = vld [vmem:[#allocation3 + $0x3f8] sm:$0xff]
  %v2662 = vld [vmem:[#allocation3 + $0x400] sm:$0xff]
  %v2663 = vld [vmem:[#allocation3 + $0x408] sm:$0xff]
  %v2664 = vld [vmem:[#allocation3 + $0x410] sm:$0xff]
  %v2665 = vld [vmem:[#allocation3 + $0x418] sm:$0xff]
  %v2666 = vld [vmem:[#allocation3 + $0x420] sm:$0xff]
  %v2667 = vld [vmem:[#allocation3 + $0x428] sm:$0xff]
  %v2668 = vld [vmem:[#allocation3 + $0x430] sm:$0xff]
  %v2669 = vld [vmem:[#allocation3 + $0x438] sm:$0xff]
  %v2670 = vld [vmem:[#allocation3 + $0x440] sm:$0xff]
  %v2671 = vld [vmem:[#allocation3 + $0x448] sm:$0xff]
  %v2672 = vld [vmem:[#allocation3 + $0x450] sm:$0xff]
  %v2673 = vld [vmem:[#allocation3 + $0x458] sm:$0xff]
  %v2674 = vld [vmem:[#allocation3 + $0x460] sm:$0xff]
  %v2675 = vld [vmem:[#allocation3 + $0x468] sm:$0xff]
  %v2676 = vld [vmem:[#allocation3 + $0x470] sm:$0xff]
  %v2677 = vld [vmem:[#allocation3 + $0x478] sm:$0xff]
  %v2678 = vld [vmem:[#allocation3 + $0x480] sm:$0xff]
  %v2679 = vld [vmem:[#allocation3 + $0x488] sm:$0xff]
  %v2680 = vld [vmem:[#allocation3 + $0x490] sm:$0xff]
  %v2681 = vld [vmem:[#allocation3 + $0x498] sm:$0xff]
  %v2682 = vld [vmem:[#allocation3 + $0x4a0] sm:$0xff]
  %v2683 = vld [vmem:[#allocation3 + $0x4a8] sm:$0xff]
  %v2684 = vld [vmem:[#allocation3 + $0x4b0] sm:$0xff]
  %v2685 = vld [vmem:[#allocation3 + $0x4b8] sm:$0xff]
  %v2686 = vld [vmem:[#allocation3 + $0x4c0] sm:$0xff]
  %v2687 = vld [vmem:[#allocation3 + $0x4c8] sm:$0xff]
  %v2688 = vld [vmem:[#allocation3 + $0x4d0] sm:$0xff]
  %v2689 = vld [vmem:[#allocation3 + $0x4d8] sm:$0xff]
  %v2690 = vld [vmem:[#allocation3 + $0x4e0] sm:$0xff]
  %v2691 = vld [vmem:[#allocation3 + $0x4e8] sm:$0xff]
  %v2692 = vld [vmem:[#allocation3 + $0x4f0] sm:$0xff]
  %v2693 = vld [vmem:[#allocation3 + $0x4f8] sm:$0xff]
  %v2694 = vld [vmem:[#allocation3 + $0x500] sm:$0xff]
  %v2695 = vld [vmem:[#allocation3 + $0x508] sm:$0xff]
  %v2696 = vld [vmem:[#allocation3 + $0x510] sm:$0xff]
  %v2697 = vld [vmem:[#allocation3 + $0x518] sm:$0xff]
  %v2698 = vld [vmem:[#allocation3 + $0x520] sm:$0xff]
  %v2699 = vld [vmem:[#allocation3 + $0x528] sm:$0xff]
  %v2700 = vld [vmem:[#allocation3 + $0x530] sm:$0xff]
  %v2701 = vld [vmem:[#allocation3 + $0x538] sm:$0xff]
  %v2702 = vld [vmem:[#allocation3 + $0x540] sm:$0xff]
  %v2703 = vld [vmem:[#allocation3 + $0x548] sm:$0xff]
  %v2704 = vld [vmem:[#allocation3 + $0x550] sm:$0xff]
  %v2705 = vld [vmem:[#allocation3 + $0x558] sm:$0xff]
  %v2706 = vld [vmem:[#allocation3 + $0x560] sm:$0xff]
  %v2707 = vld [vmem:[#allocation3 + $0x568] sm:$0xff]
  %v2708 = vld [vmem:[#allocation3 + $0x570] sm:$0xff]
  %v2709 = vld [vmem:[#allocation3 + $0x578] sm:$0xff]
  %v2710 = vld [vmem:[#allocation3 + $0x580] sm:$0xff]
  %v2711 = vld [vmem:[#allocation3 + $0x588] sm:$0xff]
  %v2712 = vld [vmem:[#allocation3 + $0x590] sm:$0xff]
  %v2713 = vld [vmem:[#allocation3 + $0x598] sm:$0xff]
  %v2714 = vld [vmem:[#allocation3 + $0x5a0] sm:$0xff]
  %v2715 = vld [vmem:[#allocation3 + $0x5a8] sm:$0xff]
  %v2716 = vld [vmem:[#allocation3 + $0x5b0] sm:$0xff]
  %v2717 = vld [vmem:[#allocation3 + $0x5b8] sm:$0xff]
  %v2718 = vld [vmem:[#allocation3 + $0x5c0] sm:$0xff]
  %v2719 = vld [vmem:[#allocation3 + $0x5c8] sm:$0xff]
  %v2720 = vld [vmem:[#allocation3 + $0x5d0] sm:$0xff]
  %v2721 = vld [vmem:[#allocation3 + $0x5d8] sm:$0xff]
  %v2722 = vld [vmem:[#allocation3 + $0x5e0] sm:$0xff]
  %v2723 = vld [vmem:[#allocation3 + $0x5e8] sm:$0xff]
  %v2724 = vld [vmem:[#allocation3 + $0x5f0] sm:$0xff]
  %v2725 = vld [vmem:[#allocation3 + $0x5f8] sm:$0xff]
  %v2726 = vld [vmem:[#allocation3 + $0x600] sm:$0xff]
  %v2727 = vld [vmem:[#allocation3 + $0x608] sm:$0xff]
  %v2728 = vld [vmem:[#allocation3 + $0x610] sm:$0xff]
  %v2729 = vld [vmem:[#allocation3 + $0x618] sm:$0xff]
  %v2730 = vld [vmem:[#allocation3 + $0x620] sm:$0xff]
  %v2731 = vld [vmem:[#allocation3 + $0x628] sm:$0xff]
  %v2732 = vld [vmem:[#allocation3 + $0x630] sm:$0xff]
  %v2733 = vld [vmem:[#allocation3 + $0x638] sm:$0xff]
  %v2734 = vld [vmem:[#allocation3 + $0x640] sm:$0xff]
  %v2735 = vld [vmem:[#allocation3 + $0x648] sm:$0xff]
  %v2736 = vld [vmem:[#allocation3 + $0x650] sm:$0xff]
  %v2737 = vld [vmem:[#allocation3 + $0x658] sm:$0xff]
  %v2738 = vld [vmem:[#allocation3 + $0x660] sm:$0xff]
  %v2739 = vld [vmem:[#allocation3 + $0x668] sm:$0xff]
  %v2740 = vld [vmem:[#allocation3 + $0x670] sm:$0xff]
  %v2741 = vld [vmem:[#allocation3 + $0x678] sm:$0xff]
  %v2742 = vld [vmem:[#allocation3 + $0x680] sm:$0xff]
  %v2743 = vld [vmem:[#allocation3 + $0x688] sm:$0xff]
  %v2744 = vld [vmem:[#allocation3 + $0x690] sm:$0xff]
  %v2745 = vld [vmem:[#allocation3 + $0x698] sm:$0xff]
  %v2746 = vld [vmem:[#allocation3 + $0x6a0] sm:$0xff]
  %v2747 = vld [vmem:[#allocation3 + $0x6a8] sm:$0xff]
  %v2748 = vld [vmem:[#allocation3 + $0x6b0] sm:$0xff]
  %v2749 = vld [vmem:[#allocation3 + $0x6b8] sm:$0xff]
  %v2750 = vld [vmem:[#allocation3 + $0x6c0] sm:$0xff]
  %v2751 = vld [vmem:[#allocation3 + $0x6c8] sm:$0xff]
  %v2752 = vld [vmem:[#allocation3 + $0x6d0] sm:$0xff]
  %v2753 = vld [vmem:[#allocation3 + $0x6d8] sm:$0xff]
  %v2754 = vld [vmem:[#allocation3 + $0x6e0] sm:$0xff]
  %v2755 = vld [vmem:[#allocation3 + $0x6e8] sm:$0xff]
  %v2756 = vld [vmem:[#allocation3 + $0x6f0] sm:$0xff]
  %v2757 = vld [vmem:[#allocation3 + $0x6f8] sm:$0xff]
  %v2758 = vld [vmem:[#allocation3 + $0x700] sm:$0xff]
  %v2759 = vld [vmem:[#allocation3 + $0x708] sm:$0xff]
  %v2760 = vld [vmem:[#allocation3 + $0x710] sm:$0xff]
  %v2761 = vld [vmem:[#allocation3 + $0x718] sm:$0xff]
  %v2762 = vld [vmem:[#allocation3 + $0x720] sm:$0xff]
  %v2763 = vld [vmem:[#allocation3 + $0x728] sm:$0xff]
  %v2764 = vld [vmem:[#allocation3 + $0x730] sm:$0xff]
  %v2765 = vld [vmem:[#allocation3 + $0x738] sm:$0xff]
  %v2766 = vld [vmem:[#allocation3 + $0x740] sm:$0xff]
  %v2767 = vld [vmem:[#allocation3 + $0x748] sm:$0xff]
  %v2768 = vld [vmem:[#allocation3 + $0x750] sm:$0xff]
  %v2769 = vld [vmem:[#allocation3 + $0x758] sm:$0xff]
  %v2770 = vld [vmem:[#allocation3 + $0x760] sm:$0xff]
  %v2771 = vld [vmem:[#allocation3 + $0x768] sm:$0xff]
  %v2772 = vld [vmem:[#allocation3 + $0x770] sm:$0xff]
  %v2773 = vld [vmem:[#allocation3 + $0x778] sm:$0xff]
  %v2774 = vld [vmem:[#allocation3 + $0x780] sm:$0xff]
  %v2775 = vld [vmem:[#allocation3 + $0x788] sm:$0xff]
  %v2776 = vld [vmem:[#allocation3 + $0x790] sm:$0xff]
  %v2777 = vld [vmem:[#allocation3 + $0x798] sm:$0xff]
  %v2778 = vld [vmem:[#allocation3 + $0x7a0] sm:$0xff]
  %v2779 = vld [vmem:[#allocation3 + $0x7a8] sm:$0xff]
  %v2780 = vld [vmem:[#allocation3 + $0x7b0] sm:$0xff]
  %v2781 = vld [vmem:[#allocation3 + $0x7b8] sm:$0xff]
  %v2782 = vld [vmem:[#allocation3 + $0x7c0] sm:$0xff]
  %v2783 = vld [vmem:[#allocation3 + $0x7c8] sm:$0xff]
  %v2784 = vld [vmem:[#allocation3 + $0x7d0] sm:$0xff]
  %v2785 = vld [vmem:[#allocation3 + $0x7d8] sm:$0xff]
  %v2786 = vld [vmem:[#allocation3 + $0x7e0] sm:$0xff]
  %v2787 = vld [vmem:[#allocation3 + $0x7e8] sm:$0xff]
  %v2788 = vld [vmem:[#allocation3 + $0x7f0] sm:$0xff]
  %v2789 = vld [vmem:[#allocation3 + $0x7f8] sm:$0xff]
  %v2790 = vld [vmem:[#allocation3 + $0x800] sm:$0xff]
  %v2791 = vld [vmem:[#allocation3 + $0x808] sm:$0xff]
  %v2792 = vld [vmem:[#allocation3 + $0x810] sm:$0xff]
  %v2793 = vld [vmem:[#allocation3 + $0x818] sm:$0xff]
  %v2794 = vld [vmem:[#allocation3 + $0x820] sm:$0xff]
  %v2795 = vld [vmem:[#allocation3 + $0x828] sm:$0xff]
  %v2796 = vld [vmem:[#allocation3 + $0x830] sm:$0xff]
  %v2797 = vld [vmem:[#allocation3 + $0x838] sm:$0xff]
  %v2798 = vld [vmem:[#allocation3 + $0x840] sm:$0xff]
  %v2799 = vld [vmem:[#allocation3 + $0x848] sm:$0xff]
  %v2800 = vld [vmem:[#allocation3 + $0x850] sm:$0xff]
  %v2801 = vld [vmem:[#allocation3 + $0x858] sm:$0xff]
  %v2802 = vld [vmem:[#allocation3 + $0x860] sm:$0xff]
  %v2803 = vld [vmem:[#allocation3 + $0x868] sm:$0xff]
  %v2804 = vld [vmem:[#allocation3 + $0x870] sm:$0xff]
  %v2805 = vld [vmem:[#allocation3 + $0x878] sm:$0xff]
  %v2806 = vld [vmem:[#allocation3 + $0x880] sm:$0xff]
  %v2807 = vld [vmem:[#allocation3 + $0x888] sm:$0xff]
  %v2808 = vld [vmem:[#allocation3 + $0x890] sm:$0xff]
  %v2809 = vld [vmem:[#allocation3 + $0x898] sm:$0xff]
  %v2810 = vld [vmem:[#allocation3 + $0x8a0] sm:$0xff]
  %v2811 = vld [vmem:[#allocation3 + $0x8a8] sm:$0xff]
  %v2812 = vld [vmem:[#allocation3 + $0x8b0] sm:$0xff]
  %v2813 = vld [vmem:[#allocation3 + $0x8b8] sm:$0xff]
  %v2814 = vld [vmem:[#allocation3 + $0x8c0] sm:$0xff]
  %v2815 = vld [vmem:[#allocation3 + $0x8c8] sm:$0xff]
  %v2816 = vld [vmem:[#allocation3 + $0x8d0] sm:$0xff]
  %v2817 = vld [vmem:[#allocation3 + $0x8d8] sm:$0xff]
  %v2818 = vld [vmem:[#allocation3 + $0x8e0] sm:$0xff]
  %v2819 = vld [vmem:[#allocation3 + $0x8e8] sm:$0xff]
  %v2820 = vld [vmem:[#allocation3 + $0x8f0] sm:$0xff]
  %v2821 = vld [vmem:[#allocation3 + $0x8f8] sm:$0xff]
  %v2822 = vld [vmem:[#allocation3 + $0x900] sm:$0xff]
  %v2823 = vld [vmem:[#allocation3 + $0x908] sm:$0xff]
  %v2824 = vld [vmem:[#allocation3 + $0x910] sm:$0xff]
  %v2825 = vld [vmem:[#allocation3 + $0x918] sm:$0xff]
  %v2826 = vld [vmem:[#allocation3 + $0x920] sm:$0xff]
  %v2827 = vld [vmem:[#allocation3 + $0x928] sm:$0xff]
  %v2828 = vld [vmem:[#allocation3 + $0x930] sm:$0xff]
  %v2829 = vld [vmem:[#allocation3 + $0x938] sm:$0xff]
  %v2830 = vld [vmem:[#allocation3 + $0x940] sm:$0xff]
  %v2831 = vld [vmem:[#allocation3 + $0x948] sm:$0xff]
  %v2832 = vld [vmem:[#allocation3 + $0x950] sm:$0xff]
  %v2833 = vld [vmem:[#allocation3 + $0x958] sm:$0xff]
  %v2834 = vld [vmem:[#allocation3 + $0x960] sm:$0xff]
  %v2835 = vld [vmem:[#allocation3 + $0x968] sm:$0xff]
  %v2836 = vld [vmem:[#allocation3 + $0x970] sm:$0xff]
  %v2837 = vld [vmem:[#allocation3 + $0x978] sm:$0xff]
  %v2838 = vld [vmem:[#allocation3 + $0x980] sm:$0xff]
  %v2839 = vld [vmem:[#allocation3 + $0x988] sm:$0xff]
  %v2840 = vld [vmem:[#allocation3 + $0x990] sm:$0xff]
  %v2841 = vld [vmem:[#allocation3 + $0x998] sm:$0xff]
  %v2842 = vld [vmem:[#allocation3 + $0x9a0] sm:$0xff]
  %v2843 = vld [vmem:[#allocation3 + $0x9a8] sm:$0xff]
  %v2844 = vld [vmem:[#allocation3 + $0x9b0] sm:$0xff]
  %v2845 = vld [vmem:[#allocation3 + $0x9b8] sm:$0xff]
  %v2846 = vld [vmem:[#allocation3 + $0x9c0] sm:$0xff]
  %v2847 = vld [vmem:[#allocation3 + $0x9c8] sm:$0xff]
  %v2848 = vld [vmem:[#allocation3 + $0x9d0] sm:$0xff]
  %v2849 = vld [vmem:[#allocation3 + $0x9d8] sm:$0xff]
  %v2850 = vld [vmem:[#allocation3 + $0x9e0] sm:$0xff]
  %v2851 = vld [vmem:[#allocation3 + $0x9e8] sm:$0xff]
  %v2852 = vld [vmem:[#allocation3 + $0x9f0] sm:$0xff]
  %v2853 = vld [vmem:[#allocation3 + $0x9f8] sm:$0xff]
  %v2854 = vld [vmem:[#allocation3 + $0xa00] sm:$0xff]
  %v2855 = vld [vmem:[#allocation3 + $0xa08] sm:$0xff]
  %v2856 = vld [vmem:[#allocation3 + $0xa10] sm:$0xff]
  %v2857 = vld [vmem:[#allocation3 + $0xa18] sm:$0xff]
  %v2858 = vld [vmem:[#allocation3 + $0xa20] sm:$0xff]
  %v2859 = vld [vmem:[#allocation3 + $0xa28] sm:$0xff]
  %v2860 = vld [vmem:[#allocation3 + $0xa30] sm:$0xff]
  %v2861 = vld [vmem:[#allocation3 + $0xa38] sm:$0xff]
  %v2862 = vld [vmem:[#allocation3 + $0xa40] sm:$0xff]
  %v2863 = vld [vmem:[#allocation3 + $0xa48] sm:$0xff]
  %v2864 = vld [vmem:[#allocation3 + $0xa50] sm:$0xff]
  %v2865 = vld [vmem:[#allocation3 + $0xa58] sm:$0xff]
  %v2866 = vld [vmem:[#allocation3 + $0xa60] sm:$0xff]
  %v2867 = vld [vmem:[#allocation3 + $0xa68] sm:$0xff]
  %v2868 = vld [vmem:[#allocation3 + $0xa70] sm:$0xff]
  %v2869 = vld [vmem:[#allocation3 + $0xa78] sm:$0xff]
  %v2870 = vld [vmem:[#allocation3 + $0xa80] sm:$0xff]
  %v2871 = vld [vmem:[#allocation3 + $0xa88] sm:$0xff]
  %v2872 = vld [vmem:[#allocation3 + $0xa90] sm:$0xff]
  %v2873 = vld [vmem:[#allocation3 + $0xa98] sm:$0xff]
  %v2874 = vld [vmem:[#allocation3 + $0xaa0] sm:$0xff]
  %v2875 = vld [vmem:[#allocation3 + $0xaa8] sm:$0xff]
  %v2876 = vld [vmem:[#allocation3 + $0xab0] sm:$0xff]
  %v2877 = vld [vmem:[#allocation3 + $0xab8] sm:$0xff]
  %v2878 = vld [vmem:[#allocation3 + $0xac0] sm:$0xff]
  %v2879 = vld [vmem:[#allocation3 + $0xac8] sm:$0xff]
  %v2880 = vld [vmem:[#allocation3 + $0xad0] sm:$0xff]
  %v2881 = vld [vmem:[#allocation3 + $0xad8] sm:$0xff]
  %v2882 = vld [vmem:[#allocation3 + $0xae0] sm:$0xff]
  %v2883 = vld [vmem:[#allocation3 + $0xae8] sm:$0xff]
  %v2884 = vld [vmem:[#allocation3 + $0xaf0] sm:$0xff]
  %v2885 = vld [vmem:[#allocation3 + $0xaf8] sm:$0xff]
  %v2886 = vld [vmem:[#allocation3 + $0xb00] sm:$0xff]
  %v2887 = vld [vmem:[#allocation3 + $0xb08] sm:$0xff]
  %v2888 = vld [vmem:[#allocation3 + $0xb10] sm:$0xff]
  %v2889 = vld [vmem:[#allocation3 + $0xb18] sm:$0xff]
  %v2890 = vld [vmem:[#allocation3 + $0xb20] sm:$0xff]
  %v2891 = vld [vmem:[#allocation3 + $0xb28] sm:$0xff]
  %v2892 = vld [vmem:[#allocation3 + $0xb30] sm:$0xff]
  %v2893 = vld [vmem:[#allocation3 + $0xb38] sm:$0xff]
  %v2894 = vld [vmem:[#allocation3 + $0xb40] sm:$0xff]
  %v2895 = vld [vmem:[#allocation3 + $0xb48] sm:$0xff]
  %v2896 = vld [vmem:[#allocation3 + $0xb50] sm:$0xff]
  %v2897 = vld [vmem:[#allocation3 + $0xb58] sm:$0xff]
  %v2898 = vld [vmem:[#allocation3 + $0xb60] sm:$0xff]
  %v2899 = vld [vmem:[#allocation3 + $0xb68] sm:$0xff]
  %v2900 = vld [vmem:[#allocation3 + $0xb70] sm:$0xff]
  %v2901 = vld [vmem:[#allocation3 + $0xb78] sm:$0xff]
  %v2902 = vld [vmem:[#allocation3 + $0xb80] sm:$0xff]
  %v2903 = vld [vmem:[#allocation3 + $0xb88] sm:$0xff]
  %v2904 = vld [vmem:[#allocation3 + $0xb90] sm:$0xff]
  %v2905 = vld [vmem:[#allocation3 + $0xb98] sm:$0xff]
  %v2906 = vld [vmem:[#allocation3 + $0xba0] sm:$0xff]
  %v2907 = vld [vmem:[#allocation3 + $0xba8] sm:$0xff]
  %v2908 = vld [vmem:[#allocation3 + $0xbb0] sm:$0xff]
  %v2909 = vld [vmem:[#allocation3 + $0xbb8] sm:$0xff]
  %v2910 = vld [vmem:[#allocation3 + $0xbc0] sm:$0xff]
  %v2911 = vld [vmem:[#allocation3 + $0xbc8] sm:$0xff]
  %v2912 = vld [vmem:[#allocation3 + $0xbd0] sm:$0xff]
  %v2913 = vld [vmem:[#allocation3 + $0xbd8] sm:$0xff]
  %v2914 = vld [vmem:[#allocation3 + $0xbe0] sm:$0xff]
  %v2915 = vld [vmem:[#allocation3 + $0xbe8] sm:$0xff]
  %v2916 = vld [vmem:[#allocation3 + $0xbf0] sm:$0xff]
  %v2917 = vld [vmem:[#allocation3 + $0xbf8] sm:$0xff]
  %vm2918 = vcmask 523264
  %v2920 = vsel %vm2918, %v2527, 0
  %v2923 = vsel %vm2918, %v2529, 0
  %v2926 = vsel %vm2918, %v2531, 0
  %v2929 = vsel %vm2918, %v2533, 0
  %2931 = vmatpush.msra.mxu0 %v2774
  %2932 = vmatpush.msra.mxu0 %v2758
  %2933 = vmatpush.msra.mxu0 %v2742
  %2934 = vmatpush.msra.mxu0 %v2726
  %2935 = vmatpush.msra.mxu0 %v2710
  %2936 = vmatpush.msra.mxu0 %v2694
  %2937 = vmatpush.msra.mxu0 %v2678
  %2938 = vmatpush.msra.mxu0 %v2662
  %2939 = vmatpush.msra.mxu0 %v2646
  %2940 = vmatpush.msra.mxu0 %v2630
  %2941 = vmatpush.msra.mxu0 %v2614
  %2942 = vmatpush.msra.mxu0 %v2598
  %2943 = vmatpush.msra.mxu0 %v2582
  %2944 = vmatpush.msra.mxu0 %v2566
  %2945 = vmatpush.msra.mxu0 %v2550
  %2946 = vmatpush.msra.mxu0 %v2534
  %2947 = vmatmul.f32.gmra.mxu0 %v2526
  %v2948 = vpop.f32.mrf.mxu0
  %v2949 = vadd.f32 0.0, %v2948
  %2950 = vmatmul.f32.gmra.mxu0 %v2528
  %v2951 = vpop.f32.mrf.mxu0
  %v2952 = vadd.f32 0.0, %v2951
  %2953 = vmatmul.f32.gmra.mxu0 %v2530
  %v2954 = vpop.f32.mrf.mxu0
  %v2955 = vadd.f32 0.0, %v2954
  %2956 = vmatmul.f32.gmra.mxu0 %v2532
  %v2957 = vpop.f32.mrf.mxu0
  %v2958 = vadd.f32 0.0, %v2957
  %2959 = vdwg.mxu0
  %2960 = vmatpush.msra.mxu0 0.0
  %2961 = vmatpush.msra.mxu0 0.0
  %2962 = vmatpush.msra.mxu0 0.0
  %2963 = vmatpush.msra.mxu0 0.0
  %2964 = vmatpush.msra.mxu0 0.0
  %2965 = vmatpush.msra.mxu0 0.0
  %2966 = vmatpush.msra.mxu0 0.0
  %2967 = vmatpush.msra.mxu0 0.0
  %2968 = vmatpush.msra.mxu0 %v2902
  %2969 = vmatpush.msra.mxu0 %v2886
  %2970 = vmatpush.msra.mxu0 %v2870
  %2971 = vmatpush.msra.mxu0 %v2854
  %2972 = vmatpush.msra.mxu0 %v2838
  %2973 = vmatpush.msra.mxu0 %v2822
  %2974 = vmatpush.msra.mxu0 %v2806
  %2975 = vmatpush.msra.mxu0 %v2790
  %2976 = vmatmul.f32.gmra.mxu0 %v2920
  %v2977 = vpop.f32.mrf.mxu0
  %v2978 = vadd.f32 %v2949, %v2977
  %2979 = vmatmul.f32.gmra.mxu0 %v2923
  %v2980 = vpop.f32.mrf.mxu0
  %v2981 = vadd.f32 %v2952, %v2980
  %2982 = vmatmul.f32.gmra.mxu0 %v2926
  %v2983 = vpop.f32.mrf.mxu0
  %v2984 = vadd.f32 %v2955, %v2983
  %2985 = vmatmul.f32.gmra.mxu0 %v2929
  %v2986 = vpop.f32.mrf.mxu0
  %v2987 = vadd.f32 %v2958, %v2986
  %2988 = vdwg.mxu0
  %2989 = vmatpush.msra.mxu0 %v2775
  %2990 = vmatpush.msra.mxu0 %v2759
  %2991 = vmatpush.msra.mxu0 %v2743
  %2992 = vmatpush.msra.mxu0 %v2727
  %2993 = vmatpush.msra.mxu0 %v2711
  %2994 = vmatpush.msra.mxu0 %v2695
  %2995 = vmatpush.msra.mxu0 %v2679
  %2996 = vmatpush.msra.mxu0 %v2663
  %2997 = vmatpush.msra.mxu0 %v2647
  %2998 = vmatpush.msra.mxu0 %v2631
  %2999 = vmatpush.msra.mxu0 %v2615
  %3000 = vmatpush.msra.mxu0 %v2599
  %3001 = vmatpush.msra.mxu0 %v2583
  %3002 = vmatpush.msra.mxu0 %v2567
  %3003 = vmatpush.msra.mxu0 %v2551
  %3004 = vmatpush.msra.mxu0 %v2535
  %3005 = vmatmul.f32.gmra.mxu0 %v2526
  %v3006 = vpop.f32.mrf.mxu0
  %v3007 = vadd.f32 0.0, %v3006
  %3008 = vmatmul.f32.gmra.mxu0 %v2528
  %v3009 = vpop.f32.mrf.mxu0
  %v3010 = vadd.f32 0.0, %v3009
  %3011 = vmatmul.f32.gmra.mxu0 %v2530
  %v3012 = vpop.f32.mrf.mxu0
  %v3013 = vadd.f32 0.0, %v3012
  %3014 = vmatmul.f32.gmra.mxu0 %v2532
  %v3015 = vpop.f32.mrf.mxu0
  %v3016 = vadd.f32 0.0, %v3015
  %3017 = vdwg.mxu0
  %3018 = vmatpush.msra.mxu0 0.0
  %3019 = vmatpush.msra.mxu0 0.0
  %3020 = vmatpush.msra.mxu0 0.0
  %3021 = vmatpush.msra.mxu0 0.0
  %3022 = vmatpush.msra.mxu0 0.0
  %3023 = vmatpush.msra.mxu0 0.0
  %3024 = vmatpush.msra.mxu0 0.0
  %3025 = vmatpush.msra.mxu0 0.0
  %3026 = vmatpush.msra.mxu0 %v2903
  %3027 = vmatpush.msra.mxu0 %v2887
  %3028 = vmatpush.msra.mxu0 %v2871
  %3029 = vmatpush.msra.mxu0 %v2855
  %3030 = vmatpush.msra.mxu0 %v2839
  %3031 = vmatpush.msra.mxu0 %v2823
  %3032 = vmatpush.msra.mxu0 %v2807
  %3033 = vmatpush.msra.mxu0 %v2791
  %3034 = vmatmul.f32.gmra.mxu0 %v2920
  %v3035 = vpop.f32.mrf.mxu0
  %v3036 = vadd.f32 %v3007, %v3035
  %3037 = vmatmul.f32.gmra.mxu0 %v2923
  %v3038 = vpop.f32.mrf.mxu0
  %v3039 = vadd.f32 %v3010, %v3038
  %3040 = vmatmul.f32.gmra.mxu0 %v2926
  %v3041 = vpop.f32.mrf.mxu0
  %v3042 = vadd.f32 %v3013, %v3041
  %3043 = vmatmul.f32.gmra.mxu0 %v2929
  %v3044 = vpop.f32.mrf.mxu0
  %v3045 = vadd.f32 %v3016, %v3044
  %3046 = vdwg.mxu0
  %3047 = vmatpush.msra.mxu0 %v2776
  %3048 = vmatpush.msra.mxu0 %v2760
  %3049 = vmatpush.msra.mxu0 %v2744
  %3050 = vmatpush.msra.mxu0 %v2728
  %3051 = vmatpush.msra.mxu0 %v2712
  %3052 = vmatpush.msra.mxu0 %v2696
  %3053 = vmatpush.msra.mxu0 %v2680
  %3054 = vmatpush.msra.mxu0 %v2664
  %3055 = vmatpush.msra.mxu0 %v2648
  %3056 = vmatpush.msra.mxu0 %v2632
  %3057 = vmatpush.msra.mxu0 %v2616
  %3058 = vmatpush.msra.mxu0 %v2600
  %3059 = vmatpush.msra.mxu0 %v2584
  %3060 = vmatpush.msra.mxu0 %v2568
  %3061 = vmatpush.msra.mxu0 %v2552
  %3062 = vmatpush.msra.mxu0 %v2536
  %3063 = vmatmul.f32.gmra.mxu0 %v2526
  %v3064 = vpop.f32.mrf.mxu0
  %v3065 = vadd.f32 0.0, %v3064
  %3066 = vmatmul.f32.gmra.mxu0 %v2528
  %v3067 = vpop.f32.mrf.mxu0
  %v3068 = vadd.f32 0.0, %v3067
  %3069 = vmatmul.f32.gmra.mxu0 %v2530
  %v3070 = vpop.f32.mrf.mxu0
  %v3071 = vadd.f32 0.0, %v3070
  %3072 = vmatmul.f32.gmra.mxu0 %v2532
  %v3073 = vpop.f32.mrf.mxu0
  %v3074 = vadd.f32 0.0, %v3073
  %3075 = vdwg.mxu0
  %3076 = vmatpush.msra.mxu0 0.0
  %3077 = vmatpush.msra.mxu0 0.0
  %3078 = vmatpush.msra.mxu0 0.0
  %3079 = vmatpush.msra.mxu0 0.0
  %3080 = vmatpush.msra.mxu0 0.0
  %3081 = vmatpush.msra.mxu0 0.0
  %3082 = vmatpush.msra.mxu0 0.0
  %3083 = vmatpush.msra.mxu0 0.0
  %3084 = vmatpush.msra.mxu0 %v2904
  %3085 = vmatpush.msra.mxu0 %v2888
  %3086 = vmatpush.msra.mxu0 %v2872
  %3087 = vmatpush.msra.mxu0 %v2856
  %3088 = vmatpush.msra.mxu0 %v2840
  %3089 = vmatpush.msra.mxu0 %v2824
  %3090 = vmatpush.msra.mxu0 %v2808
  %3091 = vmatpush.msra.mxu0 %v2792
  %3092 = vmatmul.f32.gmra.mxu0 %v2920
  %v3093 = vpop.f32.mrf.mxu0
  %v3094 = vadd.f32 %v3065, %v3093
  %3095 = vmatmul.f32.gmra.mxu0 %v2923
  %v3096 = vpop.f32.mrf.mxu0
  %v3097 = vadd.f32 %v3068, %v3096
  %3098 = vmatmul.f32.gmra.mxu0 %v2926
  %v3099 = vpop.f32.mrf.mxu0
  %v3100 = vadd.f32 %v3071, %v3099
  %3101 = vmatmul.f32.gmra.mxu0 %v2929
  %v3102 = vpop.f32.mrf.mxu0
  %v3103 = vadd.f32 %v3074, %v3102
  %3104 = vdwg.mxu0
  %3105 = vmatpush.msra.mxu0 %v2777
  %3106 = vmatpush.msra.mxu0 %v2761
  %3107 = vmatpush.msra.mxu0 %v2745
  %3108 = vmatpush.msra.mxu0 %v2729
  %3109 = vmatpush.msra.mxu0 %v2713
  %3110 = vmatpush.msra.mxu0 %v2697
  %3111 = vmatpush.msra.mxu0 %v2681
  %3112 = vmatpush.msra.mxu0 %v2665
  %3113 = vmatpush.msra.mxu0 %v2649
  %3114 = vmatpush.msra.mxu0 %v2633
  %3115 = vmatpush.msra.mxu0 %v2617
  %3116 = vmatpush.msra.mxu0 %v2601
  %3117 = vmatpush.msra.mxu0 %v2585
  %3118 = vmatpush.msra.mxu0 %v2569
  %3119 = vmatpush.msra.mxu0 %v2553
  %3120 = vmatpush.msra.mxu0 %v2537
  %3121 = vmatmul.f32.gmra.mxu0 %v2526
  %v3122 = vpop.f32.mrf.mxu0
  %v3123 = vadd.f32 0.0, %v3122
  %3124 = vmatmul.f32.gmra.mxu0 %v2528
  %v3125 = vpop.f32.mrf.mxu0
  %v3126 = vadd.f32 0.0, %v3125
  %3127 = vmatmul.f32.gmra.mxu0 %v2530
  %v3128 = vpop.f32.mrf.mxu0
  %v3129 = vadd.f32 0.0, %v3128
  %3130 = vmatmul.f32.gmra.mxu0 %v2532
  %v3131 = vpop.f32.mrf.mxu0
  %v3132 = vadd.f32 0.0, %v3131
  %3133 = vdwg.mxu0
  %3134 = vmatpush.msra.mxu0 0.0
  %3135 = vmatpush.msra.mxu0 0.0
  %3136 = vmatpush.msra.mxu0 0.0
  %3137 = vmatpush.msra.mxu0 0.0
  %3138 = vmatpush.msra.mxu0 0.0
  %3139 = vmatpush.msra.mxu0 0.0
  %3140 = vmatpush.msra.mxu0 0.0
  %3141 = vmatpush.msra.mxu0 0.0
  %3142 = vmatpush.msra.mxu0 %v2905
  %3143 = vmatpush.msra.mxu0 %v2889
  %3144 = vmatpush.msra.mxu0 %v2873
  %3145 = vmatpush.msra.mxu0 %v2857
  %3146 = vmatpush.msra.mxu0 %v2841
  %3147 = vmatpush.msra.mxu0 %v2825
  %3148 = vmatpush.msra.mxu0 %v2809
  %3149 = vmatpush.msra.mxu0 %v2793
  %3150 = vmatmul.f32.gmra.mxu0 %v2920
  %v3151 = vpop.f32.mrf.mxu0
  %v3152 = vadd.f32 %v3123, %v3151
  %3153 = vmatmul.f32.gmra.mxu0 %v2923
  %v3154 = vpop.f32.mrf.mxu0
  %v3155 = vadd.f32 %v3126, %v3154
  %3156 = vmatmul.f32.gmra.mxu0 %v2926
  %v3157 = vpop.f32.mrf.mxu0
  %v3158 = vadd.f32 %v3129, %v3157
  %3159 = vmatmul.f32.gmra.mxu0 %v2929
  %v3160 = vpop.f32.mrf.mxu0
  %v3161 = vadd.f32 %v3132, %v3160
  %3162 = vdwg.mxu0
  %3163 = vmatpush.msra.mxu0 %v2778
  %3164 = vmatpush.msra.mxu0 %v2762
  %3165 = vmatpush.msra.mxu0 %v2746
  %3166 = vmatpush.msra.mxu0 %v2730
  %3167 = vmatpush.msra.mxu0 %v2714
  %3168 = vmatpush.msra.mxu0 %v2698
  %3169 = vmatpush.msra.mxu0 %v2682
  %3170 = vmatpush.msra.mxu0 %v2666
  %3171 = vmatpush.msra.mxu0 %v2650
  %3172 = vmatpush.msra.mxu0 %v2634
  %3173 = vmatpush.msra.mxu0 %v2618
  %3174 = vmatpush.msra.mxu0 %v2602
  %3175 = vmatpush.msra.mxu0 %v2586
  %3176 = vmatpush.msra.mxu0 %v2570
  %3177 = vmatpush.msra.mxu0 %v2554
  %3178 = vmatpush.msra.mxu0 %v2538
  %3179 = vmatmul.f32.gmra.mxu0 %v2526
  %v3180 = vpop.f32.mrf.mxu0
  %v3181 = vadd.f32 0.0, %v3180
  %3182 = vmatmul.f32.gmra.mxu0 %v2528
  %v3183 = vpop.f32.mrf.mxu0
  %v3184 = vadd.f32 0.0, %v3183
  %3185 = vmatmul.f32.gmra.mxu0 %v2530
  %v3186 = vpop.f32.mrf.mxu0
  %v3187 = vadd.f32 0.0, %v3186
  %3188 = vmatmul.f32.gmra.mxu0 %v2532
  %v3189 = vpop.f32.mrf.mxu0
  %v3190 = vadd.f32 0.0, %v3189
  %3191 = vdwg.mxu0
  %3192 = vmatpush.msra.mxu0 0.0
  %3193 = vmatpush.msra.mxu0 0.0
  %3194 = vmatpush.msra.mxu0 0.0
  %3195 = vmatpush.msra.mxu0 0.0
  %3196 = vmatpush.msra.mxu0 0.0
  %3197 = vmatpush.msra.mxu0 0.0
  %3198 = vmatpush.msra.mxu0 0.0
  %3199 = vmatpush.msra.mxu0 0.0
  %3200 = vmatpush.msra.mxu0 %v2906
  %3201 = vmatpush.msra.mxu0 %v2890
  %3202 = vmatpush.msra.mxu0 %v2874
  %3203 = vmatpush.msra.mxu0 %v2858
  %3204 = vmatpush.msra.mxu0 %v2842
  %3205 = vmatpush.msra.mxu0 %v2826
  %3206 = vmatpush.msra.mxu0 %v2810
  %3207 = vmatpush.msra.mxu0 %v2794
  %3208 = vmatmul.f32.gmra.mxu0 %v2920
  %v3209 = vpop.f32.mrf.mxu0
  %v3210 = vadd.f32 %v3181, %v3209
  %3211 = vmatmul.f32.gmra.mxu0 %v2923
  %v3212 = vpop.f32.mrf.mxu0
  %v3213 = vadd.f32 %v3184, %v3212
  %3214 = vmatmul.f32.gmra.mxu0 %v2926
  %v3215 = vpop.f32.mrf.mxu0
  %v3216 = vadd.f32 %v3187, %v3215
  %3217 = vmatmul.f32.gmra.mxu0 %v2929
  %v3218 = vpop.f32.mrf.mxu0
  %v3219 = vadd.f32 %v3190, %v3218
  %3220 = vdwg.mxu0
  %3221 = vmatpush.msra.mxu0 %v2779
  %3222 = vmatpush.msra.mxu0 %v2763
  %3223 = vmatpush.msra.mxu0 %v2747
  %3224 = vmatpush.msra.mxu0 %v2731
  %3225 = vmatpush.msra.mxu0 %v2715
  %3226 = vmatpush.msra.mxu0 %v2699
  %3227 = vmatpush.msra.mxu0 %v2683
  %3228 = vmatpush.msra.mxu0 %v2667
  %3229 = vmatpush.msra.mxu0 %v2651
  %3230 = vmatpush.msra.mxu0 %v2635
  %3231 = vmatpush.msra.mxu0 %v2619
  %3232 = vmatpush.msra.mxu0 %v2603
  %3233 = vmatpush.msra.mxu0 %v2587
  %3234 = vmatpush.msra.mxu0 %v2571
  %3235 = vmatpush.msra.mxu0 %v2555
  %3236 = vmatpush.msra.mxu0 %v2539
  %3237 = vmatmul.f32.gmra.mxu0 %v2526
  %v3238 = vpop.f32.mrf.mxu0
  %v3239 = vadd.f32 0.0, %v3238
  %3240 = vmatmul.f32.gmra.mxu0 %v2528
  %v3241 = vpop.f32.mrf.mxu0
  %v3242 = vadd.f32 0.0, %v3241
  %3243 = vmatmul.f32.gmra.mxu0 %v2530
  %v3244 = vpop.f32.mrf.mxu0
  %v3245 = vadd.f32 0.0, %v3244
  %3246 = vmatmul.f32.gmra.mxu0 %v2532
  %v3247 = vpop.f32.mrf.mxu0
  %v3248 = vadd.f32 0.0, %v3247
  %3249 = vdwg.mxu0
  %3250 = vmatpush.msra.mxu0 0.0
  %3251 = vmatpush.msra.mxu0 0.0
  %3252 = vmatpush.msra.mxu0 0.0
  %3253 = vmatpush.msra.mxu0 0.0
  %3254 = vmatpush.msra.mxu0 0.0
  %3255 = vmatpush.msra.mxu0 0.0
  %3256 = vmatpush.msra.mxu0 0.0
  %3257 = vmatpush.msra.mxu0 0.0
  %3258 = vmatpush.msra.mxu0 %v2907
  %3259 = vmatpush.msra.mxu0 %v2891
  %3260 = vmatpush.msra.mxu0 %v2875
  %3261 = vmatpush.msra.mxu0 %v2859
  %3262 = vmatpush.msra.mxu0 %v2843
  %3263 = vmatpush.msra.mxu0 %v2827
  %3264 = vmatpush.msra.mxu0 %v2811
  %3265 = vmatpush.msra.mxu0 %v2795
  %3266 = vmatmul.f32.gmra.mxu0 %v2920
  %v3267 = vpop.f32.mrf.mxu0
  %v3268 = vadd.f32 %v3239, %v3267
  %3269 = vmatmul.f32.gmra.mxu0 %v2923
  %v3270 = vpop.f32.mrf.mxu0
  %v3271 = vadd.f32 %v3242, %v3270
  %3272 = vmatmul.f32.gmra.mxu0 %v2926
  %v3273 = vpop.f32.mrf.mxu0
  %v3274 = vadd.f32 %v3245, %v3273
  %3275 = vmatmul.f32.gmra.mxu0 %v2929
  %v3276 = vpop.f32.mrf.mxu0
  %v3277 = vadd.f32 %v3248, %v3276
  %3278 = vdwg.mxu0
  %3279 = vmatpush.msra.mxu0 %v2780
  %3280 = vmatpush.msra.mxu0 %v2764
  %3281 = vmatpush.msra.mxu0 %v2748
  %3282 = vmatpush.msra.mxu0 %v2732
  %3283 = vmatpush.msra.mxu0 %v2716
  %3284 = vmatpush.msra.mxu0 %v2700
  %3285 = vmatpush.msra.mxu0 %v2684
  %3286 = vmatpush.msra.mxu0 %v2668
  %3287 = vmatpush.msra.mxu0 %v2652
  %3288 = vmatpush.msra.mxu0 %v2636
  %3289 = vmatpush.msra.mxu0 %v2620
  %3290 = vmatpush.msra.mxu0 %v2604
  %3291 = vmatpush.msra.mxu0 %v2588
  %3292 = vmatpush.msra.mxu0 %v2572
  %3293 = vmatpush.msra.mxu0 %v2556
  %3294 = vmatpush.msra.mxu0 %v2540
  %3295 = vmatmul.f32.gmra.mxu0 %v2526
  %v3296 = vpop.f32.mrf.mxu0
  %v3297 = vadd.f32 0.0, %v3296
  %3298 = vmatmul.f32.gmra.mxu0 %v2528
  %v3299 = vpop.f32.mrf.mxu0
  %v3300 = vadd.f32 0.0, %v3299
  %3301 = vmatmul.f32.gmra.mxu0 %v2530
  %v3302 = vpop.f32.mrf.mxu0
  %v3303 = vadd.f32 0.0, %v3302
  %3304 = vmatmul.f32.gmra.mxu0 %v2532
  %v3305 = vpop.f32.mrf.mxu0
  %v3306 = vadd.f32 0.0, %v3305
  %3307 = vdwg.mxu0
  %3308 = vmatpush.msra.mxu0 0.0
  %3309 = vmatpush.msra.mxu0 0.0
  %3310 = vmatpush.msra.mxu0 0.0
  %3311 = vmatpush.msra.mxu0 0.0
  %3312 = vmatpush.msra.mxu0 0.0
  %3313 = vmatpush.msra.mxu0 0.0
  %3314 = vmatpush.msra.mxu0 0.0
  %3315 = vmatpush.msra.mxu0 0.0
  %3316 = vmatpush.msra.mxu0 %v2908
  %3317 = vmatpush.msra.mxu0 %v2892
  %3318 = vmatpush.msra.mxu0 %v2876
  %3319 = vmatpush.msra.mxu0 %v2860
  %3320 = vmatpush.msra.mxu0 %v2844
  %3321 = vmatpush.msra.mxu0 %v2828
  %3322 = vmatpush.msra.mxu0 %v2812
  %3323 = vmatpush.msra.mxu0 %v2796
  %3324 = vmatmul.f32.gmra.mxu0 %v2920
  %v3325 = vpop.f32.mrf.mxu0
  %v3326 = vadd.f32 %v3297, %v3325
  %3327 = vmatmul.f32.gmra.mxu0 %v2923
  %v3328 = vpop.f32.mrf.mxu0
  %v3329 = vadd.f32 %v3300, %v3328
  %3330 = vmatmul.f32.gmra.mxu0 %v2926
  %v3331 = vpop.f32.mrf.mxu0
  %v3332 = vadd.f32 %v3303, %v3331
  %3333 = vmatmul.f32.gmra.mxu0 %v2929
  %v3334 = vpop.f32.mrf.mxu0
  %v3335 = vadd.f32 %v3306, %v3334
  %3336 = vdwg.mxu0
  %3337 = vmatpush.msra.mxu0 %v2781
  %3338 = vmatpush.msra.mxu0 %v2765
  %3339 = vmatpush.msra.mxu0 %v2749
  %3340 = vmatpush.msra.mxu0 %v2733
  %3341 = vmatpush.msra.mxu0 %v2717
  %3342 = vmatpush.msra.mxu0 %v2701
  %3343 = vmatpush.msra.mxu0 %v2685
  %3344 = vmatpush.msra.mxu0 %v2669
  %3345 = vmatpush.msra.mxu0 %v2653
  %3346 = vmatpush.msra.mxu0 %v2637
  %3347 = vmatpush.msra.mxu0 %v2621
  %3348 = vmatpush.msra.mxu0 %v2605
  %3349 = vmatpush.msra.mxu0 %v2589
  %3350 = vmatpush.msra.mxu0 %v2573
  %3351 = vmatpush.msra.mxu0 %v2557
  %3352 = vmatpush.msra.mxu0 %v2541
  %3353 = vmatmul.f32.gmra.mxu0 %v2526
  %v3354 = vpop.f32.mrf.mxu0
  %v3355 = vadd.f32 0.0, %v3354
  %3356 = vmatmul.f32.gmra.mxu0 %v2528
  %v3357 = vpop.f32.mrf.mxu0
  %v3358 = vadd.f32 0.0, %v3357
  %3359 = vmatmul.f32.gmra.mxu0 %v2530
  %v3360 = vpop.f32.mrf.mxu0
  %v3361 = vadd.f32 0.0, %v3360
  %3362 = vmatmul.f32.gmra.mxu0 %v2532
  %v3363 = vpop.f32.mrf.mxu0
  %v3364 = vadd.f32 0.0, %v3363
  %3365 = vdwg.mxu0
  %3366 = vmatpush.msra.mxu0 0.0
  %3367 = vmatpush.msra.mxu0 0.0
  %3368 = vmatpush.msra.mxu0 0.0
  %3369 = vmatpush.msra.mxu0 0.0
  %3370 = vmatpush.msra.mxu0 0.0
  %3371 = vmatpush.msra.mxu0 0.0
  %3372 = vmatpush.msra.mxu0 0.0
  %3373 = vmatpush.msra.mxu0 0.0
  %3374 = vmatpush.msra.mxu0 %v2909
  %3375 = vmatpush.msra.mxu0 %v2893
  %3376 = vmatpush.msra.mxu0 %v2877
  %3377 = vmatpush.msra.mxu0 %v2861
  %3378 = vmatpush.msra.mxu0 %v2845
  %3379 = vmatpush.msra.mxu0 %v2829
  %3380 = vmatpush.msra.mxu0 %v2813
  %3381 = vmatpush.msra.mxu0 %v2797
  %3382 = vmatmul.f32.gmra.mxu0 %v2920
  %v3383 = vpop.f32.mrf.mxu0
  %v3384 = vadd.f32 %v3355, %v3383
  %3385 = vmatmul.f32.gmra.mxu0 %v2923
  %v3386 = vpop.f32.mrf.mxu0
  %v3387 = vadd.f32 %v3358, %v3386
  %3388 = vmatmul.f32.gmra.mxu0 %v2926
  %v3389 = vpop.f32.mrf.mxu0
  %v3390 = vadd.f32 %v3361, %v3389
  %3391 = vmatmul.f32.gmra.mxu0 %v2929
  %v3392 = vpop.f32.mrf.mxu0
  %v3393 = vadd.f32 %v3364, %v3392
  %3394 = vdwg.mxu0
  %3395 = vmatpush.msra.mxu0 %v2782
  %3396 = vmatpush.msra.mxu0 %v2766
  %3397 = vmatpush.msra.mxu0 %v2750
  %3398 = vmatpush.msra.mxu0 %v2734
  %3399 = vmatpush.msra.mxu0 %v2718
  %3400 = vmatpush.msra.mxu0 %v2702
  %3401 = vmatpush.msra.mxu0 %v2686
  %3402 = vmatpush.msra.mxu0 %v2670
  %3403 = vmatpush.msra.mxu0 %v2654
  %3404 = vmatpush.msra.mxu0 %v2638
  %3405 = vmatpush.msra.mxu0 %v2622
  %3406 = vmatpush.msra.mxu0 %v2606
  %3407 = vmatpush.msra.mxu0 %v2590
  %3408 = vmatpush.msra.mxu0 %v2574
  %3409 = vmatpush.msra.mxu0 %v2558
  %3410 = vmatpush.msra.mxu0 %v2542
  %3411 = vmatmul.f32.gmra.mxu0 %v2526
  %v3412 = vpop.f32.mrf.mxu0
  %v3413 = vadd.f32 0.0, %v3412
  %3414 = vmatmul.f32.gmra.mxu0 %v2528
  %v3415 = vpop.f32.mrf.mxu0
  %v3416 = vadd.f32 0.0, %v3415
  %3417 = vmatmul.f32.gmra.mxu0 %v2530
  %v3418 = vpop.f32.mrf.mxu0
  %v3419 = vadd.f32 0.0, %v3418
  %3420 = vmatmul.f32.gmra.mxu0 %v2532
  %v3421 = vpop.f32.mrf.mxu0
  %v3422 = vadd.f32 0.0, %v3421
  %3423 = vdwg.mxu0
  %3424 = vmatpush.msra.mxu0 0.0
  %3425 = vmatpush.msra.mxu0 0.0
  %3426 = vmatpush.msra.mxu0 0.0
  %3427 = vmatpush.msra.mxu0 0.0
  %3428 = vmatpush.msra.mxu0 0.0
  %3429 = vmatpush.msra.mxu0 0.0
  %3430 = vmatpush.msra.mxu0 0.0
  %3431 = vmatpush.msra.mxu0 0.0
  %3432 = vmatpush.msra.mxu0 %v2910
  %3433 = vmatpush.msra.mxu0 %v2894
  %3434 = vmatpush.msra.mxu0 %v2878
  %3435 = vmatpush.msra.mxu0 %v2862
  %3436 = vmatpush.msra.mxu0 %v2846
  %3437 = vmatpush.msra.mxu0 %v2830
  %3438 = vmatpush.msra.mxu0 %v2814
  %3439 = vmatpush.msra.mxu0 %v2798
  %3440 = vmatmul.f32.gmra.mxu0 %v2920
  %v3441 = vpop.f32.mrf.mxu0
  %v3442 = vadd.f32 %v3413, %v3441
  %3443 = vmatmul.f32.gmra.mxu0 %v2923
  %v3444 = vpop.f32.mrf.mxu0
  %v3445 = vadd.f32 %v3416, %v3444
  %3446 = vmatmul.f32.gmra.mxu0 %v2926
  %v3447 = vpop.f32.mrf.mxu0
  %v3448 = vadd.f32 %v3419, %v3447
  %3449 = vmatmul.f32.gmra.mxu0 %v2929
  %v3450 = vpop.f32.mrf.mxu0
  %v3451 = vadd.f32 %v3422, %v3450
  %3452 = vdwg.mxu0
  %3453 = vmatpush.msra.mxu0 %v2783
  %3454 = vmatpush.msra.mxu0 %v2767
  %3455 = vmatpush.msra.mxu0 %v2751
  %3456 = vmatpush.msra.mxu0 %v2735
  %3457 = vmatpush.msra.mxu0 %v2719
  %3458 = vmatpush.msra.mxu0 %v2703
  %3459 = vmatpush.msra.mxu0 %v2687
  %3460 = vmatpush.msra.mxu0 %v2671
  %3461 = vmatpush.msra.mxu0 %v2655
  %3462 = vmatpush.msra.mxu0 %v2639
  %3463 = vmatpush.msra.mxu0 %v2623
  %3464 = vmatpush.msra.mxu0 %v2607
  %3465 = vmatpush.msra.mxu0 %v2591
  %3466 = vmatpush.msra.mxu0 %v2575
  %3467 = vmatpush.msra.mxu0 %v2559
  %3468 = vmatpush.msra.mxu0 %v2543
  %3469 = vmatmul.f32.gmra.mxu0 %v2526
  %v3470 = vpop.f32.mrf.mxu0
  %v3471 = vadd.f32 0.0, %v3470
  %3472 = vmatmul.f32.gmra.mxu0 %v2528
  %v3473 = vpop.f32.mrf.mxu0
  %v3474 = vadd.f32 0.0, %v3473
  %3475 = vmatmul.f32.gmra.mxu0 %v2530
  %v3476 = vpop.f32.mrf.mxu0
  %v3477 = vadd.f32 0.0, %v3476
  %3478 = vmatmul.f32.gmra.mxu0 %v2532
  %v3479 = vpop.f32.mrf.mxu0
  %v3480 = vadd.f32 0.0, %v3479
  %3481 = vdwg.mxu0
  %3482 = vmatpush.msra.mxu0 0.0
  %3483 = vmatpush.msra.mxu0 0.0
  %3484 = vmatpush.msra.mxu0 0.0
  %3485 = vmatpush.msra.mxu0 0.0
  %3486 = vmatpush.msra.mxu0 0.0
  %3487 = vmatpush.msra.mxu0 0.0
  %3488 = vmatpush.msra.mxu0 0.0
  %3489 = vmatpush.msra.mxu0 0.0
  %3490 = vmatpush.msra.mxu0 %v2911
  %3491 = vmatpush.msra.mxu0 %v2895
  %3492 = vmatpush.msra.mxu0 %v2879
  %3493 = vmatpush.msra.mxu0 %v2863
  %3494 = vmatpush.msra.mxu0 %v2847
  %3495 = vmatpush.msra.mxu0 %v2831
  %3496 = vmatpush.msra.mxu0 %v2815
  %3497 = vmatpush.msra.mxu0 %v2799
  %3498 = vmatmul.f32.gmra.mxu0 %v2920
  %v3499 = vpop.f32.mrf.mxu0
  %v3500 = vadd.f32 %v3471, %v3499
  %3501 = vmatmul.f32.gmra.mxu0 %v2923
  %v3502 = vpop.f32.mrf.mxu0
  %v3503 = vadd.f32 %v3474, %v3502
  %3504 = vmatmul.f32.gmra.mxu0 %v2926
  %v3505 = vpop.f32.mrf.mxu0
  %v3506 = vadd.f32 %v3477, %v3505
  %3507 = vmatmul.f32.gmra.mxu0 %v2929
  %v3508 = vpop.f32.mrf.mxu0
  %v3509 = vadd.f32 %v3480, %v3508
  %3510 = vdwg.mxu0
  %3511 = vmatpush.msra.mxu0 %v2784
  %3512 = vmatpush.msra.mxu0 %v2768
  %3513 = vmatpush.msra.mxu0 %v2752
  %3514 = vmatpush.msra.mxu0 %v2736
  %3515 = vmatpush.msra.mxu0 %v2720
  %3516 = vmatpush.msra.mxu0 %v2704
  %3517 = vmatpush.msra.mxu0 %v2688
  %3518 = vmatpush.msra.mxu0 %v2672
  %3519 = vmatpush.msra.mxu0 %v2656
  %3520 = vmatpush.msra.mxu0 %v2640
  %3521 = vmatpush.msra.mxu0 %v2624
  %3522 = vmatpush.msra.mxu0 %v2608
  %3523 = vmatpush.msra.mxu0 %v2592
  %3524 = vmatpush.msra.mxu0 %v2576
  %3525 = vmatpush.msra.mxu0 %v2560
  %3526 = vmatpush.msra.mxu0 %v2544
  %3527 = vmatmul.f32.gmra.mxu0 %v2526
  %v3528 = vpop.f32.mrf.mxu0
  %v3529 = vadd.f32 0.0, %v3528
  %3530 = vmatmul.f32.gmra.mxu0 %v2528
  %v3531 = vpop.f32.mrf.mxu0
  %v3532 = vadd.f32 0.0, %v3531
  %3533 = vmatmul.f32.gmra.mxu0 %v2530
  %v3534 = vpop.f32.mrf.mxu0
  %v3535 = vadd.f32 0.0, %v3534
  %3536 = vmatmul.f32.gmra.mxu0 %v2532
  %v3537 = vpop.f32.mrf.mxu0
  %v3538 = vadd.f32 0.0, %v3537
  %3539 = vdwg.mxu0
  %3540 = vmatpush.msra.mxu0 0.0
  %3541 = vmatpush.msra.mxu0 0.0
  %3542 = vmatpush.msra.mxu0 0.0
  %3543 = vmatpush.msra.mxu0 0.0
  %3544 = vmatpush.msra.mxu0 0.0
  %3545 = vmatpush.msra.mxu0 0.0
  %3546 = vmatpush.msra.mxu0 0.0
  %3547 = vmatpush.msra.mxu0 0.0
  %3548 = vmatpush.msra.mxu0 %v2912
  %3549 = vmatpush.msra.mxu0 %v2896
  %3550 = vmatpush.msra.mxu0 %v2880
  %3551 = vmatpush.msra.mxu0 %v2864
  %3552 = vmatpush.msra.mxu0 %v2848
  %3553 = vmatpush.msra.mxu0 %v2832
  %3554 = vmatpush.msra.mxu0 %v2816
  %3555 = vmatpush.msra.mxu0 %v2800
  %3556 = vmatmul.f32.gmra.mxu0 %v2920
  %v3557 = vpop.f32.mrf.mxu0
  %v3558 = vadd.f32 %v3529, %v3557
  %3559 = vmatmul.f32.gmra.mxu0 %v2923
  %v3560 = vpop.f32.mrf.mxu0
  %v3561 = vadd.f32 %v3532, %v3560
  %3562 = vmatmul.f32.gmra.mxu0 %v2926
  %v3563 = vpop.f32.mrf.mxu0
  %v3564 = vadd.f32 %v3535, %v3563
  %3565 = vmatmul.f32.gmra.mxu0 %v2929
  %v3566 = vpop.f32.mrf.mxu0
  %v3567 = vadd.f32 %v3538, %v3566
  %3568 = vdwg.mxu0
  %3569 = vmatpush.msra.mxu0 %v2785
  %3570 = vmatpush.msra.mxu0 %v2769
  %3571 = vmatpush.msra.mxu0 %v2753
  %3572 = vmatpush.msra.mxu0 %v2737
  %3573 = vmatpush.msra.mxu0 %v2721
  %3574 = vmatpush.msra.mxu0 %v2705
  %3575 = vmatpush.msra.mxu0 %v2689
  %3576 = vmatpush.msra.mxu0 %v2673
  %3577 = vmatpush.msra.mxu0 %v2657
  %3578 = vmatpush.msra.mxu0 %v2641
  %3579 = vmatpush.msra.mxu0 %v2625
  %3580 = vmatpush.msra.mxu0 %v2609
  %3581 = vmatpush.msra.mxu0 %v2593
  %3582 = vmatpush.msra.mxu0 %v2577
  %3583 = vmatpush.msra.mxu0 %v2561
  %3584 = vmatpush.msra.mxu0 %v2545
  %3585 = vmatmul.f32.gmra.mxu0 %v2526
  %v3586 = vpop.f32.mrf.mxu0
  %v3587 = vadd.f32 0.0, %v3586
  %3588 = vmatmul.f32.gmra.mxu0 %v2528
  %v3589 = vpop.f32.mrf.mxu0
  %v3590 = vadd.f32 0.0, %v3589
  %3591 = vmatmul.f32.gmra.mxu0 %v2530
  %v3592 = vpop.f32.mrf.mxu0
  %v3593 = vadd.f32 0.0, %v3592
  %3594 = vmatmul.f32.gmra.mxu0 %v2532
  %v3595 = vpop.f32.mrf.mxu0
  %v3596 = vadd.f32 0.0, %v3595
  %3597 = vdwg.mxu0
  %3598 = vmatpush.msra.mxu0 0.0
  %3599 = vmatpush.msra.mxu0 0.0
  %3600 = vmatpush.msra.mxu0 0.0
  %3601 = vmatpush.msra.mxu0 0.0
  %3602 = vmatpush.msra.mxu0 0.0
  %3603 = vmatpush.msra.mxu0 0.0
  %3604 = vmatpush.msra.mxu0 0.0
  %3605 = vmatpush.msra.mxu0 0.0
  %3606 = vmatpush.msra.mxu0 %v2913
  %3607 = vmatpush.msra.mxu0 %v2897
  %3608 = vmatpush.msra.mxu0 %v2881
  %3609 = vmatpush.msra.mxu0 %v2865
  %3610 = vmatpush.msra.mxu0 %v2849
  %3611 = vmatpush.msra.mxu0 %v2833
  %3612 = vmatpush.msra.mxu0 %v2817
  %3613 = vmatpush.msra.mxu0 %v2801
  %3614 = vmatmul.f32.gmra.mxu0 %v2920
  %v3615 = vpop.f32.mrf.mxu0
  %v3616 = vadd.f32 %v3587, %v3615
  %3617 = vmatmul.f32.gmra.mxu0 %v2923
  %v3618 = vpop.f32.mrf.mxu0
  %v3619 = vadd.f32 %v3590, %v3618
  %3620 = vmatmul.f32.gmra.mxu0 %v2926
  %v3621 = vpop.f32.mrf.mxu0
  %v3622 = vadd.f32 %v3593, %v3621
  %3623 = vmatmul.f32.gmra.mxu0 %v2929
  %v3624 = vpop.f32.mrf.mxu0
  %v3625 = vadd.f32 %v3596, %v3624
  %3626 = vdwg.mxu0
  %3627 = vmatpush.msra.mxu0 %v2786
  %3628 = vmatpush.msra.mxu0 %v2770
  %3629 = vmatpush.msra.mxu0 %v2754
  %3630 = vmatpush.msra.mxu0 %v2738
  %3631 = vmatpush.msra.mxu0 %v2722
  %3632 = vmatpush.msra.mxu0 %v2706
  %3633 = vmatpush.msra.mxu0 %v2690
  %3634 = vmatpush.msra.mxu0 %v2674
  %3635 = vmatpush.msra.mxu0 %v2658
  %3636 = vmatpush.msra.mxu0 %v2642
  %3637 = vmatpush.msra.mxu0 %v2626
  %3638 = vmatpush.msra.mxu0 %v2610
  %3639 = vmatpush.msra.mxu0 %v2594
  %3640 = vmatpush.msra.mxu0 %v2578
  %3641 = vmatpush.msra.mxu0 %v2562
  %3642 = vmatpush.msra.mxu0 %v2546
  %3643 = vmatmul.f32.gmra.mxu0 %v2526
  %v3644 = vpop.f32.mrf.mxu0
  %v3645 = vadd.f32 0.0, %v3644
  %3646 = vmatmul.f32.gmra.mxu0 %v2528
  %v3647 = vpop.f32.mrf.mxu0
  %v3648 = vadd.f32 0.0, %v3647
  %3649 = vmatmul.f32.gmra.mxu0 %v2530
  %v3650 = vpop.f32.mrf.mxu0
  %v3651 = vadd.f32 0.0, %v3650
  %3652 = vmatmul.f32.gmra.mxu0 %v2532
  %v3653 = vpop.f32.mrf.mxu0
  %v3654 = vadd.f32 0.0, %v3653
  %3655 = vdwg.mxu0
  %3656 = vmatpush.msra.mxu0 0.0
  %3657 = vmatpush.msra.mxu0 0.0
  %3658 = vmatpush.msra.mxu0 0.0
  %3659 = vmatpush.msra.mxu0 0.0
  %3660 = vmatpush.msra.mxu0 0.0
  %3661 = vmatpush.msra.mxu0 0.0
  %3662 = vmatpush.msra.mxu0 0.0
  %3663 = vmatpush.msra.mxu0 0.0
  %3664 = vmatpush.msra.mxu0 %v2914
  %3665 = vmatpush.msra.mxu0 %v2898
  %3666 = vmatpush.msra.mxu0 %v2882
  %3667 = vmatpush.msra.mxu0 %v2866
  %3668 = vmatpush.msra.mxu0 %v2850
  %3669 = vmatpush.msra.mxu0 %v2834
  %3670 = vmatpush.msra.mxu0 %v2818
  %3671 = vmatpush.msra.mxu0 %v2802
  %3672 = vmatmul.f32.gmra.mxu0 %v2920
  %v3673 = vpop.f32.mrf.mxu0
  %v3674 = vadd.f32 %v3645, %v3673
  %3675 = vmatmul.f32.gmra.mxu0 %v2923
  %v3676 = vpop.f32.mrf.mxu0
  %v3677 = vadd.f32 %v3648, %v3676
  %3678 = vmatmul.f32.gmra.mxu0 %v2926
  %v3679 = vpop.f32.mrf.mxu0
  %v3680 = vadd.f32 %v3651, %v3679
  %3681 = vmatmul.f32.gmra.mxu0 %v2929
  %v3682 = vpop.f32.mrf.mxu0
  %v3683 = vadd.f32 %v3654, %v3682
  %3684 = vdwg.mxu0
  %3685 = vmatpush.msra.mxu0 %v2787
  %3686 = vmatpush.msra.mxu0 %v2771
  %3687 = vmatpush.msra.mxu0 %v2755
  %3688 = vmatpush.msra.mxu0 %v2739
  %3689 = vmatpush.msra.mxu0 %v2723
  %3690 = vmatpush.msra.mxu0 %v2707
  %3691 = vmatpush.msra.mxu0 %v2691
  %3692 = vmatpush.msra.mxu0 %v2675
  %3693 = vmatpush.msra.mxu0 %v2659
  %3694 = vmatpush.msra.mxu0 %v2643
  %3695 = vmatpush.msra.mxu0 %v2627
  %3696 = vmatpush.msra.mxu0 %v2611
  %3697 = vmatpush.msra.mxu0 %v2595
  %3698 = vmatpush.msra.mxu0 %v2579
  %3699 = vmatpush.msra.mxu0 %v2563
  %3700 = vmatpush.msra.mxu0 %v2547
  %3701 = vmatmul.f32.gmra.mxu0 %v2526
  %v3702 = vpop.f32.mrf.mxu0
  %v3703 = vadd.f32 0.0, %v3702
  %3704 = vmatmul.f32.gmra.mxu0 %v2528
  %v3705 = vpop.f32.mrf.mxu0
  %v3706 = vadd.f32 0.0, %v3705
  %3707 = vmatmul.f32.gmra.mxu0 %v2530
  %v3708 = vpop.f32.mrf.mxu0
  %v3709 = vadd.f32 0.0, %v3708
  %3710 = vmatmul.f32.gmra.mxu0 %v2532
  %v3711 = vpop.f32.mrf.mxu0
  %v3712 = vadd.f32 0.0, %v3711
  %3713 = vdwg.mxu0
  %3714 = vmatpush.msra.mxu0 0.0
  %3715 = vmatpush.msra.mxu0 0.0
  %3716 = vmatpush.msra.mxu0 0.0
  %3717 = vmatpush.msra.mxu0 0.0
  %3718 = vmatpush.msra.mxu0 0.0
  %3719 = vmatpush.msra.mxu0 0.0
  %3720 = vmatpush.msra.mxu0 0.0
  %3721 = vmatpush.msra.mxu0 0.0
  %3722 = vmatpush.msra.mxu0 %v2915
  %3723 = vmatpush.msra.mxu0 %v2899
  %3724 = vmatpush.msra.mxu0 %v2883
  %3725 = vmatpush.msra.mxu0 %v2867
  %3726 = vmatpush.msra.mxu0 %v2851
  %3727 = vmatpush.msra.mxu0 %v2835
  %3728 = vmatpush.msra.mxu0 %v2819
  %3729 = vmatpush.msra.mxu0 %v2803
  %3730 = vmatmul.f32.gmra.mxu0 %v2920
  %v3731 = vpop.f32.mrf.mxu0
  %v3732 = vadd.f32 %v3703, %v3731
  %3733 = vmatmul.f32.gmra.mxu0 %v2923
  %v3734 = vpop.f32.mrf.mxu0
  %v3735 = vadd.f32 %v3706, %v3734
  %3736 = vmatmul.f32.gmra.mxu0 %v2926
  %v3737 = vpop.f32.mrf.mxu0
  %v3738 = vadd.f32 %v3709, %v3737
  %3739 = vmatmul.f32.gmra.mxu0 %v2929
  %v3740 = vpop.f32.mrf.mxu0
  %v3741 = vadd.f32 %v3712, %v3740
  %3742 = vdwg.mxu0
  %3743 = vmatpush.msra.mxu0 %v2788
  %3744 = vmatpush.msra.mxu0 %v2772
  %3745 = vmatpush.msra.mxu0 %v2756
  %3746 = vmatpush.msra.mxu0 %v2740
  %3747 = vmatpush.msra.mxu0 %v2724
  %3748 = vmatpush.msra.mxu0 %v2708
  %3749 = vmatpush.msra.mxu0 %v2692
  %3750 = vmatpush.msra.mxu0 %v2676
  %3751 = vmatpush.msra.mxu0 %v2660
  %3752 = vmatpush.msra.mxu0 %v2644
  %3753 = vmatpush.msra.mxu0 %v2628
  %3754 = vmatpush.msra.mxu0 %v2612
  %3755 = vmatpush.msra.mxu0 %v2596
  %3756 = vmatpush.msra.mxu0 %v2580
  %3757 = vmatpush.msra.mxu0 %v2564
  %3758 = vmatpush.msra.mxu0 %v2548
  %3759 = vmatmul.f32.gmra.mxu0 %v2526
  %v3760 = vpop.f32.mrf.mxu0
  %v3761 = vadd.f32 0.0, %v3760
  %3762 = vmatmul.f32.gmra.mxu0 %v2528
  %v3763 = vpop.f32.mrf.mxu0
  %v3764 = vadd.f32 0.0, %v3763
  %3765 = vmatmul.f32.gmra.mxu0 %v2530
  %v3766 = vpop.f32.mrf.mxu0
  %v3767 = vadd.f32 0.0, %v3766
  %3768 = vmatmul.f32.gmra.mxu0 %v2532
  %v3769 = vpop.f32.mrf.mxu0
  %v3770 = vadd.f32 0.0, %v3769
  %3771 = vdwg.mxu0
  %3772 = vmatpush.msra.mxu0 0.0
  %3773 = vmatpush.msra.mxu0 0.0
  %3774 = vmatpush.msra.mxu0 0.0
  %3775 = vmatpush.msra.mxu0 0.0
  %3776 = vmatpush.msra.mxu0 0.0
  %3777 = vmatpush.msra.mxu0 0.0
  %3778 = vmatpush.msra.mxu0 0.0
  %3779 = vmatpush.msra.mxu0 0.0
  %3780 = vmatpush.msra.mxu0 %v2916
  %3781 = vmatpush.msra.mxu0 %v2900
  %3782 = vmatpush.msra.mxu0 %v2884
  %3783 = vmatpush.msra.mxu0 %v2868
  %3784 = vmatpush.msra.mxu0 %v2852
  %3785 = vmatpush.msra.mxu0 %v2836
  %3786 = vmatpush.msra.mxu0 %v2820
  %3787 = vmatpush.msra.mxu0 %v2804
  %3788 = vmatmul.f32.gmra.mxu0 %v2920
  %v3789 = vpop.f32.mrf.mxu0
  %v3790 = vadd.f32 %v3761, %v3789
  %3791 = vmatmul.f32.gmra.mxu0 %v2923
  %v3792 = vpop.f32.mrf.mxu0
  %v3793 = vadd.f32 %v3764, %v3792
  %3794 = vmatmul.f32.gmra.mxu0 %v2926
  %v3795 = vpop.f32.mrf.mxu0
  %v3796 = vadd.f32 %v3767, %v3795
  %3797 = vmatmul.f32.gmra.mxu0 %v2929
  %v3798 = vpop.f32.mrf.mxu0
  %v3799 = vadd.f32 %v3770, %v3798
  %3800 = vdwg.mxu0
  %3801 = vmatpush.msra.mxu0 %v2789
  %3802 = vmatpush.msra.mxu0 %v2773
  %3803 = vmatpush.msra.mxu0 %v2757
  %3804 = vmatpush.msra.mxu0 %v2741
  %3805 = vmatpush.msra.mxu0 %v2725
  %3806 = vmatpush.msra.mxu0 %v2709
  %3807 = vmatpush.msra.mxu0 %v2693
  %3808 = vmatpush.msra.mxu0 %v2677
  %3809 = vmatpush.msra.mxu0 %v2661
  %3810 = vmatpush.msra.mxu0 %v2645
  %3811 = vmatpush.msra.mxu0 %v2629
  %3812 = vmatpush.msra.mxu0 %v2613
  %3813 = vmatpush.msra.mxu0 %v2597
  %3814 = vmatpush.msra.mxu0 %v2581
  %3815 = vmatpush.msra.mxu0 %v2565
  %3816 = vmatpush.msra.mxu0 %v2549
  %3817 = vmatmul.f32.gmra.mxu0 %v2526
  %v3818 = vpop.f32.mrf.mxu0
  %v3819 = vadd.f32 0.0, %v3818
  %3820 = vmatmul.f32.gmra.mxu0 %v2528
  %v3821 = vpop.f32.mrf.mxu0
  %v3822 = vadd.f32 0.0, %v3821
  %3823 = vmatmul.f32.gmra.mxu0 %v2530
  %v3824 = vpop.f32.mrf.mxu0
  %v3825 = vadd.f32 0.0, %v3824
  %3826 = vmatmul.f32.gmra.mxu0 %v2532
  %v3827 = vpop.f32.mrf.mxu0
  %v3828 = vadd.f32 0.0, %v3827
  %3829 = vdwg.mxu0
  %3830 = vmatpush.msra.mxu0 0.0
  %3831 = vmatpush.msra.mxu0 0.0
  %3832 = vmatpush.msra.mxu0 0.0
  %3833 = vmatpush.msra.mxu0 0.0
  %3834 = vmatpush.msra.mxu0 0.0
  %3835 = vmatpush.msra.mxu0 0.0
  %3836 = vmatpush.msra.mxu0 0.0
  %3837 = vmatpush.msra.mxu0 0.0
  %3838 = vmatpush.msra.mxu0 %v2917
  %3839 = vmatpush.msra.mxu0 %v2901
  %3840 = vmatpush.msra.mxu0 %v2885
  %3841 = vmatpush.msra.mxu0 %v2869
  %3842 = vmatpush.msra.mxu0 %v2853
  %3843 = vmatpush.msra.mxu0 %v2837
  %3844 = vmatpush.msra.mxu0 %v2821
  %3845 = vmatpush.msra.mxu0 %v2805
  %3846 = vmatmul.f32.gmra.mxu0 %v2920
  %v3847 = vpop.f32.mrf.mxu0
  %v3848 = vadd.f32 %v3819, %v3847
  %3849 = vmatmul.f32.gmra.mxu0 %v2923
  %v3850 = vpop.f32.mrf.mxu0
  %v3851 = vadd.f32 %v3822, %v3850
  %3852 = vmatmul.f32.gmra.mxu0 %v2926
  %v3853 = vpop.f32.mrf.mxu0
  %v3854 = vadd.f32 %v3825, %v3853
  %3855 = vmatmul.f32.gmra.mxu0 %v2929
  %v3856 = vpop.f32.mrf.mxu0
  %v3857 = vadd.f32 %v3828, %v3856
  %3858 = vdwg.mxu0
  %3859 = vst [vmem:[#allocation4] sm:$0xff] %v2978
  %3860 = vst [vmem:[#allocation4 + $0x8] sm:$0xff] %v3036
  %3861 = vst [vmem:[#allocation4 + $0x10] sm:$0xff] %v3094
  %3862 = vst [vmem:[#allocation4 + $0x18] sm:$0xff] %v3152
  %3863 = vst [vmem:[#allocation4 + $0x20] sm:$0xff] %v3210
  %3864 = vst [vmem:[#allocation4 + $0x28] sm:$0xff] %v3268
  %3865 = vst [vmem:[#allocation4 + $0x30] sm:$0xff] %v3326
  %3866 = vst [vmem:[#allocation4 + $0x38] sm:$0xff] %v3384
  %3867 = vst [vmem:[#allocation4 + $0x40] sm:$0xff] %v3442
  %3868 = vst [vmem:[#allocation4 + $0x48] sm:$0xff] %v3500
  %3869 = vst [vmem:[#allocation4 + $0x50] sm:$0xff] %v3558
  %3870 = vst [vmem:[#allocation4 + $0x58] sm:$0xff] %v3616
  %3871 = vst [vmem:[#allocation4 + $0x60] sm:$0xff] %v3674
  %3872 = vst [vmem:[#allocation4 + $0x68] sm:$0xff] %v3732
  %3873 = vst [vmem:[#allocation4 + $0x70] sm:$0xff] %v3790
  %3874 = vst [vmem:[#allocation4 + $0x78] sm:$0xff] %v3848
  %3875 = vst [vmem:[#allocation4 + $0x80] sm:$0xff] %v2981
  %3876 = vst [vmem:[#allocation4 + $0x88] sm:$0xff] %v3039
  %3877 = vst [vmem:[#allocation4 + $0x90] sm:$0xff] %v3097
  %3878 = vst [vmem:[#allocation4 + $0x98] sm:$0xff] %v3155
  %3879 = vst [vmem:[#allocation4 + $0xa0] sm:$0xff] %v3213
  %3880 = vst [vmem:[#allocation4 + $0xa8] sm:$0xff] %v3271
  %3881 = vst [vmem:[#allocation4 + $0xb0] sm:$0xff] %v3329
  %3882 = vst [vmem:[#allocation4 + $0xb8] sm:$0xff] %v3387
  %3883 = vst [vmem:[#allocation4 + $0xc0] sm:$0xff] %v3445
  %3884 = vst [vmem:[#allocation4 + $0xc8] sm:$0xff] %v3503
  %3885 = vst [vmem:[#allocation4 + $0xd0] sm:$0xff] %v3561
  %3886 = vst [vmem:[#allocation4 + $0xd8] sm:$0xff] %v3619
  %3887 = vst [vmem:[#allocation4 + $0xe0] sm:$0xff] %v3677
  %3888 = vst [vmem:[#allocation4 + $0xe8] sm:$0xff] %v3735
  %3889 = vst [vmem:[#allocation4 + $0xf0] sm:$0xff] %v3793
  %3890 = vst [vmem:[#allocation4 + $0xf8] sm:$0xff] %v3851
  %3891 = vst [vmem:[#allocation4 + $0x100] sm:$0xff] %v2984
  %3892 = vst [vmem:[#allocation4 + $0x108] sm:$0xff] %v3042
  %3893 = vst [vmem:[#allocation4 + $0x110] sm:$0xff] %v3100
  %3894 = vst [vmem:[#allocation4 + $0x118] sm:$0xff] %v3158
  %3895 = vst [vmem:[#allocation4 + $0x120] sm:$0xff] %v3216
  %3896 = vst [vmem:[#allocation4 + $0x128] sm:$0xff] %v3274
  %3897 = vst [vmem:[#allocation4 + $0x130] sm:$0xff] %v3332
  %3898 = vst [vmem:[#allocation4 + $0x138] sm:$0xff] %v3390
  %3899 = vst [vmem:[#allocation4 + $0x140] sm:$0xff] %v3448
  %3900 = vst [vmem:[#allocation4 + $0x148] sm:$0xff] %v3506
  %3901 = vst [vmem:[#allocation4 + $0x150] sm:$0xff] %v3564
  %3902 = vst [vmem:[#allocation4 + $0x158] sm:$0xff] %v3622
  %3903 = vst [vmem:[#allocation4 + $0x160] sm:$0xff] %v3680
  %3904 = vst [vmem:[#allocation4 + $0x168] sm:$0xff] %v3738
  %3905 = vst [vmem:[#allocation4 + $0x170] sm:$0xff] %v3796
  %3906 = vst [vmem:[#allocation4 + $0x178] sm:$0xff] %v3854
  %3907 = vst [vmem:[#allocation4 + $0x180] sm:$0xff] %v2987
  %3908 = vst [vmem:[#allocation4 + $0x188] sm:$0xff] %v3045
  %3909 = vst [vmem:[#allocation4 + $0x190] sm:$0xff] %v3103
  %3910 = vst [vmem:[#allocation4 + $0x198] sm:$0xff] %v3161
  %3911 = vst [vmem:[#allocation4 + $0x1a0] sm:$0xff] %v3219
  %3912 = vst [vmem:[#allocation4 + $0x1a8] sm:$0xff] %v3277
  %3913 = vst [vmem:[#allocation4 + $0x1b0] sm:$0xff] %v3335
  %3914 = vst [vmem:[#allocation4 + $0x1b8] sm:$0xff] %v3393
  %3915 = vst [vmem:[#allocation4 + $0x1c0] sm:$0xff] %v3451
  %3916 = vst [vmem:[#allocation4 + $0x1c8] sm:$0xff] %v3509
  %3917 = vst [vmem:[#allocation4 + $0x1d0] sm:$0xff] %v3567
  %3918 = vst [vmem:[#allocation4 + $0x1d8] sm:$0xff] %v3625
  %3919 = vst [vmem:[#allocation4 + $0x1e0] sm:$0xff] %v3683
  %3920 = vst [vmem:[#allocation4 + $0x1e8] sm:$0xff] %v3741
  %3921 = vst [vmem:[#allocation4 + $0x1f0] sm:$0xff] %v3799
  %3922 = vst [vmem:[#allocation4 + $0x1f8] sm:$0xff] %v3857
  %v3923 = vadd.f32 %v2978, %v3036
  %v3924 = vadd.f32 %v3923, %v3094
  %v3925 = vadd.f32 %v3924, %v3152
  %v3926 = vadd.f32 %v3925, %v3210
  %v3927 = vadd.f32 %v3926, %v3268
  %v3928 = vadd.f32 %v3927, %v3326
  %v3929 = vadd.f32 %v3928, %v3384
  %v3930 = vadd.f32 %v3929, %v3442
  %v3931 = vadd.f32 %v3930, %v3500
  %v3932 = vadd.f32 %v3931, %v3558
  %v3933 = vadd.f32 %v3932, %v3616
  %v3934 = vadd.f32 %v3933, %v3674
  %v3935 = vadd.f32 %v3934, %v3732
  %v3936 = vadd.f32 %v3935, %v3790
  %v3937 = vadd.f32 %v3936, %v3848
  %3938 = vadd.xlane.f32.xlu0 %v3937
  %v3939 = vpop.xlane.xlu0 %3938
  %v3940 = vadd.f32 %v2981, %v3039
  %v3941 = vadd.f32 %v3940, %v3097
  %v3942 = vadd.f32 %v3941, %v3155
  %v3943 = vadd.f32 %v3942, %v3213
  %v3944 = vadd.f32 %v3943, %v3271
  %v3945 = vadd.f32 %v3944, %v3329
  %v3946 = vadd.f32 %v3945, %v3387
  %v3947 = vadd.f32 %v3946, %v3445
  %v3948 = vadd.f32 %v3947, %v3503
  %v3949 = vadd.f32 %v3948, %v3561
  %v3950 = vadd.f32 %v3949, %v3619
  %v3951 = vadd.f32 %v3950, %v3677
  %v3952 = vadd.f32 %v3951, %v3735
  %v3953 = vadd.f32 %v3952, %v3793
  %v3954 = vadd.f32 %v3953, %v3851
  %3955 = vadd.xlane.f32.xlu0 %v3954
  %v3956 = vpop.xlane.xlu0 %3955
  %v3957 = vadd.f32 %v2984, %v3042
  %v3958 = vadd.f32 %v3957, %v3100
  %v3959 = vadd.f32 %v3958, %v3158
  %v3960 = vadd.f32 %v3959, %v3216
  %v3961 = vadd.f32 %v3960, %v3274
  %v3962 = vadd.f32 %v3961, %v3332
  %v3963 = vadd.f32 %v3962, %v3390
  %v3964 = vadd.f32 %v3963, %v3448
  %v3965 = vadd.f32 %v3964, %v3506
  %v3966 = vadd.f32 %v3965, %v3564
  %v3967 = vadd.f32 %v3966, %v3622
  %v3968 = vadd.f32 %v3967, %v3680
  %v3969 = vadd.f32 %v3968, %v3738
  %v3970 = vadd.f32 %v3969, %v3796
  %v3971 = vadd.f32 %v3970, %v3854
  %3972 = vadd.xlane.f32.xlu0 %v3971
  %v3973 = vpop.xlane.xlu0 %3972
  %v3974 = vadd.f32 %v2987, %v3045
  %v3975 = vadd.f32 %v3974, %v3103
  %v3976 = vadd.f32 %v3975, %v3161
  %v3977 = vadd.f32 %v3976, %v3219
  %v3978 = vadd.f32 %v3977, %v3277
  %v3979 = vadd.f32 %v3978, %v3335
  %v3980 = vadd.f32 %v3979, %v3393
  %v3981 = vadd.f32 %v3980, %v3451
  %v3982 = vadd.f32 %v3981, %v3509
  %v3983 = vadd.f32 %v3982, %v3567
  %v3984 = vadd.f32 %v3983, %v3625
  %v3985 = vadd.f32 %v3984, %v3683
  %v3986 = vadd.f32 %v3985, %v3741
  %v3987 = vadd.f32 %v3986, %v3799
  %v3988 = vadd.f32 %v3987, %v3857
  %3989 = vadd.xlane.f32.xlu0 %v3988
  %v3990 = vpop.xlane.xlu0 %3989
  %v3991 = vadd.f32 %v3939, 0.0
  %v3992 = vadd.f32 %v3956, 0.0
  %v3993 = vadd.f32 %v3973, 0.0
  %v3994 = vadd.f32 %v3990, 0.0
  %v3995 = vmul.f32 %v2978, %v2978
  %v3996 = vmul.f32 %v3036, %v3036
  %v3997 = vmul.f32 %v3094, %v3094
  %v3998 = vmul.f32 %v3152, %v3152
  %v3999 = vmul.f32 %v3210, %v3210
  %v4000 = vmul.f32 %v3268, %v3268
  %v4001 = vmul.f32 %v3326, %v3326
  %v4002 = vmul.f32 %v3384, %v3384
  %v4003 = vmul.f32 %v3442, %v3442
  %v4004 = vmul.f32 %v3500, %v3500
  %v4005 = vmul.f32 %v3558, %v3558
  %v4006 = vmul.f32 %v3616, %v3616
  %v4007 = vmul.f32 %v3674, %v3674
  %v4008 = vmul.f32 %v3732, %v3732
  %v4009 = vmul.f32 %v3790, %v3790
  %v4010 = vmul.f32 %v3848, %v3848
  %v4011 = vmul.f32 %v2981, %v2981
  %v4012 = vmul.f32 %v3039, %v3039
  %v4013 = vmul.f32 %v3097, %v3097
  %v4014 = vmul.f32 %v3155, %v3155
  %v4015 = vmul.f32 %v3213, %v3213
  %v4016 = vmul.f32 %v3271, %v3271
  %v4017 = vmul.f32 %v3329, %v3329
  %v4018 = vmul.f32 %v3387, %v3387
  %v4019 = vmul.f32 %v3445, %v3445
  %v4020 = vmul.f32 %v3503, %v3503
  %v4021 = vmul.f32 %v3561, %v3561
  %v4022 = vmul.f32 %v3619, %v3619
  %v4023 = vmul.f32 %v3677, %v3677
  %v4024 = vmul.f32 %v3735, %v3735
  %v4025 = vmul.f32 %v3793, %v3793
  %v4026 = vmul.f32 %v3851, %v3851
  %v4027 = vmul.f32 %v2984, %v2984
  %v4028 = vmul.f32 %v3042, %v3042
  %v4029 = vmul.f32 %v3100, %v3100
  %v4030 = vmul.f32 %v3158, %v3158
  %v4031 = vmul.f32 %v3216, %v3216
  %v4032 = vmul.f32 %v3274, %v3274
  %v4033 = vmul.f32 %v3332, %v3332
  %v4034 = vmul.f32 %v3390, %v3390
  %v4035 = vmul.f32 %v3448, %v3448
  %v4036 = vmul.f32 %v3506, %v3506
  %v4037 = vmul.f32 %v3564, %v3564
  %v4038 = vmul.f32 %v3622, %v3622
  %v4039 = vmul.f32 %v3680, %v3680
  %v4040 = vmul.f32 %v3738, %v3738
  %v4041 = vmul.f32 %v3796, %v3796
  %v4042 = vmul.f32 %v3854, %v3854
  %v4043 = vmul.f32 %v2987, %v2987
  %v4044 = vmul.f32 %v3045, %v3045
  %v4045 = vmul.f32 %v3103, %v3103
  %v4046 = vmul.f32 %v3161, %v3161
  %v4047 = vmul.f32 %v3219, %v3219
  %v4048 = vmul.f32 %v3277, %v3277
  %v4049 = vmul.f32 %v3335, %v3335
  %v4050 = vmul.f32 %v3393, %v3393
  %v4051 = vmul.f32 %v3451, %v3451
  %v4052 = vmul.f32 %v3509, %v3509
  %v4053 = vmul.f32 %v3567, %v3567
  %v4054 = vmul.f32 %v3625, %v3625
  %v4055 = vmul.f32 %v3683, %v3683
  %v4056 = vmul.f32 %v3741, %v3741
  %v4057 = vmul.f32 %v3799, %v3799
  %v4058 = vmul.f32 %v3857, %v3857
  %v4059 = vadd.f32 %v3995, %v3996
  %v4060 = vadd.f32 %v4059, %v3997
  %v4061 = vadd.f32 %v4060, %v3998
  %v4062 = vadd.f32 %v4061, %v3999
  %v4063 = vadd.f32 %v4062, %v4000
  %v4064 = vadd.f32 %v4063, %v4001
  %v4065 = vadd.f32 %v4064, %v4002
  %v4066 = vadd.f32 %v4065, %v4003
  %v4067 = vadd.f32 %v4066, %v4004
  %v4068 = vadd.f32 %v4067, %v4005
  %v4069 = vadd.f32 %v4068, %v4006
  %v4070 = vadd.f32 %v4069, %v4007
  %v4071 = vadd.f32 %v4070, %v4008
  %v4072 = vadd.f32 %v4071, %v4009
  %v4073 = vadd.f32 %v4072, %v4010
  %4074 = vadd.xlane.f32.xlu0 %v4073
  %v4075 = vpop.xlane.xlu0 %4074
  %v4076 = vadd.f32 %v4011, %v4012
  %v4077 = vadd.f32 %v4076, %v4013
  %v4078 = vadd.f32 %v4077, %v4014
  %v4079 = vadd.f32 %v4078, %v4015
  %v4080 = vadd.f32 %v4079, %v4016
  %v4081 = vadd.f32 %v4080, %v4017
  %v4082 = vadd.f32 %v4081, %v4018
  %v4083 = vadd.f32 %v4082, %v4019
  %v4084 = vadd.f32 %v4083, %v4020
  %v4085 = vadd.f32 %v4084, %v4021
  %v4086 = vadd.f32 %v4085, %v4022
  %v4087 = vadd.f32 %v4086, %v4023
  %v4088 = vadd.f32 %v4087, %v4024
  %v4089 = vadd.f32 %v4088, %v4025
  %v4090 = vadd.f32 %v4089, %v4026
  %4091 = vadd.xlane.f32.xlu0 %v4090
  %v4092 = vpop.xlane.xlu0 %4091
  %v4093 = vadd.f32 %v4027, %v4028
  %v4094 = vadd.f32 %v4093, %v4029
  %v4095 = vadd.f32 %v4094, %v4030
  %v4096 = vadd.f32 %v4095, %v4031
  %v4097 = vadd.f32 %v4096, %v4032
  %v4098 = vadd.f32 %v4097, %v4033
  %v4099 = vadd.f32 %v4098, %v4034
  %v4100 = vadd.f32 %v4099, %v4035
  %v4101 = vadd.f32 %v4100, %v4036
  %v4102 = vadd.f32 %v4101, %v4037
  %v4103 = vadd.f32 %v4102, %v4038
  %v4104 = vadd.f32 %v4103, %v4039
  %v4105 = vadd.f32 %v4104, %v4040
  %v4106 = vadd.f32 %v4105, %v4041
  %v4107 = vadd.f32 %v4106, %v4042
  %4108 = vadd.xlane.f32.xlu0 %v4107
  %v4109 = vpop.xlane.xlu0 %4108
  %v4110 = vadd.f32 %v4043, %v4044
  %v4111 = vadd.f32 %v4110, %v4045
  %v4112 = vadd.f32 %v4111, %v4046
  %v4113 = vadd.f32 %v4112, %v4047
  %v4114 = vadd.f32 %v4113, %v4048
  %v4115 = vadd.f32 %v4114, %v4049
  %v4116 = vadd.f32 %v4115, %v4050
  %v4117 = vadd.f32 %v4116, %v4051
  %v4118 = vadd.f32 %v4117, %v4052
  %v4119 = vadd.f32 %v4118, %v4053
  %v4120 = vadd.f32 %v4119, %v4054
  %v4121 = vadd.f32 %v4120, %v4055
  %v4122 = vadd.f32 %v4121, %v4056
  %v4123 = vadd.f32 %v4122, %v4057
  %v4124 = vadd.f32 %v4123, %v4058
  %4125 = vadd.xlane.f32.xlu0 %v4124
  %v4126 = vpop.xlane.xlu0 %4125
  %v4127 = vadd.f32 %v4075, 0.0
  %v4128 = vadd.f32 %v4092, 0.0
  %v4129 = vadd.f32 %v4109, 0.0
  %v4130 = vadd.f32 %v4126, 0.0
  %v4131 = vld [vmem:[#allocation2 + $0x80] sm:$0xff]
  %v4132 = vld [vmem:[#allocation2 + $0x88] sm:$0xff]
  %v4133 = vld [vmem:[#allocation2 + $0x90] sm:$0xff]
  %v4134 = vld [vmem:[#allocation2 + $0x98] sm:$0xff]
  %v4135 = vld [vmem:[#allocation2 + $0xa0] sm:$0xff]
  %v4136 = vld [vmem:[#allocation2 + $0xa8] sm:$0xff]
  %v4137 = vld [vmem:[#allocation2 + $0xb0] sm:$0xff]
  %v4138 = vld [vmem:[#allocation2 + $0xb8] sm:$0xff]
  %v4139 = vld [vmem:[#allocation2 + $0xc0] sm:$0xff]
  %v4140 = vld [vmem:[#allocation2 + $0xc8] sm:$0xff]
  %v4141 = vld [vmem:[#allocation2 + $0xd0] sm:$0xff]
  %v4142 = vld [vmem:[#allocation2 + $0xd8] sm:$0xff]
  %v4143 = vld [vmem:[#allocation2 + $0xe0] sm:$0xff]
  %v4144 = vld [vmem:[#allocation2 + $0xe8] sm:$0xff]
  %v4145 = vld [vmem:[#allocation2 + $0x180] sm:$0xff]
  %v4146 = vld [vmem:[#allocation2 + $0x188] sm:$0xff]
  %v4147 = vld [vmem:[#allocation2 + $0x190] sm:$0xff]
  %v4148 = vld [vmem:[#allocation2 + $0x198] sm:$0xff]
  %v4149 = vld [vmem:[#allocation2 + $0x1a0] sm:$0xff]
  %v4150 = vld [vmem:[#allocation2 + $0x1a8] sm:$0xff]
  %v4151 = vld [vmem:[#allocation2 + $0x1b0] sm:$0xff]
  %v4152 = vld [vmem:[#allocation2 + $0x1b8] sm:$0xff]
  %v4153 = vld [vmem:[#allocation2 + $0x1c0] sm:$0xff]
  %v4154 = vld [vmem:[#allocation2 + $0x1c8] sm:$0xff]
  %v4155 = vld [vmem:[#allocation2 + $0x1d0] sm:$0xff]
  %v4156 = vld [vmem:[#allocation2 + $0x1d8] sm:$0xff]
  %v4157 = vld [vmem:[#allocation2 + $0x1e0] sm:$0xff]
  %v4158 = vld [vmem:[#allocation2 + $0x1e8] sm:$0xff]
  %4159 = vst [vmem:[#allocation3 + $0x10] sm:$0xff] %v4131
  %4160 = vst [vmem:[#allocation3 + $0x18] sm:$0xff] %v4132
  %4161 = vst [vmem:[#allocation3 + $0x20] sm:$0xff] %v4133
  %4162 = vst [vmem:[#allocation3 + $0x28] sm:$0xff] %v4134
  %4163 = vst [vmem:[#allocation3 + $0x30] sm:$0xff] %v4135
  %4164 = vst [vmem:[#allocation3 + $0x38] sm:$0xff] %v4136
  %4165 = vst [vmem:[#allocation3 + $0x40] sm:$0xff] %v4137
  %4166 = vst [vmem:[#allocation3 + $0x48] sm:$0xff] %v4138
  %4167 = vst [vmem:[#allocation3 + $0x50] sm:$0xff] %v4139
  %4168 = vst [vmem:[#allocation3 + $0x58] sm:$0xff] %v4140
  %4169 = vst [vmem:[#allocation3 + $0x60] sm:$0xff] %v4141
  %4170 = vst [vmem:[#allocation3 + $0x68] sm:$0xff] %v4142
  %4171 = vst [vmem:[#allocation3 + $0x70] sm:$0xff] %v4143
  %4172 = vst [vmem:[#allocation3 + $0x78] sm:$0xff] %v4144
  %4173 = vst [vmem:[#allocation3 + $0x90] sm:$0xff] %v4145
  %4174 = vst [vmem:[#allocation3 + $0x98] sm:$0xff] %v4146
  %4175 = vst [vmem:[#allocation3 + $0xa0] sm:$0xff] %v4147
  %4176 = vst [vmem:[#allocation3 + $0xa8] sm:$0xff] %v4148
  %4177 = vst [vmem:[#allocation3 + $0xb0] sm:$0xff] %v4149
  %4178 = vst [vmem:[#allocation3 + $0xb8] sm:$0xff] %v4150
  %4179 = vst [vmem:[#allocation3 + $0xc0] sm:$0xff] %v4151
  %4180 = vst [vmem:[#allocation3 + $0xc8] sm:$0xff] %v4152
  %4181 = vst [vmem:[#allocation3 + $0xd0] sm:$0xff] %v4153
  %4182 = vst [vmem:[#allocation3 + $0xd8] sm:$0xff] %v4154
  %4183 = vst [vmem:[#allocation3 + $0xe0] sm:$0xff] %v4155
  %4184 = vst [vmem:[#allocation3 + $0xe8] sm:$0xff] %v4156
  %4185 = vst [vmem:[#allocation3 + $0xf0] sm:$0xff] %v4157
  %4186 = vst [vmem:[#allocation3 + $0xf8] sm:$0xff] %v4158
  %v4187 = vld [vmem:[#allocation2 + $0x80] sm:$0xff]
  %v4188 = vld [vmem:[#allocation2 + $0x88] sm:$0xff]
  %v4189 = vld [vmem:[#allocation2 + $0x90] sm:$0xff]
  %v4190 = vld [vmem:[#allocation2 + $0x98] sm:$0xff]
  %v4191 = vld [vmem:[#allocation2 + $0xa0] sm:$0xff]
  %v4192 = vld [vmem:[#allocation2 + $0xa8] sm:$0xff]
  %v4193 = vld [vmem:[#allocation2 + $0xb0] sm:$0xff]
  %v4194 = vld [vmem:[#allocation2 + $0xb8] sm:$0xff]
  %v4195 = vld [vmem:[#allocation2 + $0xc0] sm:$0xff]
  %v4196 = vld [vmem:[#allocation2 + $0xc8] sm:$0xff]
  %v4197 = vld [vmem:[#allocation2 + $0xd0] sm:$0xff]
  %v4198 = vld [vmem:[#allocation2 + $0xd8] sm:$0xff]
  %v4199 = vld [vmem:[#allocation2 + $0xe0] sm:$0xff]
  %v4200 = vld [vmem:[#allocation2 + $0xe8] sm:$0xff]
  %v4201 = vld [vmem:[#allocation2 + $0xf0] sm:$0xff]
  %v4202 = vld [vmem:[#allocation2 + $0xf8] sm:$0xff]
  %v4203 = vld [vmem:[#allocation2 + $0x180] sm:$0xff]
  %v4204 = vld [vmem:[#allocation2 + $0x188] sm:$0xff]
  %v4205 = vld [vmem:[#allocation2 + $0x190] sm:$0xff]
  %v4206 = vld [vmem:[#allocation2 + $0x198] sm:$0xff]
  %v4207 = vld [vmem:[#allocation2 + $0x1a0] sm:$0xff]
  %v4208 = vld [vmem:[#allocation2 + $0x1a8] sm:$0xff]
  %v4209 = vld [vmem:[#allocation2 + $0x1b0] sm:$0xff]
  %v4210 = vld [vmem:[#allocation2 + $0x1b8] sm:$0xff]
  %v4211 = vld [vmem:[#allocation2 + $0x1c0] sm:$0xff]
  %v4212 = vld [vmem:[#allocation2 + $0x1c8] sm:$0xff]
  %v4213 = vld [vmem:[#allocation2 + $0x1d0] sm:$0xff]
  %v4214 = vld [vmem:[#allocation2 + $0x1d8] sm:$0xff]
  %v4215 = vld [vmem:[#allocation2 + $0x1e0] sm:$0xff]
  %v4216 = vld [vmem:[#allocation2 + $0x1e8] sm:$0xff]
  %v4217 = vld [vmem:[#allocation2 + $0x1f0] sm:$0xff]
  %v4218 = vld [vmem:[#allocation2 + $0x1f8] sm:$0xff]
  %4219 = vst [vmem:[#allocation3 + $0x100] sm:$0xff] %v4187
  %4220 = vst [vmem:[#allocation3 + $0x108] sm:$0xff] %v4188
  %4221 = vst [vmem:[#allocation3 + $0x110] sm:$0xff] %v4189
  %4222 = vst [vmem:[#allocation3 + $0x118] sm:$0xff] %v4190
  %4223 = vst [vmem:[#allocation3 + $0x120] sm:$0xff] %v4191
  %4224 = vst [vmem:[#allocation3 + $0x128] sm:$0xff] %v4192
  %4225 = vst [vmem:[#allocation3 + $0x130] sm:$0xff] %v4193
  %4226 = vst [vmem:[#allocation3 + $0x138] sm:$0xff] %v4194
  %4227 = vst [vmem:[#allocation3 + $0x140] sm:$0xff] %v4195
  %4228 = vst [vmem:[#allocation3 + $0x148] sm:$0xff] %v4196
  %4229 = vst [vmem:[#allocation3 + $0x150] sm:$0xff] %v4197
  %4230 = vst [vmem:[#allocation3 + $0x158] sm:$0xff] %v4198
  %4231 = vst [vmem:[#allocation3 + $0x160] sm:$0xff] %v4199
  %4232 = vst [vmem:[#allocation3 + $0x168] sm:$0xff] %v4200
  %4233 = vst [vmem:[#allocation3 + $0x170] sm:$0xff] %v4201
  %4234 = vst [vmem:[#allocation3 + $0x178] sm:$0xff] %v4202
  %4235 = vst [vmem:[#allocation3 + $0x180] sm:$0xff] %v4203
  %4236 = vst [vmem:[#allocation3 + $0x188] sm:$0xff] %v4204
  %4237 = vst [vmem:[#allocation3 + $0x190] sm:$0xff] %v4205
  %4238 = vst [vmem:[#allocation3 + $0x198] sm:$0xff] %v4206
  %4239 = vst [vmem:[#allocation3 + $0x1a0] sm:$0xff] %v4207
  %4240 = vst [vmem:[#allocation3 + $0x1a8] sm:$0xff] %v4208
  %4241 = vst [vmem:[#allocation3 + $0x1b0] sm:$0xff] %v4209
  %4242 = vst [vmem:[#allocation3 + $0x1b8] sm:$0xff] %v4210
  %4243 = vst [vmem:[#allocation3 + $0x1c0] sm:$0xff] %v4211
  %4244 = vst [vmem:[#allocation3 + $0x1c8] sm:$0xff] %v4212
  %4245 = vst [vmem:[#allocation3 + $0x1d0] sm:$0xff] %v4213
  %4246 = vst [vmem:[#allocation3 + $0x1d8] sm:$0xff] %v4214
  %4247 = vst [vmem:[#allocation3 + $0x1e0] sm:$0xff] %v4215
  %4248 = vst [vmem:[#allocation3 + $0x1e8] sm:$0xff] %v4216
  %4249 = vst [vmem:[#allocation3 + $0x1f0] sm:$0xff] %v4217
  %4250 = vst [vmem:[#allocation3 + $0x1f8] sm:$0xff] %v4218
  %v4251 = vld [vmem:[#allocation2 + $0x90] sm:$0xff]
  %v4252 = vld [vmem:[#allocation2 + $0x98] sm:$0xff]
  %v4253 = vld [vmem:[#allocation2 + $0xa0] sm:$0xff]
  %v4254 = vld [vmem:[#allocation2 + $0xa8] sm:$0xff]
  %v4255 = vld [vmem:[#allocation2 + $0xb0] sm:$0xff]
  %v4256 = vld [vmem:[#allocation2 + $0xb8] sm:$0xff]
  %v4257 = vld [vmem:[#allocation2 + $0xc0] sm:$0xff]
  %v4258 = vld [vmem:[#allocation2 + $0xc8] sm:$0xff]
  %v4259 = vld [vmem:[#allocation2 + $0xd0] sm:$0xff]
  %v4260 = vld [vmem:[#allocation2 + $0xd8] sm:$0xff]
  %v4261 = vld [vmem:[#allocation2 + $0xe0] sm:$0xff]
  %v4262 = vld [vmem:[#allocation2 + $0xe8] sm:$0xff]
  %v4263 = vld [vmem:[#allocation2 + $0xf0] sm:$0xff]
  %v4264 = vld [vmem:[#allocation2 + $0xf8] sm:$0xff]
  %v4265 = vld [vmem:[#allocation2 + $0x190] sm:$0xff]
  %v4266 = vld [vmem:[#allocation2 + $0x198] sm:$0xff]
  %v4267 = vld [vmem:[#allocation2 + $0x1a0] sm:$0xff]
  %v4268 = vld [vmem:[#allocation2 + $0x1a8] sm:$0xff]
  %v4269 = vld [vmem:[#allocation2 + $0x1b0] sm:$0xff]
  %v4270 = vld [vmem:[#allocation2 + $0x1b8] sm:$0xff]
  %v4271 = vld [vmem:[#allocation2 + $0x1c0] sm:$0xff]
  %v4272 = vld [vmem:[#allocation2 + $0x1c8] sm:$0xff]
  %v4273 = vld [vmem:[#allocation2 + $0x1d0] sm:$0xff]
  %v4274 = vld [vmem:[#allocation2 + $0x1d8] sm:$0xff]
  %v4275 = vld [vmem:[#allocation2 + $0x1e0] sm:$0xff]
  %v4276 = vld [vmem:[#allocation2 + $0x1e8] sm:$0xff]
  %v4277 = vld [vmem:[#allocation2 + $0x1f0] sm:$0xff]
  %v4278 = vld [vmem:[#allocation2 + $0x1f8] sm:$0xff]
  %4279 = vst [vmem:[#allocation3 + $0x200] sm:$0xff] %v4251
  %4280 = vst [vmem:[#allocation3 + $0x208] sm:$0xff] %v4252
  %4281 = vst [vmem:[#allocation3 + $0x210] sm:$0xff] %v4253
  %4282 = vst [vmem:[#allocation3 + $0x218] sm:$0xff] %v4254
  %4283 = vst [vmem:[#allocation3 + $0x220] sm:$0xff] %v4255
  %4284 = vst [vmem:[#allocation3 + $0x228] sm:$0xff] %v4256
  %4285 = vst [vmem:[#allocation3 + $0x230] sm:$0xff] %v4257
  %4286 = vst [vmem:[#allocation3 + $0x238] sm:$0xff] %v4258
  %4287 = vst [vmem:[#allocation3 + $0x240] sm:$0xff] %v4259
  %4288 = vst [vmem:[#allocation3 + $0x248] sm:$0xff] %v4260
  %4289 = vst [vmem:[#allocation3 + $0x250] sm:$0xff] %v4261
  %4290 = vst [vmem:[#allocation3 + $0x258] sm:$0xff] %v4262
  %4291 = vst [vmem:[#allocation3 + $0x260] sm:$0xff] %v4263
  %4292 = vst [vmem:[#allocation3 + $0x268] sm:$0xff] %v4264
  %4293 = vst [vmem:[#allocation3 + $0x280] sm:$0xff] %v4265
  %4294 = vst [vmem:[#allocation3 + $0x288] sm:$0xff] %v4266
  %4295 = vst [vmem:[#allocation3 + $0x290] sm:$0xff] %v4267
  %4296 = vst [vmem:[#allocation3 + $0x298] sm:$0xff] %v4268
  %4297 = vst [vmem:[#allocation3 + $0x2a0] sm:$0xff] %v4269
  %4298 = vst [vmem:[#allocation3 + $0x2a8] sm:$0xff] %v4270
  %4299 = vst [vmem:[#allocation3 + $0x2b0] sm:$0xff] %v4271
  %4300 = vst [vmem:[#allocation3 + $0x2b8] sm:$0xff] %v4272
  %4301 = vst [vmem:[#allocation3 + $0x2c0] sm:$0xff] %v4273
  %4302 = vst [vmem:[#allocation3 + $0x2c8] sm:$0xff] %v4274
  %4303 = vst [vmem:[#allocation3 + $0x2d0] sm:$0xff] %v4275
  %4304 = vst [vmem:[#allocation3 + $0x2d8] sm:$0xff] %v4276
  %4305 = vst [vmem:[#allocation3 + $0x2e0] sm:$0xff] %v4277
  %4306 = vst [vmem:[#allocation3 + $0x2e8] sm:$0xff] %v4278
  %v4307 = vld [vmem:[#allocation2 + $0x280] sm:$0xff]
  %v4308 = vld [vmem:[#allocation2 + $0x288] sm:$0xff]
  %v4309 = vld [vmem:[#allocation2 + $0x290] sm:$0xff]
  %v4310 = vld [vmem:[#allocation2 + $0x298] sm:$0xff]
  %v4311 = vld [vmem:[#allocation2 + $0x2a0] sm:$0xff]
  %v4312 = vld [vmem:[#allocation2 + $0x2a8] sm:$0xff]
  %v4313 = vld [vmem:[#allocation2 + $0x2b0] sm:$0xff]
  %v4314 = vld [vmem:[#allocation2 + $0x2b8] sm:$0xff]
  %v4315 = vld [vmem:[#allocation2 + $0x2c0] sm:$0xff]
  %v4316 = vld [vmem:[#allocation2 + $0x2c8] sm:$0xff]
  %v4317 = vld [vmem:[#allocation2 + $0x2d0] sm:$0xff]
  %v4318 = vld [vmem:[#allocation2 + $0x2d8] sm:$0xff]
  %v4319 = vld [vmem:[#allocation2 + $0x380] sm:$0xff]
  %v4320 = vld [vmem:[#allocation2 + $0x388] sm:$0xff]
  %v4321 = vld [vmem:[#allocation2 + $0x390] sm:$0xff]
  %v4322 = vld [vmem:[#allocation2 + $0x398] sm:$0xff]
  %v4323 = vld [vmem:[#allocation2 + $0x3a0] sm:$0xff]
  %v4324 = vld [vmem:[#allocation2 + $0x3a8] sm:$0xff]
  %v4325 = vld [vmem:[#allocation2 + $0x3b0] sm:$0xff]
  %v4326 = vld [vmem:[#allocation2 + $0x3b8] sm:$0xff]
  %v4327 = vld [vmem:[#allocation2 + $0x3c0] sm:$0xff]
  %v4328 = vld [vmem:[#allocation2 + $0x3c8] sm:$0xff]
  %v4329 = vld [vmem:[#allocation2 + $0x3d0] sm:$0xff]
  %v4330 = vld [vmem:[#allocation2 + $0x3d8] sm:$0xff]
  %4331 = vst [vmem:[#allocation3 + $0x320] sm:$0xff] %v4307
  %4332 = vst [vmem:[#allocation3 + $0x328] sm:$0xff] %v4308
  %4333 = vst [vmem:[#allocation3 + $0x330] sm:$0xff] %v4309
  %4334 = vst [vmem:[#allocation3 + $0x338] sm:$0xff] %v4310
  %4335 = vst [vmem:[#allocation3 + $0x340] sm:$0xff] %v4311
  %4336 = vst [vmem:[#allocation3 + $0x348] sm:$0xff] %v4312
  %4337 = vst [vmem:[#allocation3 + $0x350] sm:$0xff] %v4313
  %4338 = vst [vmem:[#allocation3 + $0x358] sm:$0xff] %v4314
  %4339 = vst [vmem:[#allocation3 + $0x360] sm:$0xff] %v4315
  %4340 = vst [vmem:[#allocation3 + $0x368] sm:$0xff] %v4316
  %4341 = vst [vmem:[#allocation3 + $0x370] sm:$0xff] %v4317
  %4342 = vst [vmem:[#allocation3 + $0x378] sm:$0xff] %v4318
  %4343 = vst [vmem:[#allocation3 + $0x3a0] sm:$0xff] %v4319
  %4344 = vst [vmem:[#allocation3 + $0x3a8] sm:$0xff] %v4320
  %4345 = vst [vmem:[#allocation3 + $0x3b0] sm:$0xff] %v4321
  %4346 = vst [vmem:[#allocation3 + $0x3b8] sm:$0xff] %v4322
  %4347 = vst [vmem:[#allocation3 + $0x3c0] sm:$0xff] %v4323
  %4348 = vst [vmem:[#allocation3 + $0x3c8] sm:$0xff] %v4324
  %4349 = vst [vmem:[#allocation3 + $0x3d0] sm:$0xff] %v4325
  %4350 = vst [vmem:[#allocation3 + $0x3d8] sm:$0xff] %v4326
  %4351 = vst [vmem:[#allocation3 + $0x3e0] sm:$0xff] %v4327
  %4352 = vst [vmem:[#allocation3 + $0x3e8] sm:$0xff] %v4328
  %4353 = vst [vmem:[#allocation3 + $0x3f0] sm:$0xff] %v4329
  %4354 = vst [vmem:[#allocation3 + $0x3f8] sm:$0xff] %v4330
  %v4355 = vld [vmem:[#allocation2 + $0x280] sm:$0xff]
  %v4356 = vld [vmem:[#allocation2 + $0x288] sm:$0xff]
  %v4357 = vld [vmem:[#allocation2 + $0x290] sm:$0xff]
  %v4358 = vld [vmem:[#allocation2 + $0x298] sm:$0xff]
  %v4359 = vld [vmem:[#allocation2 + $0x2a0] sm:$0xff]
  %v4360 = vld [vmem:[#allocation2 + $0x2a8] sm:$0xff]
  %v4361 = vld [vmem:[#allocation2 + $0x2b0] sm:$0xff]
  %v4362 = vld [vmem:[#allocation2 + $0x2b8] sm:$0xff]
  %v4363 = vld [vmem:[#allocation2 + $0x2c0] sm:$0xff]
  %v4364 = vld [vmem:[#allocation2 + $0x2c8] sm:$0xff]
  %v4365 = vld [vmem:[#allocation2 + $0x2d0] sm:$0xff]
  %v4366 = vld [vmem:[#allocation2 + $0x2d8] sm:$0xff]
  %v4367 = vld [vmem:[#allocation2 + $0x2e0] sm:$0xff]
  %v4368 = vld [vmem:[#allocation2 + $0x2e8] sm:$0xff]
  %v4369 = vld [vmem:[#allocation2 + $0x2f0] sm:$0xff]
  %v4370 = vld [vmem:[#allocation2 + $0x2f8] sm:$0xff]
  %v4371 = vld [vmem:[#allocation2 + $0x380] sm:$0xff]
  %v4372 = vld [vmem:[#allocation2 + $0x388] sm:$0xff]
  %v4373 = vld [vmem:[#allocation2 + $0x390] sm:$0xff]
  %v4374 = vld [vmem:[#allocation2 + $0x398] sm:$0xff]
  %v4375 = vld [vmem:[#allocation2 + $0x3a0] sm:$0xff]
  %v4376 = vld [vmem:[#allocation2 + $0x3a8] sm:$0xff]
  %v4377 = vld [vmem:[#allocation2 + $0x3b0] sm:$0xff]
  %v4378 = vld [vmem:[#allocation2 + $0x3b8] sm:$0xff]
  %v4379 = vld [vmem:[#allocation2 + $0x3c0] sm:$0xff]
  %v4380 = vld [vmem:[#allocation2 + $0x3c8] sm:$0xff]
  %v4381 = vld [vmem:[#allocation2 + $0x3d0] sm:$0xff]
  %v4382 = vld [vmem:[#allocation2 + $0x3d8] sm:$0xff]
  %v4383 = vld [vmem:[#allocation2 + $0x3e0] sm:$0xff]
  %v4384 = vld [vmem:[#allocation2 + $0x3e8] sm:$0xff]
  %v4385 = vld [vmem:[#allocation2 + $0x3f0] sm:$0xff]
  %v4386 = vld [vmem:[#allocation2 + $0x3f8] sm:$0xff]
  %4387 = vst [vmem:[#allocation3 + $0x400] sm:$0xff] %v4355
  %4388 = vst [vmem:[#allocation3 + $0x408] sm:$0xff] %v4356
  %4389 = vst [vmem:[#allocation3 + $0x410] sm:$0xff] %v4357
  %4390 = vst [vmem:[#allocation3 + $0x418] sm:$0xff] %v4358
  %4391 = vst [vmem:[#allocation3 + $0x420] sm:$0xff] %v4359
  %4392 = vst [vmem:[#allocation3 + $0x428] sm:$0xff] %v4360
  %4393 = vst [vmem:[#allocation3 + $0x430] sm:$0xff] %v4361
  %4394 = vst [vmem:[#allocation3 + $0x438] sm:$0xff] %v4362
  %4395 = vst [vmem:[#allocation3 + $0x440] sm:$0xff] %v4363
  %4396 = vst [vmem:[#allocation3 + $0x448] sm:$0xff] %v4364
  %4397 = vst [vmem:[#allocation3 + $0x450] sm:$0xff] %v4365
  %4398 = vst [vmem:[#allocation3 + $0x458] sm:$0xff] %v4366
  %4399 = vst [vmem:[#allocation3 + $0x460] sm:$0xff] %v4367
  %4400 = vst [vmem:[#allocation3 + $0x468] sm:$0xff] %v4368
  %4401 = vst [vmem:[#allocation3 + $0x470] sm:$0xff] %v4369
  %4402 = vst [vmem:[#allocation3 + $0x478] sm:$0xff] %v4370
  %4403 = vst [vmem:[#allocation3 + $0x480] sm:$0xff] %v4371
  %4404 = vst [vmem:[#allocation3 + $0x488] sm:$0xff] %v4372
  %4405 = vst [vmem:[#allocation3 + $0x490] sm:$0xff] %v4373
  %4406 = vst [vmem:[#allocation3 + $0x498] sm:$0xff] %v4374
  %4407 = vst [vmem:[#allocation3 + $0x4a0] sm:$0xff] %v4375
  %4408 = vst [vmem:[#allocation3 + $0x4a8] sm:$0xff] %v4376
  %4409 = vst [vmem:[#allocation3 + $0x4b0] sm:$0xff] %v4377
  %4410 = vst [vmem:[#allocation3 + $0x4b8] sm:$0xff] %v4378
  %4411 = vst [vmem:[#allocation3 + $0x4c0] sm:$0xff] %v4379
  %4412 = vst [vmem:[#allocation3 + $0x4c8] sm:$0xff] %v4380
  %4413 = vst [vmem:[#allocation3 + $0x4d0] sm:$0xff] %v4381
  %4414 = vst [vmem:[#allocation3 + $0x4d8] sm:$0xff] %v4382
  %4415 = vst [vmem:[#allocation3 + $0x4e0] sm:$0xff] %v4383
  %4416 = vst [vmem:[#allocation3 + $0x4e8] sm:$0xff] %v4384
  %4417 = vst [vmem:[#allocation3 + $0x4f0] sm:$0xff] %v4385
  %4418 = vst [vmem:[#allocation3 + $0x4f8] sm:$0xff] %v4386
  %v4419 = vld [vmem:[#allocation2 + $0x2a0] sm:$0xff]
  %v4420 = vld [vmem:[#allocation2 + $0x2a8] sm:$0xff]
  %v4421 = vld [vmem:[#allocation2 + $0x2b0] sm:$0xff]
  %v4422 = vld [vmem:[#allocation2 + $0x2b8] sm:$0xff]
  %v4423 = vld [vmem:[#allocation2 + $0x2c0] sm:$0xff]
  %v4424 = vld [vmem:[#allocation2 + $0x2c8] sm:$0xff]
  %v4425 = vld [vmem:[#allocation2 + $0x2d0] sm:$0xff]
  %v4426 = vld [vmem:[#allocation2 + $0x2d8] sm:$0xff]
  %v4427 = vld [vmem:[#allocation2 + $0x2e0] sm:$0xff]
  %v4428 = vld [vmem:[#allocation2 + $0x2e8] sm:$0xff]
  %v4429 = vld [vmem:[#allocation2 + $0x2f0] sm:$0xff]
  %v4430 = vld [vmem:[#allocation2 + $0x2f8] sm:$0xff]
  %v4431 = vld [vmem:[#allocation2 + $0x3a0] sm:$0xff]
  %v4432 = vld [vmem:[#allocation2 + $0x3a8] sm:$0xff]
  %v4433 = vld [vmem:[#allocation2 + $0x3b0] sm:$0xff]
  %v4434 = vld [vmem:[#allocation2 + $0x3b8] sm:$0xff]
  %v4435 = vld [vmem:[#allocation2 + $0x3c0] sm:$0xff]
  %v4436 = vld [vmem:[#allocation2 + $0x3c8] sm:$0xff]
  %v4437 = vld [vmem:[#allocation2 + $0x3d0] sm:$0xff]
  %v4438 = vld [vmem:[#allocation2 + $0x3d8] sm:$0xff]
  %v4439 = vld [vmem:[#allocation2 + $0x3e0] sm:$0xff]
  %v4440 = vld [vmem:[#allocation2 + $0x3e8] sm:$0xff]
  %v4441 = vld [vmem:[#allocation2 + $0x3f0] sm:$0xff]
  %v4442 = vld [vmem:[#allocation2 + $0x3f8] sm:$0xff]
  %4443 = vst [vmem:[#allocation3 + $0x500] sm:$0xff] %v4419
  %4444 = vst [vmem:[#allocation3 + $0x508] sm:$0xff] %v4420
  %4445 = vst [vmem:[#allocation3 + $0x510] sm:$0xff] %v4421
  %4446 = vst [vmem:[#allocation3 + $0x518] sm:$0xff] %v4422
  %4447 = vst [vmem:[#allocation3 + $0x520] sm:$0xff] %v4423
  %4448 = vst [vmem:[#allocation3 + $0x528] sm:$0xff] %v4424
  %4449 = vst [vmem:[#allocation3 + $0x530] sm:$0xff] %v4425
  %4450 = vst [vmem:[#allocation3 + $0x538] sm:$0xff] %v4426
  %4451 = vst [vmem:[#allocation3 + $0x540] sm:$0xff] %v4427
  %4452 = vst [vmem:[#allocation3 + $0x548] sm:$0xff] %v4428
  %4453 = vst [vmem:[#allocation3 + $0x550] sm:$0xff] %v4429
  %4454 = vst [vmem:[#allocation3 + $0x558] sm:$0xff] %v4430
  %4455 = vst [vmem:[#allocation3 + $0x580] sm:$0xff] %v4431
  %4456 = vst [vmem:[#allocation3 + $0x588] sm:$0xff] %v4432
  %4457 = vst [vmem:[#allocation3 + $0x590] sm:$0xff] %v4433
  %4458 = vst [vmem:[#allocation3 + $0x598] sm:$0xff] %v4434
  %4459 = vst [vmem:[#allocation3 + $0x5a0] sm:$0xff] %v4435
  %4460 = vst [vmem:[#allocation3 + $0x5a8] sm:$0xff] %v4436
  %4461 = vst [vmem:[#allocation3 + $0x5b0] sm:$0xff] %v4437
  %4462 = vst [vmem:[#allocation3 + $0x5b8] sm:$0xff] %v4438
  %4463 = vst [vmem:[#allocation3 + $0x5c0] sm:$0xff] %v4439
  %4464 = vst [vmem:[#allocation3 + $0x5c8] sm:$0xff] %v4440
  %4465 = vst [vmem:[#allocation3 + $0x5d0] sm:$0xff] %v4441
  %4466 = vst [vmem:[#allocation3 + $0x5d8] sm:$0xff] %v4442
  %v4467 = vld [vmem:[#allocation2 + $0x480] sm:$0xff]
  %v4468 = vld [vmem:[#allocation2 + $0x488] sm:$0xff]
  %v4469 = vld [vmem:[#allocation2 + $0x490] sm:$0xff]
  %v4470 = vld [vmem:[#allocation2 + $0x498] sm:$0xff]
  %v4471 = vld [vmem:[#allocation2 + $0x4a0] sm:$0xff]
  %v4472 = vld [vmem:[#allocation2 + $0x4a8] sm:$0xff]
  %v4473 = vld [vmem:[#allocation2 + $0x4b0] sm:$0xff]
  %v4474 = vld [vmem:[#allocation2 + $0x4b8] sm:$0xff]
  %v4475 = vld [vmem:[#allocation2 + $0x580] sm:$0xff]
  %v4476 = vld [vmem:[#allocation2 + $0x588] sm:$0xff]
  %v4477 = vld [vmem:[#allocation2 + $0x590] sm:$0xff]
  %v4478 = vld [vmem:[#allocation2 + $0x598] sm:$0xff]
  %v4479 = vld [vmem:[#allocation2 + $0x5a0] sm:$0xff]
  %v4480 = vld [vmem:[#allocation2 + $0x5a8] sm:$0xff]
  %v4481 = vld [vmem:[#allocation2 + $0x5b0] sm:$0xff]
  %v4482 = vld [vmem:[#allocation2 + $0x5b8] sm:$0xff]
  %4483 = vst [vmem:[#allocation3 + $0x640] sm:$0xff] %v4467
  %4484 = vst [vmem:[#allocation3 + $0x648] sm:$0xff] %v4468
  %4485 = vst [vmem:[#allocation3 + $0x650] sm:$0xff] %v4469
  %4486 = vst [vmem:[#allocation3 + $0x658] sm:$0xff] %v4470
  %4487 = vst [vmem:[#allocation3 + $0x660] sm:$0xff] %v4471
  %4488 = vst [vmem:[#allocation3 + $0x668] sm:$0xff] %v4472
  %4489 = vst [vmem:[#allocation3 + $0x670] sm:$0xff] %v4473
  %4490 = vst [vmem:[#allocation3 + $0x678] sm:$0xff] %v4474
  %4491 = vst [vmem:[#allocation3 + $0x6c0] sm:$0xff] %v4475
  %4492 = vst [vmem:[#allocation3 + $0x6c8] sm:$0xff] %v4476
  %4493 = vst [vmem:[#allocation3 + $0x6d0] sm:$0xff] %v4477
  %4494 = vst [vmem:[#allocation3 + $0x6d8] sm:$0xff] %v4478
  %4495 = vst [vmem:[#allocation3 + $0x6e0] sm:$0xff] %v4479
  %4496 = vst [vmem:[#allocation3 + $0x6e8] sm:$0xff] %v4480
  %4497 = vst [vmem:[#allocation3 + $0x6f0] sm:$0xff] %v4481
  %4498 = vst [vmem:[#allocation3 + $0x6f8] sm:$0xff] %v4482
  %v4499 = vld [vmem:[#allocation2 + $0x480] sm:$0xff]
  %v4500 = vld [vmem:[#allocation2 + $0x488] sm:$0xff]
  %v4501 = vld [vmem:[#allocation2 + $0x490] sm:$0xff]
  %v4502 = vld [vmem:[#allocation2 + $0x498] sm:$0xff]
  %v4503 = vld [vmem:[#allocation2 + $0x4a0] sm:$0xff]
  %v4504 = vld [vmem:[#allocation2 + $0x4a8] sm:$0xff]
  %v4505 = vld [vmem:[#allocation2 + $0x4b0] sm:$0xff]
  %v4506 = vld [vmem:[#allocation2 + $0x4b8] sm:$0xff]
  %v4507 = vld [vmem:[#allocation2 + $0x4c0] sm:$0xff]
  %v4508 = vld [vmem:[#allocation2 + $0x4c8] sm:$0xff]
  %v4509 = vld [vmem:[#allocation2 + $0x4d0] sm:$0xff]
  %v4510 = vld [vmem:[#allocation2 + $0x4d8] sm:$0xff]
  %v4511 = vld [vmem:[#allocation2 + $0x4e0] sm:$0xff]
  %v4512 = vld [vmem:[#allocation2 + $0x4e8] sm:$0xff]
  %v4513 = vld [vmem:[#allocation2 + $0x4f0] sm:$0xff]
  %v4514 = vld [vmem:[#allocation2 + $0x4f8] sm:$0xff]
  %v4515 = vld [vmem:[#allocation2 + $0x580] sm:$0xff]
  %v4516 = vld [vmem:[#allocation2 + $0x588] sm:$0xff]
  %v4517 = vld [vmem:[#allocation2 + $0x590] sm:$0xff]
  %v4518 = vld [vmem:[#allocation2 + $0x598] sm:$0xff]
  %v4519 = vld [vmem:[#allocation2 + $0x5a0] sm:$0xff]
  %v4520 = vld [vmem:[#allocation2 + $0x5a8] sm:$0xff]
  %v4521 = vld [vmem:[#allocation2 + $0x5b0] sm:$0xff]
  %v4522 = vld [vmem:[#allocation2 + $0x5b8] sm:$0xff]
  %v4523 = vld [vmem:[#allocation2 + $0x5c0] sm:$0xff]
  %v4524 = vld [vmem:[#allocation2 + $0x5c8] sm:$0xff]
  %v4525 = vld [vmem:[#allocation2 + $0x5d0] sm:$0xff]
  %v4526 = vld [vmem:[#allocation2 + $0x5d8] sm:$0xff]
  %v4527 = vld [vmem:[#allocation2 + $0x5e0] sm:$0xff]
  %v4528 = vld [vmem:[#allocation2 + $0x5e8] sm:$0xff]
  %v4529 = vld [vmem:[#allocation2 + $0x5f0] sm:$0xff]
  %v4530 = vld [vmem:[#allocation2 + $0x5f8] sm:$0xff]
  %4531 = vst [vmem:[#allocation3 + $0x700] sm:$0xff] %v4499
  %4532 = vst [vmem:[#allocation3 + $0x708] sm:$0xff] %v4500
  %4533 = vst [vmem:[#allocation3 + $0x710] sm:$0xff] %v4501
  %4534 = vst [vmem:[#allocation3 + $0x718] sm:$0xff] %v4502
  %4535 = vst [vmem:[#allocation3 + $0x720] sm:$0xff] %v4503
  %4536 = vst [vmem:[#allocation3 + $0x728] sm:$0xff] %v4504
  %4537 = vst [vmem:[#allocation3 + $0x730] sm:$0xff] %v4505
  %4538 = vst [vmem:[#allocation3 + $0x738] sm:$0xff] %v4506
  %4539 = vst [vmem:[#allocation3 + $0x740] sm:$0xff] %v4507
  %4540 = vst [vmem:[#allocation3 + $0x748] sm:$0xff] %v4508
  %4541 = vst [vmem:[#allocation3 + $0x750] sm:$0xff] %v4509
  %4542 = vst [vmem:[#allocation3 + $0x758] sm:$0xff] %v4510
  %4543 = vst [vmem:[#allocation3 + $0x760] sm:$0xff] %v4511
  %4544 = vst [vmem:[#allocation3 + $0x768] sm:$0xff] %v4512
  %4545 = vst [vmem:[#allocation3 + $0x770] sm:$0xff] %v4513
  %4546 = vst [vmem:[#allocation3 + $0x778] sm:$0xff] %v4514
  %4547 = vst [vmem:[#allocation3 + $0x780] sm:$0xff] %v4515
  %4548 = vst [vmem:[#allocation3 + $0x788] sm:$0xff] %v4516
  %4549 = vst [vmem:[#allocation3 + $0x790] sm:$0xff] %v4517
  %4550 = vst [vmem:[#allocation3 + $0x798] sm:$0xff] %v4518
  %4551 = vst [vmem:[#allocation3 + $0x7a0] sm:$0xff] %v4519
  %4552 = vst [vmem:[#allocation3 + $0x7a8] sm:$0xff] %v4520
  %4553 = vst [vmem:[#allocation3 + $0x7b0] sm:$0xff] %v4521
  %4554 = vst [vmem:[#allocation3 + $0x7b8] sm:$0xff] %v4522
  %4555 = vst [vmem:[#allocation3 + $0x7c0] sm:$0xff] %v4523
  %4556 = vst [vmem:[#allocation3 + $0x7c8] sm:$0xff] %v4524
  %4557 = vst [vmem:[#allocation3 + $0x7d0] sm:$0xff] %v4525
  %4558 = vst [vmem:[#allocation3 + $0x7d8] sm:$0xff] %v4526
  %4559 = vst [vmem:[#allocation3 + $0x7e0] sm:$0xff] %v4527
  %4560 = vst [vmem:[#allocation3 + $0x7e8] sm:$0xff] %v4528
  %4561 = vst [vmem:[#allocation3 + $0x7f0] sm:$0xff] %v4529
  %4562 = vst [vmem:[#allocation3 + $0x7f8] sm:$0xff] %v4530
  %v4563 = vld [vmem:[#allocation2 + $0x4c0] sm:$0xff]
  %v4564 = vld [vmem:[#allocation2 + $0x4c8] sm:$0xff]
  %v4565 = vld [vmem:[#allocation2 + $0x4d0] sm:$0xff]
  %v4566 = vld [vmem:[#allocation2 + $0x4d8] sm:$0xff]
  %v4567 = vld [vmem:[#allocation2 + $0x4e0] sm:$0xff]
  %v4568 = vld [vmem:[#allocation2 + $0x4e8] sm:$0xff]
  %v4569 = vld [vmem:[#allocation2 + $0x4f0] sm:$0xff]
  %v4570 = vld [vmem:[#allocation2 + $0x4f8] sm:$0xff]
  %v4571 = vld [vmem:[#allocation2 + $0x5c0] sm:$0xff]
  %v4572 = vld [vmem:[#allocation2 + $0x5c8] sm:$0xff]
  %v4573 = vld [vmem:[#allocation2 + $0x5d0] sm:$0xff]
  %v4574 = vld [vmem:[#allocation2 + $0x5d8] sm:$0xff]
  %v4575 = vld [vmem:[#allocation2 + $0x5e0] sm:$0xff]
  %v4576 = vld [vmem:[#allocation2 + $0x5e8] sm:$0xff]
  %v4577 = vld [vmem:[#allocation2 + $0x5f0] sm:$0xff]
  %v4578 = vld [vmem:[#allocation2 + $0x5f8] sm:$0xff]
  %4579 = vst [vmem:[#allocation3 + $0x800] sm:$0xff] %v4563
  %4580 = vst [vmem:[#allocation3 + $0x808] sm:$0xff] %v4564
  %4581 = vst [vmem:[#allocation3 + $0x810] sm:$0xff] %v4565
  %4582 = vst [vmem:[#allocation3 + $0x818] sm:$0xff] %v4566
  %4583 = vst [vmem:[#allocation3 + $0x820] sm:$0xff] %v4567
  %4584 = vst [vmem:[#allocation3 + $0x828] sm:$0xff] %v4568
  %4585 = vst [vmem:[#allocation3 + $0x830] sm:$0xff] %v4569
  %4586 = vst [vmem:[#allocation3 + $0x838] sm:$0xff] %v4570
  %4587 = vst [vmem:[#allocation3 + $0x880] sm:$0xff] %v4571
  %4588 = vst [vmem:[#allocation3 + $0x888] sm:$0xff] %v4572
  %4589 = vst [vmem:[#allocation3 + $0x890] sm:$0xff] %v4573
  %4590 = vst [vmem:[#allocation3 + $0x898] sm:$0xff] %v4574
  %4591 = vst [vmem:[#allocation3 + $0x8a0] sm:$0xff] %v4575
  %4592 = vst [vmem:[#allocation3 + $0x8a8] sm:$0xff] %v4576
  %4593 = vst [vmem:[#allocation3 + $0x8b0] sm:$0xff] %v4577
  %4594 = vst [vmem:[#allocation3 + $0x8b8] sm:$0xff] %v4578
  %v4595 = vld [vmem:[#allocation2 + $0x680] sm:$0xff]
  %v4596 = vld [vmem:[#allocation2 + $0x688] sm:$0xff]
  %v4597 = vld [vmem:[#allocation2 + $0x690] sm:$0xff]
  %v4598 = vld [vmem:[#allocation2 + $0x698] sm:$0xff]
  %v4599 = vld [vmem:[#allocation2 + $0x6a0] sm:$0xff]
  %v4600 = vld [vmem:[#allocation2 + $0x6a8] sm:$0xff]
  %v4601 = vld [vmem:[#allocation2 + $0x6b0] sm:$0xff]
  %v4602 = vld [vmem:[#allocation2 + $0x6b8] sm:$0xff]
  %v4603 = vld [vmem:[#allocation2 + $0x6c0] sm:$0xff]
  %v4604 = vld [vmem:[#allocation2 + $0x6c8] sm:$0xff]
  %v4605 = vld [vmem:[#allocation2 + $0x6d0] sm:$0xff]
  %v4606 = vld [vmem:[#allocation2 + $0x6d8] sm:$0xff]
  %v4607 = vld [vmem:[#allocation2 + $0x6e0] sm:$0xff]
  %v4608 = vld [vmem:[#allocation2 + $0x6e8] sm:$0xff]
  %v4609 = vld [vmem:[#allocation2 + $0x6f0] sm:$0xff]
  %v4610 = vld [vmem:[#allocation2 + $0x6f8] sm:$0xff]
  %v4611 = vld [vmem:[#allocation2 + $0x780] sm:$0xff]
  %v4612 = vld [vmem:[#allocation2 + $0x788] sm:$0xff]
  %v4613 = vld [vmem:[#allocation2 + $0x790] sm:$0xff]
  %v4614 = vld [vmem:[#allocation2 + $0x798] sm:$0xff]
  %v4615 = vld [vmem:[#allocation2 + $0x7a0] sm:$0xff]
  %v4616 = vld [vmem:[#allocation2 + $0x7a8] sm:$0xff]
  %v4617 = vld [vmem:[#allocation2 + $0x7b0] sm:$0xff]
  %v4618 = vld [vmem:[#allocation2 + $0x7b8] sm:$0xff]
  %v4619 = vld [vmem:[#allocation2 + $0x7c0] sm:$0xff]
  %v4620 = vld [vmem:[#allocation2 + $0x7c8] sm:$0xff]
  %v4621 = vld [vmem:[#allocation2 + $0x7d0] sm:$0xff]
  %v4622 = vld [vmem:[#allocation2 + $0x7d8] sm:$0xff]
  %v4623 = vld [vmem:[#allocation2 + $0x7e0] sm:$0xff]
  %v4624 = vld [vmem:[#allocation2 + $0x7e8] sm:$0xff]
  %v4625 = vld [vmem:[#allocation2 + $0x7f0] sm:$0xff]
  %v4626 = vld [vmem:[#allocation2 + $0x7f8] sm:$0xff]
  %4627 = vst [vmem:[#allocation3 + $0xa00] sm:$0xff] %v4595
  %4628 = vst [vmem:[#allocation3 + $0xa08] sm:$0xff] %v4596
  %4629 = vst [vmem:[#allocation3 + $0xa10] sm:$0xff] %v4597
  %4630 = vst [vmem:[#allocation3 + $0xa18] sm:$0xff] %v4598
  %4631 = vst [vmem:[#allocation3 + $0xa20] sm:$0xff] %v4599
  %4632 = vst [vmem:[#allocation3 + $0xa28] sm:$0xff] %v4600
  %4633 = vst [vmem:[#allocation3 + $0xa30] sm:$0xff] %v4601
  %4634 = vst [vmem:[#allocation3 + $0xa38] sm:$0xff] %v4602
  %4635 = vst [vmem:[#allocation3 + $0xa40] sm:$0xff] %v4603
  %4636 = vst [vmem:[#allocation3 + $0xa48] sm:$0xff] %v4604
  %4637 = vst [vmem:[#allocation3 + $0xa50] sm:$0xff] %v4605
  %4638 = vst [vmem:[#allocation3 + $0xa58] sm:$0xff] %v4606
  %4639 = vst [vmem:[#allocation3 + $0xa60] sm:$0xff] %v4607
  %4640 = vst [vmem:[#allocation3 + $0xa68] sm:$0xff] %v4608
  %4641 = vst [vmem:[#allocation3 + $0xa70] sm:$0xff] %v4609
  %4642 = vst [vmem:[#allocation3 + $0xa78] sm:$0xff] %v4610
  %4643 = vst [vmem:[#allocation3 + $0xa80] sm:$0xff] %v4611
  %4644 = vst [vmem:[#allocation3 + $0xa88] sm:$0xff] %v4612
  %4645 = vst [vmem:[#allocation3 + $0xa90] sm:$0xff] %v4613
  %4646 = vst [vmem:[#allocation3 + $0xa98] sm:$0xff] %v4614
  %4647 = vst [vmem:[#allocation3 + $0xaa0] sm:$0xff] %v4615
  %4648 = vst [vmem:[#allocation3 + $0xaa8] sm:$0xff] %v4616
  %4649 = vst [vmem:[#allocation3 + $0xab0] sm:$0xff] %v4617
  %4650 = vst [vmem:[#allocation3 + $0xab8] sm:$0xff] %v4618
  %4651 = vst [vmem:[#allocation3 + $0xac0] sm:$0xff] %v4619
  %4652 = vst [vmem:[#allocation3 + $0xac8] sm:$0xff] %v4620
  %4653 = vst [vmem:[#allocation3 + $0xad0] sm:$0xff] %v4621
  %4654 = vst [vmem:[#allocation3 + $0xad8] sm:$0xff] %v4622
  %4655 = vst [vmem:[#allocation3 + $0xae0] sm:$0xff] %v4623
  %4656 = vst [vmem:[#allocation3 + $0xae8] sm:$0xff] %v4624
  %4657 = vst [vmem:[#allocation3 + $0xaf0] sm:$0xff] %v4625
  %4658 = vst [vmem:[#allocation3 + $0xaf8] sm:$0xff] %v4626
  %v4659 = vld [vmem:[%s2] sm:$0xff]
  %v4660 = vld [vmem:[%s2 + $0x8] sm:$0xff]
  %v4661 = vld [vmem:[%s2 + $0x10] sm:$0xff]
  %v4662 = vld [vmem:[%s2 + $0x18] sm:$0xff]
  %v4663 = vld [vmem:[%s2 + $0x20] sm:$0xff]
  %v4664 = vld [vmem:[%s2 + $0x28] sm:$0xff]
  %v4665 = vld [vmem:[%s2 + $0x30] sm:$0xff]
  %v4666 = vld [vmem:[%s2 + $0x38] sm:$0xff]
  %v4667 = vld [vmem:[#allocation3] sm:$0xff]
  %v4668 = vld [vmem:[#allocation3 + $0x8] sm:$0xff]
  %v4669 = vld [vmem:[#allocation3 + $0x10] sm:$0xff]
  %v4670 = vld [vmem:[#allocation3 + $0x18] sm:$0xff]
  %v4671 = vld [vmem:[#allocation3 + $0x20] sm:$0xff]
  %v4672 = vld [vmem:[#allocation3 + $0x28] sm:$0xff]
  %v4673 = vld [vmem:[#allocation3 + $0x30] sm:$0xff]
  %v4674 = vld [vmem:[#allocation3 + $0x38] sm:$0xff]
  %v4675 = vld [vmem:[#allocation3 + $0x40] sm:$0xff]
  %v4676 = vld [vmem:[#allocation3 + $0x48] sm:$0xff]
  %v4677 = vld [vmem:[#allocation3 + $0x50] sm:$0xff]
  %v4678 = vld [vmem:[#allocation3 + $0x58] sm:$0xff]
  %v4679 = vld [vmem:[#allocation3 + $0x60] sm:$0xff]
  %v4680 = vld [vmem:[#allocation3 + $0x68] sm:$0xff]
  %v4681 = vld [vmem:[#allocation3 + $0x70] sm:$0xff]
  %v4682 = vld [vmem:[#allocation3 + $0x78] sm:$0xff]
  %v4683 = vld [vmem:[#allocation3 + $0x80] sm:$0xff]
  %v4684 = vld [vmem:[#allocation3 + $0x88] sm:$0xff]
  %v4685 = vld [vmem:[#allocation3 + $0x90] sm:$0xff]
  %v4686 = vld [vmem:[#allocation3 + $0x98] sm:$0xff]
  %v4687 = vld [vmem:[#allocation3 + $0xa0] sm:$0xff]
  %v4688 = vld [vmem:[#allocation3 + $0xa8] sm:$0xff]
  %v4689 = vld [vmem:[#allocation3 + $0xb0] sm:$0xff]
  %v4690 = vld [vmem:[#allocation3 + $0xb8] sm:$0xff]
  %v4691 = vld [vmem:[#allocation3 + $0xc0] sm:$0xff]
  %v4692 = vld [vmem:[#allocation3 + $0xc8] sm:$0xff]
  %v4693 = vld [vmem:[#allocation3 + $0xd0] sm:$0xff]
  %v4694 = vld [vmem:[#allocation3 + $0xd8] sm:$0xff]
  %v4695 = vld [vmem:[#allocation3 + $0xe0] sm:$0xff]
  %v4696 = vld [vmem:[#allocation3 + $0xe8] sm:$0xff]
  %v4697 = vld [vmem:[#allocation3 + $0xf0] sm:$0xff]
  %v4698 = vld [vmem:[#allocation3 + $0xf8] sm:$0xff]
  %v4699 = vld [vmem:[#allocation3 + $0x100] sm:$0xff]
  %v4700 = vld [vmem:[#allocation3 + $0x108] sm:$0xff]
  %v4701 = vld [vmem:[#allocation3 + $0x110] sm:$0xff]
  %v4702 = vld [vmem:[#allocation3 + $0x118] sm:$0xff]
  %v4703 = vld [vmem:[#allocation3 + $0x120] sm:$0xff]
  %v4704 = vld [vmem:[#allocation3 + $0x128] sm:$0xff]
  %v4705 = vld [vmem:[#allocation3 + $0x130] sm:$0xff]
  %v4706 = vld [vmem:[#allocation3 + $0x138] sm:$0xff]
  %v4707 = vld [vmem:[#allocation3 + $0x140] sm:$0xff]
  %v4708 = vld [vmem:[#allocation3 + $0x148] sm:$0xff]
  %v4709 = vld [vmem:[#allocation3 + $0x150] sm:$0xff]
  %v4710 = vld [vmem:[#allocation3 + $0x158] sm:$0xff]
  %v4711 = vld [vmem:[#allocation3 + $0x160] sm:$0xff]
  %v4712 = vld [vmem:[#allocation3 + $0x168] sm:$0xff]
  %v4713 = vld [vmem:[#allocation3 + $0x170] sm:$0xff]
  %v4714 = vld [vmem:[#allocation3 + $0x178] sm:$0xff]
  %v4715 = vld [vmem:[#allocation3 + $0x180] sm:$0xff]
  %v4716 = vld [vmem:[#allocation3 + $0x188] sm:$0xff]
  %v4717 = vld [vmem:[#allocation3 + $0x190] sm:$0xff]
  %v4718 = vld [vmem:[#allocation3 + $0x198] sm:$0xff]
  %v4719 = vld [vmem:[#allocation3 + $0x1a0] sm:$0xff]
  %v4720 = vld [vmem:[#allocation3 + $0x1a8] sm:$0xff]
  %v4721 = vld [vmem:[#allocation3 + $0x1b0] sm:$0xff]
  %v4722 = vld [vmem:[#allocation3 + $0x1b8] sm:$0xff]
  %v4723 = vld [vmem:[#allocation3 + $0x1c0] sm:$0xff]
  %v4724 = vld [vmem:[#allocation3 + $0x1c8] sm:$0xff]
  %v4725 = vld [vmem:[#allocation3 + $0x1d0] sm:$0xff]
  %v4726 = vld [vmem:[#allocation3 + $0x1d8] sm:$0xff]
  %v4727 = vld [vmem:[#allocation3 + $0x1e0] sm:$0xff]
  %v4728 = vld [vmem:[#allocation3 + $0x1e8] sm:$0xff]
  %v4729 = vld [vmem:[#allocation3 + $0x1f0] sm:$0xff]
  %v4730 = vld [vmem:[#allocation3 + $0x1f8] sm:$0xff]
  %v4731 = vld [vmem:[#allocation3 + $0x200] sm:$0xff]
  %v4732 = vld [vmem:[#allocation3 + $0x208] sm:$0xff]
  %v4733 = vld [vmem:[#allocation3 + $0x210] sm:$0xff]
  %v4734 = vld [vmem:[#allocation3 + $0x218] sm:$0xff]
  %v4735 = vld [vmem:[#allocation3 + $0x220] sm:$0xff]
  %v4736 = vld [vmem:[#allocation3 + $0x228] sm:$0xff]
  %v4737 = vld [vmem:[#allocation3 + $0x230] sm:$0xff]
  %v4738 = vld [vmem:[#allocation3 + $0x238] sm:$0xff]
  %v4739 = vld [vmem:[#allocation3 + $0x240] sm:$0xff]
  %v4740 = vld [vmem:[#allocation3 + $0x248] sm:$0xff]
  %v4741 = vld [vmem:[#allocation3 + $0x250] sm:$0xff]
  %v4742 = vld [vmem:[#allocation3 + $0x258] sm:$0xff]
  %v4743 = vld [vmem:[#allocation3 + $0x260] sm:$0xff]
  %v4744 = vld [vmem:[#allocation3 + $0x268] sm:$0xff]
  %v4745 = vld [vmem:[#allocation3 + $0x270] sm:$0xff]
  %v4746 = vld [vmem:[#allocation3 + $0x278] sm:$0xff]
  %v4747 = vld [vmem:[#allocation3 + $0x280] sm:$0xff]
  %v4748 = vld [vmem:[#allocation3 + $0x288] sm:$0xff]
  %v4749 = vld [vmem:[#allocation3 + $0x290] sm:$0xff]
  %v4750 = vld [vmem:[#allocation3 + $0x298] sm:$0xff]
  %v4751 = vld [vmem:[#allocation3 + $0x2a0] sm:$0xff]
  %v4752 = vld [vmem:[#allocation3 + $0x2a8] sm:$0xff]
  %v4753 = vld [vmem:[#allocation3 + $0x2b0] sm:$0xff]
  %v4754 = vld [vmem:[#allocation3 + $0x2b8] sm:$0xff]
  %v4755 = vld [vmem:[#allocation3 + $0x2c0] sm:$0xff]
  %v4756 = vld [vmem:[#allocation3 + $0x2c8] sm:$0xff]
  %v4757 = vld [vmem:[#allocation3 + $0x2d0] sm:$0xff]
  %v4758 = vld [vmem:[#allocation3 + $0x2d8] sm:$0xff]
  %v4759 = vld [vmem:[#allocation3 + $0x2e0] sm:$0xff]
  %v4760 = vld [vmem:[#allocation3 + $0x2e8] sm:$0xff]
  %v4761 = vld [vmem:[#allocation3 + $0x2f0] sm:$0xff]
  %v4762 = vld [vmem:[#allocation3 + $0x2f8] sm:$0xff]
  %v4763 = vld [vmem:[#allocation3 + $0x300] sm:$0xff]
  %v4764 = vld [vmem:[#allocation3 + $0x308] sm:$0xff]
  %v4765 = vld [vmem:[#allocation3 + $0x310] sm:$0xff]
  %v4766 = vld [vmem:[#allocation3 + $0x318] sm:$0xff]
  %v4767 = vld [vmem:[#allocation3 + $0x320] sm:$0xff]
  %v4768 = vld [vmem:[#allocation3 + $0x328] sm:$0xff]
  %v4769 = vld [vmem:[#allocation3 + $0x330] sm:$0xff]
  %v4770 = vld [vmem:[#allocation3 + $0x338] sm:$0xff]
  %v4771 = vld [vmem:[#allocation3 + $0x340] sm:$0xff]
  %v4772 = vld [vmem:[#allocation3 + $0x348] sm:$0xff]
  %v4773 = vld [vmem:[#allocation3 + $0x350] sm:$0xff]
  %v4774 = vld [vmem:[#allocation3 + $0x358] sm:$0xff]
  %v4775 = vld [vmem:[#allocation3 + $0x360] sm:$0xff]
  %v4776 = vld [vmem:[#allocation3 + $0x368] sm:$0xff]
  %v4777 = vld [vmem:[#allocation3 + $0x370] sm:$0xff]
  %v4778 = vld [vmem:[#allocation3 + $0x378] sm:$0xff]
  %v4779 = vld [vmem:[#allocation3 + $0x380] sm:$0xff]
  %v4780 = vld [vmem:[#allocation3 + $0x388] sm:$0xff]
  %v4781 = vld [vmem:[#allocation3 + $0x390] sm:$0xff]
  %v4782 = vld [vmem:[#allocation3 + $0x398] sm:$0xff]
  %v4783 = vld [vmem:[#allocation3 + $0x3a0] sm:$0xff]
  %v4784 = vld [vmem:[#allocation3 + $0x3a8] sm:$0xff]
  %v4785 = vld [vmem:[#allocation3 + $0x3b0] sm:$0xff]
  %v4786 = vld [vmem:[#allocation3 + $0x3b8] sm:$0xff]
  %v4787 = vld [vmem:[#allocation3 + $0x3c0] sm:$0xff]
  %v4788 = vld [vmem:[#allocation3 + $0x3c8] sm:$0xff]
  %v4789 = vld [vmem:[#allocation3 + $0x3d0] sm:$0xff]
  %v4790 = vld [vmem:[#allocation3 + $0x3d8] sm:$0xff]
  %v4791 = vld [vmem:[#allocation3 + $0x3e0] sm:$0xff]
  %v4792 = vld [vmem:[#allocation3 + $0x3e8] sm:$0xff]
  %v4793 = vld [vmem:[#allocation3 + $0x3f0] sm:$0xff]
  %v4794 = vld [vmem:[#allocation3 + $0x3f8] sm:$0xff]
  %v4795 = vld [vmem:[#allocation3 + $0x400] sm:$0xff]
  %v4796 = vld [vmem:[#allocation3 + $0x408] sm:$0xff]
  %v4797 = vld [vmem:[#allocation3 + $0x410] sm:$0xff]
  %v4798 = vld [vmem:[#allocation3 + $0x418] sm:$0xff]
  %v4799 = vld [vmem:[#allocation3 + $0x420] sm:$0xff]
  %v4800 = vld [vmem:[#allocation3 + $0x428] sm:$0xff]
  %v4801 = vld [vmem:[#allocation3 + $0x430] sm:$0xff]
  %v4802 = vld [vmem:[#allocation3 + $0x438] sm:$0xff]
  %v4803 = vld [vmem:[#allocation3 + $0x440] sm:$0xff]
  %v4804 = vld [vmem:[#allocation3 + $0x448] sm:$0xff]
  %v4805 = vld [vmem:[#allocation3 + $0x450] sm:$0xff]
  %v4806 = vld [vmem:[#allocation3 + $0x458] sm:$0xff]
  %v4807 = vld [vmem:[#allocation3 + $0x460] sm:$0xff]
  %v4808 = vld [vmem:[#allocation3 + $0x468] sm:$0xff]
  %v4809 = vld [vmem:[#allocation3 + $0x470] sm:$0xff]
  %v4810 = vld [vmem:[#allocation3 + $0x478] sm:$0xff]
  %v4811 = vld [vmem:[#allocation3 + $0x480] sm:$0xff]
  %v4812 = vld [vmem:[#allocation3 + $0x488] sm:$0xff]
  %v4813 = vld [vmem:[#allocation3 + $0x490] sm:$0xff]
  %v4814 = vld [vmem:[#allocation3 + $0x498] sm:$0xff]
  %v4815 = vld [vmem:[#allocation3 + $0x4a0] sm:$0xff]
  %v4816 = vld [vmem:[#allocation3 + $0x4a8] sm:$0xff]
  %v4817 = vld [vmem:[#allocation3 + $0x4b0] sm:$0xff]
  %v4818 = vld [vmem:[#allocation3 + $0x4b8] sm:$0xff]
  %v4819 = vld [vmem:[#allocation3 + $0x4c0] sm:$0xff]
  %v4820 = vld [vmem:[#allocation3 + $0x4c8] sm:$0xff]
  %v4821 = vld [vmem:[#allocation3 + $0x4d0] sm:$0xff]
  %v4822 = vld [vmem:[#allocation3 + $0x4d8] sm:$0xff]
  %v4823 = vld [vmem:[#allocation3 + $0x4e0] sm:$0xff]
  %v4824 = vld [vmem:[#allocation3 + $0x4e8] sm:$0xff]
  %v4825 = vld [vmem:[#allocation3 + $0x4f0] sm:$0xff]
  %v4826 = vld [vmem:[#allocation3 + $0x4f8] sm:$0xff]
  %v4827 = vld [vmem:[#allocation3 + $0x500] sm:$0xff]
  %v4828 = vld [vmem:[#allocation3 + $0x508] sm:$0xff]
  %v4829 = vld [vmem:[#allocation3 + $0x510] sm:$0xff]
  %v4830 = vld [vmem:[#allocation3 + $0x518] sm:$0xff]
  %v4831 = vld [vmem:[#allocation3 + $0x520] sm:$0xff]
  %v4832 = vld [vmem:[#allocation3 + $0x528] sm:$0xff]
  %v4833 = vld [vmem:[#allocation3 + $0x530] sm:$0xff]
  %v4834 = vld [vmem:[#allocation3 + $0x538] sm:$0xff]
  %v4835 = vld [vmem:[#allocation3 + $0x540] sm:$0xff]
  %v4836 = vld [vmem:[#allocation3 + $0x548] sm:$0xff]
  %v4837 = vld [vmem:[#allocation3 + $0x550] sm:$0xff]
  %v4838 = vld [vmem:[#allocation3 + $0x558] sm:$0xff]
  %v4839 = vld [vmem:[#allocation3 + $0x560] sm:$0xff]
  %v4840 = vld [vmem:[#allocation3 + $0x568] sm:$0xff]
  %v4841 = vld [vmem:[#allocation3 + $0x570] sm:$0xff]
  %v4842 = vld [vmem:[#allocation3 + $0x578] sm:$0xff]
  %v4843 = vld [vmem:[#allocation3 + $0x580] sm:$0xff]
  %v4844 = vld [vmem:[#allocation3 + $0x588] sm:$0xff]
  %v4845 = vld [vmem:[#allocation3 + $0x590] sm:$0xff]
  %v4846 = vld [vmem:[#allocation3 + $0x598] sm:$0xff]
  %v4847 = vld [vmem:[#allocation3 + $0x5a0] sm:$0xff]
  %v4848 = vld [vmem:[#allocation3 + $0x5a8] sm:$0xff]
  %v4849 = vld [vmem:[#allocation3 + $0x5b0] sm:$0xff]
  %v4850 = vld [vmem:[#allocation3 + $0x5b8] sm:$0xff]
  %v4851 = vld [vmem:[#allocation3 + $0x5c0] sm:$0xff]
  %v4852 = vld [vmem:[#allocation3 + $0x5c8] sm:$0xff]
  %v4853 = vld [vmem:[#allocation3 + $0x5d0] sm:$0xff]
  %v4854 = vld [vmem:[#allocation3 + $0x5d8] sm:$0xff]
  %v4855 = vld [vmem:[#allocation3 + $0x5e0] sm:$0xff]
  %v4856 = vld [vmem:[#allocation3 + $0x5e8] sm:$0xff]
  %v4857 = vld [vmem:[#allocation3 + $0x5f0] sm:$0xff]
  %v4858 = vld [vmem:[#allocation3 + $0x5f8] sm:$0xff]
  %v4859 = vld [vmem:[#allocation3 + $0x600] sm:$0xff]
  %v4860 = vld [vmem:[#allocation3 + $0x608] sm:$0xff]
  %v4861 = vld [vmem:[#allocation3 + $0x610] sm:$0xff]
  %v4862 = vld [vmem:[#allocation3 + $0x618] sm:$0xff]
  %v4863 = vld [vmem:[#allocation3 + $0x620] sm:$0xff]
  %v4864 = vld [vmem:[#allocation3 + $0x628] sm:$0xff]
  %v4865 = vld [vmem:[#allocation3 + $0x630] sm:$0xff]
  %v4866 = vld [vmem:[#allocation3 + $0x638] sm:$0xff]
  %v4867 = vld [vmem:[#allocation3 + $0x640] sm:$0xff]
  %v4868 = vld [vmem:[#allocation3 + $0x648] sm:$0xff]
  %v4869 = vld [vmem:[#allocation3 + $0x650] sm:$0xff]
  %v4870 = vld [vmem:[#allocation3 + $0x658] sm:$0xff]
  %v4871 = vld [vmem:[#allocation3 + $0x660] sm:$0xff]
  %v4872 = vld [vmem:[#allocation3 + $0x668] sm:$0xff]
  %v4873 = vld [vmem:[#allocation3 + $0x670] sm:$0xff]
  %v4874 = vld [vmem:[#allocation3 + $0x678] sm:$0xff]
  %v4875 = vld [vmem:[#allocation3 + $0x680] sm:$0xff]
  %v4876 = vld [vmem:[#allocation3 + $0x688] sm:$0xff]
  %v4877 = vld [vmem:[#allocation3 + $0x690] sm:$0xff]
  %v4878 = vld [vmem:[#allocation3 + $0x698] sm:$0xff]
  %v4879 = vld [vmem:[#allocation3 + $0x6a0] sm:$0xff]
  %v4880 = vld [vmem:[#allocation3 + $0x6a8] sm:$0xff]
  %v4881 = vld [vmem:[#allocation3 + $0x6b0] sm:$0xff]
  %v4882 = vld [vmem:[#allocation3 + $0x6b8] sm:$0xff]
  %v4883 = vld [vmem:[#allocation3 + $0x6c0] sm:$0xff]
  %v4884 = vld [vmem:[#allocation3 + $0x6c8] sm:$0xff]
  %v4885 = vld [vmem:[#allocation3 + $0x6d0] sm:$0xff]
  %v4886 = vld [vmem:[#allocation3 + $0x6d8] sm:$0xff]
  %v4887 = vld [vmem:[#allocation3 + $0x6e0] sm:$0xff]
  %v4888 = vld [vmem:[#allocation3 + $0x6e8] sm:$0xff]
  %v4889 = vld [vmem:[#allocation3 + $0x6f0] sm:$0xff]
  %v4890 = vld [vmem:[#allocation3 + $0x6f8] sm:$0xff]
  %v4891 = vld [vmem:[#allocation3 + $0x700] sm:$0xff]
  %v4892 = vld [vmem:[#allocation3 + $0x708] sm:$0xff]
  %v4893 = vld [vmem:[#allocation3 + $0x710] sm:$0xff]
  %v4894 = vld [vmem:[#allocation3 + $0x718] sm:$0xff]
  %v4895 = vld [vmem:[#allocation3 + $0x720] sm:$0xff]
  %v4896 = vld [vmem:[#allocation3 + $0x728] sm:$0xff]
  %v4897 = vld [vmem:[#allocation3 + $0x730] sm:$0xff]
  %v4898 = vld [vmem:[#allocation3 + $0x738] sm:$0xff]
  %v4899 = vld [vmem:[#allocation3 + $0x740] sm:$0xff]
  %v4900 = vld [vmem:[#allocation3 + $0x748] sm:$0xff]
  %v4901 = vld [vmem:[#allocation3 + $0x750] sm:$0xff]
  %v4902 = vld [vmem:[#allocation3 + $0x758] sm:$0xff]
  %v4903 = vld [vmem:[#allocation3 + $0x760] sm:$0xff]
  %v4904 = vld [vmem:[#allocation3 + $0x768] sm:$0xff]
  %v4905 = vld [vmem:[#allocation3 + $0x770] sm:$0xff]
  %v4906 = vld [vmem:[#allocation3 + $0x778] sm:$0xff]
  %v4907 = vld [vmem:[#allocation3 + $0x780] sm:$0xff]
  %v4908 = vld [vmem:[#allocation3 + $0x788] sm:$0xff]
  %v4909 = vld [vmem:[#allocation3 + $0x790] sm:$0xff]
  %v4910 = vld [vmem:[#allocation3 + $0x798] sm:$0xff]
  %v4911 = vld [vmem:[#allocation3 + $0x7a0] sm:$0xff]
  %v4912 = vld [vmem:[#allocation3 + $0x7a8] sm:$0xff]
  %v4913 = vld [vmem:[#allocation3 + $0x7b0] sm:$0xff]
  %v4914 = vld [vmem:[#allocation3 + $0x7b8] sm:$0xff]
  %v4915 = vld [vmem:[#allocation3 + $0x7c0] sm:$0xff]
  %v4916 = vld [vmem:[#allocation3 + $0x7c8] sm:$0xff]
  %v4917 = vld [vmem:[#allocation3 + $0x7d0] sm:$0xff]
  %v4918 = vld [vmem:[#allocation3 + $0x7d8] sm:$0xff]
  %v4919 = vld [vmem:[#allocation3 + $0x7e0] sm:$0xff]
  %v4920 = vld [vmem:[#allocation3 + $0x7e8] sm:$0xff]
  %v4921 = vld [vmem:[#allocation3 + $0x7f0] sm:$0xff]
  %v4922 = vld [vmem:[#allocation3 + $0x7f8] sm:$0xff]
  %v4923 = vld [vmem:[#allocation3 + $0x800] sm:$0xff]
  %v4924 = vld [vmem:[#allocation3 + $0x808] sm:$0xff]
  %v4925 = vld [vmem:[#allocation3 + $0x810] sm:$0xff]
  %v4926 = vld [vmem:[#allocation3 + $0x818] sm:$0xff]
  %v4927 = vld [vmem:[#allocation3 + $0x820] sm:$0xff]
  %v4928 = vld [vmem:[#allocation3 + $0x828] sm:$0xff]
  %v4929 = vld [vmem:[#allocation3 + $0x830] sm:$0xff]
  %v4930 = vld [vmem:[#allocation3 + $0x838] sm:$0xff]
  %v4931 = vld [vmem:[#allocation3 + $0x840] sm:$0xff]
  %v4932 = vld [vmem:[#allocation3 + $0x848] sm:$0xff]
  %v4933 = vld [vmem:[#allocation3 + $0x850] sm:$0xff]
  %v4934 = vld [vmem:[#allocation3 + $0x858] sm:$0xff]
  %v4935 = vld [vmem:[#allocation3 + $0x860] sm:$0xff]
  %v4936 = vld [vmem:[#allocation3 + $0x868] sm:$0xff]
  %v4937 = vld [vmem:[#allocation3 + $0x870] sm:$0xff]
  %v4938 = vld [vmem:[#allocation3 + $0x878] sm:$0xff]
  %v4939 = vld [vmem:[#allocation3 + $0x880] sm:$0xff]
  %v4940 = vld [vmem:[#allocation3 + $0x888] sm:$0xff]
  %v4941 = vld [vmem:[#allocation3 + $0x890] sm:$0xff]
  %v4942 = vld [vmem:[#allocation3 + $0x898] sm:$0xff]
  %v4943 = vld [vmem:[#allocation3 + $0x8a0] sm:$0xff]
  %v4944 = vld [vmem:[#allocation3 + $0x8a8] sm:$0xff]
  %v4945 = vld [vmem:[#allocation3 + $0x8b0] sm:$0xff]
  %v4946 = vld [vmem:[#allocation3 + $0x8b8] sm:$0xff]
  %v4947 = vld [vmem:[#allocation3 + $0x8c0] sm:$0xff]
  %v4948 = vld [vmem:[#allocation3 + $0x8c8] sm:$0xff]
  %v4949 = vld [vmem:[#allocation3 + $0x8d0] sm:$0xff]
  %v4950 = vld [vmem:[#allocation3 + $0x8d8] sm:$0xff]
  %v4951 = vld [vmem:[#allocation3 + $0x8e0] sm:$0xff]
  %v4952 = vld [vmem:[#allocation3 + $0x8e8] sm:$0xff]
  %v4953 = vld [vmem:[#allocation3 + $0x8f0] sm:$0xff]
  %v4954 = vld [vmem:[#allocation3 + $0x8f8] sm:$0xff]
  %v4955 = vld [vmem:[#allocation3 + $0x900] sm:$0xff]
  %v4956 = vld [vmem:[#allocation3 + $0x908] sm:$0xff]
  %v4957 = vld [vmem:[#allocation3 + $0x910] sm:$0xff]
  %v4958 = vld [vmem:[#allocation3 + $0x918] sm:$0xff]
  %v4959 = vld [vmem:[#allocation3 + $0x920] sm:$0xff]
  %v4960 = vld [vmem:[#allocation3 + $0x928] sm:$0xff]
  %v4961 = vld [vmem:[#allocation3 + $0x930] sm:$0xff]
  %v4962 = vld [vmem:[#allocation3 + $0x938] sm:$0xff]
  %v4963 = vld [vmem:[#allocation3 + $0x940] sm:$0xff]
  %v4964 = vld [vmem:[#allocation3 + $0x948] sm:$0xff]
  %v4965 = vld [vmem:[#allocation3 + $0x950] sm:$0xff]
  %v4966 = vld [vmem:[#allocation3 + $0x958] sm:$0xff]
  %v4967 = vld [vmem:[#allocation3 + $0x960] sm:$0xff]
  %v4968 = vld [vmem:[#allocation3 + $0x968] sm:$0xff]
  %v4969 = vld [vmem:[#allocation3 + $0x970] sm:$0xff]
  %v4970 = vld [vmem:[#allocation3 + $0x978] sm:$0xff]
  %v4971 = vld [vmem:[#allocation3 + $0x980] sm:$0xff]
  %v4972 = vld [vmem:[#allocation3 + $0x988] sm:$0xff]
  %v4973 = vld [vmem:[#allocation3 + $0x990] sm:$0xff]
  %v4974 = vld [vmem:[#allocation3 + $0x998] sm:$0xff]
  %v4975 = vld [vmem:[#allocation3 + $0x9a0] sm:$0xff]
  %v4976 = vld [vmem:[#allocation3 + $0x9a8] sm:$0xff]
  %v4977 = vld [vmem:[#allocation3 + $0x9b0] sm:$0xff]
  %v4978 = vld [vmem:[#allocation3 + $0x9b8] sm:$0xff]
  %v4979 = vld [vmem:[#allocation3 + $0x9c0] sm:$0xff]
  %v4980 = vld [vmem:[#allocation3 + $0x9c8] sm:$0xff]
  %v4981 = vld [vmem:[#allocation3 + $0x9d0] sm:$0xff]
  %v4982 = vld [vmem:[#allocation3 + $0x9d8] sm:$0xff]
  %v4983 = vld [vmem:[#allocation3 + $0x9e0] sm:$0xff]
  %v4984 = vld [vmem:[#allocation3 + $0x9e8] sm:$0xff]
  %v4985 = vld [vmem:[#allocation3 + $0x9f0] sm:$0xff]
  %v4986 = vld [vmem:[#allocation3 + $0x9f8] sm:$0xff]
  %v4987 = vld [vmem:[#allocation3 + $0xa00] sm:$0xff]
  %v4988 = vld [vmem:[#allocation3 + $0xa08] sm:$0xff]
  %v4989 = vld [vmem:[#allocation3 + $0xa10] sm:$0xff]
  %v4990 = vld [vmem:[#allocation3 + $0xa18] sm:$0xff]
  %v4991 = vld [vmem:[#allocation3 + $0xa20] sm:$0xff]
  %v4992 = vld [vmem:[#allocation3 + $0xa28] sm:$0xff]
  %v4993 = vld [vmem:[#allocation3 + $0xa30] sm:$0xff]
  %v4994 = vld [vmem:[#allocation3 + $0xa38] sm:$0xff]
  %v4995 = vld [vmem:[#allocation3 + $0xa40] sm:$0xff]
  %v4996 = vld [vmem:[#allocation3 + $0xa48] sm:$0xff]
  %v4997 = vld [vmem:[#allocation3 + $0xa50] sm:$0xff]
  %v4998 = vld [vmem:[#allocation3 + $0xa58] sm:$0xff]
  %v4999 = vld [vmem:[#allocation3 + $0xa60] sm:$0xff]
  %v5000 = vld [vmem:[#allocation3 + $0xa68] sm:$0xff]
  %v5001 = vld [vmem:[#allocation3 + $0xa70] sm:$0xff]
  %v5002 = vld [vmem:[#allocation3 + $0xa78] sm:$0xff]
  %v5003 = vld [vmem:[#allocation3 + $0xa80] sm:$0xff]
  %v5004 = vld [vmem:[#allocation3 + $0xa88] sm:$0xff]
  %v5005 = vld [vmem:[#allocation3 + $0xa90] sm:$0xff]
  %v5006 = vld [vmem:[#allocation3 + $0xa98] sm:$0xff]
  %v5007 = vld [vmem:[#allocation3 + $0xaa0] sm:$0xff]
  %v5008 = vld [vmem:[#allocation3 + $0xaa8] sm:$0xff]
  %v5009 = vld [vmem:[#allocation3 + $0xab0] sm:$0xff]
  %v5010 = vld [vmem:[#allocation3 + $0xab8] sm:$0xff]
  %v5011 = vld [vmem:[#allocation3 + $0xac0] sm:$0xff]
  %v5012 = vld [vmem:[#allocation3 + $0xac8] sm:$0xff]
  %v5013 = vld [vmem:[#allocation3 + $0xad0] sm:$0xff]
  %v5014 = vld [vmem:[#allocation3 + $0xad8] sm:$0xff]
  %v5015 = vld [vmem:[#allocation3 + $0xae0] sm:$0xff]
  %v5016 = vld [vmem:[#allocation3 + $0xae8] sm:$0xff]
  %v5017 = vld [vmem:[#allocation3 + $0xaf0] sm:$0xff]
  %v5018 = vld [vmem:[#allocation3 + $0xaf8] sm:$0xff]
  %v5019 = vld [vmem:[#allocation3 + $0xb00] sm:$0xff]
  %v5020 = vld [vmem:[#allocation3 + $0xb08] sm:$0xff]
  %v5021 = vld [vmem:[#allocation3 + $0xb10] sm:$0xff]
  %v5022 = vld [vmem:[#allocation3 + $0xb18] sm:$0xff]
  %v5023 = vld [vmem:[#allocation3 + $0xb20] sm:$0xff]
  %v5024 = vld [vmem:[#allocation3 + $0xb28] sm:$0xff]
  %v5025 = vld [vmem:[#allocation3 + $0xb30] sm:$0xff]
  %v5026 = vld [vmem:[#allocation3 + $0xb38] sm:$0xff]
  %v5027 = vld [vmem:[#allocation3 + $0xb40] sm:$0xff]
  %v5028 = vld [vmem:[#allocation3 + $0xb48] sm:$0xff]
  %v5029 = vld [vmem:[#allocation3 + $0xb50] sm:$0xff]
  %v5030 = vld [vmem:[#allocation3 + $0xb58] sm:$0xff]
  %v5031 = vld [vmem:[#allocation3 + $0xb60] sm:$0xff]
  %v5032 = vld [vmem:[#allocation3 + $0xb68] sm:$0xff]
  %v5033 = vld [vmem:[#allocation3 + $0xb70] sm:$0xff]
  %v5034 = vld [vmem:[#allocation3 + $0xb78] sm:$0xff]
  %v5035 = vld [vmem:[#allocation3 + $0xb80] sm:$0xff]
  %v5036 = vld [vmem:[#allocation3 + $0xb88] sm:$0xff]
  %v5037 = vld [vmem:[#allocation3 + $0xb90] sm:$0xff]
  %v5038 = vld [vmem:[#allocation3 + $0xb98] sm:$0xff]
  %v5039 = vld [vmem:[#allocation3 + $0xba0] sm:$0xff]
  %v5040 = vld [vmem:[#allocation3 + $0xba8] sm:$0xff]
  %v5041 = vld [vmem:[#allocation3 + $0xbb0] sm:$0xff]
  %v5042 = vld [vmem:[#allocation3 + $0xbb8] sm:$0xff]
  %v5043 = vld [vmem:[#allocation3 + $0xbc0] sm:$0xff]
  %v5044 = vld [vmem:[#allocation3 + $0xbc8] sm:$0xff]
  %v5045 = vld [vmem:[#allocation3 + $0xbd0] sm:$0xff]
  %v5046 = vld [vmem:[#allocation3 + $0xbd8] sm:$0xff]
  %v5047 = vld [vmem:[#allocation3 + $0xbe0] sm:$0xff]
  %v5048 = vld [vmem:[#allocation3 + $0xbe8] sm:$0xff]
  %v5049 = vld [vmem:[#allocation3 + $0xbf0] sm:$0xff]
  %v5050 = vld [vmem:[#allocation3 + $0xbf8] sm:$0xff]
  %v5052 = vsel %vm2918, %v4660, 0
  %v5055 = vsel %vm2918, %v4662, 0
  %v5058 = vsel %vm2918, %v4664, 0
  %v5061 = vsel %vm2918, %v4666, 0
  %5063 = vmatpush.msra.mxu0 %v4907
  %5064 = vmatpush.msra.mxu0 %v4891
  %5065 = vmatpush.msra.mxu0 %v4875
  %5066 = vmatpush.msra.mxu0 %v4859
  %5067 = vmatpush.msra.mxu0 %v4843
  %5068 = vmatpush.msra.mxu0 %v4827
  %5069 = vmatpush.msra.mxu0 %v4811
  %5070 = vmatpush.msra.mxu0 %v4795
  %5071 = vmatpush.msra.mxu0 %v4779
  %5072 = vmatpush.msra.mxu0 %v4763
  %5073 = vmatpush.msra.mxu0 %v4747
  %5074 = vmatpush.msra.mxu0 %v4731
  %5075 = vmatpush.msra.mxu0 %v4715
  %5076 = vmatpush.msra.mxu0 %v4699
  %5077 = vmatpush.msra.mxu0 %v4683
  %5078 = vmatpush.msra.mxu0 %v4667
  %5079 = vmatmul.f32.gmra.mxu0 %v4659
  %v5080 = vpop.f32.mrf.mxu0
  %v5081 = vadd.f32 0.0, %v5080
  %5082 = vmatmul.f32.gmra.mxu0 %v4661
  %v5083 = vpop.f32.mrf.mxu0
  %v5084 = vadd.f32 0.0, %v5083
  %5085 = vmatmul.f32.gmra.mxu0 %v4663
  %v5086 = vpop.f32.mrf.mxu0
  %v5087 = vadd.f32 0.0, %v5086
  %5088 = vmatmul.f32.gmra.mxu0 %v4665
  %v5089 = vpop.f32.mrf.mxu0
  %v5090 = vadd.f32 0.0, %v5089
  %5091 = vdwg.mxu0
  %5092 = vmatpush.msra.mxu0 0.0
  %5093 = vmatpush.msra.mxu0 0.0
  %5094 = vmatpush.msra.mxu0 0.0
  %5095 = vmatpush.msra.mxu0 0.0
  %5096 = vmatpush.msra.mxu0 0.0
  %5097 = vmatpush.msra.mxu0 0.0
  %5098 = vmatpush.msra.mxu0 0.0
  %5099 = vmatpush.msra.mxu0 0.0
  %5100 = vmatpush.msra.mxu0 %v5035
  %5101 = vmatpush.msra.mxu0 %v5019
  %5102 = vmatpush.msra.mxu0 %v5003
  %5103 = vmatpush.msra.mxu0 %v4987
  %5104 = vmatpush.msra.mxu0 %v4971
  %5105 = vmatpush.msra.mxu0 %v4955
  %5106 = vmatpush.msra.mxu0 %v4939
  %5107 = vmatpush.msra.mxu0 %v4923
  %5108 = vmatmul.f32.gmra.mxu0 %v5052
  %v5109 = vpop.f32.mrf.mxu0
  %v5110 = vadd.f32 %v5081, %v5109
  %5111 = vmatmul.f32.gmra.mxu0 %v5055
  %v5112 = vpop.f32.mrf.mxu0
  %v5113 = vadd.f32 %v5084, %v5112
  %5114 = vmatmul.f32.gmra.mxu0 %v5058
  %v5115 = vpop.f32.mrf.mxu0
  %v5116 = vadd.f32 %v5087, %v5115
  %5117 = vmatmul.f32.gmra.mxu0 %v5061
  %v5118 = vpop.f32.mrf.mxu0
  %v5119 = vadd.f32 %v5090, %v5118
  %5120 = vdwg.mxu0
  %5121 = vmatpush.msra.mxu0 %v4908
  %5122 = vmatpush.msra.mxu0 %v4892
  %5123 = vmatpush.msra.mxu0 %v4876
  %5124 = vmatpush.msra.mxu0 %v4860
  %5125 = vmatpush.msra.mxu0 %v4844
  %5126 = vmatpush.msra.mxu0 %v4828
  %5127 = vmatpush.msra.mxu0 %v4812
  %5128 = vmatpush.msra.mxu0 %v4796
  %5129 = vmatpush.msra.mxu0 %v4780
  %5130 = vmatpush.msra.mxu0 %v4764
  %5131 = vmatpush.msra.mxu0 %v4748
  %5132 = vmatpush.msra.mxu0 %v4732
  %5133 = vmatpush.msra.mxu0 %v4716
  %5134 = vmatpush.msra.mxu0 %v4700
  %5135 = vmatpush.msra.mxu0 %v4684
  %5136 = vmatpush.msra.mxu0 %v4668
  %5137 = vmatmul.f32.gmra.mxu0 %v4659
  %v5138 = vpop.f32.mrf.mxu0
  %v5139 = vadd.f32 0.0, %v5138
  %5140 = vmatmul.f32.gmra.mxu0 %v4661
  %v5141 = vpop.f32.mrf.mxu0
  %v5142 = vadd.f32 0.0, %v5141
  %5143 = vmatmul.f32.gmra.mxu0 %v4663
  %v5144 = vpop.f32.mrf.mxu0
  %v5145 = vadd.f32 0.0, %v5144
  %5146 = vmatmul.f32.gmra.mxu0 %v4665
  %v5147 = vpop.f32.mrf.mxu0
  %v5148 = vadd.f32 0.0, %v5147
  %5149 = vdwg.mxu0
  %5150 = vmatpush.msra.mxu0 0.0
  %5151 = vmatpush.msra.mxu0 0.0
  %5152 = vmatpush.msra.mxu0 0.0
  %5153 = vmatpush.msra.mxu0 0.0
  %5154 = vmatpush.msra.mxu0 0.0
  %5155 = vmatpush.msra.mxu0 0.0
  %5156 = vmatpush.msra.mxu0 0.0
  %5157 = vmatpush.msra.mxu0 0.0
  %5158 = vmatpush.msra.mxu0 %v5036
  %5159 = vmatpush.msra.mxu0 %v5020
  %5160 = vmatpush.msra.mxu0 %v5004
  %5161 = vmatpush.msra.mxu0 %v4988
  %5162 = vmatpush.msra.mxu0 %v4972
  %5163 = vmatpush.msra.mxu0 %v4956
  %5164 = vmatpush.msra.mxu0 %v4940
  %5165 = vmatpush.msra.mxu0 %v4924
  %5166 = vmatmul.f32.gmra.mxu0 %v5052
  %v5167 = vpop.f32.mrf.mxu0
  %v5168 = vadd.f32 %v5139, %v5167
  %5169 = vmatmul.f32.gmra.mxu0 %v5055
  %v5170 = vpop.f32.mrf.mxu0
  %v5171 = vadd.f32 %v5142, %v5170
  %5172 = vmatmul.f32.gmra.mxu0 %v5058
  %v5173 = vpop.f32.mrf.mxu0
  %v5174 = vadd.f32 %v5145, %v5173
  %5175 = vmatmul.f32.gmra.mxu0 %v5061
  %v5176 = vpop.f32.mrf.mxu0
  %v5177 = vadd.f32 %v5148, %v5176
  %5178 = vdwg.mxu0
  %5179 = vmatpush.msra.mxu0 %v4909
  %5180 = vmatpush.msra.mxu0 %v4893
  %5181 = vmatpush.msra.mxu0 %v4877
  %5182 = vmatpush.msra.mxu0 %v4861
  %5183 = vmatpush.msra.mxu0 %v4845
  %5184 = vmatpush.msra.mxu0 %v4829
  %5185 = vmatpush.msra.mxu0 %v4813
  %5186 = vmatpush.msra.mxu0 %v4797
  %5187 = vmatpush.msra.mxu0 %v4781
  %5188 = vmatpush.msra.mxu0 %v4765
  %5189 = vmatpush.msra.mxu0 %v4749
  %5190 = vmatpush.msra.mxu0 %v4733
  %5191 = vmatpush.msra.mxu0 %v4717
  %5192 = vmatpush.msra.mxu0 %v4701
  %5193 = vmatpush.msra.mxu0 %v4685
  %5194 = vmatpush.msra.mxu0 %v4669
  %5195 = vmatmul.f32.gmra.mxu0 %v4659
  %v5196 = vpop.f32.mrf.mxu0
  %v5197 = vadd.f32 0.0, %v5196
  %5198 = vmatmul.f32.gmra.mxu0 %v4661
  %v5199 = vpop.f32.mrf.mxu0
  %v5200 = vadd.f32 0.0, %v5199
  %5201 = vmatmul.f32.gmra.mxu0 %v4663
  %v5202 = vpop.f32.mrf.mxu0
  %v5203 = vadd.f32 0.0, %v5202
  %5204 = vmatmul.f32.gmra.mxu0 %v4665
  %v5205 = vpop.f32.mrf.mxu0
  %v5206 = vadd.f32 0.0, %v5205
  %5207 = vdwg.mxu0
  %5208 = vmatpush.msra.mxu0 0.0
  %5209 = vmatpush.msra.mxu0 0.0
  %5210 = vmatpush.msra.mxu0 0.0
  %5211 = vmatpush.msra.mxu0 0.0
  %5212 = vmatpush.msra.mxu0 0.0
  %5213 = vmatpush.msra.mxu0 0.0
  %5214 = vmatpush.msra.mxu0 0.0
  %5215 = vmatpush.msra.mxu0 0.0
  %5216 = vmatpush.msra.mxu0 %v5037
  %5217 = vmatpush.msra.mxu0 %v5021
  %5218 = vmatpush.msra.mxu0 %v5005
  %5219 = vmatpush.msra.mxu0 %v4989
  %5220 = vmatpush.msra.mxu0 %v4973
  %5221 = vmatpush.msra.mxu0 %v4957
  %5222 = vmatpush.msra.mxu0 %v4941
  %5223 = vmatpush.msra.mxu0 %v4925
  %5224 = vmatmul.f32.gmra.mxu0 %v5052
  %v5225 = vpop.f32.mrf.mxu0
  %v5226 = vadd.f32 %v5197, %v5225
  %5227 = vmatmul.f32.gmra.mxu0 %v5055
  %v5228 = vpop.f32.mrf.mxu0
  %v5229 = vadd.f32 %v5200, %v5228
  %5230 = vmatmul.f32.gmra.mxu0 %v5058
  %v5231 = vpop.f32.mrf.mxu0
  %v5232 = vadd.f32 %v5203, %v5231
  %5233 = vmatmul.f32.gmra.mxu0 %v5061
  %v5234 = vpop.f32.mrf.mxu0
  %v5235 = vadd.f32 %v5206, %v5234
  %5236 = vdwg.mxu0
  %5237 = vmatpush.msra.mxu0 %v4910
  %5238 = vmatpush.msra.mxu0 %v4894
  %5239 = vmatpush.msra.mxu0 %v4878
  %5240 = vmatpush.msra.mxu0 %v4862
  %5241 = vmatpush.msra.mxu0 %v4846
  %5242 = vmatpush.msra.mxu0 %v4830
  %5243 = vmatpush.msra.mxu0 %v4814
  %5244 = vmatpush.msra.mxu0 %v4798
  %5245 = vmatpush.msra.mxu0 %v4782
  %5246 = vmatpush.msra.mxu0 %v4766
  %5247 = vmatpush.msra.mxu0 %v4750
  %5248 = vmatpush.msra.mxu0 %v4734
  %5249 = vmatpush.msra.mxu0 %v4718
  %5250 = vmatpush.msra.mxu0 %v4702
  %5251 = vmatpush.msra.mxu0 %v4686
  %5252 = vmatpush.msra.mxu0 %v4670
  %5253 = vmatmul.f32.gmra.mxu0 %v4659
  %v5254 = vpop.f32.mrf.mxu0
  %v5255 = vadd.f32 0.0, %v5254
  %5256 = vmatmul.f32.gmra.mxu0 %v4661
  %v5257 = vpop.f32.mrf.mxu0
  %v5258 = vadd.f32 0.0, %v5257
  %5259 = vmatmul.f32.gmra.mxu0 %v4663
  %v5260 = vpop.f32.mrf.mxu0
  %v5261 = vadd.f32 0.0, %v5260
  %5262 = vmatmul.f32.gmra.mxu0 %v4665
  %v5263 = vpop.f32.mrf.mxu0
  %v5264 = vadd.f32 0.0, %v5263
  %5265 = vdwg.mxu0
  %5266 = vmatpush.msra.mxu0 0.0
  %5267 = vmatpush.msra.mxu0 0.0
  %5268 = vmatpush.msra.mxu0 0.0
  %5269 = vmatpush.msra.mxu0 0.0
  %5270 = vmatpush.msra.mxu0 0.0
  %5271 = vmatpush.msra.mxu0 0.0
  %5272 = vmatpush.msra.mxu0 0.0
  %5273 = vmatpush.msra.mxu0 0.0
  %5274 = vmatpush.msra.mxu0 %v5038
  %5275 = vmatpush.msra.mxu0 %v5022
  %5276 = vmatpush.msra.mxu0 %v5006
  %5277 = vmatpush.msra.mxu0 %v4990
  %5278 = vmatpush.msra.mxu0 %v4974
  %5279 = vmatpush.msra.mxu0 %v4958
  %5280 = vmatpush.msra.mxu0 %v4942
  %5281 = vmatpush.msra.mxu0 %v4926
  %5282 = vmatmul.f32.gmra.mxu0 %v5052
  %v5283 = vpop.f32.mrf.mxu0
  %v5284 = vadd.f32 %v5255, %v5283
  %5285 = vmatmul.f32.gmra.mxu0 %v5055
  %v5286 = vpop.f32.mrf.mxu0
  %v5287 = vadd.f32 %v5258, %v5286
  %5288 = vmatmul.f32.gmra.mxu0 %v5058
  %v5289 = vpop.f32.mrf.mxu0
  %v5290 = vadd.f32 %v5261, %v5289
  %5291 = vmatmul.f32.gmra.mxu0 %v5061
  %v5292 = vpop.f32.mrf.mxu0
  %v5293 = vadd.f32 %v5264, %v5292
  %5294 = vdwg.mxu0
  %5295 = vmatpush.msra.mxu0 %v4911
  %5296 = vmatpush.msra.mxu0 %v4895
  %5297 = vmatpush.msra.mxu0 %v4879
  %5298 = vmatpush.msra.mxu0 %v4863
  %5299 = vmatpush.msra.mxu0 %v4847
  %5300 = vmatpush.msra.mxu0 %v4831
  %5301 = vmatpush.msra.mxu0 %v4815
  %5302 = vmatpush.msra.mxu0 %v4799
  %5303 = vmatpush.msra.mxu0 %v4783
  %5304 = vmatpush.msra.mxu0 %v4767
  %5305 = vmatpush.msra.mxu0 %v4751
  %5306 = vmatpush.msra.mxu0 %v4735
  %5307 = vmatpush.msra.mxu0 %v4719
  %5308 = vmatpush.msra.mxu0 %v4703
  %5309 = vmatpush.msra.mxu0 %v4687
  %5310 = vmatpush.msra.mxu0 %v4671
  %5311 = vmatmul.f32.gmra.mxu0 %v4659
  %v5312 = vpop.f32.mrf.mxu0
  %v5313 = vadd.f32 0.0, %v5312
  %5314 = vmatmul.f32.gmra.mxu0 %v4661
  %v5315 = vpop.f32.mrf.mxu0
  %v5316 = vadd.f32 0.0, %v5315
  %5317 = vmatmul.f32.gmra.mxu0 %v4663
  %v5318 = vpop.f32.mrf.mxu0
  %v5319 = vadd.f32 0.0, %v5318
  %5320 = vmatmul.f32.gmra.mxu0 %v4665
  %v5321 = vpop.f32.mrf.mxu0
  %v5322 = vadd.f32 0.0, %v5321
  %5323 = vdwg.mxu0
  %5324 = vmatpush.msra.mxu0 0.0
  %5325 = vmatpush.msra.mxu0 0.0
  %5326 = vmatpush.msra.mxu0 0.0
  %5327 = vmatpush.msra.mxu0 0.0
  %5328 = vmatpush.msra.mxu0 0.0
  %5329 = vmatpush.msra.mxu0 0.0
  %5330 = vmatpush.msra.mxu0 0.0
  %5331 = vmatpush.msra.mxu0 0.0
  %5332 = vmatpush.msra.mxu0 %v5039
  %5333 = vmatpush.msra.mxu0 %v5023
  %5334 = vmatpush.msra.mxu0 %v5007
  %5335 = vmatpush.msra.mxu0 %v4991
  %5336 = vmatpush.msra.mxu0 %v4975
  %5337 = vmatpush.msra.mxu0 %v4959
  %5338 = vmatpush.msra.mxu0 %v4943
  %5339 = vmatpush.msra.mxu0 %v4927
  %5340 = vmatmul.f32.gmra.mxu0 %v5052
  %v5341 = vpop.f32.mrf.mxu0
  %v5342 = vadd.f32 %v5313, %v5341
  %5343 = vmatmul.f32.gmra.mxu0 %v5055
  %v5344 = vpop.f32.mrf.mxu0
  %v5345 = vadd.f32 %v5316, %v5344
  %5346 = vmatmul.f32.gmra.mxu0 %v5058
  %v5347 = vpop.f32.mrf.mxu0
  %v5348 = vadd.f32 %v5319, %v5347
  %5349 = vmatmul.f32.gmra.mxu0 %v5061
  %v5350 = vpop.f32.mrf.mxu0
  %v5351 = vadd.f32 %v5322, %v5350
  %5352 = vdwg.mxu0
  %5353 = vmatpush.msra.mxu0 %v4912
  %5354 = vmatpush.msra.mxu0 %v4896
  %5355 = vmatpush.msra.mxu0 %v4880
  %5356 = vmatpush.msra.mxu0 %v4864
  %5357 = vmatpush.msra.mxu0 %v4848
  %5358 = vmatpush.msra.mxu0 %v4832
  %5359 = vmatpush.msra.mxu0 %v4816
  %5360 = vmatpush.msra.mxu0 %v4800
  %5361 = vmatpush.msra.mxu0 %v4784
  %5362 = vmatpush.msra.mxu0 %v4768
  %5363 = vmatpush.msra.mxu0 %v4752
  %5364 = vmatpush.msra.mxu0 %v4736
  %5365 = vmatpush.msra.mxu0 %v4720
  %5366 = vmatpush.msra.mxu0 %v4704
  %5367 = vmatpush.msra.mxu0 %v4688
  %5368 = vmatpush.msra.mxu0 %v4672
  %5369 = vmatmul.f32.gmra.mxu0 %v4659
  %v5370 = vpop.f32.mrf.mxu0
  %v5371 = vadd.f32 0.0, %v5370
  %5372 = vmatmul.f32.gmra.mxu0 %v4661
  %v5373 = vpop.f32.mrf.mxu0
  %v5374 = vadd.f32 0.0, %v5373
  %5375 = vmatmul.f32.gmra.mxu0 %v4663
  %v5376 = vpop.f32.mrf.mxu0
  %v5377 = vadd.f32 0.0, %v5376
  %5378 = vmatmul.f32.gmra.mxu0 %v4665
  %v5379 = vpop.f32.mrf.mxu0
  %v5380 = vadd.f32 0.0, %v5379
  %5381 = vdwg.mxu0
  %5382 = vmatpush.msra.mxu0 0.0
  %5383 = vmatpush.msra.mxu0 0.0
  %5384 = vmatpush.msra.mxu0 0.0
  %5385 = vmatpush.msra.mxu0 0.0
  %5386 = vmatpush.msra.mxu0 0.0
  %5387 = vmatpush.msra.mxu0 0.0
  %5388 = vmatpush.msra.mxu0 0.0
  %5389 = vmatpush.msra.mxu0 0.0
  %5390 = vmatpush.msra.mxu0 %v5040
  %5391 = vmatpush.msra.mxu0 %v5024
  %5392 = vmatpush.msra.mxu0 %v5008
  %5393 = vmatpush.msra.mxu0 %v4992
  %5394 = vmatpush.msra.mxu0 %v4976
  %5395 = vmatpush.msra.mxu0 %v4960
  %5396 = vmatpush.msra.mxu0 %v4944
  %5397 = vmatpush.msra.mxu0 %v4928
  %5398 = vmatmul.f32.gmra.mxu0 %v5052
  %v5399 = vpop.f32.mrf.mxu0
  %v5400 = vadd.f32 %v5371, %v5399
  %5401 = vmatmul.f32.gmra.mxu0 %v5055
  %v5402 = vpop.f32.mrf.mxu0
  %v5403 = vadd.f32 %v5374, %v5402
  %5404 = vmatmul.f32.gmra.mxu0 %v5058
  %v5405 = vpop.f32.mrf.mxu0
  %v5406 = vadd.f32 %v5377, %v5405
  %5407 = vmatmul.f32.gmra.mxu0 %v5061
  %v5408 = vpop.f32.mrf.mxu0
  %v5409 = vadd.f32 %v5380, %v5408
  %5410 = vdwg.mxu0
  %5411 = vmatpush.msra.mxu0 %v4913
  %5412 = vmatpush.msra.mxu0 %v4897
  %5413 = vmatpush.msra.mxu0 %v4881
  %5414 = vmatpush.msra.mxu0 %v4865
  %5415 = vmatpush.msra.mxu0 %v4849
  %5416 = vmatpush.msra.mxu0 %v4833
  %5417 = vmatpush.msra.mxu0 %v4817
  %5418 = vmatpush.msra.mxu0 %v4801
  %5419 = vmatpush.msra.mxu0 %v4785
  %5420 = vmatpush.msra.mxu0 %v4769
  %5421 = vmatpush.msra.mxu0 %v4753
  %5422 = vmatpush.msra.mxu0 %v4737
  %5423 = vmatpush.msra.mxu0 %v4721
  %5424 = vmatpush.msra.mxu0 %v4705
  %5425 = vmatpush.msra.mxu0 %v4689
  %5426 = vmatpush.msra.mxu0 %v4673
  %5427 = vmatmul.f32.gmra.mxu0 %v4659
  %v5428 = vpop.f32.mrf.mxu0
  %v5429 = vadd.f32 0.0, %v5428
  %5430 = vmatmul.f32.gmra.mxu0 %v4661
  %v5431 = vpop.f32.mrf.mxu0
  %v5432 = vadd.f32 0.0, %v5431
  %5433 = vmatmul.f32.gmra.mxu0 %v4663
  %v5434 = vpop.f32.mrf.mxu0
  %v5435 = vadd.f32 0.0, %v5434
  %5436 = vmatmul.f32.gmra.mxu0 %v4665
  %v5437 = vpop.f32.mrf.mxu0
  %v5438 = vadd.f32 0.0, %v5437
  %5439 = vdwg.mxu0
  %5440 = vmatpush.msra.mxu0 0.0
  %5441 = vmatpush.msra.mxu0 0.0
  %5442 = vmatpush.msra.mxu0 0.0
  %5443 = vmatpush.msra.mxu0 0.0
  %5444 = vmatpush.msra.mxu0 0.0
  %5445 = vmatpush.msra.mxu0 0.0
  %5446 = vmatpush.msra.mxu0 0.0
  %5447 = vmatpush.msra.mxu0 0.0
  %5448 = vmatpush.msra.mxu0 %v5041
  %5449 = vmatpush.msra.mxu0 %v5025
  %5450 = vmatpush.msra.mxu0 %v5009
  %5451 = vmatpush.msra.mxu0 %v4993
  %5452 = vmatpush.msra.mxu0 %v4977
  %5453 = vmatpush.msra.mxu0 %v4961
  %5454 = vmatpush.msra.mxu0 %v4945
  %5455 = vmatpush.msra.mxu0 %v4929
  %5456 = vmatmul.f32.gmra.mxu0 %v5052
  %v5457 = vpop.f32.mrf.mxu0
  %v5458 = vadd.f32 %v5429, %v5457
  %5459 = vmatmul.f32.gmra.mxu0 %v5055
  %v5460 = vpop.f32.mrf.mxu0
  %v5461 = vadd.f32 %v5432, %v5460
  %5462 = vmatmul.f32.gmra.mxu0 %v5058
  %v5463 = vpop.f32.mrf.mxu0
  %v5464 = vadd.f32 %v5435, %v5463
  %5465 = vmatmul.f32.gmra.mxu0 %v5061
  %v5466 = vpop.f32.mrf.mxu0
  %v5467 = vadd.f32 %v5438, %v5466
  %5468 = vdwg.mxu0
  %5469 = vmatpush.msra.mxu0 %v4914
  %5470 = vmatpush.msra.mxu0 %v4898
  %5471 = vmatpush.msra.mxu0 %v4882
  %5472 = vmatpush.msra.mxu0 %v4866
  %5473 = vmatpush.msra.mxu0 %v4850
  %5474 = vmatpush.msra.mxu0 %v4834
  %5475 = vmatpush.msra.mxu0 %v4818
  %5476 = vmatpush.msra.mxu0 %v4802
  %5477 = vmatpush.msra.mxu0 %v4786
  %5478 = vmatpush.msra.mxu0 %v4770
  %5479 = vmatpush.msra.mxu0 %v4754
  %5480 = vmatpush.msra.mxu0 %v4738
  %5481 = vmatpush.msra.mxu0 %v4722
  %5482 = vmatpush.msra.mxu0 %v4706
  %5483 = vmatpush.msra.mxu0 %v4690
  %5484 = vmatpush.msra.mxu0 %v4674
  %5485 = vmatmul.f32.gmra.mxu0 %v4659
  %v5486 = vpop.f32.mrf.mxu0
  %v5487 = vadd.f32 0.0, %v5486
  %5488 = vmatmul.f32.gmra.mxu0 %v4661
  %v5489 = vpop.f32.mrf.mxu0
  %v5490 = vadd.f32 0.0, %v5489
  %5491 = vmatmul.f32.gmra.mxu0 %v4663
  %v5492 = vpop.f32.mrf.mxu0
  %v5493 = vadd.f32 0.0, %v5492
  %5494 = vmatmul.f32.gmra.mxu0 %v4665
  %v5495 = vpop.f32.mrf.mxu0
  %v5496 = vadd.f32 0.0, %v5495
  %5497 = vdwg.mxu0
  %5498 = vmatpush.msra.mxu0 0.0
  %5499 = vmatpush.msra.mxu0 0.0
  %5500 = vmatpush.msra.mxu0 0.0
  %5501 = vmatpush.msra.mxu0 0.0
  %5502 = vmatpush.msra.mxu0 0.0
  %5503 = vmatpush.msra.mxu0 0.0
  %5504 = vmatpush.msra.mxu0 0.0
  %5505 = vmatpush.msra.mxu0 0.0
  %5506 = vmatpush.msra.mxu0 %v5042
  %5507 = vmatpush.msra.mxu0 %v5026
  %5508 = vmatpush.msra.mxu0 %v5010
  %5509 = vmatpush.msra.mxu0 %v4994
  %5510 = vmatpush.msra.mxu0 %v4978
  %5511 = vmatpush.msra.mxu0 %v4962
  %5512 = vmatpush.msra.mxu0 %v4946
  %5513 = vmatpush.msra.mxu0 %v4930
  %5514 = vmatmul.f32.gmra.mxu0 %v5052
  %v5515 = vpop.f32.mrf.mxu0
  %v5516 = vadd.f32 %v5487, %v5515
  %5517 = vmatmul.f32.gmra.mxu0 %v5055
  %v5518 = vpop.f32.mrf.mxu0
  %v5519 = vadd.f32 %v5490, %v5518
  %5520 = vmatmul.f32.gmra.mxu0 %v5058
  %v5521 = vpop.f32.mrf.mxu0
  %v5522 = vadd.f32 %v5493, %v5521
  %5523 = vmatmul.f32.gmra.mxu0 %v5061
  %v5524 = vpop.f32.mrf.mxu0
  %v5525 = vadd.f32 %v5496, %v5524
  %5526 = vdwg.mxu0
  %5527 = vmatpush.msra.mxu0 %v4915
  %5528 = vmatpush.msra.mxu0 %v4899
  %5529 = vmatpush.msra.mxu0 %v4883
  %5530 = vmatpush.msra.mxu0 %v4867
  %5531 = vmatpush.msra.mxu0 %v4851
  %5532 = vmatpush.msra.mxu0 %v4835
  %5533 = vmatpush.msra.mxu0 %v4819
  %5534 = vmatpush.msra.mxu0 %v4803
  %5535 = vmatpush.msra.mxu0 %v4787
  %5536 = vmatpush.msra.mxu0 %v4771
  %5537 = vmatpush.msra.mxu0 %v4755
  %5538 = vmatpush.msra.mxu0 %v4739
  %5539 = vmatpush.msra.mxu0 %v4723
  %5540 = vmatpush.msra.mxu0 %v4707
  %5541 = vmatpush.msra.mxu0 %v4691
  %5542 = vmatpush.msra.mxu0 %v4675
  %5543 = vmatmul.f32.gmra.mxu0 %v4659
  %v5544 = vpop.f32.mrf.mxu0
  %v5545 = vadd.f32 0.0, %v5544
  %5546 = vmatmul.f32.gmra.mxu0 %v4661
  %v5547 = vpop.f32.mrf.mxu0
  %v5548 = vadd.f32 0.0, %v5547
  %5549 = vmatmul.f32.gmra.mxu0 %v4663
  %v5550 = vpop.f32.mrf.mxu0
  %v5551 = vadd.f32 0.0, %v5550
  %5552 = vmatmul.f32.gmra.mxu0 %v4665
  %v5553 = vpop.f32.mrf.mxu0
  %v5554 = vadd.f32 0.0, %v5553
  %5555 = vdwg.mxu0
  %5556 = vmatpush.msra.mxu0 0.0
  %5557 = vmatpush.msra.mxu0 0.0
  %5558 = vmatpush.msra.mxu0 0.0
  %5559 = vmatpush.msra.mxu0 0.0
  %5560 = vmatpush.msra.mxu0 0.0
  %5561 = vmatpush.msra.mxu0 0.0
  %5562 = vmatpush.msra.mxu0 0.0
  %5563 = vmatpush.msra.mxu0 0.0
  %5564 = vmatpush.msra.mxu0 %v5043
  %5565 = vmatpush.msra.mxu0 %v5027
  %5566 = vmatpush.msra.mxu0 %v5011
  %5567 = vmatpush.msra.mxu0 %v4995
  %5568 = vmatpush.msra.mxu0 %v4979
  %5569 = vmatpush.msra.mxu0 %v4963
  %5570 = vmatpush.msra.mxu0 %v4947
  %5571 = vmatpush.msra.mxu0 %v4931
  %5572 = vmatmul.f32.gmra.mxu0 %v5052
  %v5573 = vpop.f32.mrf.mxu0
  %v5574 = vadd.f32 %v5545, %v5573
  %5575 = vmatmul.f32.gmra.mxu0 %v5055
  %v5576 = vpop.f32.mrf.mxu0
  %v5577 = vadd.f32 %v5548, %v5576
  %5578 = vmatmul.f32.gmra.mxu0 %v5058
  %v5579 = vpop.f32.mrf.mxu0
  %v5580 = vadd.f32 %v5551, %v5579
  %5581 = vmatmul.f32.gmra.mxu0 %v5061
  %v5582 = vpop.f32.mrf.mxu0
  %v5583 = vadd.f32 %v5554, %v5582
  %5584 = vdwg.mxu0
  %5585 = vmatpush.msra.mxu0 %v4916
  %5586 = vmatpush.msra.mxu0 %v4900
  %5587 = vmatpush.msra.mxu0 %v4884
  %5588 = vmatpush.msra.mxu0 %v4868
  %5589 = vmatpush.msra.mxu0 %v4852
  %5590 = vmatpush.msra.mxu0 %v4836
  %5591 = vmatpush.msra.mxu0 %v4820
  %5592 = vmatpush.msra.mxu0 %v4804
  %5593 = vmatpush.msra.mxu0 %v4788
  %5594 = vmatpush.msra.mxu0 %v4772
  %5595 = vmatpush.msra.mxu0 %v4756
  %5596 = vmatpush.msra.mxu0 %v4740
  %5597 = vmatpush.msra.mxu0 %v4724
  %5598 = vmatpush.msra.mxu0 %v4708
  %5599 = vmatpush.msra.mxu0 %v4692
  %5600 = vmatpush.msra.mxu0 %v4676
  %5601 = vmatmul.f32.gmra.mxu0 %v4659
  %v5602 = vpop.f32.mrf.mxu0
  %v5603 = vadd.f32 0.0, %v5602
  %5604 = vmatmul.f32.gmra.mxu0 %v4661
  %v5605 = vpop.f32.mrf.mxu0
  %v5606 = vadd.f32 0.0, %v5605
  %5607 = vmatmul.f32.gmra.mxu0 %v4663
  %v5608 = vpop.f32.mrf.mxu0
  %v5609 = vadd.f32 0.0, %v5608
  %5610 = vmatmul.f32.gmra.mxu0 %v4665
  %v5611 = vpop.f32.mrf.mxu0
  %v5612 = vadd.f32 0.0, %v5611
  %5613 = vdwg.mxu0
  %5614 = vmatpush.msra.mxu0 0.0
  %5615 = vmatpush.msra.mxu0 0.0
  %5616 = vmatpush.msra.mxu0 0.0
  %5617 = vmatpush.msra.mxu0 0.0
  %5618 = vmatpush.msra.mxu0 0.0
  %5619 = vmatpush.msra.mxu0 0.0
  %5620 = vmatpush.msra.mxu0 0.0
  %5621 = vmatpush.msra.mxu0 0.0
  %5622 = vmatpush.msra.mxu0 %v5044
  %5623 = vmatpush.msra.mxu0 %v5028
  %5624 = vmatpush.msra.mxu0 %v5012
  %5625 = vmatpush.msra.mxu0 %v4996
  %5626 = vmatpush.msra.mxu0 %v4980
  %5627 = vmatpush.msra.mxu0 %v4964
  %5628 = vmatpush.msra.mxu0 %v4948
  %5629 = vmatpush.msra.mxu0 %v4932
  %5630 = vmatmul.f32.gmra.mxu0 %v5052
  %v5631 = vpop.f32.mrf.mxu0
  %v5632 = vadd.f32 %v5603, %v5631
  %5633 = vmatmul.f32.gmra.mxu0 %v5055
  %v5634 = vpop.f32.mrf.mxu0
  %v5635 = vadd.f32 %v5606, %v5634
  %5636 = vmatmul.f32.gmra.mxu0 %v5058
  %v5637 = vpop.f32.mrf.mxu0
  %v5638 = vadd.f32 %v5609, %v5637
  %5639 = vmatmul.f32.gmra.mxu0 %v5061
  %v5640 = vpop.f32.mrf.mxu0
  %v5641 = vadd.f32 %v5612, %v5640
  %5642 = vdwg.mxu0
  %5643 = vmatpush.msra.mxu0 %v4917
  %5644 = vmatpush.msra.mxu0 %v4901
  %5645 = vmatpush.msra.mxu0 %v4885
  %5646 = vmatpush.msra.mxu0 %v4869
  %5647 = vmatpush.msra.mxu0 %v4853
  %5648 = vmatpush.msra.mxu0 %v4837
  %5649 = vmatpush.msra.mxu0 %v4821
  %5650 = vmatpush.msra.mxu0 %v4805
  %5651 = vmatpush.msra.mxu0 %v4789
  %5652 = vmatpush.msra.mxu0 %v4773
  %5653 = vmatpush.msra.mxu0 %v4757
  %5654 = vmatpush.msra.mxu0 %v4741
  %5655 = vmatpush.msra.mxu0 %v4725
  %5656 = vmatpush.msra.mxu0 %v4709
  %5657 = vmatpush.msra.mxu0 %v4693
  %5658 = vmatpush.msra.mxu0 %v4677
  %5659 = vmatmul.f32.gmra.mxu0 %v4659
  %v5660 = vpop.f32.mrf.mxu0
  %v5661 = vadd.f32 0.0, %v5660
  %5662 = vmatmul.f32.gmra.mxu0 %v4661
  %v5663 = vpop.f32.mrf.mxu0
  %v5664 = vadd.f32 0.0, %v5663
  %5665 = vmatmul.f32.gmra.mxu0 %v4663
  %v5666 = vpop.f32.mrf.mxu0
  %v5667 = vadd.f32 0.0, %v5666
  %5668 = vmatmul.f32.gmra.mxu0 %v4665
  %v5669 = vpop.f32.mrf.mxu0
  %v5670 = vadd.f32 0.0, %v5669
  %5671 = vdwg.mxu0
  %5672 = vmatpush.msra.mxu0 0.0
  %5673 = vmatpush.msra.mxu0 0.0
  %5674 = vmatpush.msra.mxu0 0.0
  %5675 = vmatpush.msra.mxu0 0.0
  %5676 = vmatpush.msra.mxu0 0.0
  %5677 = vmatpush.msra.mxu0 0.0
  %5678 = vmatpush.msra.mxu0 0.0
  %5679 = vmatpush.msra.mxu0 0.0
  %5680 = vmatpush.msra.mxu0 %v5045
  %5681 = vmatpush.msra.mxu0 %v5029
  %5682 = vmatpush.msra.mxu0 %v5013
  %5683 = vmatpush.msra.mxu0 %v4997
  %5684 = vmatpush.msra.mxu0 %v4981
  %5685 = vmatpush.msra.mxu0 %v4965
  %5686 = vmatpush.msra.mxu0 %v4949
  %5687 = vmatpush.msra.mxu0 %v4933
  %5688 = vmatmul.f32.gmra.mxu0 %v5052
  %v5689 = vpop.f32.mrf.mxu0
  %v5690 = vadd.f32 %v5661, %v5689
  %5691 = vmatmul.f32.gmra.mxu0 %v5055
  %v5692 = vpop.f32.mrf.mxu0
  %v5693 = vadd.f32 %v5664, %v5692
  %5694 = vmatmul.f32.gmra.mxu0 %v5058
  %v5695 = vpop.f32.mrf.mxu0
  %v5696 = vadd.f32 %v5667, %v5695
  %5697 = vmatmul.f32.gmra.mxu0 %v5061
  %v5698 = vpop.f32.mrf.mxu0
  %v5699 = vadd.f32 %v5670, %v5698
  %5700 = vdwg.mxu0
  %5701 = vmatpush.msra.mxu0 %v4918
  %5702 = vmatpush.msra.mxu0 %v4902
  %5703 = vmatpush.msra.mxu0 %v4886
  %5704 = vmatpush.msra.mxu0 %v4870
  %5705 = vmatpush.msra.mxu0 %v4854
  %5706 = vmatpush.msra.mxu0 %v4838
  %5707 = vmatpush.msra.mxu0 %v4822
  %5708 = vmatpush.msra.mxu0 %v4806
  %5709 = vmatpush.msra.mxu0 %v4790
  %5710 = vmatpush.msra.mxu0 %v4774
  %5711 = vmatpush.msra.mxu0 %v4758
  %5712 = vmatpush.msra.mxu0 %v4742
  %5713 = vmatpush.msra.mxu0 %v4726
  %5714 = vmatpush.msra.mxu0 %v4710
  %5715 = vmatpush.msra.mxu0 %v4694
  %5716 = vmatpush.msra.mxu0 %v4678
  %5717 = vmatmul.f32.gmra.mxu0 %v4659
  %v5718 = vpop.f32.mrf.mxu0
  %v5719 = vadd.f32 0.0, %v5718
  %5720 = vmatmul.f32.gmra.mxu0 %v4661
  %v5721 = vpop.f32.mrf.mxu0
  %v5722 = vadd.f32 0.0, %v5721
  %5723 = vmatmul.f32.gmra.mxu0 %v4663
  %v5724 = vpop.f32.mrf.mxu0
  %v5725 = vadd.f32 0.0, %v5724
  %5726 = vmatmul.f32.gmra.mxu0 %v4665
  %v5727 = vpop.f32.mrf.mxu0
  %v5728 = vadd.f32 0.0, %v5727
  %5729 = vdwg.mxu0
  %5730 = vmatpush.msra.mxu0 0.0
  %5731 = vmatpush.msra.mxu0 0.0
  %5732 = vmatpush.msra.mxu0 0.0
  %5733 = vmatpush.msra.mxu0 0.0
  %5734 = vmatpush.msra.mxu0 0.0
  %5735 = vmatpush.msra.mxu0 0.0
  %5736 = vmatpush.msra.mxu0 0.0
  %5737 = vmatpush.msra.mxu0 0.0
  %5738 = vmatpush.msra.mxu0 %v5046
  %5739 = vmatpush.msra.mxu0 %v5030
  %5740 = vmatpush.msra.mxu0 %v5014
  %5741 = vmatpush.msra.mxu0 %v4998
  %5742 = vmatpush.msra.mxu0 %v4982
  %5743 = vmatpush.msra.mxu0 %v4966
  %5744 = vmatpush.msra.mxu0 %v4950
  %5745 = vmatpush.msra.mxu0 %v4934
  %5746 = vmatmul.f32.gmra.mxu0 %v5052
  %v5747 = vpop.f32.mrf.mxu0
  %v5748 = vadd.f32 %v5719, %v5747
  %5749 = vmatmul.f32.gmra.mxu0 %v5055
  %v5750 = vpop.f32.mrf.mxu0
  %v5751 = vadd.f32 %v5722, %v5750
  %5752 = vmatmul.f32.gmra.mxu0 %v5058
  %v5753 = vpop.f32.mrf.mxu0
  %v5754 = vadd.f32 %v5725, %v5753
  %5755 = vmatmul.f32.gmra.mxu0 %v5061
  %v5756 = vpop.f32.mrf.mxu0
  %v5757 = vadd.f32 %v5728, %v5756
  %5758 = vdwg.mxu0
  %5759 = vmatpush.msra.mxu0 %v4919
  %5760 = vmatpush.msra.mxu0 %v4903
  %5761 = vmatpush.msra.mxu0 %v4887
  %5762 = vmatpush.msra.mxu0 %v4871
  %5763 = vmatpush.msra.mxu0 %v4855
  %5764 = vmatpush.msra.mxu0 %v4839
  %5765 = vmatpush.msra.mxu0 %v4823
  %5766 = vmatpush.msra.mxu0 %v4807
  %5767 = vmatpush.msra.mxu0 %v4791
  %5768 = vmatpush.msra.mxu0 %v4775
  %5769 = vmatpush.msra.mxu0 %v4759
  %5770 = vmatpush.msra.mxu0 %v4743
  %5771 = vmatpush.msra.mxu0 %v4727
  %5772 = vmatpush.msra.mxu0 %v4711
  %5773 = vmatpush.msra.mxu0 %v4695
  %5774 = vmatpush.msra.mxu0 %v4679
  %5775 = vmatmul.f32.gmra.mxu0 %v4659
  %v5776 = vpop.f32.mrf.mxu0
  %v5777 = vadd.f32 0.0, %v5776
  %5778 = vmatmul.f32.gmra.mxu0 %v4661
  %v5779 = vpop.f32.mrf.mxu0
  %v5780 = vadd.f32 0.0, %v5779
  %5781 = vmatmul.f32.gmra.mxu0 %v4663
  %v5782 = vpop.f32.mrf.mxu0
  %v5783 = vadd.f32 0.0, %v5782
  %5784 = vmatmul.f32.gmra.mxu0 %v4665
  %v5785 = vpop.f32.mrf.mxu0
  %v5786 = vadd.f32 0.0, %v5785
  %5787 = vdwg.mxu0
  %5788 = vmatpush.msra.mxu0 0.0
  %5789 = vmatpush.msra.mxu0 0.0
  %5790 = vmatpush.msra.mxu0 0.0
  %5791 = vmatpush.msra.mxu0 0.0
  %5792 = vmatpush.msra.mxu0 0.0
  %5793 = vmatpush.msra.mxu0 0.0
  %5794 = vmatpush.msra.mxu0 0.0
  %5795 = vmatpush.msra.mxu0 0.0
  %5796 = vmatpush.msra.mxu0 %v5047
  %5797 = vmatpush.msra.mxu0 %v5031
  %5798 = vmatpush.msra.mxu0 %v5015
  %5799 = vmatpush.msra.mxu0 %v4999
  %5800 = vmatpush.msra.mxu0 %v4983
  %5801 = vmatpush.msra.mxu0 %v4967
  %5802 = vmatpush.msra.mxu0 %v4951
  %5803 = vmatpush.msra.mxu0 %v4935
  %5804 = vmatmul.f32.gmra.mxu0 %v5052
  %v5805 = vpop.f32.mrf.mxu0
  %v5806 = vadd.f32 %v5777, %v5805
  %5807 = vmatmul.f32.gmra.mxu0 %v5055
  %v5808 = vpop.f32.mrf.mxu0
  %v5809 = vadd.f32 %v5780, %v5808
  %5810 = vmatmul.f32.gmra.mxu0 %v5058
  %v5811 = vpop.f32.mrf.mxu0
  %v5812 = vadd.f32 %v5783, %v5811
  %5813 = vmatmul.f32.gmra.mxu0 %v5061
  %v5814 = vpop.f32.mrf.mxu0
  %v5815 = vadd.f32 %v5786, %v5814
  %5816 = vdwg.mxu0
  %5817 = vmatpush.msra.mxu0 %v4920
  %5818 = vmatpush.msra.mxu0 %v4904
  %5819 = vmatpush.msra.mxu0 %v4888
  %5820 = vmatpush.msra.mxu0 %v4872
  %5821 = vmatpush.msra.mxu0 %v4856
  %5822 = vmatpush.msra.mxu0 %v4840
  %5823 = vmatpush.msra.mxu0 %v4824
  %5824 = vmatpush.msra.mxu0 %v4808
  %5825 = vmatpush.msra.mxu0 %v4792
  %5826 = vmatpush.msra.mxu0 %v4776
  %5827 = vmatpush.msra.mxu0 %v4760
  %5828 = vmatpush.msra.mxu0 %v4744
  %5829 = vmatpush.msra.mxu0 %v4728
  %5830 = vmatpush.msra.mxu0 %v4712
  %5831 = vmatpush.msra.mxu0 %v4696
  %5832 = vmatpush.msra.mxu0 %v4680
  %5833 = vmatmul.f32.gmra.mxu0 %v4659
  %v5834 = vpop.f32.mrf.mxu0
  %v5835 = vadd.f32 0.0, %v5834
  %5836 = vmatmul.f32.gmra.mxu0 %v4661
  %v5837 = vpop.f32.mrf.mxu0
  %v5838 = vadd.f32 0.0, %v5837
  %5839 = vmatmul.f32.gmra.mxu0 %v4663
  %v5840 = vpop.f32.mrf.mxu0
  %v5841 = vadd.f32 0.0, %v5840
  %5842 = vmatmul.f32.gmra.mxu0 %v4665
  %v5843 = vpop.f32.mrf.mxu0
  %v5844 = vadd.f32 0.0, %v5843
  %5845 = vdwg.mxu0
  %5846 = vmatpush.msra.mxu0 0.0
  %5847 = vmatpush.msra.mxu0 0.0
  %5848 = vmatpush.msra.mxu0 0.0
  %5849 = vmatpush.msra.mxu0 0.0
  %5850 = vmatpush.msra.mxu0 0.0
  %5851 = vmatpush.msra.mxu0 0.0
  %5852 = vmatpush.msra.mxu0 0.0
  %5853 = vmatpush.msra.mxu0 0.0
  %5854 = vmatpush.msra.mxu0 %v5048
  %5855 = vmatpush.msra.mxu0 %v5032
  %5856 = vmatpush.msra.mxu0 %v5016
  %5857 = vmatpush.msra.mxu0 %v5000
  %5858 = vmatpush.msra.mxu0 %v4984
  %5859 = vmatpush.msra.mxu0 %v4968
  %5860 = vmatpush.msra.mxu0 %v4952
  %5861 = vmatpush.msra.mxu0 %v4936
  %5862 = vmatmul.f32.gmra.mxu0 %v5052
  %v5863 = vpop.f32.mrf.mxu0
  %v5864 = vadd.f32 %v5835, %v5863
  %5865 = vmatmul.f32.gmra.mxu0 %v5055
  %v5866 = vpop.f32.mrf.mxu0
  %v5867 = vadd.f32 %v5838, %v5866
  %5868 = vmatmul.f32.gmra.mxu0 %v5058
  %v5869 = vpop.f32.mrf.mxu0
  %v5870 = vadd.f32 %v5841, %v5869
  %5871 = vmatmul.f32.gmra.mxu0 %v5061
  %v5872 = vpop.f32.mrf.mxu0
  %v5873 = vadd.f32 %v5844, %v5872
  %5874 = vdwg.mxu0
  %5875 = vmatpush.msra.mxu0 %v4921
  %5876 = vmatpush.msra.mxu0 %v4905
  %5877 = vmatpush.msra.mxu0 %v4889
  %5878 = vmatpush.msra.mxu0 %v4873
  %5879 = vmatpush.msra.mxu0 %v4857
  %5880 = vmatpush.msra.mxu0 %v4841
  %5881 = vmatpush.msra.mxu0 %v4825
  %5882 = vmatpush.msra.mxu0 %v4809
  %5883 = vmatpush.msra.mxu0 %v4793
  %5884 = vmatpush.msra.mxu0 %v4777
  %5885 = vmatpush.msra.mxu0 %v4761
  %5886 = vmatpush.msra.mxu0 %v4745
  %5887 = vmatpush.msra.mxu0 %v4729
  %5888 = vmatpush.msra.mxu0 %v4713
  %5889 = vmatpush.msra.mxu0 %v4697
  %5890 = vmatpush.msra.mxu0 %v4681
  %5891 = vmatmul.f32.gmra.mxu0 %v4659
  %v5892 = vpop.f32.mrf.mxu0
  %v5893 = vadd.f32 0.0, %v5892
  %5894 = vmatmul.f32.gmra.mxu0 %v4661
  %v5895 = vpop.f32.mrf.mxu0
  %v5896 = vadd.f32 0.0, %v5895
  %5897 = vmatmul.f32.gmra.mxu0 %v4663
  %v5898 = vpop.f32.mrf.mxu0
  %v5899 = vadd.f32 0.0, %v5898
  %5900 = vmatmul.f32.gmra.mxu0 %v4665
  %v5901 = vpop.f32.mrf.mxu0
  %v5902 = vadd.f32 0.0, %v5901
  %5903 = vdwg.mxu0
  %5904 = vmatpush.msra.mxu0 0.0
  %5905 = vmatpush.msra.mxu0 0.0
  %5906 = vmatpush.msra.mxu0 0.0
  %5907 = vmatpush.msra.mxu0 0.0
  %5908 = vmatpush.msra.mxu0 0.0
  %5909 = vmatpush.msra.mxu0 0.0
  %5910 = vmatpush.msra.mxu0 0.0
  %5911 = vmatpush.msra.mxu0 0.0
  %5912 = vmatpush.msra.mxu0 %v5049
  %5913 = vmatpush.msra.mxu0 %v5033
  %5914 = vmatpush.msra.mxu0 %v5017
  %5915 = vmatpush.msra.mxu0 %v5001
  %5916 = vmatpush.msra.mxu0 %v4985
  %5917 = vmatpush.msra.mxu0 %v4969
  %5918 = vmatpush.msra.mxu0 %v4953
  %5919 = vmatpush.msra.mxu0 %v4937
  %5920 = vmatmul.f32.gmra.mxu0 %v5052
  %v5921 = vpop.f32.mrf.mxu0
  %v5922 = vadd.f32 %v5893, %v5921
  %5923 = vmatmul.f32.gmra.mxu0 %v5055
  %v5924 = vpop.f32.mrf.mxu0
  %v5925 = vadd.f32 %v5896, %v5924
  %5926 = vmatmul.f32.gmra.mxu0 %v5058
  %v5927 = vpop.f32.mrf.mxu0
  %v5928 = vadd.f32 %v5899, %v5927
  %5929 = vmatmul.f32.gmra.mxu0 %v5061
  %v5930 = vpop.f32.mrf.mxu0
  %v5931 = vadd.f32 %v5902, %v5930
  %5932 = vdwg.mxu0
  %5933 = vmatpush.msra.mxu0 %v4922
  %5934 = vmatpush.msra.mxu0 %v4906
  %5935 = vmatpush.msra.mxu0 %v4890
  %5936 = vmatpush.msra.mxu0 %v4874
  %5937 = vmatpush.msra.mxu0 %v4858
  %5938 = vmatpush.msra.mxu0 %v4842
  %5939 = vmatpush.msra.mxu0 %v4826
  %5940 = vmatpush.msra.mxu0 %v4810
  %5941 = vmatpush.msra.mxu0 %v4794
  %5942 = vmatpush.msra.mxu0 %v4778
  %5943 = vmatpush.msra.mxu0 %v4762
  %5944 = vmatpush.msra.mxu0 %v4746
  %5945 = vmatpush.msra.mxu0 %v4730
  %5946 = vmatpush.msra.mxu0 %v4714
  %5947 = vmatpush.msra.mxu0 %v4698
  %5948 = vmatpush.msra.mxu0 %v4682
  %5949 = vmatmul.f32.gmra.mxu0 %v4659
  %v5950 = vpop.f32.mrf.mxu0
  %v5951 = vadd.f32 0.0, %v5950
  %5952 = vmatmul.f32.gmra.mxu0 %v4661
  %v5953 = vpop.f32.mrf.mxu0
  %v5954 = vadd.f32 0.0, %v5953
  %5955 = vmatmul.f32.gmra.mxu0 %v4663
  %v5956 = vpop.f32.mrf.mxu0
  %v5957 = vadd.f32 0.0, %v5956
  %5958 = vmatmul.f32.gmra.mxu0 %v4665
  %v5959 = vpop.f32.mrf.mxu0
  %v5960 = vadd.f32 0.0, %v5959
  %5961 = vdwg.mxu0
  %5962 = vmatpush.msra.mxu0 0.0
  %5963 = vmatpush.msra.mxu0 0.0
  %5964 = vmatpush.msra.mxu0 0.0
  %5965 = vmatpush.msra.mxu0 0.0
  %5966 = vmatpush.msra.mxu0 0.0
  %5967 = vmatpush.msra.mxu0 0.0
  %5968 = vmatpush.msra.mxu0 0.0
  %5969 = vmatpush.msra.mxu0 0.0
  %5970 = vmatpush.msra.mxu0 %v5050
  %5971 = vmatpush.msra.mxu0 %v5034
  %5972 = vmatpush.msra.mxu0 %v5018
  %5973 = vmatpush.msra.mxu0 %v5002
  %5974 = vmatpush.msra.mxu0 %v4986
  %5975 = vmatpush.msra.mxu0 %v4970
  %5976 = vmatpush.msra.mxu0 %v4954
  %5977 = vmatpush.msra.mxu0 %v4938
  %5978 = vmatmul.f32.gmra.mxu0 %v5052
  %v5979 = vpop.f32.mrf.mxu0
  %v5980 = vadd.f32 %v5951, %v5979
  %5981 = vmatmul.f32.gmra.mxu0 %v5055
  %v5982 = vpop.f32.mrf.mxu0
  %v5983 = vadd.f32 %v5954, %v5982
  %5984 = vmatmul.f32.gmra.mxu0 %v5058
  %v5985 = vpop.f32.mrf.mxu0
  %v5986 = vadd.f32 %v5957, %v5985
  %5987 = vmatmul.f32.gmra.mxu0 %v5061
  %v5988 = vpop.f32.mrf.mxu0
  %v5989 = vadd.f32 %v5960, %v5988
  %5990 = vdwg.mxu0
  %s5991 = scalar_lea.vmem [#allocation4], 512
  %5992 = vst [vmem:[%s5991] sm:$0xff] %v5110
  %5993 = vst [vmem:[%s5991 + $0x8] sm:$0xff] %v5168
  %5994 = vst [vmem:[%s5991 + $0x10] sm:$0xff] %v5226
  %5995 = vst [vmem:[%s5991 + $0x18] sm:$0xff] %v5284
  %5996 = vst [vmem:[%s5991 + $0x20] sm:$0xff] %v5342
  %5997 = vst [vmem:[%s5991 + $0x28] sm:$0xff] %v5400
  %5998 = vst [vmem:[%s5991 + $0x30] sm:$0xff] %v5458
  %5999 = vst [vmem:[%s5991 + $0x38] sm:$0xff] %v5516
  %6000 = vst [vmem:[%s5991 + $0x40] sm:$0xff] %v5574
  %6001 = vst [vmem:[%s5991 + $0x48] sm:$0xff] %v5632
  %6002 = vst [vmem:[%s5991 + $0x50] sm:$0xff] %v5690
  %6003 = vst [vmem:[%s5991 + $0x58] sm:$0xff] %v5748
  %6004 = vst [vmem:[%s5991 + $0x60] sm:$0xff] %v5806
  %6005 = vst [vmem:[%s5991 + $0x68] sm:$0xff] %v5864
  %6006 = vst [vmem:[%s5991 + $0x70] sm:$0xff] %v5922
  %6007 = vst [vmem:[%s5991 + $0x78] sm:$0xff] %v5980
  %6008 = vst [vmem:[%s5991 + $0x80] sm:$0xff] %v5113
  %6009 = vst [vmem:[%s5991 + $0x88] sm:$0xff] %v5171
  %6010 = vst [vmem:[%s5991 + $0x90] sm:$0xff] %v5229
  %6011 = vst [vmem:[%s5991 + $0x98] sm:$0xff] %v5287
  %6012 = vst [vmem:[%s5991 + $0xa0] sm:$0xff] %v5345
  %6013 = vst [vmem:[%s5991 + $0xa8] sm:$0xff] %v5403
  %6014 = vst [vmem:[%s5991 + $0xb0] sm:$0xff] %v5461
  %6015 = vst [vmem:[%s5991 + $0xb8] sm:$0xff] %v5519
  %6016 = vst [vmem:[%s5991 + $0xc0] sm:$0xff] %v5577
  %6017 = vst [vmem:[%s5991 + $0xc8] sm:$0xff] %v5635
  %6018 = vst [vmem:[%s5991 + $0xd0] sm:$0xff] %v5693
  %6019 = vst [vmem:[%s5991 + $0xd8] sm:$0xff] %v5751
  %6020 = vst [vmem:[%s5991 + $0xe0] sm:$0xff] %v5809
  %6021 = vst [vmem:[%s5991 + $0xe8] sm:$0xff] %v5867
  %6022 = vst [vmem:[%s5991 + $0xf0] sm:$0xff] %v5925
  %6023 = vst [vmem:[%s5991 + $0xf8] sm:$0xff] %v5983
  %6024 = vst [vmem:[%s5991 + $0x100] sm:$0xff] %v5116
  %6025 = vst [vmem:[%s5991 + $0x108] sm:$0xff] %v5174
  %6026 = vst [vmem:[%s5991 + $0x110] sm:$0xff] %v5232
  %6027 = vst [vmem:[%s5991 + $0x118] sm:$0xff] %v5290
  %6028 = vst [vmem:[%s5991 + $0x120] sm:$0xff] %v5348
  %6029 = vst [vmem:[%s5991 + $0x128] sm:$0xff] %v5406
  %6030 = vst [vmem:[%s5991 + $0x130] sm:$0xff] %v5464
  %6031 = vst [vmem:[%s5991 + $0x138] sm:$0xff] %v5522
  %6032 = vst [vmem:[%s5991 + $0x140] sm:$0xff] %v5580
  %6033 = vst [vmem:[%s5991 + $0x148] sm:$0xff] %v5638
  %6034 = vst [vmem:[%s5991 + $0x150] sm:$0xff] %v5696
  %6035 = vst [vmem:[%s5991 + $0x158] sm:$0xff] %v5754
  %6036 = vst [vmem:[%s5991 + $0x160] sm:$0xff] %v5812
  %6037 = vst [vmem:[%s5991 + $0x168] sm:$0xff] %v5870
  %6038 = vst [vmem:[%s5991 + $0x170] sm:$0xff] %v5928
  %6039 = vst [vmem:[%s5991 + $0x178] sm:$0xff] %v5986
  %6040 = vst [vmem:[%s5991 + $0x180] sm:$0xff] %v5119
  %6041 = vst [vmem:[%s5991 + $0x188] sm:$0xff] %v5177
  %6042 = vst [vmem:[%s5991 + $0x190] sm:$0xff] %v5235
  %6043 = vst [vmem:[%s5991 + $0x198] sm:$0xff] %v5293
  %6044 = vst [vmem:[%s5991 + $0x1a0] sm:$0xff] %v5351
  %6045 = vst [vmem:[%s5991 + $0x1a8] sm:$0xff] %v5409
  %6046 = vst [vmem:[%s5991 + $0x1b0] sm:$0xff] %v5467
  %6047 = vst [vmem:[%s5991 + $0x1b8] sm:$0xff] %v5525
  %6048 = vst [vmem:[%s5991 + $0x1c0] sm:$0xff] %v5583
  %6049 = vst [vmem:[%s5991 + $0x1c8] sm:$0xff] %v5641
  %6050 = vst [vmem:[%s5991 + $0x1d0] sm:$0xff] %v5699
  %6051 = vst [vmem:[%s5991 + $0x1d8] sm:$0xff] %v5757
  %6052 = vst [vmem:[%s5991 + $0x1e0] sm:$0xff] %v5815
  %6053 = vst [vmem:[%s5991 + $0x1e8] sm:$0xff] %v5873
  %6054 = vst [vmem:[%s5991 + $0x1f0] sm:$0xff] %v5931
  %6055 = vst [vmem:[%s5991 + $0x1f8] sm:$0xff] %v5989
  %v6056 = vadd.f32 %v5110, %v5168
  %v6057 = vadd.f32 %v6056, %v5226
  %v6058 = vadd.f32 %v6057, %v5284
  %v6059 = vadd.f32 %v6058, %v5342
  %v6060 = vadd.f32 %v6059, %v5400
  %v6061 = vadd.f32 %v6060, %v5458
  %v6062 = vadd.f32 %v6061, %v5516
  %v6063 = vadd.f32 %v6062, %v5574
  %v6064 = vadd.f32 %v6063, %v5632
  %v6065 = vadd.f32 %v6064, %v5690
  %v6066 = vadd.f32 %v6065, %v5748
  %v6067 = vadd.f32 %v6066, %v5806
  %v6068 = vadd.f32 %v6067, %v5864
  %v6069 = vadd.f32 %v6068, %v5922
  %v6070 = vadd.f32 %v6069, %v5980
  %6071 = vadd.xlane.f32.xlu0 %v6070
  %v6072 = vpop.xlane.xlu0 %6071
  %v6073 = vadd.f32 %v5113, %v5171
  %v6074 = vadd.f32 %v6073, %v5229
  %v6075 = vadd.f32 %v6074, %v5287
  %v6076 = vadd.f32 %v6075, %v5345
  %v6077 = vadd.f32 %v6076, %v5403
  %v6078 = vadd.f32 %v6077, %v5461
  %v6079 = vadd.f32 %v6078, %v5519
  %v6080 = vadd.f32 %v6079, %v5577
  %v6081 = vadd.f32 %v6080, %v5635
  %v6082 = vadd.f32 %v6081, %v5693
  %v6083 = vadd.f32 %v6082, %v5751
  %v6084 = vadd.f32 %v6083, %v5809
  %v6085 = vadd.f32 %v6084, %v5867
  %v6086 = vadd.f32 %v6085, %v5925
  %v6087 = vadd.f32 %v6086, %v5983
  %6088 = vadd.xlane.f32.xlu0 %v6087
  %v6089 = vpop.xlane.xlu0 %6088
  %v6090 = vadd.f32 %v5116, %v5174
  %v6091 = vadd.f32 %v6090, %v5232
  %v6092 = vadd.f32 %v6091, %v5290
  %v6093 = vadd.f32 %v6092, %v5348
  %v6094 = vadd.f32 %v6093, %v5406
  %v6095 = vadd.f32 %v6094, %v5464
  %v6096 = vadd.f32 %v6095, %v5522
  %v6097 = vadd.f32 %v6096, %v5580
  %v6098 = vadd.f32 %v6097, %v5638
  %v6099 = vadd.f32 %v6098, %v5696
  %v6100 = vadd.f32 %v6099, %v5754
  %v6101 = vadd.f32 %v6100, %v5812
  %v6102 = vadd.f32 %v6101, %v5870
  %v6103 = vadd.f32 %v6102, %v5928
  %v6104 = vadd.f32 %v6103, %v5986
  %6105 = vadd.xlane.f32.xlu0 %v6104
  %v6106 = vpop.xlane.xlu0 %6105
  %v6107 = vadd.f32 %v5119, %v5177
  %v6108 = vadd.f32 %v6107, %v5235
  %v6109 = vadd.f32 %v6108, %v5293
  %v6110 = vadd.f32 %v6109, %v5351
  %v6111 = vadd.f32 %v6110, %v5409
  %v6112 = vadd.f32 %v6111, %v5467
  %v6113 = vadd.f32 %v6112, %v5525
  %v6114 = vadd.f32 %v6113, %v5583
  %v6115 = vadd.f32 %v6114, %v5641
  %v6116 = vadd.f32 %v6115, %v5699
  %v6117 = vadd.f32 %v6116, %v5757
  %v6118 = vadd.f32 %v6117, %v5815
  %v6119 = vadd.f32 %v6118, %v5873
  %v6120 = vadd.f32 %v6119, %v5931
  %v6121 = vadd.f32 %v6120, %v5989
  %6122 = vadd.xlane.f32.xlu0 %v6121
  %v6123 = vpop.xlane.xlu0 %6122
  %v6124 = vadd.f32 %v3991, %v6072
  %v6125 = vadd.f32 %v3992, %v6089
  %v6126 = vadd.f32 %v3993, %v6106
  %v6127 = vadd.f32 %v3994, %v6123
  %v6128 = vmul.f32 %v5110, %v5110
  %v6129 = vmul.f32 %v5168, %v5168
  %v6130 = vmul.f32 %v5226, %v5226
  %v6131 = vmul.f32 %v5284, %v5284
  %v6132 = vmul.f32 %v5342, %v5342
  %v6133 = vmul.f32 %v5400, %v5400
  %v6134 = vmul.f32 %v5458, %v5458
  %v6135 = vmul.f32 %v5516, %v5516
  %v6136 = vmul.f32 %v5574, %v5574
  %v6137 = vmul.f32 %v5632, %v5632
  %v6138 = vmul.f32 %v5690, %v5690
  %v6139 = vmul.f32 %v5748, %v5748
  %v6140 = vmul.f32 %v5806, %v5806
  %v6141 = vmul.f32 %v5864, %v5864
  %v6142 = vmul.f32 %v5922, %v5922
  %v6143 = vmul.f32 %v5980, %v5980
  %v6144 = vmul.f32 %v5113, %v5113
  %v6145 = vmul.f32 %v5171, %v5171
  %v6146 = vmul.f32 %v5229, %v5229
  %v6147 = vmul.f32 %v5287, %v5287
  %v6148 = vmul.f32 %v5345, %v5345
  %v6149 = vmul.f32 %v5403, %v5403
  %v6150 = vmul.f32 %v5461, %v5461
  %v6151 = vmul.f32 %v5519, %v5519
  %v6152 = vmul.f32 %v5577, %v5577
  %v6153 = vmul.f32 %v5635, %v5635
  %v6154 = vmul.f32 %v5693, %v5693
  %v6155 = vmul.f32 %v5751, %v5751
  %v6156 = vmul.f32 %v5809, %v5809
  %v6157 = vmul.f32 %v5867, %v5867
  %v6158 = vmul.f32 %v5925, %v5925
  %v6159 = vmul.f32 %v5983, %v5983
  %v6160 = vmul.f32 %v5116, %v5116
  %v6161 = vmul.f32 %v5174, %v5174
  %v6162 = vmul.f32 %v5232, %v5232
  %v6163 = vmul.f32 %v5290, %v5290
  %v6164 = vmul.f32 %v5348, %v5348
  %v6165 = vmul.f32 %v5406, %v5406
  %v6166 = vmul.f32 %v5464, %v5464
  %v6167 = vmul.f32 %v5522, %v5522
  %v6168 = vmul.f32 %v5580, %v5580
  %v6169 = vmul.f32 %v5638, %v5638
  %v6170 = vmul.f32 %v5696, %v5696
  %v6171 = vmul.f32 %v5754, %v5754
  %v6172 = vmul.f32 %v5812, %v5812
  %v6173 = vmul.f32 %v5870, %v5870
  %v6174 = vmul.f32 %v5928, %v5928
  %v6175 = vmul.f32 %v5986, %v5986
  %v6176 = vmul.f32 %v5119, %v5119
  %v6177 = vmul.f32 %v5177, %v5177
  %v6178 = vmul.f32 %v5235, %v5235
  %v6179 = vmul.f32 %v5293, %v5293
  %v6180 = vmul.f32 %v5351, %v5351
  %v6181 = vmul.f32 %v5409, %v5409
  %v6182 = vmul.f32 %v5467, %v5467
  %v6183 = vmul.f32 %v5525, %v5525
  %v6184 = vmul.f32 %v5583, %v5583
  %v6185 = vmul.f32 %v5641, %v5641
  %v6186 = vmul.f32 %v5699, %v5699
  %v6187 = vmul.f32 %v5757, %v5757
  %v6188 = vmul.f32 %v5815, %v5815
  %v6189 = vmul.f32 %v5873, %v5873
  %v6190 = vmul.f32 %v5931, %v5931
  %v6191 = vmul.f32 %v5989, %v5989
  %v6192 = vadd.f32 %v6128, %v6129
  %v6193 = vadd.f32 %v6192, %v6130
  %v6194 = vadd.f32 %v6193, %v6131
  %v6195 = vadd.f32 %v6194, %v6132
  %v6196 = vadd.f32 %v6195, %v6133
  %v6197 = vadd.f32 %v6196, %v6134
  %v6198 = vadd.f32 %v6197, %v6135
  %v6199 = vadd.f32 %v6198, %v6136
  %v6200 = vadd.f32 %v6199, %v6137
  %v6201 = vadd.f32 %v6200, %v6138
  %v6202 = vadd.f32 %v6201, %v6139
  %v6203 = vadd.f32 %v6202, %v6140
  %v6204 = vadd.f32 %v6203, %v6141
  %v6205 = vadd.f32 %v6204, %v6142
  %v6206 = vadd.f32 %v6205, %v6143
  %6207 = vadd.xlane.f32.xlu0 %v6206
  %v6208 = vpop.xlane.xlu0 %6207
  %v6209 = vadd.f32 %v6144, %v6145
  %v6210 = vadd.f32 %v6209, %v6146
  %v6211 = vadd.f32 %v6210, %v6147
  %v6212 = vadd.f32 %v6211, %v6148
  %v6213 = vadd.f32 %v6212, %v6149
  %v6214 = vadd.f32 %v6213, %v6150
  %v6215 = vadd.f32 %v6214, %v6151
  %v6216 = vadd.f32 %v6215, %v6152
  %v6217 = vadd.f32 %v6216, %v6153
  %v6218 = vadd.f32 %v6217, %v6154
  %v6219 = vadd.f32 %v6218, %v6155
  %v6220 = vadd.f32 %v6219, %v6156
  %v6221 = vadd.f32 %v6220, %v6157
  %v6222 = vadd.f32 %v6221, %v6158
  %v6223 = vadd.f32 %v6222, %v6159
  %6224 = vadd.xlane.f32.xlu0 %v6223
  %v6225 = vpop.xlane.xlu0 %6224
  %v6226 = vadd.f32 %v6160, %v6161
  %v6227 = vadd.f32 %v6226, %v6162
  %v6228 = vadd.f32 %v6227, %v6163
  %v6229 = vadd.f32 %v6228, %v6164
  %v6230 = vadd.f32 %v6229, %v6165
  %v6231 = vadd.f32 %v6230, %v6166
  %v6232 = vadd.f32 %v6231, %v6167
  %v6233 = vadd.f32 %v6232, %v6168
  %v6234 = vadd.f32 %v6233, %v6169
  %v6235 = vadd.f32 %v6234, %v6170
  %v6236 = vadd.f32 %v6235, %v6171
  %v6237 = vadd.f32 %v6236, %v6172
  %v6238 = vadd.f32 %v6237, %v6173
  %v6239 = vadd.f32 %v6238, %v6174
  %v6240 = vadd.f32 %v6239, %v6175
  %6241 = vadd.xlane.f32.xlu0 %v6240
  %v6242 = vpop.xlane.xlu0 %6241
  %v6243 = vadd.f32 %v6176, %v6177
  %v6244 = vadd.f32 %v6243, %v6178
  %v6245 = vadd.f32 %v6244, %v6179
  %v6246 = vadd.f32 %v6245, %v6180
  %v6247 = vadd.f32 %v6246, %v6181
  %v6248 = vadd.f32 %v6247, %v6182
  %v6249 = vadd.f32 %v6248, %v6183
  %v6250 = vadd.f32 %v6249, %v6184
  %v6251 = vadd.f32 %v6250, %v6185
  %v6252 = vadd.f32 %v6251, %v6186
  %v6253 = vadd.f32 %v6252, %v6187
  %v6254 = vadd.f32 %v6253, %v6188
  %v6255 = vadd.f32 %v6254, %v6189
  %v6256 = vadd.f32 %v6255, %v6190
  %v6257 = vadd.f32 %v6256, %v6191
  %6258 = vadd.xlane.f32.xlu0 %v6257
  %v6259 = vpop.xlane.xlu0 %6258
  %v6260 = vadd.f32 %v4127, %v6208
  %v6261 = vadd.f32 %v4128, %v6225
  %v6262 = vadd.f32 %v4129, %v6242
  %v6263 = vadd.f32 %v4130, %v6259
  %v6264 = vmul.f32 %v6124, 0.00024414063
  %v6265 = vmul.f32 %v6125, 0.00024414063
  %v6266 = vmul.f32 %v6126, 0.00024414063
  %v6267 = vmul.f32 %v6127, 0.00024414063
  %v6268 = vmul.f32 %v6260, 0.00024414063
  %v6269 = vmul.f32 %v6261, 0.00024414063
  %v6270 = vmul.f32 %v6262, 0.00024414063
  %v6271 = vmul.f32 %v6263, 0.00024414063
  %v6272 = vmul.f32 %v6264, %v6264
  %v6273 = vmul.f32 %v6265, %v6265
  %v6274 = vmul.f32 %v6266, %v6266
  %v6275 = vmul.f32 %v6267, %v6267
  %v6276 = vsub.f32 %v6268, %v6272
  %v6277 = vsub.f32 %v6269, %v6273
  %v6278 = vsub.f32 %v6270, %v6274
  %v6279 = vsub.f32 %v6271, %v6275
  %v6280 = vadd.f32 %v6276, 0.001
  %v6281 = vadd.f32 %v6277, 0.001
  %v6282 = vadd.f32 %v6278, 0.001
  %v6283 = vadd.f32 %v6279, 0.001
  %v6284 = vrsqrt.pop %v6280
  %v6285 = vmul.f32 %v6284, %v6280
  %v6286 = vmul.f32 %v6285, %v6284
  %v6287 = vmul.f32 0.5, %v6286
  %v6288 = vsub.f32 1.5, %v6287
  %v6289 = vmul.f32 %v6284, %v6288
  %vm6290 = vweird.f32 %v6280
  %vm6291 = vweird.f32 %v6284
  %vm6292 = vmor %vm6290, %vm6291
  %v6293 = vsel %vm6292, %v6284, %v6289
  %v6294 = vrsqrt.pop %v6281
  %v6295 = vmul.f32 %v6294, %v6281
  %v6296 = vmul.f32 %v6295, %v6294
  %v6297 = vmul.f32 0.5, %v6296
  %v6298 = vsub.f32 1.5, %v6297
  %v6299 = vmul.f32 %v6294, %v6298
  %vm6300 = vweird.f32 %v6281
  %vm6301 = vweird.f32 %v6294
  %vm6302 = vmor %vm6300, %vm6301
  %v6303 = vsel %vm6302, %v6294, %v6299
  %v6304 = vrsqrt.pop %v6282
  %v6305 = vmul.f32 %v6304, %v6282
  %v6306 = vmul.f32 %v6305, %v6304
  %v6307 = vmul.f32 0.5, %v6306
  %v6308 = vsub.f32 1.5, %v6307
  %v6309 = vmul.f32 %v6304, %v6308
  %vm6310 = vweird.f32 %v6282
  %vm6311 = vweird.f32 %v6304
  %vm6312 = vmor %vm6310, %vm6311
  %v6313 = vsel %vm6312, %v6304, %v6309
  %v6314 = vrsqrt.pop %v6283
  %v6315 = vmul.f32 %v6314, %v6283
  %v6316 = vmul.f32 %v6315, %v6314
  %v6317 = vmul.f32 0.5, %v6316
  %v6318 = vsub.f32 1.5, %v6317
  %v6319 = vmul.f32 %v6314, %v6318
  %vm6320 = vweird.f32 %v6283
  %vm6321 = vweird.f32 %v6314
  %vm6322 = vmor %vm6320, %vm6321
  %v6323 = vsel %vm6322, %v6314, %v6319
  %v6324 = vld [vmem:[%s3] sm:$0xff]
  %v6325 = vld [vmem:[%s3 + $0x8] sm:$0xff]
  %v6326 = vld [vmem:[%s3 + $0x10] sm:$0xff]
  %v6327 = vld [vmem:[%s3 + $0x18] sm:$0xff]
  %v6328 = vmul.f32 %v6293, %v6324
  %v6329 = vmul.f32 %v6303, %v6325
  %v6330 = vmul.f32 %v6313, %v6326
  %v6331 = vmul.f32 %v6323, %v6327
  %v6332 = vld [vmem:[%s4] sm:$0xff]
  %v6333 = vld [vmem:[%s4 + $0x8] sm:$0xff]
  %v6334 = vld [vmem:[%s4 + $0x10] sm:$0xff]
  %v6335 = vld [vmem:[%s4 + $0x18] sm:$0xff]
  %v6336 = vmul.f32 %v6264, %v6328
  %v6337 = vmul.f32 %v6265, %v6329
  %v6338 = vmul.f32 %v6266, %v6330
  %v6339 = vmul.f32 %v6267, %v6331
  %v6340 = vsub.f32 %v6332, %v6336
  %v6341 = vsub.f32 %v6333, %v6337
  %v6342 = vsub.f32 %v6334, %v6338
  %v6343 = vsub.f32 %v6335, %v6339
  %v6344 = vld [vmem:[#allocation4] sm:$0xff]
  %v6345 = vld [vmem:[#allocation4 + $0x8] sm:$0xff]
  %v6346 = vld [vmem:[#allocation4 + $0x10] sm:$0xff]
  %v6347 = vld [vmem:[#allocation4 + $0x18] sm:$0xff]
  %v6348 = vld [vmem:[#allocation4 + $0x20] sm:$0xff]
  %v6349 = vld [vmem:[#allocation4 + $0x28] sm:$0xff]
  %v6350 = vld [vmem:[#allocation4 + $0x30] sm:$0xff]
  %v6351 = vld [vmem:[#allocation4 + $0x38] sm:$0xff]
  %v6352 = vld [vmem:[#allocation4 + $0x40] sm:$0xff]
  %v6353 = vld [vmem:[#allocation4 + $0x48] sm:$0xff]
  %v6354 = vld [vmem:[#allocation4 + $0x50] sm:$0xff]
  %v6355 = vld [vmem:[#allocation4 + $0x58] sm:$0xff]
  %v6356 = vld [vmem:[#allocation4 + $0x60] sm:$0xff]
  %v6357 = vld [vmem:[#allocation4 + $0x68] sm:$0xff]
  %v6358 = vld [vmem:[#allocation4 + $0x70] sm:$0xff]
  %v6359 = vld [vmem:[#allocation4 + $0x78] sm:$0xff]
  %v6360 = vld [vmem:[#allocation4 + $0x80] sm:$0xff]
  %v6361 = vld [vmem:[#allocation4 + $0x88] sm:$0xff]
  %v6362 = vld [vmem:[#allocation4 + $0x90] sm:$0xff]
  %v6363 = vld [vmem:[#allocation4 + $0x98] sm:$0xff]
  %v6364 = vld [vmem:[#allocation4 + $0xa0] sm:$0xff]
  %v6365 = vld [vmem:[#allocation4 + $0xa8] sm:$0xff]
  %v6366 = vld [vmem:[#allocation4 + $0xb0] sm:$0xff]
  %v6367 = vld [vmem:[#allocation4 + $0xb8] sm:$0xff]
  %v6368 = vld [vmem:[#allocation4 + $0xc0] sm:$0xff]
  %v6369 = vld [vmem:[#allocation4 + $0xc8] sm:$0xff]
  %v6370 = vld [vmem:[#allocation4 + $0xd0] sm:$0xff]
  %v6371 = vld [vmem:[#allocation4 + $0xd8] sm:$0xff]
  %v6372 = vld [vmem:[#allocation4 + $0xe0] sm:$0xff]
  %v6373 = vld [vmem:[#allocation4 + $0xe8] sm:$0xff]
  %v6374 = vld [vmem:[#allocation4 + $0xf0] sm:$0xff]
  %v6375 = vld [vmem:[#allocation4 + $0xf8] sm:$0xff]
  %v6376 = vld [vmem:[#allocation4 + $0x100] sm:$0xff]
  %v6377 = vld [vmem:[#allocation4 + $0x108] sm:$0xff]
  %v6378 = vld [vmem:[#allocation4 + $0x110] sm:$0xff]
  %v6379 = vld [vmem:[#allocation4 + $0x118] sm:$0xff]
  %v6380 = vld [vmem:[#allocation4 + $0x120] sm:$0xff]
  %v6381 = vld [vmem:[#allocation4 + $0x128] sm:$0xff]
  %v6382 = vld [vmem:[#allocation4 + $0x130] sm:$0xff]
  %v6383 = vld [vmem:[#allocation4 + $0x138] sm:$0xff]
  %v6384 = vld [vmem:[#allocation4 + $0x140] sm:$0xff]
  %v6385 = vld [vmem:[#allocation4 + $0x148] sm:$0xff]
  %v6386 = vld [vmem:[#allocation4 + $0x150] sm:$0xff]
  %v6387 = vld [vmem:[#allocation4 + $0x158] sm:$0xff]
  %v6388 = vld [vmem:[#allocation4 + $0x160] sm:$0xff]
  %v6389 = vld [vmem:[#allocation4 + $0x168] sm:$0xff]
  %v6390 = vld [vmem:[#allocation4 + $0x170] sm:$0xff]
  %v6391 = vld [vmem:[#allocation4 + $0x178] sm:$0xff]
  %v6392 = vld [vmem:[#allocation4 + $0x180] sm:$0xff]
  %v6393 = vld [vmem:[#allocation4 + $0x188] sm:$0xff]
  %v6394 = vld [vmem:[#allocation4 + $0x190] sm:$0xff]
  %v6395 = vld [vmem:[#allocation4 + $0x198] sm:$0xff]
  %v6396 = vld [vmem:[#allocation4 + $0x1a0] sm:$0xff]
  %v6397 = vld [vmem:[#allocation4 + $0x1a8] sm:$0xff]
  %v6398 = vld [vmem:[#allocation4 + $0x1b0] sm:$0xff]
  %v6399 = vld [vmem:[#allocation4 + $0x1b8] sm:$0xff]
  %v6400 = vld [vmem:[#allocation4 + $0x1c0] sm:$0xff]
  %v6401 = vld [vmem:[#allocation4 + $0x1c8] sm:$0xff]
  %v6402 = vld [vmem:[#allocation4 + $0x1d0] sm:$0xff]
  %v6403 = vld [vmem:[#allocation4 + $0x1d8] sm:$0xff]
  %v6404 = vld [vmem:[#allocation4 + $0x1e0] sm:$0xff]
  %v6405 = vld [vmem:[#allocation4 + $0x1e8] sm:$0xff]
  %v6406 = vld [vmem:[#allocation4 + $0x1f0] sm:$0xff]
  %v6407 = vld [vmem:[#allocation4 + $0x1f8] sm:$0xff]
  %6409 = vset.pattern.permute.xlu0 0
  %6410 = vperm.xlu0 %6409, %v6328
  %v6411 = vpop.permute.xlu0 %6410
  %6414 = vset.pattern.permute.xlu0 0
  %6415 = vperm.xlu0 %6414, %v6329
  %v6416 = vpop.permute.xlu0 %6415
  %6419 = vset.pattern.permute.xlu0 0
  %6420 = vperm.xlu0 %6419, %v6330
  %v6421 = vpop.permute.xlu0 %6420
  %6424 = vset.pattern.permute.xlu0 0
  %6425 = vperm.xlu0 %6424, %v6331
  %v6426 = vpop.permute.xlu0 %6425
  %v6428 = vmul.f32 %v6344, %v6411
  %v6429 = vmul.f32 %v6345, %v6411
  %v6430 = vmul.f32 %v6346, %v6411
  %v6431 = vmul.f32 %v6347, %v6411
  %v6432 = vmul.f32 %v6348, %v6411
  %v6433 = vmul.f32 %v6349, %v6411
  %v6434 = vmul.f32 %v6350, %v6411
  %v6435 = vmul.f32 %v6351, %v6411
  %v6436 = vmul.f32 %v6352, %v6411
  %v6437 = vmul.f32 %v6353, %v6411
  %v6438 = vmul.f32 %v6354, %v6411
  %v6439 = vmul.f32 %v6355, %v6411
  %v6440 = vmul.f32 %v6356, %v6411
  %v6441 = vmul.f32 %v6357, %v6411
  %v6442 = vmul.f32 %v6358, %v6411
  %v6443 = vmul.f32 %v6359, %v6411
  %v6444 = vmul.f32 %v6360, %v6416
  %v6445 = vmul.f32 %v6361, %v6416
  %v6446 = vmul.f32 %v6362, %v6416
  %v6447 = vmul.f32 %v6363, %v6416
  %v6448 = vmul.f32 %v6364, %v6416
  %v6449 = vmul.f32 %v6365, %v6416
  %v6450 = vmul.f32 %v6366, %v6416
  %v6451 = vmul.f32 %v6367, %v6416
  %v6452 = vmul.f32 %v6368, %v6416
  %v6453 = vmul.f32 %v6369, %v6416
  %v6454 = vmul.f32 %v6370, %v6416
  %v6455 = vmul.f32 %v6371, %v6416
  %v6456 = vmul.f32 %v6372, %v6416
  %v6457 = vmul.f32 %v6373, %v6416
  %v6458 = vmul.f32 %v6374, %v6416
  %v6459 = vmul.f32 %v6375, %v6416
  %v6460 = vmul.f32 %v6376, %v6421
  %v6461 = vmul.f32 %v6377, %v6421
  %v6462 = vmul.f32 %v6378, %v6421
  %v6463 = vmul.f32 %v6379, %v6421
  %v6464 = vmul.f32 %v6380, %v6421
  %v6465 = vmul.f32 %v6381, %v6421
  %v6466 = vmul.f32 %v6382, %v6421
  %v6467 = vmul.f32 %v6383, %v6421
  %v6468 = vmul.f32 %v6384, %v6421
  %v6469 = vmul.f32 %v6385, %v6421
  %v6470 = vmul.f32 %v6386, %v6421
  %v6471 = vmul.f32 %v6387, %v6421
  %v6472 = vmul.f32 %v6388, %v6421
  %v6473 = vmul.f32 %v6389, %v6421
  %v6474 = vmul.f32 %v6390, %v6421
  %v6475 = vmul.f32 %v6391, %v6421
  %v6476 = vmul.f32 %v6392, %v6426
  %v6477 = vmul.f32 %v6393, %v6426
  %v6478 = vmul.f32 %v6394, %v6426
  %v6479 = vmul.f32 %v6395, %v6426
  %v6480 = vmul.f32 %v6396, %v6426
  %v6481 = vmul.f32 %v6397, %v6426
  %v6482 = vmul.f32 %v6398, %v6426
  %v6483 = vmul.f32 %v6399, %v6426
  %v6484 = vmul.f32 %v6400, %v6426
  %v6485 = vmul.f32 %v6401, %v6426
  %v6486 = vmul.f32 %v6402, %v6426
  %v6487 = vmul.f32 %v6403, %v6426
  %v6488 = vmul.f32 %v6404, %v6426
  %v6489 = vmul.f32 %v6405, %v6426
  %v6490 = vmul.f32 %v6406, %v6426
  %v6491 = vmul.f32 %v6407, %v6426
  %6493 = vset.pattern.permute.xlu0 0
  %6494 = vperm.xlu0 %6493, %v6340
  %v6495 = vpop.permute.xlu0 %6494
  %6498 = vset.pattern.permute.xlu0 0
  %6499 = vperm.xlu0 %6498, %v6341
  %v6500 = vpop.permute.xlu0 %6499
  %6503 = vset.pattern.permute.xlu0 0
  %6504 = vperm.xlu0 %6503, %v6342
  %v6505 = vpop.permute.xlu0 %6504
  %6508 = vset.pattern.permute.xlu0 0
  %6509 = vperm.xlu0 %6508, %v6343
  %v6510 = vpop.permute.xlu0 %6509
  %v6512 = vadd.f32 %v6428, %v6495
  %v6513 = vadd.f32 %v6429, %v6495
  %v6514 = vadd.f32 %v6430, %v6495
  %v6515 = vadd.f32 %v6431, %v6495
  %v6516 = vadd.f32 %v6432, %v6495
  %v6517 = vadd.f32 %v6433, %v6495
  %v6518 = vadd.f32 %v6434, %v6495
  %v6519 = vadd.f32 %v6435, %v6495
  %v6520 = vadd.f32 %v6436, %v6495
  %v6521 = vadd.f32 %v6437, %v6495
  %v6522 = vadd.f32 %v6438, %v6495
  %v6523 = vadd.f32 %v6439, %v6495
  %v6524 = vadd.f32 %v6440, %v6495
  %v6525 = vadd.f32 %v6441, %v6495
  %v6526 = vadd.f32 %v6442, %v6495
  %v6527 = vadd.f32 %v6443, %v6495
  %v6528 = vadd.f32 %v6444, %v6500
  %v6529 = vadd.f32 %v6445, %v6500
  %v6530 = vadd.f32 %v6446, %v6500
  %v6531 = vadd.f32 %v6447, %v6500
  %v6532 = vadd.f32 %v6448, %v6500
  %v6533 = vadd.f32 %v6449, %v6500
  %v6534 = vadd.f32 %v6450, %v6500
  %v6535 = vadd.f32 %v6451, %v6500
  %v6536 = vadd.f32 %v6452, %v6500
  %v6537 = vadd.f32 %v6453, %v6500
  %v6538 = vadd.f32 %v6454, %v6500
  %v6539 = vadd.f32 %v6455, %v6500
  %v6540 = vadd.f32 %v6456, %v6500
  %v6541 = vadd.f32 %v6457, %v6500
  %v6542 = vadd.f32 %v6458, %v6500
  %v6543 = vadd.f32 %v6459, %v6500
  %v6544 = vadd.f32 %v6460, %v6505
  %v6545 = vadd.f32 %v6461, %v6505
  %v6546 = vadd.f32 %v6462, %v6505
  %v6547 = vadd.f32 %v6463, %v6505
  %v6548 = vadd.f32 %v6464, %v6505
  %v6549 = vadd.f32 %v6465, %v6505
  %v6550 = vadd.f32 %v6466, %v6505
  %v6551 = vadd.f32 %v6467, %v6505
  %v6552 = vadd.f32 %v6468, %v6505
  %v6553 = vadd.f32 %v6469, %v6505
  %v6554 = vadd.f32 %v6470, %v6505
  %v6555 = vadd.f32 %v6471, %v6505
  %v6556 = vadd.f32 %v6472, %v6505
  %v6557 = vadd.f32 %v6473, %v6505
  %v6558 = vadd.f32 %v6474, %v6505
  %v6559 = vadd.f32 %v6475, %v6505
  %v6560 = vadd.f32 %v6476, %v6510
  %v6561 = vadd.f32 %v6477, %v6510
  %v6562 = vadd.f32 %v6478, %v6510
  %v6563 = vadd.f32 %v6479, %v6510
  %v6564 = vadd.f32 %v6480, %v6510
  %v6565 = vadd.f32 %v6481, %v6510
  %v6566 = vadd.f32 %v6482, %v6510
  %v6567 = vadd.f32 %v6483, %v6510
  %v6568 = vadd.f32 %v6484, %v6510
  %v6569 = vadd.f32 %v6485, %v6510
  %v6570 = vadd.f32 %v6486, %v6510
  %v6571 = vadd.f32 %v6487, %v6510
  %v6572 = vadd.f32 %v6488, %v6510
  %v6573 = vadd.f32 %v6489, %v6510
  %v6574 = vadd.f32 %v6490, %v6510
  %v6575 = vadd.f32 %v6491, %v6510
  %6576 = vst [vmem:[%s5] sm:$0xff] %v6512
  %6577 = vst [vmem:[%s5 + $0x8] sm:$0xff] %v6513
  %6578 = vst [vmem:[%s5 + $0x10] sm:$0xff] %v6514
  %6579 = vst [vmem:[%s5 + $0x18] sm:$0xff] %v6515
  %6580 = vst [vmem:[%s5 + $0x20] sm:$0xff] %v6516
  %6581 = vst [vmem:[%s5 + $0x28] sm:$0xff] %v6517
  %6582 = vst [vmem:[%s5 + $0x30] sm:$0xff] %v6518
  %6583 = vst [vmem:[%s5 + $0x38] sm:$0xff] %v6519
  %6584 = vst [vmem:[%s5 + $0x40] sm:$0xff] %v6520
  %6585 = vst [vmem:[%s5 + $0x48] sm:$0xff] %v6521
  %6586 = vst [vmem:[%s5 + $0x50] sm:$0xff] %v6522
  %6587 = vst [vmem:[%s5 + $0x58] sm:$0xff] %v6523
  %6588 = vst [vmem:[%s5 + $0x60] sm:$0xff] %v6524
  %6589 = vst [vmem:[%s5 + $0x68] sm:$0xff] %v6525
  %6590 = vst [vmem:[%s5 + $0x70] sm:$0xff] %v6526
  %6591 = vst [vmem:[%s5 + $0x78] sm:$0xff] %v6527
  %6592 = vst [vmem:[%s5 + $0x80] sm:$0xff] %v6528
  %6593 = vst [vmem:[%s5 + $0x88] sm:$0xff] %v6529
  %6594 = vst [vmem:[%s5 + $0x90] sm:$0xff] %v6530
  %6595 = vst [vmem:[%s5 + $0x98] sm:$0xff] %v6531
  %6596 = vst [vmem:[%s5 + $0xa0] sm:$0xff] %v6532
  %6597 = vst [vmem:[%s5 + $0xa8] sm:$0xff] %v6533
  %6598 = vst [vmem:[%s5 + $0xb0] sm:$0xff] %v6534
  %6599 = vst [vmem:[%s5 + $0xb8] sm:$0xff] %v6535
  %6600 = vst [vmem:[%s5 + $0xc0] sm:$0xff] %v6536
  %6601 = vst [vmem:[%s5 + $0xc8] sm:$0xff] %v6537
  %6602 = vst [vmem:[%s5 + $0xd0] sm:$0xff] %v6538
  %6603 = vst [vmem:[%s5 + $0xd8] sm:$0xff] %v6539
  %6604 = vst [vmem:[%s5 + $0xe0] sm:$0xff] %v6540
  %6605 = vst [vmem:[%s5 + $0xe8] sm:$0xff] %v6541
  %6606 = vst [vmem:[%s5 + $0xf0] sm:$0xff] %v6542
  %6607 = vst [vmem:[%s5 + $0xf8] sm:$0xff] %v6543
  %6608 = vst [vmem:[%s5 + $0x100] sm:$0xff] %v6544
  %6609 = vst [vmem:[%s5 + $0x108] sm:$0xff] %v6545
  %6610 = vst [vmem:[%s5 + $0x110] sm:$0xff] %v6546
  %6611 = vst [vmem:[%s5 + $0x118] sm:$0xff] %v6547
  %6612 = vst [vmem:[%s5 + $0x120] sm:$0xff] %v6548
  %6613 = vst [vmem:[%s5 + $0x128] sm:$0xff] %v6549
  %6614 = vst [vmem:[%s5 + $0x130] sm:$0xff] %v6550
  %6615 = vst [vmem:[%s5 + $0x138] sm:$0xff] %v6551
  %6616 = vst [vmem:[%s5 + $0x140] sm:$0xff] %v6552
  %6617 = vst [vmem:[%s5 + $0x148] sm:$0xff] %v6553
  %6618 = vst [vmem:[%s5 + $0x150] sm:$0xff] %v6554
  %6619 = vst [vmem:[%s5 + $0x158] sm:$0xff] %v6555
  %6620 = vst [vmem:[%s5 + $0x160] sm:$0xff] %v6556
  %6621 = vst [vmem:[%s5 + $0x168] sm:$0xff] %v6557
  %6622 = vst [vmem:[%s5 + $0x170] sm:$0xff] %v6558
  %6623 = vst [vmem:[%s5 + $0x178] sm:$0xff] %v6559
  %6624 = vst [vmem:[%s5 + $0x180] sm:$0xff] %v6560
  %6625 = vst [vmem:[%s5 + $0x188] sm:$0xff] %v6561
  %6626 = vst [vmem:[%s5 + $0x190] sm:$0xff] %v6562
  %6627 = vst [vmem:[%s5 + $0x198] sm:$0xff] %v6563
  %6628 = vst [vmem:[%s5 + $0x1a0] sm:$0xff] %v6564
  %6629 = vst [vmem:[%s5 + $0x1a8] sm:$0xff] %v6565
  %6630 = vst [vmem:[%s5 + $0x1b0] sm:$0xff] %v6566
  %6631 = vst [vmem:[%s5 + $0x1b8] sm:$0xff] %v6567
  %6632 = vst [vmem:[%s5 + $0x1c0] sm:$0xff] %v6568
  %6633 = vst [vmem:[%s5 + $0x1c8] sm:$0xff] %v6569
  %6634 = vst [vmem:[%s5 + $0x1d0] sm:$0xff] %v6570
  %6635 = vst [vmem:[%s5 + $0x1d8] sm:$0xff] %v6571
  %6636 = vst [vmem:[%s5 + $0x1e0] sm:$0xff] %v6572
  %6637 = vst [vmem:[%s5 + $0x1e8] sm:$0xff] %v6573
  %6638 = vst [vmem:[%s5 + $0x1f0] sm:$0xff] %v6574
  %6639 = vst [vmem:[%s5 + $0x1f8] sm:$0xff] %v6575
  %v6640 = vld [vmem:[%s5991] sm:$0xff]
  %v6641 = vld [vmem:[%s5991 + $0x8] sm:$0xff]
  %v6642 = vld [vmem:[%s5991 + $0x10] sm:$0xff]
  %v6643 = vld [vmem:[%s5991 + $0x18] sm:$0xff]
  %v6644 = vld [vmem:[%s5991 + $0x20] sm:$0xff]
  %v6645 = vld [vmem:[%s5991 + $0x28] sm:$0xff]
  %v6646 = vld [vmem:[%s5991 + $0x30] sm:$0xff]
  %v6647 = vld [vmem:[%s5991 + $0x38] sm:$0xff]
  %v6648 = vld [vmem:[%s5991 + $0x40] sm:$0xff]
  %v6649 = vld [vmem:[%s5991 + $0x48] sm:$0xff]
  %v6650 = vld [vmem:[%s5991 + $0x50] sm:$0xff]
  %v6651 = vld [vmem:[%s5991 + $0x58] sm:$0xff]
  %v6652 = vld [vmem:[%s5991 + $0x60] sm:$0xff]
  %v6653 = vld [vmem:[%s5991 + $0x68] sm:$0xff]
  %v6654 = vld [vmem:[%s5991 + $0x70] sm:$0xff]
  %v6655 = vld [vmem:[%s5991 + $0x78] sm:$0xff]
  %v6656 = vld [vmem:[%s5991 + $0x80] sm:$0xff]
  %v6657 = vld [vmem:[%s5991 + $0x88] sm:$0xff]
  %v6658 = vld [vmem:[%s5991 + $0x90] sm:$0xff]
  %v6659 = vld [vmem:[%s5991 + $0x98] sm:$0xff]
  %v6660 = vld [vmem:[%s5991 + $0xa0] sm:$0xff]
  %v6661 = vld [vmem:[%s5991 + $0xa8] sm:$0xff]
  %v6662 = vld [vmem:[%s5991 + $0xb0] sm:$0xff]
  %v6663 = vld [vmem:[%s5991 + $0xb8] sm:$0xff]
  %v6664 = vld [vmem:[%s5991 + $0xc0] sm:$0xff]
  %v6665 = vld [vmem:[%s5991 + $0xc8] sm:$0xff]
  %v6666 = vld [vmem:[%s5991 + $0xd0] sm:$0xff]
  %v6667 = vld [vmem:[%s5991 + $0xd8] sm:$0xff]
  %v6668 = vld [vmem:[%s5991 + $0xe0] sm:$0xff]
  %v6669 = vld [vmem:[%s5991 + $0xe8] sm:$0xff]
  %v6670 = vld [vmem:[%s5991 + $0xf0] sm:$0xff]
  %v6671 = vld [vmem:[%s5991 + $0xf8] sm:$0xff]
  %v6672 = vld [vmem:[%s5991 + $0x100] sm:$0xff]
  %v6673 = vld [vmem:[%s5991 + $0x108] sm:$0xff]
  %v6674 = vld [vmem:[%s5991 + $0x110] sm:$0xff]
  %v6675 = vld [vmem:[%s5991 + $0x118] sm:$0xff]
  %v6676 = vld [vmem:[%s5991 + $0x120] sm:$0xff]
  %v6677 = vld [vmem:[%s5991 + $0x128] sm:$0xff]
  %v6678 = vld [vmem:[%s5991 + $0x130] sm:$0xff]
  %v6679 = vld [vmem:[%s5991 + $0x138] sm:$0xff]
  %v6680 = vld [vmem:[%s5991 + $0x140] sm:$0xff]
  %v6681 = vld [vmem:[%s5991 + $0x148] sm:$0xff]
  %v6682 = vld [vmem:[%s5991 + $0x150] sm:$0xff]
  %v6683 = vld [vmem:[%s5991 + $0x158] sm:$0xff]
  %v6684 = vld [vmem:[%s5991 + $0x160] sm:$0xff]
  %v6685 = vld [vmem:[%s5991 + $0x168] sm:$0xff]
  %v6686 = vld [vmem:[%s5991 + $0x170] sm:$0xff]
  %v6687 = vld [vmem:[%s5991 + $0x178] sm:$0xff]
  %v6688 = vld [vmem:[%s5991 + $0x180] sm:$0xff]
  %v6689 = vld [vmem:[%s5991 + $0x188] sm:$0xff]
  %v6690 = vld [vmem:[%s5991 + $0x190] sm:$0xff]
  %v6691 = vld [vmem:[%s5991 + $0x198] sm:$0xff]
  %v6692 = vld [vmem:[%s5991 + $0x1a0] sm:$0xff]
  %v6693 = vld [vmem:[%s5991 + $0x1a8] sm:$0xff]
  %v6694 = vld [vmem:[%s5991 + $0x1b0] sm:$0xff]
  %v6695 = vld [vmem:[%s5991 + $0x1b8] sm:$0xff]
  %v6696 = vld [vmem:[%s5991 + $0x1c0] sm:$0xff]
  %v6697 = vld [vmem:[%s5991 + $0x1c8] sm:$0xff]
  %v6698 = vld [vmem:[%s5991 + $0x1d0] sm:$0xff]
  %v6699 = vld [vmem:[%s5991 + $0x1d8] sm:$0xff]
  %v6700 = vld [vmem:[%s5991 + $0x1e0] sm:$0xff]
  %v6701 = vld [vmem:[%s5991 + $0x1e8] sm:$0xff]
  %v6702 = vld [vmem:[%s5991 + $0x1f0] sm:$0xff]
  %v6703 = vld [vmem:[%s5991 + $0x1f8] sm:$0xff]
  %v6704 = vmul.f32 %v6640, %v6411
  %v6705 = vmul.f32 %v6641, %v6411
  %v6706 = vmul.f32 %v6642, %v6411
  %v6707 = vmul.f32 %v6643, %v6411
  %v6708 = vmul.f32 %v6644, %v6411
  %v6709 = vmul.f32 %v6645, %v6411
  %v6710 = vmul.f32 %v6646, %v6411
  %v6711 = vmul.f32 %v6647, %v6411
  %v6712 = vmul.f32 %v6648, %v6411
  %v6713 = vmul.f32 %v6649, %v6411
  %v6714 = vmul.f32 %v6650, %v6411
  %v6715 = vmul.f32 %v6651, %v6411
  %v6716 = vmul.f32 %v6652, %v6411
  %v6717 = vmul.f32 %v6653, %v6411
  %v6718 = vmul.f32 %v6654, %v6411
  %v6719 = vmul.f32 %v6655, %v6411
  %v6720 = vmul.f32 %v6656, %v6416
  %v6721 = vmul.f32 %v6657, %v6416
  %v6722 = vmul.f32 %v6658, %v6416
  %v6723 = vmul.f32 %v6659, %v6416
  %v6724 = vmul.f32 %v6660, %v6416
  %v6725 = vmul.f32 %v6661, %v6416
  %v6726 = vmul.f32 %v6662, %v6416
  %v6727 = vmul.f32 %v6663, %v6416
  %v6728 = vmul.f32 %v6664, %v6416
  %v6729 = vmul.f32 %v6665, %v6416
  %v6730 = vmul.f32 %v6666, %v6416
  %v6731 = vmul.f32 %v6667, %v6416
  %v6732 = vmul.f32 %v6668, %v6416
  %v6733 = vmul.f32 %v6669, %v6416
  %v6734 = vmul.f32 %v6670, %v6416
  %v6735 = vmul.f32 %v6671, %v6416
  %v6736 = vmul.f32 %v6672, %v6421
  %v6737 = vmul.f32 %v6673, %v6421
  %v6738 = vmul.f32 %v6674, %v6421
  %v6739 = vmul.f32 %v6675, %v6421
  %v6740 = vmul.f32 %v6676, %v6421
  %v6741 = vmul.f32 %v6677, %v6421
  %v6742 = vmul.f32 %v6678, %v6421
  %v6743 = vmul.f32 %v6679, %v6421
  %v6744 = vmul.f32 %v6680, %v6421
  %v6745 = vmul.f32 %v6681, %v6421
  %v6746 = vmul.f32 %v6682, %v6421
  %v6747 = vmul.f32 %v6683, %v6421
  %v6748 = vmul.f32 %v6684, %v6421
  %v6749 = vmul.f32 %v6685, %v6421
  %v6750 = vmul.f32 %v6686, %v6421
  %v6751 = vmul.f32 %v6687, %v6421
  %v6752 = vmul.f32 %v6688, %v6426
  %v6753 = vmul.f32 %v6689, %v6426
  %v6754 = vmul.f32 %v6690, %v6426
  %v6755 = vmul.f32 %v6691, %v6426
  %v6756 = vmul.f32 %v6692, %v6426
  %v6757 = vmul.f32 %v6693, %v6426
  %v6758 = vmul.f32 %v6694, %v6426
  %v6759 = vmul.f32 %v6695, %v6426
  %v6760 = vmul.f32 %v6696, %v6426
  %v6761 = vmul.f32 %v6697, %v6426
  %v6762 = vmul.f32 %v6698, %v6426
  %v6763 = vmul.f32 %v6699, %v6426
  %v6764 = vmul.f32 %v6700, %v6426
  %v6765 = vmul.f32 %v6701, %v6426
  %v6766 = vmul.f32 %v6702, %v6426
  %v6767 = vmul.f32 %v6703, %v6426
  %v6768 = vadd.f32 %v6704, %v6495
  %v6769 = vadd.f32 %v6705, %v6495
  %v6770 = vadd.f32 %v6706, %v6495
  %v6771 = vadd.f32 %v6707, %v6495
  %v6772 = vadd.f32 %v6708, %v6495
  %v6773 = vadd.f32 %v6709, %v6495
  %v6774 = vadd.f32 %v6710, %v6495
  %v6775 = vadd.f32 %v6711, %v6495
  %v6776 = vadd.f32 %v6712, %v6495
  %v6777 = vadd.f32 %v6713, %v6495
  %v6778 = vadd.f32 %v6714, %v6495
  %v6779 = vadd.f32 %v6715, %v6495
  %v6780 = vadd.f32 %v6716, %v6495
  %v6781 = vadd.f32 %v6717, %v6495
  %v6782 = vadd.f32 %v6718, %v6495
  %v6783 = vadd.f32 %v6719, %v6495
  %v6784 = vadd.f32 %v6720, %v6500
  %v6785 = vadd.f32 %v6721, %v6500
  %v6786 = vadd.f32 %v6722, %v6500
  %v6787 = vadd.f32 %v6723, %v6500
  %v6788 = vadd.f32 %v6724, %v6500
  %v6789 = vadd.f32 %v6725, %v6500
  %v6790 = vadd.f32 %v6726, %v6500
  %v6791 = vadd.f32 %v6727, %v6500
  %v6792 = vadd.f32 %v6728, %v6500
  %v6793 = vadd.f32 %v6729, %v6500
  %v6794 = vadd.f32 %v6730, %v6500
  %v6795 = vadd.f32 %v6731, %v6500
  %v6796 = vadd.f32 %v6732, %v6500
  %v6797 = vadd.f32 %v6733, %v6500
  %v6798 = vadd.f32 %v6734, %v6500
  %v6799 = vadd.f32 %v6735, %v6500
  %v6800 = vadd.f32 %v6736, %v6505
  %v6801 = vadd.f32 %v6737, %v6505
  %v6802 = vadd.f32 %v6738, %v6505
  %v6803 = vadd.f32 %v6739, %v6505
  %v6804 = vadd.f32 %v6740, %v6505
  %v6805 = vadd.f32 %v6741, %v6505
  %v6806 = vadd.f32 %v6742, %v6505
  %v6807 = vadd.f32 %v6743, %v6505
  %v6808 = vadd.f32 %v6744, %v6505
  %v6809 = vadd.f32 %v6745, %v6505
  %v6810 = vadd.f32 %v6746, %v6505
  %v6811 = vadd.f32 %v6747, %v6505
  %v6812 = vadd.f32 %v6748, %v6505
  %v6813 = vadd.f32 %v6749, %v6505
  %v6814 = vadd.f32 %v6750, %v6505
  %v6815 = vadd.f32 %v6751, %v6505
  %v6816 = vadd.f32 %v6752, %v6510
  %v6817 = vadd.f32 %v6753, %v6510
  %v6818 = vadd.f32 %v6754, %v6510
  %v6819 = vadd.f32 %v6755, %v6510
  %v6820 = vadd.f32 %v6756, %v6510
  %v6821 = vadd.f32 %v6757, %v6510
  %v6822 = vadd.f32 %v6758, %v6510
  %v6823 = vadd.f32 %v6759, %v6510
  %v6824 = vadd.f32 %v6760, %v6510
  %v6825 = vadd.f32 %v6761, %v6510
  %v6826 = vadd.f32 %v6762, %v6510
  %v6827 = vadd.f32 %v6763, %v6510
  %v6828 = vadd.f32 %v6764, %v6510
  %v6829 = vadd.f32 %v6765, %v6510
  %v6830 = vadd.f32 %v6766, %v6510
  %v6831 = vadd.f32 %v6767, %v6510
  %s6832 = scalar_lea.vmem %s5, 512
  %6833 = vst [vmem:[%s6832] sm:$0xff] %v6768
  %6834 = vst [vmem:[%s6832 + $0x8] sm:$0xff] %v6769
  %6835 = vst [vmem:[%s6832 + $0x10] sm:$0xff] %v6770
  %6836 = vst [vmem:[%s6832 + $0x18] sm:$0xff] %v6771
  %6837 = vst [vmem:[%s6832 + $0x20] sm:$0xff] %v6772
  %6838 = vst [vmem:[%s6832 + $0x28] sm:$0xff] %v6773
  %6839 = vst [vmem:[%s6832 + $0x30] sm:$0xff] %v6774
  %6840 = vst [vmem:[%s6832 + $0x38] sm:$0xff] %v6775
  %6841 = vst [vmem:[%s6832 + $0x40] sm:$0xff] %v6776
  %6842 = vst [vmem:[%s6832 + $0x48] sm:$0xff] %v6777
  %6843 = vst [vmem:[%s6832 + $0x50] sm:$0xff] %v6778
  %6844 = vst [vmem:[%s6832 + $0x58] sm:$0xff] %v6779
  %6845 = vst [vmem:[%s6832 + $0x60] sm:$0xff] %v6780
  %6846 = vst [vmem:[%s6832 + $0x68] sm:$0xff] %v6781
  %6847 = vst [vmem:[%s6832 + $0x70] sm:$0xff] %v6782
  %6848 = vst [vmem:[%s6832 + $0x78] sm:$0xff] %v6783
  %6849 = vst [vmem:[%s6832 + $0x80] sm:$0xff] %v6784
  %6850 = vst [vmem:[%s6832 + $0x88] sm:$0xff] %v6785
  %6851 = vst [vmem:[%s6832 + $0x90] sm:$0xff] %v6786
  %6852 = vst [vmem:[%s6832 + $0x98] sm:$0xff] %v6787
  %6853 = vst [vmem:[%s6832 + $0xa0] sm:$0xff] %v6788
  %6854 = vst [vmem:[%s6832 + $0xa8] sm:$0xff] %v6789
  %6855 = vst [vmem:[%s6832 + $0xb0] sm:$0xff] %v6790
  %6856 = vst [vmem:[%s6832 + $0xb8] sm:$0xff] %v6791
  %6857 = vst [vmem:[%s6832 + $0xc0] sm:$0xff] %v6792
  %6858 = vst [vmem:[%s6832 + $0xc8] sm:$0xff] %v6793
  %6859 = vst [vmem:[%s6832 + $0xd0] sm:$0xff] %v6794
  %6860 = vst [vmem:[%s6832 + $0xd8] sm:$0xff] %v6795
  %6861 = vst [vmem:[%s6832 + $0xe0] sm:$0xff] %v6796
  %6862 = vst [vmem:[%s6832 + $0xe8] sm:$0xff] %v6797
  %6863 = vst [vmem:[%s6832 + $0xf0] sm:$0xff] %v6798
  %6864 = vst [vmem:[%s6832 + $0xf8] sm:$0xff] %v6799
  %6865 = vst [vmem:[%s6832 + $0x100] sm:$0xff] %v6800
  %6866 = vst [vmem:[%s6832 + $0x108] sm:$0xff] %v6801
  %6867 = vst [vmem:[%s6832 + $0x110] sm:$0xff] %v6802
  %6868 = vst [vmem:[%s6832 + $0x118] sm:$0xff] %v6803
  %6869 = vst [vmem:[%s6832 + $0x120] sm:$0xff] %v6804
  %6870 = vst [vmem:[%s6832 + $0x128] sm:$0xff] %v6805
  %6871 = vst [vmem:[%s6832 + $0x130] sm:$0xff] %v6806
  %6872 = vst [vmem:[%s6832 + $0x138] sm:$0xff] %v6807
  %6873 = vst [vmem:[%s6832 + $0x140] sm:$0xff] %v6808
  %6874 = vst [vmem:[%s6832 + $0x148] sm:$0xff] %v6809
  %6875 = vst [vmem:[%s6832 + $0x150] sm:$0xff] %v6810
  %6876 = vst [vmem:[%s6832 + $0x158] sm:$0xff] %v6811
  %6877 = vst [vmem:[%s6832 + $0x160] sm:$0xff] %v6812
  %6878 = vst [vmem:[%s6832 + $0x168] sm:$0xff] %v6813
  %6879 = vst [vmem:[%s6832 + $0x170] sm:$0xff] %v6814
  %6880 = vst [vmem:[%s6832 + $0x178] sm:$0xff] %v6815
  %6881 = vst [vmem:[%s6832 + $0x180] sm:$0xff] %v6816
  %6882 = vst [vmem:[%s6832 + $0x188] sm:$0xff] %v6817
  %6883 = vst [vmem:[%s6832 + $0x190] sm:$0xff] %v6818
  %6884 = vst [vmem:[%s6832 + $0x198] sm:$0xff] %v6819
  %6885 = vst [vmem:[%s6832 + $0x1a0] sm:$0xff] %v6820
  %6886 = vst [vmem:[%s6832 + $0x1a8] sm:$0xff] %v6821
  %6887 = vst [vmem:[%s6832 + $0x1b0] sm:$0xff] %v6822
  %6888 = vst [vmem:[%s6832 + $0x1b8] sm:$0xff] %v6823
  %6889 = vst [vmem:[%s6832 + $0x1c0] sm:$0xff] %v6824
  %6890 = vst [vmem:[%s6832 + $0x1c8] sm:$0xff] %v6825
  %6891 = vst [vmem:[%s6832 + $0x1d0] sm:$0xff] %v6826
  %6892 = vst [vmem:[%s6832 + $0x1d8] sm:$0xff] %v6827
  %6893 = vst [vmem:[%s6832 + $0x1e0] sm:$0xff] %v6828
  %6894 = vst [vmem:[%s6832 + $0x1e8] sm:$0xff] %v6829
  %6895 = vst [vmem:[%s6832 + $0x1f0] sm:$0xff] %v6830
  %6896 = vst [vmem:[%s6832 + $0x1f8] sm:$0xff] %v6831
  // Predicated region
  $region22: #{_lambda_.1} parent=0 // pred_check
    _
  $region23: #{_lambda_.1} parent=0 // pred_check_branch
    %6898 = sbr.rel (0) target = $region25
  $region24: #{_lambda_.1} parent=0 // pred_region
    _
  $region25: #{_lambda_.1} parent=0 // pred_fallthru
    _
  // Predicated region
  $region26: #{_lambda_.1} parent=0 // pred_check
    _
  $region27: #{_lambda_.1} parent=0 // pred_check_branch
    %6900 = sbr.rel (0) target = $region29
  $region28: #{_lambda_.1} parent=0 // pred_region
    _
  $region29: #{_lambda_.1} parent=0 // pred_fallthru
    _

</llo_original>
